<compile_context>
chip_gen: v7x
topology: tpu7x:2x2x1
jax: 0.10.0
libtpu: 0.0.40
codegen_flags: <defaults>
</compile_context>

<pallas_src>
import functools

import numpy as np
import jax
import jax.numpy as jnp
from jax.experimental import pallas as pl
from jax.experimental.pallas import tpu as pltpu

COMPUTE_DTYPE = jnp.bfloat16     # matmul-operand dtype; accumulation is always f32
_NEG_INF = float("-inf")


def _vmem_limit_bytes():
    """Per-chip VMEM cap: ~3/4 of physical (v5e/v6e 128 MiB -> 96 MiB, v7x 64 MiB -> 48 MiB)."""
    try:
        info_fn = getattr(pltpu, "get_tpu_info", None)
        if info_fn is not None:
            cap = getattr(info_fn(), "vmem_capacity_bytes", None)
            if cap:
                return int(min(cap * 3 // 4, 96 * 1024 * 1024))
    except Exception:
        pass
    return 32 * 1024 * 1024      # safe default scoped limit


_VMEM_LIMIT = _vmem_limit_bytes()


# ------------------------------------------------------------------- kernels
def _tower_pool_kernel(x_ref, w1_ref, b1_ref, w2_ref, b2_ref, w3_ref, b3_ref,
                       o_ref, top_sc, *, relu_last, topk, tile_n, valid_last):
    """One (sample, point-tile) step: 3 pointwise convs (channels-last) + streamed pool.

    x_ref : (1, TILE_N, 3) bf16     w1_ref: (1, 3, 64) bf16 (per-sample when trans is folded)
    w2_ref: (64, 128) bf16          w3_ref: (128, 1024) bf16    b*_ref: (1, Cout) f32
    o_ref : (1, 1, 1024) f32        top_sc: (topk, 1024) f32 running max / top-k accumulator
    """
    t = pl.program_id(1)
    n_t = pl.num_programs(1)
    f32, cdt = jnp.float32, COMPUTE_DTYPE

    @pl.when(t == 0)
    def _():
        top_sc[...] = jnp.full(top_sc.shape, _NEG_INF, top_sc.dtype)

    h = jnp.dot(x_ref[0], w1_ref[0], preferred_element_type=f32) + b1_ref[...]
    h = jnp.maximum(h, 0.0)                                                   # (TILE_N, 64)
    h = jnp.dot(h.astype(cdt), w2_ref[...], preferred_element_type=f32) + b2_ref[...]
    h = jnp.maximum(h, 0.0)                                                   # (TILE_N, 128)
    h = jnp.dot(h.astype(cdt), w3_ref[...], preferred_element_type=f32) + b3_ref[...]
    if relu_last:
        h = jnp.maximum(h, 0.0)                                               # (TILE_N, 1024)

    has_pad = valid_last < tile_n
    if has_pad or topk > 1:
        row = jax.lax.broadcasted_iota(jnp.int32, h.shape, 0)
    if has_pad:
        # Only the last point-tile carries zero-padded points; exclude them from the pool.
        h = jnp.where(jnp.logical_and(row >= valid_last, t == n_t - 1), _NEG_INF, h)

    if topk == 1:
        top_sc[...] = jnp.maximum(top_sc[...], jnp.max(h, axis=0, keepdims=True))
    else:
        # Duplicate-exact top-k of this tile (k extraction rounds over the sublane axis),
        # then merge with the running top-k over a tiny (2k, 1024) candidate set.
        def extract(vals, idx, k, sentinel):
            out = []
            for _ in range(k):
                m = jnp.max(vals, axis=0, keepdims=True)
                out.append(m)
                first = jnp.min(jnp.where(vals == m, idx, sentinel), axis=0, keepdims=True)
                vals = jnp.where(idx == first, _NEG_INF, vals)
            return out

        tile_top = extract(h, row, topk, tile_n)
        cand = jnp.concatenate([top_sc[...]] + tile_top, axis=0)              # (2k, 1024)
        crow = jax.lax.broadcasted_iota(jnp.int32, cand.shape, 0)
        top_sc[...] = jnp.concatenate(extract(cand, crow, topk, cand.shape[0]), axis=0)

    @pl.when(t == n_t - 1)
    def _():
        o_ref[0] = jnp.sum(top_sc[...], axis=0, keepdims=True)                # lane-dense store


def _stn_head_kernel(g_ref, w1_ref, b1_ref, w2_ref, b2_ref, w3_ref, b3_ref, o_ref):
    """Batched STN3d fc head: (B, 1024) -> (B, 128); lanes 0..8 hold trans + identity."""
    cdt, f32 = COMPUTE_DTYPE, jnp.float32
    g = g_ref[...].astype(cdt)                                                # (B, 1024)
    h = jnp.maximum(jnp.dot(g, w1_ref[...], preferred_element_type=f32) + b1_ref[...], 0.0)
    h = jnp.maximum(jnp.dot(h.astype(cdt), w2_ref[...], preferred_element_type=f32)
                    + b2_ref[...], 0.0)
    t = jnp.dot(h.astype(cdt), w3_ref[...], preferred_element_type=f32) + b3_ref[...]
    # identity (eye(3) flattened -> lanes 0, 4, 8), built in-kernel: no captured constants
    lane = jax.lax.broadcasted_iota(jnp.int32, t.shape, 1)
    ident = jnp.where((lane == 0) | (lane == 4) | (lane == 8), 1.0, 0.0)
    o_ref[...] = t + ident


# ------------------------------------------------------------------ wrappers
def _full_spec(a):
    zeros = (0,) * a.ndim
    return pl.BlockSpec(a.shape, lambda i, _z=zeros: _z)


def _row(v):     # (C,) -> (1, C) lane-dense f32 bias row
    return v.reshape(1, -1).astype(jnp.float32)


def _conv_tower_pool(xb, w1, b1, w2, b2, w3, b3, *, relu_last, topk, n_valid, tile_n):
    """Streamed conv-tower + pool.  xb: (B, N_pad, 3) bf16, channels-last, N_pad % tile_n == 0.
    w1: (1, 3, 64) shared or (B, 3, 64) per-sample (trans-folded) bf16."""
    B, n_pad, _ = xb.shape
    n_tiles = n_pad // tile_n
    cout = w3.shape[1]
    valid_last = n_valid - (n_tiles - 1) * tile_n           # valid points in the last tile

    if w1.shape[0] == 1:
        w1_map = lambda b, t: (0, 0, 0)                     # shared conv1 weight (STN tower)
    else:
        w1_map = lambda b, t: (b, 0, 0)                     # per-sample trans-folded weight
    const2 = lambda b, t: (0, 0)

    kernel = functools.partial(_tower_pool_kernel, relu_last=relu_last, topk=topk,
                               tile_n=tile_n, valid_last=valid_last)
    out = pl.pallas_call(
        kernel,
        out_shape=jax.ShapeDtypeStruct((B, 1, cout), jnp.float32),
        grid=(B, n_tiles),
        in_specs=[
            pl.BlockSpec((1, tile_n, 3), lambda b, t: (b, t, 0)),
            pl.BlockSpec((1,) + w1.shape[1:], w1_map),
            pl.BlockSpec(b1.shape, const2),
            pl.BlockSpec(w2.shape, const2),
            pl.BlockSpec(b2.shape, const2),
            pl.BlockSpec(w3.shape, const2),
            pl.BlockSpec(b3.shape, const2),
        ],
        out_specs=pl.BlockSpec((1, 1, cout), lambda b, t: (b, 0, 0)),
        scratch_shapes=[pltpu.VMEM((topk, cout), jnp.float32)],
        compiler_params=pltpu.CompilerParams(
            dimension_semantics=("parallel", "arbitrary"),   # batch split across v7x's 2 TCs
            vmem_limit_bytes=_VMEM_LIMIT,
        ),
    )(xb, w1, b1, w2, b2, w3, b3)
    return out[:, 0, :]                                      # (B, cout), free reshape


def _stn_head(pooled, p):
    """STN3d fc1/fc2/fc3 head, batched over B in a single grid step."""
    B = pooled.shape[0]
    cdt, f32 = COMPUTE_DTYPE, jnp.float32
    w1 = p['fw1'].T.astype(cdt)                                               # (1024, 512)
    b1 = p['fb1'].reshape(1, -1).astype(f32)
    w2 = p['fw2'].T.astype(cdt)                                               # (512, 256)
    b2 = p['fb2'].reshape(1, -1).astype(f32)
    # fc3 zero-padded from 9 to 128 output lanes -> lane-aligned output store
    w3 = jnp.zeros((p['fw3'].shape[1], 128), f32).at[:, :9].set(p['fw3'].T).astype(cdt)
    b3 = jnp.zeros((1, 128), f32).at[0, :9].set(p['fb3'])
    out = pl.pallas_call(
        _stn_head_kernel,
        out_shape=jax.ShapeDtypeStruct((B, 128), f32),
        grid=(1,),
        in_specs=[_full_spec(pooled), _full_spec(w1), _full_spec(b1),
                  _full_spec(w2), _full_spec(b2), _full_spec(w3), _full_spec(b3)],
        out_specs=pl.BlockSpec((B, 128), lambda i: (0, 0)),
        compiler_params=pltpu.CompilerParams(dimension_semantics=("arbitrary",)),
    )(pooled, w1, b1, w2, b2, w3, b3)
    return out[:, :9].reshape(B, 3, 3)


@functools.partial(jax.jit, static_argnames=("topk",))
def pointnetfeat_forward(x_ncw, stn_p, feat_p, *, topk):
    """PointNetfeat(global_feat=True, feature_transform=False).forward.
    x_ncw: (B, 3, N) f32 (PyTorch NCW).  Returns (global_feat (B,1024), trans (B,3,3), None).
    NOTE: matmul operands run in bf16 (MXU-native), accumulation/pool math in f32."""
    B, C, N = x_ncw.shape
    assert C == 3
    assert 1 <= topk <= N, "top-k pool needs 1 <= topk <= n_pts"
    cdt = COMPUTE_DTYPE

    # MXU/lane-friendly point tile (multiple of 256, capped so many tiles stream through VMEM)
    tile_n = min(512, ((N + 255) // 256) * 256)
    n_pad = ((N + tile_n - 1) // tile_n) * tile_n

    # channels-last input; zero-pad points to a tile multiple (masked to -inf before pooling)
    xb = jnp.transpose(x_ncw, (0, 2, 1)).astype(cdt)                          # (B, N, 3)
    if n_pad != N:
        xb = jnp.pad(xb, ((0, 0), (0, n_pad - N), (0, 0)))
    if B % 2:  # even sample count -> the "parallel" batch axis splits cleanly on v7x's 2 TCs
        xb = jnp.concatenate([xb, jnp.zeros_like(xb[:1])], axis=0)

    # ---- STN3d: conv tower + streamed max-pool (Pallas, grid over batch x point-tiles) ----
    pooled = _conv_tower_pool(
        xb, stn_p['w1'].T.astype(cdt)[None], _row(stn_p['b1']),
        stn_p['w2'].T.astype(cdt), _row(stn_p['b2']),
        stn_p['w3'].T.astype(cdt), _row(stn_p['b3']),
        relu_last=True, topk=1, n_valid=N, tile_n=tile_n)                     # (Bp, 1024)

    # ---- STN3d fc head: one batched pallas_call for all samples ----
    trans = _stn_head(pooled, stn_p)                                          # (Bp, 3, 3)

    # ---- fold the per-sample 3x3 transform into the first feature conv (exact) ----
    # channels-last: h = (x^T @ trans) @ W1^T = x^T @ (trans @ W1^T)
    w1f = jnp.einsum('bij,oj->bio', trans, feat_p['w1']).astype(cdt)          # (Bp, 3, 64)

    # ---- feature conv tower + streamed max / top-k-sum pool ----
    gfeat = _conv_tower_pool(
        xb, w1f, _row(feat_p['b1']),
        feat_p['w2'].T.astype(cdt), _row(feat_p['b2']),
        feat_p['w3'].T.astype(cdt), _row(feat_p['b3']),
        relu_last=False, topk=topk, n_valid=N, tile_n=tile_n)                 # (Bp, 1024)

    # global_feat=True, feature_transform=False -> trans_feat is None
    return gfeat[:B], trans[:B], None


# ------------------------------------------------------------ parameter setup
def _fold(W, b, gamma, beta, mean, var, eps=1e-5):
    """Fold eval-mode BatchNorm into the preceding conv/fc (weights kept as (Cout, Cin))."""
    scale = gamma / jnp.sqrt(var + eps)
    return W * scale[:, None], (b - mean) * scale + beta


def make_params(key):
    ks = iter(jax.random.split(key, 64))

    def lin(cin, cout):
        bound = 1.0 / np.sqrt(cin)
        W = jax.random.uniform(next(ks), (cout, cin), jnp.float32, -bound, bound)
        b = jax.random.uniform(next(ks), (cout,), jnp.float32, -bound, bound)
        return W, b

    def bn(c):
        gamma = 1.0 + 0.1 * jax.random.normal(next(ks), (c,), jnp.float32)
        beta = 0.1 * jax.random.normal(next(ks), (c,), jnp.float32)
        return gamma, beta, jnp.zeros((c,), jnp.float32), jnp.ones((c,), jnp.float32)

    stn = {}
    for name, (cin, cout) in [('1', (3, 64)), ('2', (64, 128)), ('3', (128, 1024))]:
        W, b = lin(cin, cout)
        stn['w' + name], stn['b' + name] = _fold(W, b, *bn(cout))
    for name, (cin, cout) in [('1', (1024, 512)), ('2', (512, 256))]:
        W, b = lin(cin, cout)
        stn['fw' + name], stn['fb' + name] = _fold(W, b, *bn(cout))
    stn['fw3'], stn['fb3'] = lin(256, 9)                  # fc3 has no BN

    feat = {}
    for name, (cin, cout) in [('1', (3, 64)), ('2', (64, 128)), ('3', (128, 1024))]:
        W, b = lin(cin, cout)
        feat['w' + name], feat['b' + name] = _fold(W, b, *bn(cout))
    return stn, feat


# ------------------------------------------------------- pure-JAX reference
def ref_forward(x_ncw, stn_p, feat_p, topk):
    """Pure-JAX reference mirroring the kernel numerics (bf16 matmul operands, f32
    accumulation; BN and 3x3-transform folds are exact-math rewrites of the PyTorch order)."""
    f32, cdt = jnp.float32, COMPUTE_DTYPE
    x = x_ncw.astype(f32)                                                     # (B, 3, N)

    def conv(h, w, b, relu=True):                                             # 1x1 Conv1d
        y = jnp.einsum('oc,bcn->bon', w.astype(cdt), h.astype(cdt),
                       preferred_element_type=f32) + b[None, :, None]
        return jnp.maximum(y, 0.0) if relu else y

    def fc(h, w, b, relu=True):                                               # Linear
        y = jnp.dot(h.astype(cdt), w.T.astype(cdt),
                    preferred_element_type=f32) + b[None, :]
        return jnp.maximum(y, 0.0) if relu else y

    # STN3d
    h = conv(x, stn_p['w1'], stn_p['b1'])
    h = conv(h, stn_p['w2'], stn_p['b2'])
    h = conv(h, stn_p['w3'], stn_p['b3'])
    g = jnp.max(h, axis=2)                                                    # (B, 1024)
    g = fc(g, stn_p['fw1'], stn_p['fb1'])
    g = fc(g, stn_p['fw2'], stn_p['fb2'])
    g = fc(g, stn_p['fw3'], stn_p['fb3'], relu=False)                         # (B, 9)
    trans = (g + jnp.eye(3, dtype=f32).reshape(1, 9)).reshape(-1, 3, 3)

    # feature path; folding trans into conv1 == bmm(x^T, trans)^T then conv1
    w1f = jnp.einsum('fj,bij->bfi', feat_p['w1'], trans)                      # (B, 64, 3)
    h = jnp.einsum('bfc,bcn->bfn', w1f.astype(cdt), x.astype(cdt),
                   preferred_element_type=f32) + feat_p['b1'][None, :, None]
    h = jnp.maximum(h, 0.0)
    h = conv(h, feat_p['w2'], feat_p['b2'])
    h = conv(h, feat_p['w3'], feat_p['b3'], relu=False)                       # (B, 1024, N)
    if topk == 1:
        pooled = jnp.max(h, axis=2)
    else:
        pooled = jnp.sum(jax.lax.top_k(h, topk)[0], axis=-1)
    return pooled, trans


# ------------------------------------------------------------------------ main
if __name__ == "__main__":
    key = jax.random.PRNGKey(0)
    kp, kx = jax.random.split(key)
    stn_p, feat_p = make_params(kp)

    B, N = 2, 64
    x = jax.random.normal(kx, (B, 3, N), jnp.float32)     # PyTorch NCW input: (B, C=3, n_pts)

    ok = True
    for topk in (1, 3):
        out, trans, trans_feat = pointnetfeat_forward(x, stn_p, feat_p, topk=topk)
        out = jax.block_until_ready(out)
        trans = jax.block_until_ready(trans)
        ref_out, ref_trans = ref_forward(x, stn_p, feat_p, topk)
        ok &= bool(jnp.allclose(out, ref_out, atol=2e-3, rtol=2e-3))
        ok &= bool(jnp.allclose(trans, ref_trans, atol=2e-3, rtol=2e-3))
        assert trans_feat is None
    if ok:
        print("KERNEL_OK")
</pallas_src>

<mosaic_0001>
module attributes {stable_mosaic.version = 11 : i64} {
  func.func @_tower_pool_kernel(%arg0: i32, %arg1: i32, %arg2: memref<1x256x3xbf16, #tpu.memory_space<vmem>>, %arg3: memref<1x3x64xbf16, #tpu.memory_space<vmem>>, %arg4: memref<1x64xf32, #tpu.memory_space<vmem>>, %arg5: memref<64x128xbf16, #tpu.memory_space<vmem>>, %arg6: memref<1x128xf32, #tpu.memory_space<vmem>>, %arg7: memref<128x1024xbf16, #tpu.memory_space<vmem>>, %arg8: memref<1x1024xf32, #tpu.memory_space<vmem>>, %arg9: memref<1x1x1024xf32, #tpu.memory_space<vmem>>, %arg10: memref<1x1024xf32, #tpu.memory_space<vmem>>) attributes {dimension_semantics = [#tpu.dimension_semantics<parallel>, #tpu.dimension_semantics<arbitrary>], iteration_bounds = array<i64: 2, 1>, scalar_prefetch = 0 : i64, scratch_operands = 1 : i64, tpu.core_type = #tpu.core_type<tc>, window_params = [{transform_indices = @transform_0, window_bounds = array<i64: 1, 256, 3>}, {pipeline_mode = #tpu.pipeline_mode<synchronous>, transform_indices = @transform_1, window_bounds = array<i64: 1, 3, 64>}, {pipeline_mode = #tpu.pipeline_mode<synchronous>, transform_indices = @transform_2, window_bounds = array<i64: 1, 64>}, {pipeline_mode = #tpu.pipeline_mode<synchronous>, transform_indices = @transform_3, window_bounds = array<i64: 64, 128>}, {pipeline_mode = #tpu.pipeline_mode<synchronous>, transform_indices = @transform_4, window_bounds = array<i64: 1, 128>}, {pipeline_mode = #tpu.pipeline_mode<synchronous>, transform_indices = @transform_5, window_bounds = array<i64: 128, 1024>}, {pipeline_mode = #tpu.pipeline_mode<synchronous>, transform_indices = @transform_6, window_bounds = array<i64: 1, 1024>}, {transform_indices = @transform_7, window_bounds = array<i64: 1, 1, 1024>}]} {
    %c0_i32 = arith.constant 0 : i32
    %0 = arith.cmpi eq, %arg1, %c0_i32 : i32
    %1 = arith.extui %0 : i1 to i32
    %c0_i32_0 = arith.constant 0 : i32
    %2 = arith.cmpi ne, %1, %c0_i32_0 : i32
    scf.if %2 {
      %cst_30 = arith.constant 0xFF800000 : f32
      %45 = vector.broadcast %cst_30 : f32 to vector<1x1024xf32>
      %c0_31 = arith.constant 0 : index
      %c0_32 = arith.constant 0 : index
      %46 = vector.load %arg10[%c0_31, %c0_32] : memref<1x1024xf32, #tpu.memory_space<vmem>>, vector<1x1024xf32>
      tpu.vector_store %arg10[%c0_31, %c0_32], %45 {strides = array<i32>} : memref<1x1024xf32, #tpu.memory_space<vmem>>, vector<1x1024xf32>,
    } else {
    }
    %c0 = arith.constant 0 : index
    %c0_1 = arith.constant 0 : index
    %c0_2 = arith.constant 0 : index
    %3 = vector.load %arg2[%c0, %c0_1, %c0_2] : memref<1x256x3xbf16, #tpu.memory_space<vmem>>, vector<1x256x3xbf16>
    %4 = vector.shape_cast %3 : vector<1x256x3xbf16> to vector<256x3xbf16>
    %c0_3 = arith.constant 0 : index
    %c0_4 = arith.constant 0 : index
    %c0_5 = arith.constant 0 : index
    %5 = vector.load %arg3[%c0_3, %c0_4, %c0_5] : memref<1x3x64xbf16, #tpu.memory_space<vmem>>, vector<1x3x64xbf16>
    %6 = vector.shape_cast %5 : vector<1x3x64xbf16> to vector<3x64xbf16>
    %cst = arith.constant dense<0.000000e+00> : vector<256x64xf32>
    %7 = tpu.matmul %4, %6, %cst {dimension_numbers = #tpu.dot_dimension_numbers<[1], [0], [0], [1], [0, 0, 1, 1], [], []>} : vector<256x3xbf16>, vector<3x64xbf16>, vector<256x64xf32> -> vector<256x64xf32>
    %c0_6 = arith.constant 0 : index
    %c0_7 = arith.constant 0 : index
    %8 = vector.load %arg4[%c0_6, %c0_7] : memref<1x64xf32, #tpu.memory_space<vmem>>, vector<1x64xf32>
    %9 = vector.broadcast %8 : vector<1x64xf32> to vector<256x64xf32>
    %10 = arith.addf %7, %9 : vector<256x64xf32>
    %cst_8 = arith.constant 0.000000e+00 : f32
    %11 = vector.broadcast %cst_8 : f32 to vector<256x64xf32>
    %12 = arith.maximumf %10, %11 : vector<256x64xf32>
    %13 = arith.truncf %12 : vector<256x64xf32> to vector<256x64xbf16>
    %c0_9 = arith.constant 0 : index
    %c0_10 = arith.constant 0 : index
    %14 = vector.load %arg5[%c0_9, %c0_10] : memref<64x128xbf16, #tpu.memory_space<vmem>>, vector<64x128xbf16>
    %cst_11 = arith.constant dense<0.000000e+00> : vector<256x128xf32>
    %15 = tpu.matmul %13, %14, %cst_11 {dimension_numbers = #tpu.dot_dimension_numbers<[1], [0], [0], [1], [0, 0, 1, 1], [], []>} : vector<256x64xbf16>, vector<64x128xbf16>, vector<256x128xf32> -> vector<256x128xf32>
    %c0_12 = arith.constant 0 : index
    %c0_13 = arith.constant 0 : index
    %16 = vector.load %arg6[%c0_12, %c0_13] : memref<1x128xf32, #tpu.memory_space<vmem>>, vector<1x128xf32>
    %17 = vector.broadcast %16 : vector<1x128xf32> to vector<256x128xf32>
    %18 = arith.addf %15, %17 : vector<256x128xf32>
    %cst_14 = arith.constant 0.000000e+00 : f32
    %19 = vector.broadcast %cst_14 : f32 to vector<256x128xf32>
    %20 = arith.maximumf %18, %19 : vector<256x128xf32>
    %21 = arith.truncf %20 : vector<256x128xf32> to vector<256x128xbf16>
    %c0_15 = arith.constant 0 : index
    %c0_16 = arith.constant 0 : index
    %22 = vector.load %arg7[%c0_15, %c0_16] : memref<128x1024xbf16, #tpu.memory_space<vmem>>, vector<128x1024xbf16>
    %cst_17 = arith.constant dense<0.000000e+00> : vector<256x1024xf32>
    %23 = tpu.matmul %21, %22, %cst_17 {dimension_numbers = #tpu.dot_dimension_numbers<[1], [0], [0], [1], [0, 0, 1, 1], [], []>} : vector<256x128xbf16>, vector<128x1024xbf16>, vector<256x1024xf32> -> vector<256x1024xf32>
    %c0_18 = arith.constant 0 : index
    %c0_19 = arith.constant 0 : index
    %24 = vector.load %arg8[%c0_18, %c0_19] : memref<1x1024xf32, #tpu.memory_space<vmem>>, vector<1x1024xf32>
    %25 = vector.broadcast %24 : vector<1x1024xf32> to vector<256x1024xf32>
    %26 = arith.addf %23, %25 : vector<256x1024xf32>
    %cst_20 = arith.constant 0.000000e+00 : f32
    %27 = vector.broadcast %cst_20 : f32 to vector<256x1024xf32>
    %28 = arith.maximumf %26, %27 : vector<256x1024xf32>
    %29 = tpu.iota {dimensions = array<i32: 0>} : vector<256x1024xi32>
    %c64_i32 = arith.constant 64 : i32
    %30 = vector.broadcast %c64_i32 : i32 to vector<256x1024xi32>
    %31 = arith.cmpi sge, %29, %30 : vector<256x1024xi32>
    %c0_i32_21 = arith.constant 0 : i32
    %32 = arith.cmpi eq, %arg1, %c0_i32_21 : i32
    %33 = vector.broadcast %32 : i1 to vector<256x1024xi1>
    %34 = arith.andi %31, %33 : vector<256x1024xi1>
    %cst_22 = arith.constant 0xFF800000 : f32
    %35 = vector.broadcast %cst_22 : f32 to vector<256x1024xf32>
    %36 = arith.select %34, %35, %28 : vector<256x1024xi1>, vector<256x1024xf32>
    %c0_23 = arith.constant 0 : index
    %c0_24 = arith.constant 0 : index
    %37 = vector.load %arg10[%c0_23, %c0_24] : memref<1x1024xf32, #tpu.memory_space<vmem>>, vector<1x1024xf32>
    %cst_25 = arith.constant dense<0xFF800000> : vector<1024xf32>
    %38 = vector.multi_reduction <maximumf>, %36, %cst_25 [0] : vector<256x1024xf32> to vector<1024xf32>
    %39 = vector.shape_cast %38 : vector<1024xf32> to vector<1x1024xf32>
    %40 = arith.maximumf %37, %39 : vector<1x1024xf32>
    %c0_26 = arith.constant 0 : index
    %c0_27 = arith.constant 0 : index
    %41 = vector.load %arg10[%c0_26, %c0_27] : memref<1x1024xf32, #tpu.memory_space<vmem>>, vector<1x1024xf32>
    tpu.vector_store %arg10[%c0_26, %c0_27], %40 {strides = array<i32>} : memref<1x1024xf32, #tpu.memory_space<vmem>>, vector<1x1024xf32>,
    %c0_i32_28 = arith.constant 0 : i32
    %42 = arith.cmpi eq, %arg1, %c0_i32_28 : i32
    %43 = arith.extui %42 : i1 to i32
    %c0_i32_29 = arith.constant 0 : i32
    %44 = arith.cmpi ne, %43, %c0_i32_29 : i32
    scf.if %44 {
      %c0_30 = arith.constant 0 : index
      %c0_31 = arith.constant 0 : index
      %45 = vector.load %arg10[%c0_30, %c0_31] : memref<1x1024xf32, #tpu.memory_space<vmem>>, vector<1x1024xf32>
      %cst_32 = arith.constant dense<0.000000e+00> : vector<1024xf32>
      %46 = vector.multi_reduction <add>, %45, %cst_32 [0] : vector<1x1024xf32> to vector<1024xf32>
      %47 = vector.shape_cast %46 : vector<1024xf32> to vector<1x1024xf32>
      %c0_33 = arith.constant 0 : index
      %c0_34 = arith.constant 0 : index
      %c0_35 = arith.constant 0 : index
      %48 = vector.load %arg9[%c0_33, %c0_34, %c0_35] : memref<1x1x1024xf32, #tpu.memory_space<vmem>>, vector<1x1x1024xf32>
      %49 = vector.shape_cast %48 : vector<1x1x1024xf32> to vector<1x1024xf32>
      %50 = vector.shape_cast %47 : vector<1x1024xf32> to vector<1x1x1024xf32>
      tpu.vector_store %arg9[%c0_33, %c0_34, %c0_35], %50 {strides = array<i32>} : memref<1x1x1024xf32, #tpu.memory_space<vmem>>, vector<1x1x1024xf32>,
    } else {
    }
    return
  }
  func.func @transform_0(%arg0: i32, %arg1: i32) -> (i32, i32, i32) {
    %c0_i32 = arith.constant 0 : i32
    %c0_i32_0 = arith.constant 0 : i32
    return %arg0, %arg1, %c0_i32 : i32, i32, i32
  }
  func.func @transform_1(%arg0: i32, %arg1: i32) -> (i32, i32, i32) {
    %c0_i32 = arith.constant 0 : i32
    %c0_i32_0 = arith.constant 0 : i32
    %c0_i32_1 = arith.constant 0 : i32
    %c0_i32_2 = arith.constant 0 : i32
    return %c0_i32, %c0_i32_0, %c0_i32_1 : i32, i32, i32
  }
  func.func @transform_2(%arg0: i32, %arg1: i32) -> (i32, i32) {
    %c0_i32 = arith.constant 0 : i32
    %c0_i32_0 = arith.constant 0 : i32
    %c0_i32_1 = arith.constant 0 : i32
    return %c0_i32, %c0_i32_0 : i32, i32
  }
  func.func @transform_3(%arg0: i32, %arg1: i32) -> (i32, i32) {
    %c0_i32 = arith.constant 0 : i32
    %c0_i32_0 = arith.constant 0 : i32
    %c0_i32_1 = arith.constant 0 : i32
    return %c0_i32, %c0_i32_0 : i32, i32
  }
  func.func @transform_4(%arg0: i32, %arg1: i32) -> (i32, i32) {
    %c0_i32 = arith.constant 0 : i32
    %c0_i32_0 = arith.constant 0 : i32
    %c0_i32_1 = arith.constant 0 : i32
    return %c0_i32, %c0_i32_0 : i32, i32
  }
  func.func @transform_5(%arg0: i32, %arg1: i32) -> (i32, i32) {
    %c0_i32 = arith.constant 0 : i32
    %c0_i32_0 = arith.constant 0 : i32
    %c0_i32_1 = arith.constant 0 : i32
    return %c0_i32, %c0_i32_0 : i32, i32
  }
  func.func @transform_6(%arg0: i32, %arg1: i32) -> (i32, i32) {
    %c0_i32 = arith.constant 0 : i32
    %c0_i32_0 = arith.constant 0 : i32
    %c0_i32_1 = arith.constant 0 : i32
    return %c0_i32, %c0_i32_0 : i32, i32
  }
  func.func @transform_7(%arg0: i32, %arg1: i32) -> (i32, i32, i32) {
    %c0_i32 = arith.constant 0 : i32
    %c0_i32_0 = arith.constant 0 : i32
    %c0_i32_1 = arith.constant 0 : i32
    return %arg0, %c0_i32, %c0_i32_0 : i32, i32, i32
  }
}

module attributes {stable_mosaic.version = 11 : i64} {
  func.func @_stn_head_kernel(%arg0: i32, %arg1: memref<2x1024xf32, #tpu.memory_space<vmem>>, %arg2: memref<1024x512xbf16, #tpu.memory_space<vmem>>, %arg3: memref<1x512xf32, #tpu.memory_space<vmem>>, %arg4: memref<512x256xbf16, #tpu.memory_space<vmem>>, %arg5: memref<1x256xf32, #tpu.memory_space<vmem>>, %arg6: memref<256x128xbf16, #tpu.memory_space<vmem>>, %arg7: memref<1x128xf32, #tpu.memory_space<vmem>>, %arg8: memref<2x128xf32, #tpu.memory_space<vmem>>) attributes {dimension_semantics = [#tpu.dimension_semantics<arbitrary>], iteration_bounds = array<i64: 1>, scalar_prefetch = 0 : i64, scratch_operands = 0 : i64, tpu.core_type = #tpu.core_type<tc>, window_params = [{pipeline_mode = #tpu.pipeline_mode<synchronous>, transform_indices = @transform_0, window_bounds = array<i64: 2, 1024>}, {pipeline_mode = #tpu.pipeline_mode<synchronous>, transform_indices = @transform_1, window_bounds = array<i64: 1024, 512>}, {pipeline_mode = #tpu.pipeline_mode<synchronous>, transform_indices = @transform_2, window_bounds = array<i64: 1, 512>}, {pipeline_mode = #tpu.pipeline_mode<synchronous>, transform_indices = @transform_3, window_bounds = array<i64: 512, 256>}, {pipeline_mode = #tpu.pipeline_mode<synchronous>, transform_indices = @transform_4, window_bounds = array<i64: 1, 256>}, {pipeline_mode = #tpu.pipeline_mode<synchronous>, transform_indices = @transform_5, window_bounds = array<i64: 256, 128>}, {pipeline_mode = #tpu.pipeline_mode<synchronous>, transform_indices = @transform_6, window_bounds = array<i64: 1, 128>}, {pipeline_mode = #tpu.pipeline_mode<synchronous>, transform_indices = @transform_7, window_bounds = array<i64: 2, 128>}]} {
    %c0 = arith.constant 0 : index
    %c0_0 = arith.constant 0 : index
    %0 = vector.load %arg1[%c0, %c0_0] : memref<2x1024xf32, #tpu.memory_space<vmem>>, vector<2x1024xf32>
    %1 = arith.truncf %0 : vector<2x1024xf32> to vector<2x1024xbf16>
    %c0_1 = arith.constant 0 : index
    %c0_2 = arith.constant 0 : index
    %2 = vector.load %arg2[%c0_1, %c0_2] : memref<1024x512xbf16, #tpu.memory_space<vmem>>, vector<1024x512xbf16>
    %cst = arith.constant dense<0.000000e+00> : vector<2x512xf32>
    %3 = tpu.matmul %1, %2, %cst {dimension_numbers = #tpu.dot_dimension_numbers<[1], [0], [0], [1], [0, 0, 1, 1], [], []>} : vector<2x1024xbf16>, vector<1024x512xbf16>, vector<2x512xf32> -> vector<2x512xf32>
    %c0_3 = arith.constant 0 : index
    %c0_4 = arith.constant 0 : index
    %4 = vector.load %arg3[%c0_3, %c0_4] : memref<1x512xf32, #tpu.memory_space<vmem>>, vector<1x512xf32>
    %5 = vector.broadcast %4 : vector<1x512xf32> to vector<2x512xf32>
    %6 = arith.addf %3, %5 : vector<2x512xf32>
    %cst_5 = arith.constant 0.000000e+00 : f32
    %7 = vector.broadcast %cst_5 : f32 to vector<2x512xf32>
    %8 = arith.maximumf %6, %7 : vector<2x512xf32>
    %9 = arith.truncf %8 : vector<2x512xf32> to vector<2x512xbf16>
    %c0_6 = arith.constant 0 : index
    %c0_7 = arith.constant 0 : index
    %10 = vector.load %arg4[%c0_6, %c0_7] : memref<512x256xbf16, #tpu.memory_space<vmem>>, vector<512x256xbf16>
    %cst_8 = arith.constant dense<0.000000e+00> : vector<2x256xf32>
    %11 = tpu.matmul %9, %10, %cst_8 {dimension_numbers = #tpu.dot_dimension_numbers<[1], [0], [0], [1], [0, 0, 1, 1], [], []>} : vector<2x512xbf16>, vector<512x256xbf16>, vector<2x256xf32> -> vector<2x256xf32>
    %c0_9 = arith.constant 0 : index
    %c0_10 = arith.constant 0 : index
    %12 = vector.load %arg5[%c0_9, %c0_10] : memref<1x256xf32, #tpu.memory_space<vmem>>, vector<1x256xf32>
    %13 = vector.broadcast %12 : vector<1x256xf32> to vector<2x256xf32>
    %14 = arith.addf %11, %13 : vector<2x256xf32>
    %cst_11 = arith.constant 0.000000e+00 : f32
    %15 = vector.broadcast %cst_11 : f32 to vector<2x256xf32>
    %16 = arith.maximumf %14, %15 : vector<2x256xf32>
    %17 = arith.truncf %16 : vector<2x256xf32> to vector<2x256xbf16>
    %c0_12 = arith.constant 0 : index
    %c0_13 = arith.constant 0 : index
    %18 = vector.load %arg6[%c0_12, %c0_13] : memref<256x128xbf16, #tpu.memory_space<vmem>>, vector<256x128xbf16>
    %cst_14 = arith.constant dense<0.000000e+00> : vector<2x128xf32>
    %19 = tpu.matmul %17, %18, %cst_14 {dimension_numbers = #tpu.dot_dimension_numbers<[1], [0], [0], [1], [0, 0, 1, 1], [], []>} : vector<2x256xbf16>, vector<256x128xbf16>, vector<2x128xf32> -> vector<2x128xf32>
    %c0_15 = arith.constant 0 : index
    %c0_16 = arith.constant 0 : index
    %20 = vector.load %arg7[%c0_15, %c0_16] : memref<1x128xf32, #tpu.memory_space<vmem>>, vector<1x128xf32>
    %21 = vector.broadcast %20 : vector<1x128xf32> to vector<2x128xf32>
    %22 = arith.addf %19, %21 : vector<2x128xf32>
    %23 = tpu.iota {dimensions = array<i32: 1>} : vector<2x128xi32>
    %c0_i32 = arith.constant 0 : i32
    %24 = vector.broadcast %c0_i32 : i32 to vector<2x128xi32>
    %25 = arith.cmpi eq, %23, %24 : vector<2x128xi32>
    %c4_i32 = arith.constant 4 : i32
    %26 = vector.broadcast %c4_i32 : i32 to vector<2x128xi32>
    %27 = arith.cmpi eq, %23, %26 : vector<2x128xi32>
    %28 = arith.ori %25, %27 : vector<2x128xi1>
    %c8_i32 = arith.constant 8 : i32
    %29 = vector.broadcast %c8_i32 : i32 to vector<2x128xi32>
    %30 = arith.cmpi eq, %23, %29 : vector<2x128xi32>
    %31 = arith.ori %28, %30 : vector<2x128xi1>
    %cst_17 = arith.constant 1.000000e+00 : f32
    %cst_18 = arith.constant 0.000000e+00 : f32
    %32 = vector.broadcast %cst_17 : f32 to vector<2x128xf32>
    %33 = vector.broadcast %cst_18 : f32 to vector<2x128xf32>
    %34 = arith.select %31, %32, %33 : vector<2x128xi1>, vector<2x128xf32>
    %35 = arith.addf %22, %34 : vector<2x128xf32>
    %c0_19 = arith.constant 0 : index
    %c0_20 = arith.constant 0 : index
    %36 = vector.load %arg8[%c0_19, %c0_20] : memref<2x128xf32, #tpu.memory_space<vmem>>, vector<2x128xf32>
    tpu.vector_store %arg8[%c0_19, %c0_20], %35 {strides = array<i32>} : memref<2x128xf32, #tpu.memory_space<vmem>>, vector<2x128xf32>,
    return
  }
  func.func @transform_0(%arg0: i32) -> (i32, i32) {
    %c0_i32 = arith.constant 0 : i32
    %c0_i32_0 = arith.constant 0 : i32
    %c0_i32_1 = arith.constant 0 : i32
    return %c0_i32, %c0_i32_0 : i32, i32
  }
  func.func @transform_1(%arg0: i32) -> (i32, i32) {
    %c0_i32 = arith.constant 0 : i32
    %c0_i32_0 = arith.constant 0 : i32
    %c0_i32_1 = arith.constant 0 : i32
    return %c0_i32, %c0_i32_0 : i32, i32
  }
  func.func @transform_2(%arg0: i32) -> (i32, i32) {
    %c0_i32 = arith.constant 0 : i32
    %c0_i32_0 = arith.constant 0 : i32
    %c0_i32_1 = arith.constant 0 : i32
    return %c0_i32, %c0_i32_0 : i32, i32
  }
  func.func @transform_3(%arg0: i32) -> (i32, i32) {
    %c0_i32 = arith.constant 0 : i32
    %c0_i32_0 = arith.constant 0 : i32
    %c0_i32_1 = arith.constant 0 : i32
    return %c0_i32, %c0_i32_0 : i32, i32
  }
  func.func @transform_4(%arg0: i32) -> (i32, i32) {
    %c0_i32 = arith.constant 0 : i32
    %c0_i32_0 = arith.constant 0 : i32
    %c0_i32_1 = arith.constant 0 : i32
    return %c0_i32, %c0_i32_0 : i32, i32
  }
  func.func @transform_5(%arg0: i32) -> (i32, i32) {
    %c0_i32 = arith.constant 0 : i32
    %c0_i32_0 = arith.constant 0 : i32
    %c0_i32_1 = arith.constant 0 : i32
    return %c0_i32, %c0_i32_0 : i32, i32
  }
  func.func @transform_6(%arg0: i32) -> (i32, i32) {
    %c0_i32 = arith.constant 0 : i32
    %c0_i32_0 = arith.constant 0 : i32
    %c0_i32_1 = arith.constant 0 : i32
    return %c0_i32, %c0_i32_0 : i32, i32
  }
  func.func @transform_7(%arg0: i32) -> (i32, i32) {
    %c0_i32 = arith.constant 0 : i32
    %c0_i32_0 = arith.constant 0 : i32
    %c0_i32_1 = arith.constant 0 : i32
    return %c0_i32, %c0_i32_0 : i32, i32
  }
}

module attributes {stable_mosaic.version = 11 : i64} {
  func.func @_tower_pool_kernel(%arg0: i32, %arg1: i32, %arg2: memref<1x256x3xbf16, #tpu.memory_space<vmem>>, %arg3: memref<1x3x64xbf16, #tpu.memory_space<vmem>>, %arg4: memref<1x64xf32, #tpu.memory_space<vmem>>, %arg5: memref<64x128xbf16, #tpu.memory_space<vmem>>, %arg6: memref<1x128xf32, #tpu.memory_space<vmem>>, %arg7: memref<128x1024xbf16, #tpu.memory_space<vmem>>, %arg8: memref<1x1024xf32, #tpu.memory_space<vmem>>, %arg9: memref<1x1x1024xf32, #tpu.memory_space<vmem>>, %arg10: memref<1x1024xf32, #tpu.memory_space<vmem>>) attributes {dimension_semantics = [#tpu.dimension_semantics<parallel>, #tpu.dimension_semantics<arbitrary>], iteration_bounds = array<i64: 2, 1>, scalar_prefetch = 0 : i64, scratch_operands = 1 : i64, tpu.core_type = #tpu.core_type<tc>, window_params = [{transform_indices = @transform_0, window_bounds = array<i64: 1, 256, 3>}, {transform_indices = @transform_1, window_bounds = array<i64: 1, 3, 64>}, {pipeline_mode = #tpu.pipeline_mode<synchronous>, transform_indices = @transform_2, window_bounds = array<i64: 1, 64>}, {pipeline_mode = #tpu.pipeline_mode<synchronous>, transform_indices = @transform_3, window_bounds = array<i64: 64, 128>}, {pipeline_mode = #tpu.pipeline_mode<synchronous>, transform_indices = @transform_4, window_bounds = array<i64: 1, 128>}, {pipeline_mode = #tpu.pipeline_mode<synchronous>, transform_indices = @transform_5, window_bounds = array<i64: 128, 1024>}, {pipeline_mode = #tpu.pipeline_mode<synchronous>, transform_indices = @transform_6, window_bounds = array<i64: 1, 1024>}, {transform_indices = @transform_7, window_bounds = array<i64: 1, 1, 1024>}]} {
    %c0_i32 = arith.constant 0 : i32
    %0 = arith.cmpi eq, %arg1, %c0_i32 : i32
    %1 = arith.extui %0 : i1 to i32
    %c0_i32_0 = arith.constant 0 : i32
    %2 = arith.cmpi ne, %1, %c0_i32_0 : i32
    scf.if %2 {
      %cst_29 = arith.constant 0xFF800000 : f32
      %43 = vector.broadcast %cst_29 : f32 to vector<1x1024xf32>
      %c0_30 = arith.constant 0 : index
      %c0_31 = arith.constant 0 : index
      %44 = vector.load %arg10[%c0_30, %c0_31] : memref<1x1024xf32, #tpu.memory_space<vmem>>, vector<1x1024xf32>
      tpu.vector_store %arg10[%c0_30, %c0_31], %43 {strides = array<i32>} : memref<1x1024xf32, #tpu.memory_space<vmem>>, vector<1x1024xf32>,
    } else {
    }
    %c0 = arith.constant 0 : index
    %c0_1 = arith.constant 0 : index
    %c0_2 = arith.constant 0 : index
    %3 = vector.load %arg2[%c0, %c0_1, %c0_2] : memref<1x256x3xbf16, #tpu.memory_space<vmem>>, vector<1x256x3xbf16>
    %4 = vector.shape_cast %3 : vector<1x256x3xbf16> to vector<256x3xbf16>
    %c0_3 = arith.constant 0 : index
    %c0_4 = arith.constant 0 : index
    %c0_5 = arith.constant 0 : index
    %5 = vector.load %arg3[%c0_3, %c0_4, %c0_5] : memref<1x3x64xbf16, #tpu.memory_space<vmem>>, vector<1x3x64xbf16>
    %6 = vector.shape_cast %5 : vector<1x3x64xbf16> to vector<3x64xbf16>
    %cst = arith.constant dense<0.000000e+00> : vector<256x64xf32>
    %7 = tpu.matmul %4, %6, %cst {dimension_numbers = #tpu.dot_dimension_numbers<[1], [0], [0], [1], [0, 0, 1, 1], [], []>} : vector<256x3xbf16>, vector<3x64xbf16>, vector<256x64xf32> -> vector<256x64xf32>
    %c0_6 = arith.constant 0 : index
    %c0_7 = arith.constant 0 : index
    %8 = vector.load %arg4[%c0_6, %c0_7] : memref<1x64xf32, #tpu.memory_space<vmem>>, vector<1x64xf32>
    %9 = vector.broadcast %8 : vector<1x64xf32> to vector<256x64xf32>
    %10 = arith.addf %7, %9 : vector<256x64xf32>
    %cst_8 = arith.constant 0.000000e+00 : f32
    %11 = vector.broadcast %cst_8 : f32 to vector<256x64xf32>
    %12 = arith.maximumf %10, %11 : vector<256x64xf32>
    %13 = arith.truncf %12 : vector<256x64xf32> to vector<256x64xbf16>
    %c0_9 = arith.constant 0 : index
    %c0_10 = arith.constant 0 : index
    %14 = vector.load %arg5[%c0_9, %c0_10] : memref<64x128xbf16, #tpu.memory_space<vmem>>, vector<64x128xbf16>
    %cst_11 = arith.constant dense<0.000000e+00> : vector<256x128xf32>
    %15 = tpu.matmul %13, %14, %cst_11 {dimension_numbers = #tpu.dot_dimension_numbers<[1], [0], [0], [1], [0, 0, 1, 1], [], []>} : vector<256x64xbf16>, vector<64x128xbf16>, vector<256x128xf32> -> vector<256x128xf32>
    %c0_12 = arith.constant 0 : index
    %c0_13 = arith.constant 0 : index
    %16 = vector.load %arg6[%c0_12, %c0_13] : memref<1x128xf32, #tpu.memory_space<vmem>>, vector<1x128xf32>
    %17 = vector.broadcast %16 : vector<1x128xf32> to vector<256x128xf32>
    %18 = arith.addf %15, %17 : vector<256x128xf32>
    %cst_14 = arith.constant 0.000000e+00 : f32
    %19 = vector.broadcast %cst_14 : f32 to vector<256x128xf32>
    %20 = arith.maximumf %18, %19 : vector<256x128xf32>
    %21 = arith.truncf %20 : vector<256x128xf32> to vector<256x128xbf16>
    %c0_15 = arith.constant 0 : index
    %c0_16 = arith.constant 0 : index
    %22 = vector.load %arg7[%c0_15, %c0_16] : memref<128x1024xbf16, #tpu.memory_space<vmem>>, vector<128x1024xbf16>
    %cst_17 = arith.constant dense<0.000000e+00> : vector<256x1024xf32>
    %23 = tpu.matmul %21, %22, %cst_17 {dimension_numbers = #tpu.dot_dimension_numbers<[1], [0], [0], [1], [0, 0, 1, 1], [], []>} : vector<256x128xbf16>, vector<128x1024xbf16>, vector<256x1024xf32> -> vector<256x1024xf32>
    %c0_18 = arith.constant 0 : index
    %c0_19 = arith.constant 0 : index
    %24 = vector.load %arg8[%c0_18, %c0_19] : memref<1x1024xf32, #tpu.memory_space<vmem>>, vector<1x1024xf32>
    %25 = vector.broadcast %24 : vector<1x1024xf32> to vector<256x1024xf32>
    %26 = arith.addf %23, %25 : vector<256x1024xf32>
    %27 = tpu.iota {dimensions = array<i32: 0>} : vector<256x1024xi32>
    %c64_i32 = arith.constant 64 : i32
    %28 = vector.broadcast %c64_i32 : i32 to vector<256x1024xi32>
    %29 = arith.cmpi sge, %27, %28 : vector<256x1024xi32>
    %c0_i32_20 = arith.constant 0 : i32
    %30 = arith.cmpi eq, %arg1, %c0_i32_20 : i32
    %31 = vector.broadcast %30 : i1 to vector<256x1024xi1>
    %32 = arith.andi %29, %31 : vector<256x1024xi1>
    %cst_21 = arith.constant 0xFF800000 : f32
    %33 = vector.broadcast %cst_21 : f32 to vector<256x1024xf32>
    %34 = arith.select %32, %33, %26 : vector<256x1024xi1>, vector<256x1024xf32>
    %c0_22 = arith.constant 0 : index
    %c0_23 = arith.constant 0 : index
    %35 = vector.load %arg10[%c0_22, %c0_23] : memref<1x1024xf32, #tpu.memory_space<vmem>>, vector<1x1024xf32>
    %cst_24 = arith.constant dense<0xFF800000> : vector<1024xf32>
    %36 = vector.multi_reduction <maximumf>, %34, %cst_24 [0] : vector<256x1024xf32> to vector<1024xf32>
    %37 = vector.shape_cast %36 : vector<1024xf32> to vector<1x1024xf32>
    %38 = arith.maximumf %35, %37 : vector<1x1024xf32>
    %c0_25 = arith.constant 0 : index
    %c0_26 = arith.constant 0 : index
    %39 = vector.load %arg10[%c0_25, %c0_26] : memref<1x1024xf32, #tpu.memory_space<vmem>>, vector<1x1024xf32>
    tpu.vector_store %arg10[%c0_25, %c0_26], %38 {strides = array<i32>} : memref<1x1024xf32, #tpu.memory_space<vmem>>, vector<1x1024xf32>,
    %c0_i32_27 = arith.constant 0 : i32
    %40 = arith.cmpi eq, %arg1, %c0_i32_27 : i32
    %41 = arith.extui %40 : i1 to i32
    %c0_i32_28 = arith.constant 0 : i32
    %42 = arith.cmpi ne, %41, %c0_i32_28 : i32
    scf.if %42 {
      %c0_29 = arith.constant 0 : index
      %c0_30 = arith.constant 0 : index
      %43 = vector.load %arg10[%c0_29, %c0_30] : memref<1x1024xf32, #tpu.memory_space<vmem>>, vector<1x1024xf32>
      %cst_31 = arith.constant dense<0.000000e+00> : vector<1024xf32>
      %44 = vector.multi_reduction <add>, %43, %cst_31 [0] : vector<1x1024xf32> to vector<1024xf32>
      %45 = vector.shape_cast %44 : vector<1024xf32> to vector<1x1024xf32>
      %c0_32 = arith.constant 0 : index
      %c0_33 = arith.constant 0 : index
      %c0_34 = arith.constant 0 : index
      %46 = vector.load %arg9[%c0_32, %c0_33, %c0_34] : memref<1x1x1024xf32, #tpu.memory_space<vmem>>, vector<1x1x1024xf32>
      %47 = vector.shape_cast %46 : vector<1x1x1024xf32> to vector<1x1024xf32>
      %48 = vector.shape_cast %45 : vector<1x1024xf32> to vector<1x1x1024xf32>
      tpu.vector_store %arg9[%c0_32, %c0_33, %c0_34], %48 {strides = array<i32>} : memref<1x1x1024xf32, #tpu.memory_space<vmem>>, vector<1x1x1024xf32>,
    } else {
    }
    return
  }
  func.func @transform_0(%arg0: i32, %arg1: i32) -> (i32, i32, i32) {
    %c0_i32 = arith.constant 0 : i32
    %c0_i32_0 = arith.constant 0 : i32
    return %arg0, %arg1, %c0_i32 : i32, i32, i32
  }
  func.func @transform_1(%arg0: i32, %arg1: i32) -> (i32, i32, i32) {
    %c0_i32 = arith.constant 0 : i32
    %c0_i32_0 = arith.constant 0 : i32
    %c0_i32_1 = arith.constant 0 : i32
    return %arg0, %c0_i32, %c0_i32_0 : i32, i32, i32
  }
  func.func @transform_2(%arg0: i32, %arg1: i32) -> (i32, i32) {
    %c0_i32 = arith.constant 0 : i32
    %c0_i32_0 = arith.constant 0 : i32
    %c0_i32_1 = arith.constant 0 : i32
    return %c0_i32, %c0_i32_0 : i32, i32
  }
  func.func @transform_3(%arg0: i32, %arg1: i32) -> (i32, i32) {
    %c0_i32 = arith.constant 0 : i32
    %c0_i32_0 = arith.constant 0 : i32
    %c0_i32_1 = arith.constant 0 : i32
    return %c0_i32, %c0_i32_0 : i32, i32
  }
  func.func @transform_4(%arg0: i32, %arg1: i32) -> (i32, i32) {
    %c0_i32 = arith.constant 0 : i32
    %c0_i32_0 = arith.constant 0 : i32
    %c0_i32_1 = arith.constant 0 : i32
    return %c0_i32, %c0_i32_0 : i32, i32
  }
  func.func @transform_5(%arg0: i32, %arg1: i32) -> (i32, i32) {
    %c0_i32 = arith.constant 0 : i32
    %c0_i32_0 = arith.constant 0 : i32
    %c0_i32_1 = arith.constant 0 : i32
    return %c0_i32, %c0_i32_0 : i32, i32
  }
  func.func @transform_6(%arg0: i32, %arg1: i32) -> (i32, i32) {
    %c0_i32 = arith.constant 0 : i32
    %c0_i32_0 = arith.constant 0 : i32
    %c0_i32_1 = arith.constant 0 : i32
    return %c0_i32, %c0_i32_0 : i32, i32
  }
  func.func @transform_7(%arg0: i32, %arg1: i32) -> (i32, i32, i32) {
    %c0_i32 = arith.constant 0 : i32
    %c0_i32_0 = arith.constant 0 : i32
    %c0_i32_1 = arith.constant 0 : i32
    return %arg0, %c0_i32, %c0_i32_0 : i32, i32, i32
  }
}

</mosaic_0001>

<llo_original>
// kernel: pointnetfeat_forward.3
$region0: #{pointnetfeat_forward.3}
  #allocation0 [shape = 'u32[]', space=smem, size = 0x4, offset = 0x4, fixed_abs, tag = 'smem constant byte address 0x4 - core index']
  #allocation1 [shape = 'u32[144,128]{1,0:T(1,128)}', space=vmem, size = 0x12000, scoped, tag = 'internal scratch']
  #allocation2 [shape = 'f32[1,1024]{1,0:T(1,128)}', space=vmem, size = 0x1000, scoped, tag = 'scratch operand']
  %s0 = inlined_call_operand.vmem [shape: bf16[2,256,3], index: 0, kind: input, shape index: {}]
  %s1 = inlined_call_operand.vmem [shape: bf16[1,3,64], index: 1, kind: input, shape index: {}]
  %s2 = inlined_call_operand.hbm [shape: f32[1,64], index: 2, kind: input, shape index: {}]
  %s3 = inlined_call_operand.vmem [shape: bf16[64,128], index: 3, kind: input, shape index: {}]
  %s4 = inlined_call_operand.hbm [shape: f32[1,128], index: 4, kind: input, shape index: {}]
  %s5 = inlined_call_operand.vmem [shape: bf16[128,1024], index: 5, kind: input, shape index: {}]
  %s6 = inlined_call_operand.hbm [shape: f32[1,1024], index: 6, kind: input, shape index: {}]
  %s7 = inlined_call_operand.vmem [shape: f32[2,1,1024], index: 7, kind: output, shape index: {}]
  %s8 = sld [smem:[#allocation0]]
  $region81: #{pointnetfeat_forward.3} parent=0
    _
  %s10 = ssub.s32 1, %s8
  %s11 = scalar_select 0, %s10, %s8
  $region1: #{pointnetfeat_forward.3} parent=0
    #allocation3 [shape = 'u8[512]{0}', space=vmem, size = 0x400, scoped, tag = 'input window, operand 2, single buffered']
    #allocation4 [shape = 's32[2]{0}', space=sflag, size = 0x8, scoped, tag = 'scoped memory for pointnetfeat_forward.3']
    #allocation5 [shape = 'u8[512]{0}', space=vmem, size = 0x400, scoped, tag = 'input window, operand 4, single buffered']
    #allocation6 [shape = 's32[1]{0}', space=sflag, size = 0x4, scoped, tag = 'scoped memory for pointnetfeat_forward.3']
    #allocation7 [shape = 'u8[4096]{0}', space=vmem, size = 0x1000, scoped, tag = 'input window, operand 6, single buffered']
    %12 = vsyncpa [#allocation4], 0
    %13 = vsyncpa [#allocation6], 0
    loop: start=0, step=1, limit=4
    $region2: #{pointnetfeat_forward.3} parent=1 // loop_pre_header
      _
    $region3: #{pointnetfeat_forward.3} parent=1 // loop_header
      %s15 = sphi 0, %s19
      %p16 = scmp.ge.s32.totalorder %s15, 4
      %s22 = sphi 0, %s34
      %s23 = sphi 0, %s30
      %s24 = sphi 0, %s22
      %s25 = sphi 0, %s23
      %s26 = sphi 0, %s24
      %s27 = sphi 0, %s25
      %s39 = sphi 0, %s41
      %s42 = sphi 0, %s39
      %s43 = sphi 0, %s42
      %s59 = sphi 0, %s43
      %s63 = sphi 0, %s63
      %s65 = sphi 0, %s63
      %s66 = sphi 0, %s65
      %s80 = sphi 0, %s66
      %s84 = sphi 0, %s84
      %s86 = sphi 0, %s84
      %s87 = sphi 0, %s86
      %s101 = sphi 0, %s87
      %s105 = sphi 0, %s105
      %s107 = sphi 0, %s105
      %s108 = sphi 0, %s107
      %s122 = sphi 0, %s108
      %s126 = sphi 0, %s126
      %s128 = sphi 0, %s126
      %s129 = sphi 0, %s128
      %s143 = sphi 0, %s129
      %s147 = sphi 0, %s147
      %s149 = sphi 0, %s147
      %s150 = sphi 0, %s149
      %s164 = sphi 0, %s150
      %s168 = sphi 0, %s168
      %s170 = sphi 0, %s168
      %s171 = sphi 0, %s170
      %s185 = sphi 0, %s171
      %s191 = sphi 0, %s193
      %s194 = sphi 0, %s191
      %s195 = sphi 0, %s194
      %s211 = sphi 0, %s195
    $region4: #{pointnetfeat_forward.3} parent=1 // loop_header_branch
      %18 = sbr.rel (%p16) target = $region8
    $region5: #{pointnetfeat_forward.3} parent=1 // loop_body
      %s20 = ssub.s32 %s15, 1
      %s21 = ssub.s32 %s15, 2
      %s28 = sadd.s32 1, %s23
      %p29 = scmp.ge.s32.totalorder %s28, 1
      %s30 = scalar_select %p29, 0, %s28
      %s31 = sadd.s32 1, %s22
      %s32 = scalar_select %p29, %s31, %s22
      %p33 = scmp.ge.s32.totalorder %s32, 2
      %s34 = scalar_select %p33, 0, %s32
      %s35 = ssub.s32 %s22, %s34
      %s36 = ssub.s32 %s23, %s30
      %s37 = sor.u32 %s35, %s36
      %p38 = scmp.eq.s32.totalorder %s37, 0
      %s40 = sadd.s32 %s39, 1
      %s41 = scalar_select %p38, %s39, %s40
      %p44 = pneg %p38
      %p45 = scmp.eq.s32.totalorder %s15, 1
      %p46 = por %p44, %p45
      %p47 = scmp.ne.s32.totalorder %s39, %s42
      %p48 = scmp.eq.s32.totalorder %s15, 0
      %p49 = por %p47, %p48
      %p50 = scmp.ne.s32.totalorder %s39, %s42
      %p51 = scmp.eq.s32.totalorder %s20, 1
      %p52 = por %p50, %p51
      %p53 = scmp.ne.s32.totalorder %s42, %s43
      %p54 = scmp.eq.s32.totalorder %s20, 0
      %p55 = por %p53, %p54
      %p56 = scmp.ne.s32.totalorder %s42, %s43
      %p57 = scmp.eq.s32.totalorder %s21, 1
      %p58 = por %p56, %p57
      %p60 = scmp.ne.s32.totalorder %s43, %s59
      %p61 = scmp.eq.s32.totalorder %s21, 0
      %p62 = por %p60, %p61
      %s64 = sadd.s32 %s63, 1
      %p67 = scmp.eq.s32.totalorder %s15, 1
      %p68 = scmp.ne.s32.totalorder %s63, %s65
      %p69 = scmp.eq.s32.totalorder %s15, 0
      %p70 = por %p68, %p69
      %p71 = scmp.ne.s32.totalorder %s63, %s65
      %p72 = scmp.eq.s32.totalorder %s20, 1
      %p73 = por %p71, %p72
      %p74 = scmp.ne.s32.totalorder %s65, %s66
      %p75 = scmp.eq.s32.totalorder %s20, 0
      %p76 = por %p74, %p75
      %p77 = scmp.ne.s32.totalorder %s65, %s66
      %p78 = scmp.eq.s32.totalorder %s21, 1
      %p79 = por %p77, %p78
      %p81 = scmp.ne.s32.totalorder %s66, %s80
      %p82 = scmp.eq.s32.totalorder %s21, 0
      %p83 = por %p81, %p82
      %s85 = sadd.s32 %s84, 1
      %p88 = scmp.eq.s32.totalorder %s15, 1
      %p89 = scmp.ne.s32.totalorder %s84, %s86
      %p90 = scmp.eq.s32.totalorder %s15, 0
      %p91 = por %p89, %p90
      %p92 = scmp.ne.s32.totalorder %s84, %s86
      %p93 = scmp.eq.s32.totalorder %s20, 1
      %p94 = por %p92, %p93
      %p95 = scmp.ne.s32.totalorder %s86, %s87
      %p96 = scmp.eq.s32.totalorder %s20, 0
      %p97 = por %p95, %p96
      %p98 = scmp.ne.s32.totalorder %s86, %s87
      %p99 = scmp.eq.s32.totalorder %s21, 1
      %p100 = por %p98, %p99
      %p102 = scmp.ne.s32.totalorder %s87, %s101
      %p103 = scmp.eq.s32.totalorder %s21, 0
      %p104 = por %p102, %p103
      %s106 = sadd.s32 %s105, 1
      %p109 = scmp.eq.s32.totalorder %s15, 1
      %p110 = scmp.ne.s32.totalorder %s105, %s107
      %p111 = scmp.eq.s32.totalorder %s15, 0
      %p112 = por %p110, %p111
      %p113 = scmp.ne.s32.totalorder %s105, %s107
      %p114 = scmp.eq.s32.totalorder %s20, 1
      %p115 = por %p113, %p114
      %p116 = scmp.ne.s32.totalorder %s107, %s108
      %p117 = scmp.eq.s32.totalorder %s20, 0
      %p118 = por %p116, %p117
      %p119 = scmp.ne.s32.totalorder %s107, %s108
      %p120 = scmp.eq.s32.totalorder %s21, 1
      %p121 = por %p119, %p120
      %p123 = scmp.ne.s32.totalorder %s108, %s122
      %p124 = scmp.eq.s32.totalorder %s21, 0
      %p125 = por %p123, %p124
      %s127 = sadd.s32 %s126, 1
      %p130 = scmp.eq.s32.totalorder %s15, 1
      %p131 = scmp.ne.s32.totalorder %s126, %s128
      %p132 = scmp.eq.s32.totalorder %s15, 0
      %p133 = por %p131, %p132
      %p134 = scmp.ne.s32.totalorder %s126, %s128
      %p135 = scmp.eq.s32.totalorder %s20, 1
      %p136 = por %p134, %p135
      %p137 = scmp.ne.s32.totalorder %s128, %s129
      %p138 = scmp.eq.s32.totalorder %s20, 0
      %p139 = por %p137, %p138
      %p140 = scmp.ne.s32.totalorder %s128, %s129
      %p141 = scmp.eq.s32.totalorder %s21, 1
      %p142 = por %p140, %p141
      %p144 = scmp.ne.s32.totalorder %s129, %s143
      %p145 = scmp.eq.s32.totalorder %s21, 0
      %p146 = por %p144, %p145
      %s148 = sadd.s32 %s147, 1
      %p151 = scmp.eq.s32.totalorder %s15, 1
      %p152 = scmp.ne.s32.totalorder %s147, %s149
      %p153 = scmp.eq.s32.totalorder %s15, 0
      %p154 = por %p152, %p153
      %p155 = scmp.ne.s32.totalorder %s147, %s149
      %p156 = scmp.eq.s32.totalorder %s20, 1
      %p157 = por %p155, %p156
      %p158 = scmp.ne.s32.totalorder %s149, %s150
      %p159 = scmp.eq.s32.totalorder %s20, 0
      %p160 = por %p158, %p159
      %p161 = scmp.ne.s32.totalorder %s149, %s150
      %p162 = scmp.eq.s32.totalorder %s21, 1
      %p163 = por %p161, %p162
      %p165 = scmp.ne.s32.totalorder %s150, %s164
      %p166 = scmp.eq.s32.totalorder %s21, 0
      %p167 = por %p165, %p166
      %s169 = sadd.s32 %s168, 1
      %p172 = scmp.eq.s32.totalorder %s15, 1
      %p173 = scmp.ne.s32.totalorder %s168, %s170
      %p174 = scmp.eq.s32.totalorder %s15, 0
      %p175 = por %p173, %p174
      %p176 = scmp.ne.s32.totalorder %s168, %s170
      %p177 = scmp.eq.s32.totalorder %s20, 1
      %p178 = por %p176, %p177
      %p179 = scmp.ne.s32.totalorder %s170, %s171
      %p180 = scmp.eq.s32.totalorder %s20, 0
      %p181 = por %p179, %p180
      %p182 = scmp.ne.s32.totalorder %s170, %s171
      %p183 = scmp.eq.s32.totalorder %s21, 1
      %p184 = por %p182, %p183
      %p186 = scmp.ne.s32.totalorder %s171, %s185
      %p187 = scmp.eq.s32.totalorder %s21, 0
      %p188 = por %p186, %p187
      %s189 = ssub.s32 %s22, %s34
      %p190 = scmp.eq.s32.totalorder %s189, 0
      %s192 = sadd.s32 %s191, 1
      %s193 = scalar_select %p190, %s191, %s192
      %p196 = pneg %p190
      %p197 = scmp.eq.s32.totalorder %s15, 1
      %p198 = por %p196, %p197
      %p199 = scmp.ne.s32.totalorder %s191, %s194
      %p200 = scmp.eq.s32.totalorder %s15, 0
      %p201 = por %p199, %p200
      %p202 = scmp.ne.s32.totalorder %s191, %s194
      %p203 = scmp.eq.s32.totalorder %s20, 1
      %p204 = por %p202, %p203
      %p205 = scmp.ne.s32.totalorder %s194, %s195
      %p206 = scmp.eq.s32.totalorder %s20, 0
      %p207 = por %p205, %p206
      %p208 = scmp.ne.s32.totalorder %s194, %s195
      %p209 = scmp.eq.s32.totalorder %s21, 1
      %p210 = por %p208, %p209
      %p212 = scmp.ne.s32.totalorder %s195, %s211
      %p213 = scmp.eq.s32.totalorder %s21, 0
      %p214 = por %p212, %p213
      %p215 = scmp.le.s32.totalorder 1, %s15
      %p216 = scmp.lt.s32.totalorder %s15, 3
      %p217 = pnand %p215, %p216
      %p218 = pneg %p217
      // Predicated region
      $region9: #{pointnetfeat_forward.3} parent=5 // pred_check
        _
      $region10: #{pointnetfeat_forward.3} parent=5 // pred_check_branch
        %220 = sbr.rel (%p217) target = $region12
      $region11: #{pointnetfeat_forward.3} parent=5 // pred_region
        %s221 = ssub.s32 %s15, 1
        // Predicated region
        $region13: #{pointnetfeat_forward.3} parent=11 // pred_check
          %p222 = pneg %p76
        $region14: #{pointnetfeat_forward.3} parent=11 // pred_check_branch
          %224 = sbr.rel (%p222) target = $region16
        $region15: #{pointnetfeat_forward.3} parent=11 // pred_region
          _
        $region16: #{pointnetfeat_forward.3} parent=11 // pred_fallthru
          _
        // Predicated region
        $region17: #{pointnetfeat_forward.3} parent=11 // pred_check
          %p225 = pneg %p97
        $region18: #{pointnetfeat_forward.3} parent=11 // pred_check_branch
          %227 = sbr.rel (%p225) target = $region20
        $region19: #{pointnetfeat_forward.3} parent=11 // pred_region
          %s229 = ssub.s32 16, 16
          %230 = vsyncadd [#allocation4], %s229
          %s232 = sshll.u32 [#allocation3], 4
          %s233 = int_to_ptr.vmem [resolvable:$true] %s232
          %235 = dma.hbm_to_vmem [thread:$0]  %s2, 16, %s233, [#allocation4]
        $region20: #{pointnetfeat_forward.3} parent=11 // pred_fallthru
          _
        // Predicated region
        $region21: #{pointnetfeat_forward.3} parent=11 // pred_check
          %p236 = pneg %p118
        $region22: #{pointnetfeat_forward.3} parent=11 // pred_check_branch
          %238 = sbr.rel (%p236) target = $region24
        $region23: #{pointnetfeat_forward.3} parent=11 // pred_region
          _
        $region24: #{pointnetfeat_forward.3} parent=11 // pred_fallthru
          _
        // Predicated region
        $region25: #{pointnetfeat_forward.3} parent=11 // pred_check
          %p239 = pneg %p139
        $region26: #{pointnetfeat_forward.3} parent=11 // pred_check_branch
          %241 = sbr.rel (%p239) target = $region28
        $region27: #{pointnetfeat_forward.3} parent=11 // pred_region
          %s243 = ssub.s32 16, 16
          %244 = vsyncadd [#allocation6], %s243
          %s246 = sshll.u32 [#allocation5], 4
          %s247 = int_to_ptr.vmem [resolvable:$true] %s246
          %249 = dma.hbm_to_vmem [thread:$0]  %s4, 16, %s247, [#allocation6]
        $region28: #{pointnetfeat_forward.3} parent=11 // pred_fallthru
          _
        // Predicated region
        $region29: #{pointnetfeat_forward.3} parent=11 // pred_check
          %p250 = pneg %p160
        $region30: #{pointnetfeat_forward.3} parent=11 // pred_check_branch
          %252 = sbr.rel (%p250) target = $region32
        $region31: #{pointnetfeat_forward.3} parent=11 // pred_region
          _
        $region32: #{pointnetfeat_forward.3} parent=11 // pred_fallthru
          _
        // Predicated region
        $region33: #{pointnetfeat_forward.3} parent=11 // pred_check
          %p253 = pneg %p181
        $region34: #{pointnetfeat_forward.3} parent=11 // pred_check_branch
          %255 = sbr.rel (%p253) target = $region36
        $region35: #{pointnetfeat_forward.3} parent=11 // pred_region
          %s257 = ssub.s32 128, 128
          %258 = vsyncadd [#allocation6], %s257
          %s260 = sshll.u32 [#allocation7], 4
          %s261 = int_to_ptr.vmem [resolvable:$true] %s260
          %263 = dma.hbm_to_vmem [thread:$0]  %s6, 128, %s261, [#allocation6]
        $region36: #{pointnetfeat_forward.3} parent=11 // pred_fallthru
          _
      $region12: #{pointnetfeat_forward.3} parent=5 // pred_fallthru
        _
      %p264 = scmp.lt.s32.totalorder %s15, 2
      // Predicated region
      $region37: #{pointnetfeat_forward.3} parent=5 // pred_check
        %p265 = pneg %p264
      $region38: #{pointnetfeat_forward.3} parent=5 // pred_check_branch
        %267 = sbr.rel (%p265) target = $region40
      $region39: #{pointnetfeat_forward.3} parent=5 // pred_region
        // Predicated region
        $region41: #{pointnetfeat_forward.3} parent=39 // pred_check
          %p268 = pneg %p49
        $region42: #{pointnetfeat_forward.3} parent=39 // pred_check_branch
          %270 = sbr.rel (%p268) target = $region44
        $region43: #{pointnetfeat_forward.3} parent=39 // pred_region
          %s271 = smul.u32 32, %s23
          %p272 = scmp.lt.s32.totalorder %s22, 1
          %s273 = scalar_select %p272, %s22, 1
          %p274 = scmp.lt.s32.totalorder %s271, 31
          %s275 = scalar_select %p274, %s271, 31
          %s276 = smul.addr %s273, 32
          %s277 = sadd.s32 %s275, %s276
          %s278 = smul.addr %s277, 4
          %s279 = scalar_lea.vmem %s0, %s278
          %s280 = smul.u32 32, %s23
        $region44: #{pointnetfeat_forward.3} parent=39 // pred_fallthru
          _
      $region40: #{pointnetfeat_forward.3} parent=5 // pred_fallthru
        _
      %p281 = scmp.le.s32.totalorder 1, %s15
      %p282 = scmp.lt.s32.totalorder %s15, 3
      %p283 = pnand %p281, %p282
      %p284 = pneg %p283
      // Predicated region
      $region45: #{pointnetfeat_forward.3} parent=5 // pred_check
        _
      $region46: #{pointnetfeat_forward.3} parent=5 // pred_check_branch
        %286 = sbr.rel (%p283) target = $region48
      $region47: #{pointnetfeat_forward.3} parent=5 // pred_region
        %s287 = ssub.s32 %s15, 1
        // Predicated region
        $region49: #{pointnetfeat_forward.3} parent=47 // pred_check
          %p288 = pneg %p97
        $region50: #{pointnetfeat_forward.3} parent=47 // pred_check_branch
          %290 = sbr.rel (%p288) target = $region52
        $region51: #{pointnetfeat_forward.3} parent=47 // pred_region
          %291 = dma.done [#allocation4], 16
        $region52: #{pointnetfeat_forward.3} parent=47 // pred_fallthru
          _
        // Predicated region
        $region53: #{pointnetfeat_forward.3} parent=47 // pred_check
          %p292 = pneg %p139
        $region54: #{pointnetfeat_forward.3} parent=47 // pred_check_branch
          %294 = sbr.rel (%p292) target = $region56
        $region55: #{pointnetfeat_forward.3} parent=47 // pred_region
          %295 = dma.done [#allocation6], 16
        $region56: #{pointnetfeat_forward.3} parent=47 // pred_fallthru
          _
        // Predicated region
        $region57: #{pointnetfeat_forward.3} parent=47 // pred_check
          %p296 = pneg %p181
        $region58: #{pointnetfeat_forward.3} parent=47 // pred_check_branch
          %298 = sbr.rel (%p296) target = $region60
        $region59: #{pointnetfeat_forward.3} parent=47 // pred_region
          %299 = dma.done [#allocation6], 128
        $region60: #{pointnetfeat_forward.3} parent=47 // pred_fallthru
          _
        %s300 = smul.u32 32, %s25
        %p301 = scmp.lt.s32.totalorder %s24, 1
        %s302 = scalar_select %p301, %s24, 1
        %p303 = scmp.lt.s32.totalorder %s300, 31
        %s304 = scalar_select %p303, %s300, 31
        %s305 = smul.addr %s302, 32
        %s306 = sadd.s32 %s304, %s305
        %s307 = smul.addr %s306, 4
        %s308 = scalar_lea.vmem %s0, %s307
        %p309 = pneg %p55
        %p310 = pneg %p52
        %p311 = pneg %p76
        %p312 = pneg %p73
        %p313 = pneg %p97
        %p314 = pneg %p94
        %p315 = pneg %p118
        %p316 = pneg %p115
        %p317 = pneg %p139
        %p318 = pneg %p136
        %p319 = pneg %p160
        %p320 = pneg %p157
        %p321 = pneg %p181
        %p322 = pneg %p178
        %p323 = pneg %p207
        %p324 = pneg %p204
        %p325 = scmp.lt.s32.totalorder %s24, 1
        %s326 = scalar_select %p325, %s24, 1
        %s327 = smul.addr %s326, 8
        %s328 = scalar_lea.vmem %s7, %s327
        %s329 = smul.u32 32, %s25
        %p330 = scmp.lt.s32.totalorder %s24, 1
        %s331 = scalar_select %p330, %s24, 1
        %p332 = scmp.lt.s32.totalorder %s329, 31
        %s333 = scalar_select %p332, %s329, 31
        %s334 = smul.addr %s331, 32
        %s335 = sadd.s32 %s333, %s334
        %s336 = smul.addr %s335, 4
        %s337 = scalar_lea.vmem %s0, %s336
        %s338 = smul.u32 32, %s25
        %p339 = scmp.lt.s32.totalorder %s24, 1
        %s340 = scalar_select %p339, %s24, 1
        %s341 = smul.addr %s340, 8
        %s342 = scalar_lea.vmem %s7, %s341
        %p344 = scmp.eq.s32.totalorder %s25, 0
        // Predicated region
        $region61: #{pointnetfeat_forward.3} parent=47 // pred_check
          %p345 = pneg %p344
        $region62: #{pointnetfeat_forward.3} parent=47 // pred_check_branch
          %347 = sbr.rel (%p345) target = $region64
        $region63: #{pointnetfeat_forward.3} parent=47 // pred_region
          %348 = vst [vmem:[#allocation2] sm:$0xff] -inf
        $region64: #{pointnetfeat_forward.3} parent=47 // pred_fallthru
          _
        %v349 = vld [vmem:[%s337] sm:$0xf]
        %v350 = vld [vmem:[%s337 + $0x4] sm:$0xf]
        %v351 = vld [vmem:[%s337 + $0x8] sm:$0xf]
        %v352 = vld [vmem:[%s337 + $0xc] sm:$0xf]
        %v353 = vld [vmem:[%s337 + $0x10] sm:$0xf]
        %v354 = vld [vmem:[%s337 + $0x14] sm:$0xf]
        %v355 = vld [vmem:[%s337 + $0x18] sm:$0xf]
        %v356 = vld [vmem:[%s337 + $0x1c] sm:$0xf]
        %v357 = vld [vmem:[%s337 + $0x20] sm:$0xf]
        %v358 = vld [vmem:[%s337 + $0x24] sm:$0xf]
        %v359 = vld [vmem:[%s337 + $0x28] sm:$0xf]
        %v360 = vld [vmem:[%s337 + $0x2c] sm:$0xf]
        %v361 = vld [vmem:[%s337 + $0x30] sm:$0xf]
        %v362 = vld [vmem:[%s337 + $0x34] sm:$0xf]
        %v363 = vld [vmem:[%s337 + $0x38] sm:$0xf]
        %v364 = vld [vmem:[%s337 + $0x3c] sm:$0xf]
        %v365 = vld [vmem:[%s337 + $0x40] sm:$0xf]
        %v366 = vld [vmem:[%s337 + $0x44] sm:$0xf]
        %v367 = vld [vmem:[%s337 + $0x48] sm:$0xf]
        %v368 = vld [vmem:[%s337 + $0x4c] sm:$0xf]
        %v369 = vld [vmem:[%s337 + $0x50] sm:$0xf]
        %v370 = vld [vmem:[%s337 + $0x54] sm:$0xf]
        %v371 = vld [vmem:[%s337 + $0x58] sm:$0xf]
        %v372 = vld [vmem:[%s337 + $0x5c] sm:$0xf]
        %v373 = vld [vmem:[%s337 + $0x60] sm:$0xf]
        %v374 = vld [vmem:[%s337 + $0x64] sm:$0xf]
        %v375 = vld [vmem:[%s337 + $0x68] sm:$0xf]
        %v376 = vld [vmem:[%s337 + $0x6c] sm:$0xf]
        %v377 = vld [vmem:[%s337 + $0x70] sm:$0xf]
        %v378 = vld [vmem:[%s337 + $0x74] sm:$0xf]
        %v379 = vld [vmem:[%s337 + $0x78] sm:$0xf]
        %v380 = vld [vmem:[%s337 + $0x7c] sm:$0xf]
        %v381 = vld [vmem:[%s1] sm:$0x3]
        %v382 = vld [vmem:[#allocation3] sm:$0x1]
        %v384 = vlaneseq
        %v385 = vshrl.u32 %v384, 7
        %v386 = vsub.s32 0, %v385
        %v387 = vrot.slane %v382, %v386
        %v421 = vunpack.c.l.b16 %v349
        %v422 = vunpack.c.l.b16 %v350
        %v423 = vunpack.c.l.b16 %v351
        %v424 = vunpack.c.l.b16 %v352
        %v425 = vunpack.c.l.b16 %v353
        %v426 = vunpack.c.l.b16 %v354
        %v427 = vunpack.c.l.b16 %v355
        %v428 = vunpack.c.l.b16 %v356
        %v429 = vunpack.c.l.b16 %v357
        %v430 = vunpack.c.l.b16 %v358
        %v431 = vunpack.c.l.b16 %v359
        %v432 = vunpack.c.l.b16 %v360
        %v433 = vunpack.c.l.b16 %v361
        %v434 = vunpack.c.l.b16 %v362
        %v435 = vunpack.c.l.b16 %v363
        %v436 = vunpack.c.l.b16 %v364
        %v437 = vunpack.c.l.b16 %v365
        %v438 = vunpack.c.l.b16 %v366
        %v439 = vunpack.c.l.b16 %v367
        %v440 = vunpack.c.l.b16 %v368
        %v441 = vunpack.c.l.b16 %v369
        %v442 = vunpack.c.l.b16 %v370
        %v443 = vunpack.c.l.b16 %v371
        %v444 = vunpack.c.l.b16 %v372
        %v445 = vunpack.c.l.b16 %v373
        %v446 = vunpack.c.l.b16 %v374
        %v447 = vunpack.c.l.b16 %v375
        %v448 = vunpack.c.l.b16 %v376
        %v449 = vunpack.c.l.b16 %v377
        %v450 = vunpack.c.l.b16 %v378
        %v451 = vunpack.c.l.b16 %v379
        %v452 = vunpack.c.l.b16 %v380
        %v453 = vpack.c.b16 %v422, %v421
        %v454 = vpack.c.b16 %v424, %v423
        %v455 = vpack.c.b16 %v426, %v425
        %v456 = vpack.c.b16 %v428, %v427
        %v457 = vpack.c.b16 %v430, %v429
        %v458 = vpack.c.b16 %v432, %v431
        %v459 = vpack.c.b16 %v434, %v433
        %v460 = vpack.c.b16 %v436, %v435
        %v461 = vpack.c.b16 %v438, %v437
        %v462 = vpack.c.b16 %v440, %v439
        %v463 = vpack.c.b16 %v442, %v441
        %v464 = vpack.c.b16 %v444, %v443
        %v465 = vpack.c.b16 %v446, %v445
        %v466 = vpack.c.b16 %v448, %v447
        %v467 = vpack.c.b16 %v450, %v449
        %v468 = vpack.c.b16 %v452, %v451
        %vm469 = vcmask 23552
        %v471 = vsel %vm469, %v453, 0
        %v474 = vsel %vm469, %v454, 0
        %v477 = vsel %vm469, %v455, 0
        %v480 = vsel %vm469, %v456, 0
        %v483 = vsel %vm469, %v457, 0
        %v486 = vsel %vm469, %v458, 0
        %v489 = vsel %vm469, %v459, 0
        %v492 = vsel %vm469, %v460, 0
        %v495 = vsel %vm469, %v461, 0
        %v498 = vsel %vm469, %v462, 0
        %v501 = vsel %vm469, %v463, 0
        %v504 = vsel %vm469, %v464, 0
        %v507 = vsel %vm469, %v465, 0
        %v510 = vsel %vm469, %v466, 0
        %v513 = vsel %vm469, %v467, 0
        %v516 = vsel %vm469, %v468, 0
        %vm518 = vcmask 1040384
        %vm519 = vcmask 1041408
        %v520 = vsel %vm518, 4294967295, 65535
        %v521 = vsel %vm519, %v520, 0
        %v523 = vand.u32 %v381, %v521
        %525 = vmatprep.subr.bf16.mxu0 0
        %526 = vmatpush1.bf16.msra.mxu0 %v523
        %527 = vmatprep.subr.bf16.mxu0 0
        %528 = vmatpush1.bf16.msra.mxu0 0
        %529 = vmatprep.subr.bf16.mxu0 0
        %530 = vmatpush1.bf16.msra.mxu0 0
        %531 = vmatprep.subr.bf16.mxu0 0
        %532 = vmatpush1.bf16.msra.mxu0 0
        %533 = vmatprep.subr.bf16.mxu0 0
        %534 = vmatpush1.bf16.msra.mxu0 0
        %535 = vmatprep.subr.bf16.mxu0 0
        %536 = vmatpush1.bf16.msra.mxu0 0
        %537 = vmatprep.subr.bf16.mxu0 0
        %538 = vmatpush1.bf16.msra.mxu0 0
        %539 = vmatprep.subr.bf16.mxu0 0
        %540 = vmatpush1.bf16.msra.mxu0 0
        %541 = vmatprep.subr.bf16.mxu0 0
        %542 = vmatpush1.bf16.msra.mxu0 0
        %543 = vmatprep.subr.bf16.mxu0 0
        %544 = vmatpush1.bf16.msra.mxu0 0
        %545 = vmatprep.subr.bf16.mxu0 0
        %546 = vmatpush1.bf16.msra.mxu0 0
        %547 = vmatprep.subr.bf16.mxu0 0
        %548 = vmatpush1.bf16.msra.mxu0 0
        %549 = vmatprep.subr.bf16.mxu0 0
        %550 = vmatpush1.bf16.msra.mxu0 0
        %551 = vmatprep.subr.bf16.mxu0 0
        %552 = vmatpush1.bf16.msra.mxu0 0
        %553 = vmatprep.subr.bf16.mxu0 0
        %554 = vmatpush1.bf16.msra.mxu0 0
        %555 = vmatprep.subr.bf16.mxu0 0
        %556 = vmatpush1.bf16.msra.mxu0 0
        %557 = vmatprep.mubr.bf16.mxu0 0
        %558 = vmatmul.mubr.bf16.gmra.mrb[0].mxu0 %v471
        %v559 = vpop.f32.mrb[0].mxu0
        %v560 = vadd.f32 %v387, %v559
        %v561 = vpop.f32.mrb[0].mxu0
        %v562 = vpop.f32.mrb[0].mxu0
        %v563 = vadd.f32 %v387, %v562
        %v564 = vpop.f32.mrb[0].mxu0
        %565 = vmatprep.mubr.bf16.mxu0 0
        %566 = vmatmul.mubr.bf16.gmra.mrb[0].mxu0 %v474
        %v567 = vpop.f32.mrb[0].mxu0
        %v568 = vadd.f32 %v387, %v567
        %v569 = vpop.f32.mrb[0].mxu0
        %v570 = vpop.f32.mrb[0].mxu0
        %v571 = vadd.f32 %v387, %v570
        %v572 = vpop.f32.mrb[0].mxu0
        %573 = vmatprep.mubr.bf16.mxu0 0
        %574 = vmatmul.mubr.bf16.gmra.mrb[0].mxu0 %v477
        %v575 = vpop.f32.mrb[0].mxu0
        %v576 = vadd.f32 %v387, %v575
        %v577 = vpop.f32.mrb[0].mxu0
        %v578 = vpop.f32.mrb[0].mxu0
        %v579 = vadd.f32 %v387, %v578
        %v580 = vpop.f32.mrb[0].mxu0
        %581 = vmatprep.mubr.bf16.mxu0 0
        %582 = vmatmul.mubr.bf16.gmra.mrb[0].mxu0 %v480
        %v583 = vpop.f32.mrb[0].mxu0
        %v584 = vadd.f32 %v387, %v583
        %v585 = vpop.f32.mrb[0].mxu0
        %v586 = vpop.f32.mrb[0].mxu0
        %v587 = vadd.f32 %v387, %v586
        %v588 = vpop.f32.mrb[0].mxu0
        %589 = vmatprep.mubr.bf16.mxu0 0
        %590 = vmatmul.mubr.bf16.gmra.mrb[0].mxu0 %v483
        %v591 = vpop.f32.mrb[0].mxu0
        %v592 = vadd.f32 %v387, %v591
        %v593 = vpop.f32.mrb[0].mxu0
        %v594 = vpop.f32.mrb[0].mxu0
        %v595 = vadd.f32 %v387, %v594
        %v596 = vpop.f32.mrb[0].mxu0
        %597 = vmatprep.mubr.bf16.mxu0 0
        %598 = vmatmul.mubr.bf16.gmra.mrb[0].mxu0 %v486
        %v599 = vpop.f32.mrb[0].mxu0
        %v600 = vadd.f32 %v387, %v599
        %v601 = vpop.f32.mrb[0].mxu0
        %v602 = vpop.f32.mrb[0].mxu0
        %v603 = vadd.f32 %v387, %v602
        %v604 = vpop.f32.mrb[0].mxu0
        %605 = vmatprep.mubr.bf16.mxu0 0
        %606 = vmatmul.mubr.bf16.gmra.mrb[0].mxu0 %v489
        %v607 = vpop.f32.mrb[0].mxu0
        %v608 = vadd.f32 %v387, %v607
        %v609 = vpop.f32.mrb[0].mxu0
        %v610 = vpop.f32.mrb[0].mxu0
        %v611 = vadd.f32 %v387, %v610
        %v612 = vpop.f32.mrb[0].mxu0
        %613 = vmatprep.mubr.bf16.mxu0 0
        %614 = vmatmul.mubr.bf16.gmra.mrb[0].mxu0 %v492
        %v615 = vpop.f32.mrb[0].mxu0
        %v616 = vadd.f32 %v387, %v615
        %v617 = vpop.f32.mrb[0].mxu0
        %v618 = vpop.f32.mrb[0].mxu0
        %v619 = vadd.f32 %v387, %v618
        %v620 = vpop.f32.mrb[0].mxu0
        %621 = vmatprep.mubr.bf16.mxu0 0
        %622 = vmatmul.mubr.bf16.gmra.mrb[0].mxu0 %v495
        %v623 = vpop.f32.mrb[0].mxu0
        %v624 = vadd.f32 %v387, %v623
        %v625 = vpop.f32.mrb[0].mxu0
        %v626 = vpop.f32.mrb[0].mxu0
        %v627 = vadd.f32 %v387, %v626
        %v628 = vpop.f32.mrb[0].mxu0
        %629 = vmatprep.mubr.bf16.mxu0 0
        %630 = vmatmul.mubr.bf16.gmra.mrb[0].mxu0 %v498
        %v631 = vpop.f32.mrb[0].mxu0
        %v632 = vadd.f32 %v387, %v631
        %v633 = vpop.f32.mrb[0].mxu0
        %v634 = vpop.f32.mrb[0].mxu0
        %v635 = vadd.f32 %v387, %v634
        %v636 = vpop.f32.mrb[0].mxu0
        %637 = vmatprep.mubr.bf16.mxu0 0
        %638 = vmatmul.mubr.bf16.gmra.mrb[0].mxu0 %v501
        %v639 = vpop.f32.mrb[0].mxu0
        %v640 = vadd.f32 %v387, %v639
        %v641 = vpop.f32.mrb[0].mxu0
        %v642 = vpop.f32.mrb[0].mxu0
        %v643 = vadd.f32 %v387, %v642
        %v644 = vpop.f32.mrb[0].mxu0
        %645 = vmatprep.mubr.bf16.mxu0 0
        %646 = vmatmul.mubr.bf16.gmra.mrb[0].mxu0 %v504
        %v647 = vpop.f32.mrb[0].mxu0
        %v648 = vadd.f32 %v387, %v647
        %v649 = vpop.f32.mrb[0].mxu0
        %v650 = vpop.f32.mrb[0].mxu0
        %v651 = vadd.f32 %v387, %v650
        %v652 = vpop.f32.mrb[0].mxu0
        %653 = vmatprep.mubr.bf16.mxu0 0
        %654 = vmatmul.mubr.bf16.gmra.mrb[0].mxu0 %v507
        %v655 = vpop.f32.mrb[0].mxu0
        %v656 = vadd.f32 %v387, %v655
        %v657 = vpop.f32.mrb[0].mxu0
        %v658 = vpop.f32.mrb[0].mxu0
        %v659 = vadd.f32 %v387, %v658
        %v660 = vpop.f32.mrb[0].mxu0
        %661 = vmatprep.mubr.bf16.mxu0 0
        %662 = vmatmul.mubr.bf16.gmra.mrb[0].mxu0 %v510
        %v663 = vpop.f32.mrb[0].mxu0
        %v664 = vadd.f32 %v387, %v663
        %v665 = vpop.f32.mrb[0].mxu0
        %v666 = vpop.f32.mrb[0].mxu0
        %v667 = vadd.f32 %v387, %v666
        %v668 = vpop.f32.mrb[0].mxu0
        %669 = vmatprep.mubr.bf16.mxu0 0
        %670 = vmatmul.mubr.bf16.gmra.mrb[0].mxu0 %v513
        %v671 = vpop.f32.mrb[0].mxu0
        %v672 = vadd.f32 %v387, %v671
        %v673 = vpop.f32.mrb[0].mxu0
        %v674 = vpop.f32.mrb[0].mxu0
        %v675 = vadd.f32 %v387, %v674
        %v676 = vpop.f32.mrb[0].mxu0
        %677 = vmatprep.mubr.bf16.mxu0 0
        %678 = vmatmul.mubr.bf16.gmra.mrb[0].mxu0 %v516
        %v679 = vpop.f32.mrb[0].mxu0
        %v680 = vadd.f32 %v387, %v679
        %v681 = vpop.f32.mrb[0].mxu0
        %v682 = vpop.f32.mrb[0].mxu0
        %v683 = vadd.f32 %v387, %v682
        %v684 = vpop.f32.mrb[0].mxu0
        %685 = vdwg.mxu0
        %v686 = vmax.f32 %v560, 0.0
        %v687 = vmax.f32 %v563, 0.0
        %v688 = vmax.f32 %v568, 0.0
        %v689 = vmax.f32 %v571, 0.0
        %v690 = vmax.f32 %v576, 0.0
        %v691 = vmax.f32 %v579, 0.0
        %v692 = vmax.f32 %v584, 0.0
        %v693 = vmax.f32 %v587, 0.0
        %v694 = vmax.f32 %v592, 0.0
        %v695 = vmax.f32 %v595, 0.0
        %v696 = vmax.f32 %v600, 0.0
        %v697 = vmax.f32 %v603, 0.0
        %v698 = vmax.f32 %v608, 0.0
        %v699 = vmax.f32 %v611, 0.0
        %v700 = vmax.f32 %v616, 0.0
        %v701 = vmax.f32 %v619, 0.0
        %v702 = vmax.f32 %v624, 0.0
        %v703 = vmax.f32 %v627, 0.0
        %v704 = vmax.f32 %v632, 0.0
        %v705 = vmax.f32 %v635, 0.0
        %v706 = vmax.f32 %v640, 0.0
        %v707 = vmax.f32 %v643, 0.0
        %v708 = vmax.f32 %v648, 0.0
        %v709 = vmax.f32 %v651, 0.0
        %v710 = vmax.f32 %v656, 0.0
        %v711 = vmax.f32 %v659, 0.0
        %v712 = vmax.f32 %v664, 0.0
        %v713 = vmax.f32 %v667, 0.0
        %v714 = vmax.f32 %v672, 0.0
        %v715 = vmax.f32 %v675, 0.0
        %v716 = vmax.f32 %v680, 0.0
        %v717 = vmax.f32 %v683, 0.0
        %v718 = vpack.c.bf16 %v687, %v686
        %v719 = vpack.c.bf16 %v689, %v688
        %v720 = vpack.c.bf16 %v691, %v690
        %v721 = vpack.c.bf16 %v693, %v692
        %v722 = vpack.c.bf16 %v695, %v694
        %v723 = vpack.c.bf16 %v697, %v696
        %v724 = vpack.c.bf16 %v699, %v698
        %v725 = vpack.c.bf16 %v701, %v700
        %v726 = vpack.c.bf16 %v703, %v702
        %v727 = vpack.c.bf16 %v705, %v704
        %v728 = vpack.c.bf16 %v707, %v706
        %v729 = vpack.c.bf16 %v709, %v708
        %v730 = vpack.c.bf16 %v711, %v710
        %v731 = vpack.c.bf16 %v713, %v712
        %v732 = vpack.c.bf16 %v715, %v714
        %v733 = vpack.c.bf16 %v717, %v716
        %v734 = vld [vmem:[%s3] sm:$0xf]
        %v735 = vld [vmem:[%s3 + $0x4] sm:$0xf]
        %v736 = vld [vmem:[%s3 + $0x8] sm:$0xf]
        %v737 = vld [vmem:[%s3 + $0xc] sm:$0xf]
        %v738 = vld [vmem:[%s3 + $0x10] sm:$0xf]
        %v739 = vld [vmem:[%s3 + $0x14] sm:$0xf]
        %v740 = vld [vmem:[%s3 + $0x18] sm:$0xf]
        %v741 = vld [vmem:[%s3 + $0x1c] sm:$0xf]
        %v742 = vld [vmem:[#allocation5] sm:$0x1]
        %v744 = vlaneseq
        %v745 = vshrl.u32 %v744, 7
        %v746 = vsub.s32 0, %v745
        %v747 = vrot.slane %v742, %v746
        %v757 = vunpack.c.l.b16 %v734
        %v758 = vunpack.c.l.b16 %v735
        %v759 = vunpack.c.l.b16 %v736
        %v760 = vunpack.c.l.b16 %v737
        %v761 = vunpack.c.l.b16 %v738
        %v762 = vunpack.c.l.b16 %v739
        %v763 = vunpack.c.l.b16 %v740
        %v764 = vunpack.c.l.b16 %v741
        %v765 = vpack.c.b16 %v758, %v757
        %v766 = vpack.c.b16 %v760, %v759
        %v767 = vpack.c.b16 %v762, %v761
        %v768 = vpack.c.b16 %v764, %v763
        %vm773 = vcmask 523264
        %v775 = vsel %vm773, %v718, 0
        %v778 = vsel %vm773, %v719, 0
        %v781 = vsel %vm773, %v720, 0
        %v784 = vsel %vm773, %v721, 0
        %v787 = vsel %vm773, %v722, 0
        %v790 = vsel %vm773, %v723, 0
        %v793 = vsel %vm773, %v724, 0
        %v796 = vsel %vm773, %v725, 0
        %v799 = vsel %vm773, %v726, 0
        %v802 = vsel %vm773, %v727, 0
        %v805 = vsel %vm773, %v728, 0
        %v808 = vsel %vm773, %v729, 0
        %v811 = vsel %vm773, %v730, 0
        %v814 = vsel %vm773, %v731, 0
        %v817 = vsel %vm773, %v732, 0
        %v820 = vsel %vm773, %v733, 0
        %822 = vmatprep.subr.bf16.mxu0 0
        %823 = vmatpush1.bf16.msra.mxu0 %v765
        %824 = vmatprep.subr.bf16.mxu0 0
        %825 = vmatpush1.bf16.msra.mxu0 %v766
        %826 = vmatprep.subr.bf16.mxu0 0
        %827 = vmatpush1.bf16.msra.mxu0 %v767
        %828 = vmatprep.subr.bf16.mxu0 0
        %829 = vmatpush1.bf16.msra.mxu0 %v768
        %830 = vmatprep.subr.bf16.mxu0 0
        %831 = vmatpush1.bf16.msra.mxu0 0
        %832 = vmatprep.subr.bf16.mxu0 0
        %833 = vmatpush1.bf16.msra.mxu0 0
        %834 = vmatprep.subr.bf16.mxu0 0
        %835 = vmatpush1.bf16.msra.mxu0 0
        %836 = vmatprep.subr.bf16.mxu0 0
        %837 = vmatpush1.bf16.msra.mxu0 0
        %838 = vmatprep.subr.bf16.mxu0 0
        %839 = vmatpush1.bf16.msra.mxu0 0
        %840 = vmatprep.subr.bf16.mxu0 0
        %841 = vmatpush1.bf16.msra.mxu0 0
        %842 = vmatprep.subr.bf16.mxu0 0
        %843 = vmatpush1.bf16.msra.mxu0 0
        %844 = vmatprep.subr.bf16.mxu0 0
        %845 = vmatpush1.bf16.msra.mxu0 0
        %846 = vmatprep.subr.bf16.mxu0 0
        %847 = vmatpush1.bf16.msra.mxu0 0
        %848 = vmatprep.subr.bf16.mxu0 0
        %849 = vmatpush1.bf16.msra.mxu0 0
        %850 = vmatprep.subr.bf16.mxu0 0
        %851 = vmatpush1.bf16.msra.mxu0 0
        %852 = vmatprep.subr.bf16.mxu0 0
        %853 = vmatpush1.bf16.msra.mxu0 0
        %854 = vmatprep.mubr.bf16.mxu0 0
        %855 = vmatmul.mubr.bf16.gmra.mrb[0].mxu0 %v775
        %v856 = vpop.f32.mrb[0].mxu0
        %v857 = vadd.f32 %v747, %v856
        %v858 = vpop.f32.mrb[0].mxu0
        %v859 = vpop.f32.mrb[0].mxu0
        %v860 = vadd.f32 %v747, %v859
        %v861 = vpop.f32.mrb[0].mxu0
        %862 = vmatprep.mubr.bf16.mxu0 0
        %863 = vmatmul.mubr.bf16.gmra.mrb[0].mxu0 %v778
        %v864 = vpop.f32.mrb[0].mxu0
        %v865 = vadd.f32 %v747, %v864
        %v866 = vpop.f32.mrb[0].mxu0
        %v867 = vpop.f32.mrb[0].mxu0
        %v868 = vadd.f32 %v747, %v867
        %v869 = vpop.f32.mrb[0].mxu0
        %870 = vmatprep.mubr.bf16.mxu0 0
        %871 = vmatmul.mubr.bf16.gmra.mrb[0].mxu0 %v781
        %v872 = vpop.f32.mrb[0].mxu0
        %v873 = vadd.f32 %v747, %v872
        %v874 = vpop.f32.mrb[0].mxu0
        %v875 = vpop.f32.mrb[0].mxu0
        %v876 = vadd.f32 %v747, %v875
        %v877 = vpop.f32.mrb[0].mxu0
        %878 = vmatprep.mubr.bf16.mxu0 0
        %879 = vmatmul.mubr.bf16.gmra.mrb[0].mxu0 %v784
        %v880 = vpop.f32.mrb[0].mxu0
        %v881 = vadd.f32 %v747, %v880
        %v882 = vpop.f32.mrb[0].mxu0
        %v883 = vpop.f32.mrb[0].mxu0
        %v884 = vadd.f32 %v747, %v883
        %v885 = vpop.f32.mrb[0].mxu0
        %886 = vmatprep.mubr.bf16.mxu0 0
        %887 = vmatmul.mubr.bf16.gmra.mrb[0].mxu0 %v787
        %v888 = vpop.f32.mrb[0].mxu0
        %v889 = vadd.f32 %v747, %v888
        %v890 = vpop.f32.mrb[0].mxu0
        %v891 = vpop.f32.mrb[0].mxu0
        %v892 = vadd.f32 %v747, %v891
        %v893 = vpop.f32.mrb[0].mxu0
        %894 = vmatprep.mubr.bf16.mxu0 0
        %895 = vmatmul.mubr.bf16.gmra.mrb[0].mxu0 %v790
        %v896 = vpop.f32.mrb[0].mxu0
        %v897 = vadd.f32 %v747, %v896
        %v898 = vpop.f32.mrb[0].mxu0
        %v899 = vpop.f32.mrb[0].mxu0
        %v900 = vadd.f32 %v747, %v899
        %v901 = vpop.f32.mrb[0].mxu0
        %902 = vmatprep.mubr.bf16.mxu0 0
        %903 = vmatmul.mubr.bf16.gmra.mrb[0].mxu0 %v793
        %v904 = vpop.f32.mrb[0].mxu0
        %v905 = vadd.f32 %v747, %v904
        %v906 = vpop.f32.mrb[0].mxu0
        %v907 = vpop.f32.mrb[0].mxu0
        %v908 = vadd.f32 %v747, %v907
        %v909 = vpop.f32.mrb[0].mxu0
        %910 = vmatprep.mubr.bf16.mxu0 0
        %911 = vmatmul.mubr.bf16.gmra.mrb[0].mxu0 %v796
        %v912 = vpop.f32.mrb[0].mxu0
        %v913 = vadd.f32 %v747, %v912
        %v914 = vpop.f32.mrb[0].mxu0
        %v915 = vpop.f32.mrb[0].mxu0
        %v916 = vadd.f32 %v747, %v915
        %v917 = vpop.f32.mrb[0].mxu0
        %918 = vmatprep.mubr.bf16.mxu0 0
        %919 = vmatmul.mubr.bf16.gmra.mrb[0].mxu0 %v799
        %v920 = vpop.f32.mrb[0].mxu0
        %v921 = vadd.f32 %v747, %v920
        %v922 = vpop.f32.mrb[0].mxu0
        %v923 = vpop.f32.mrb[0].mxu0
        %v924 = vadd.f32 %v747, %v923
        %v925 = vpop.f32.mrb[0].mxu0
        %926 = vmatprep.mubr.bf16.mxu0 0
        %927 = vmatmul.mubr.bf16.gmra.mrb[0].mxu0 %v802
        %v928 = vpop.f32.mrb[0].mxu0
        %v929 = vadd.f32 %v747, %v928
        %v930 = vpop.f32.mrb[0].mxu0
        %v931 = vpop.f32.mrb[0].mxu0
        %v932 = vadd.f32 %v747, %v931
        %v933 = vpop.f32.mrb[0].mxu0
        %934 = vmatprep.mubr.bf16.mxu0 0
        %935 = vmatmul.mubr.bf16.gmra.mrb[0].mxu0 %v805
        %v936 = vpop.f32.mrb[0].mxu0
        %v937 = vadd.f32 %v747, %v936
        %v938 = vpop.f32.mrb[0].mxu0
        %v939 = vpop.f32.mrb[0].mxu0
        %v940 = vadd.f32 %v747, %v939
        %v941 = vpop.f32.mrb[0].mxu0
        %942 = vmatprep.mubr.bf16.mxu0 0
        %943 = vmatmul.mubr.bf16.gmra.mrb[0].mxu0 %v808
        %v944 = vpop.f32.mrb[0].mxu0
        %v945 = vadd.f32 %v747, %v944
        %v946 = vpop.f32.mrb[0].mxu0
        %v947 = vpop.f32.mrb[0].mxu0
        %v948 = vadd.f32 %v747, %v947
        %v949 = vpop.f32.mrb[0].mxu0
        %950 = vmatprep.mubr.bf16.mxu0 0
        %951 = vmatmul.mubr.bf16.gmra.mrb[0].mxu0 %v811
        %v952 = vpop.f32.mrb[0].mxu0
        %v953 = vadd.f32 %v747, %v952
        %v954 = vpop.f32.mrb[0].mxu0
        %v955 = vpop.f32.mrb[0].mxu0
        %v956 = vadd.f32 %v747, %v955
        %v957 = vpop.f32.mrb[0].mxu0
        %958 = vmatprep.mubr.bf16.mxu0 0
        %959 = vmatmul.mubr.bf16.gmra.mrb[0].mxu0 %v814
        %v960 = vpop.f32.mrb[0].mxu0
        %v961 = vadd.f32 %v747, %v960
        %v962 = vpop.f32.mrb[0].mxu0
        %v963 = vpop.f32.mrb[0].mxu0
        %v964 = vadd.f32 %v747, %v963
        %v965 = vpop.f32.mrb[0].mxu0
        %966 = vmatprep.mubr.bf16.mxu0 0
        %967 = vmatmul.mubr.bf16.gmra.mrb[0].mxu0 %v817
        %v968 = vpop.f32.mrb[0].mxu0
        %v969 = vadd.f32 %v747, %v968
        %v970 = vpop.f32.mrb[0].mxu0
        %v971 = vpop.f32.mrb[0].mxu0
        %v972 = vadd.f32 %v747, %v971
        %v973 = vpop.f32.mrb[0].mxu0
        %974 = vmatprep.mubr.bf16.mxu0 0
        %975 = vmatmul.mubr.bf16.gmra.mrb[0].mxu0 %v820
        %v976 = vpop.f32.mrb[0].mxu0
        %v977 = vadd.f32 %v747, %v976
        %v978 = vpop.f32.mrb[0].mxu0
        %v979 = vpop.f32.mrb[0].mxu0
        %v980 = vadd.f32 %v747, %v979
        %v981 = vpop.f32.mrb[0].mxu0
        %982 = vdwg.mxu0
        %v983 = vmax.f32 %v857, 0.0
        %v984 = vmax.f32 %v860, 0.0
        %v985 = vmax.f32 %v865, 0.0
        %v986 = vmax.f32 %v868, 0.0
        %v987 = vmax.f32 %v873, 0.0
        %v988 = vmax.f32 %v876, 0.0
        %v989 = vmax.f32 %v881, 0.0
        %v990 = vmax.f32 %v884, 0.0
        %v991 = vmax.f32 %v889, 0.0
        %v992 = vmax.f32 %v892, 0.0
        %v993 = vmax.f32 %v897, 0.0
        %v994 = vmax.f32 %v900, 0.0
        %v995 = vmax.f32 %v905, 0.0
        %v996 = vmax.f32 %v908, 0.0
        %v997 = vmax.f32 %v913, 0.0
        %v998 = vmax.f32 %v916, 0.0
        %v999 = vmax.f32 %v921, 0.0
        %v1000 = vmax.f32 %v924, 0.0
        %v1001 = vmax.f32 %v929, 0.0
        %v1002 = vmax.f32 %v932, 0.0
        %v1003 = vmax.f32 %v937, 0.0
        %v1004 = vmax.f32 %v940, 0.0
        %v1005 = vmax.f32 %v945, 0.0
        %v1006 = vmax.f32 %v948, 0.0
        %v1007 = vmax.f32 %v953, 0.0
        %v1008 = vmax.f32 %v956, 0.0
        %v1009 = vmax.f32 %v961, 0.0
        %v1010 = vmax.f32 %v964, 0.0
        %v1011 = vmax.f32 %v969, 0.0
        %v1012 = vmax.f32 %v972, 0.0
        %v1013 = vmax.f32 %v977, 0.0
        %v1014 = vmax.f32 %v980, 0.0
        %v1015 = vpack.c.bf16 %v984, %v983
        %v1016 = vpack.c.bf16 %v986, %v985
        %v1017 = vpack.c.bf16 %v988, %v987
        %v1018 = vpack.c.bf16 %v990, %v989
        %v1019 = vpack.c.bf16 %v992, %v991
        %v1020 = vpack.c.bf16 %v994, %v993
        %v1021 = vpack.c.bf16 %v996, %v995
        %v1022 = vpack.c.bf16 %v998, %v997
        %v1023 = vpack.c.bf16 %v1000, %v999
        %v1024 = vpack.c.bf16 %v1002, %v1001
        %v1025 = vpack.c.bf16 %v1004, %v1003
        %v1026 = vpack.c.bf16 %v1006, %v1005
        %v1027 = vpack.c.bf16 %v1008, %v1007
        %v1028 = vpack.c.bf16 %v1010, %v1009
        %v1029 = vpack.c.bf16 %v1012, %v1011
        %v1030 = vpack.c.bf16 %v1014, %v1013
        %v1031 = vld [vmem:[%s5] sm:$0xff]
        %v1032 = vld [vmem:[%s5 + $0x8] sm:$0xff]
        %v1033 = vld [vmem:[%s5 + $0x10] sm:$0xff]
        %v1034 = vld [vmem:[%s5 + $0x18] sm:$0xff]
        %v1035 = vld [vmem:[%s5 + $0x20] sm:$0xff]
        %v1036 = vld [vmem:[%s5 + $0x28] sm:$0xff]
        %v1037 = vld [vmem:[%s5 + $0x30] sm:$0xff]
        %v1038 = vld [vmem:[%s5 + $0x38] sm:$0xff]
        %v1039 = vld [vmem:[%s5 + $0x40] sm:$0xff]
        %v1040 = vld [vmem:[%s5 + $0x48] sm:$0xff]
        %v1041 = vld [vmem:[%s5 + $0x50] sm:$0xff]
        %v1042 = vld [vmem:[%s5 + $0x58] sm:$0xff]
        %v1043 = vld [vmem:[%s5 + $0x60] sm:$0xff]
        %v1044 = vld [vmem:[%s5 + $0x68] sm:$0xff]
        %v1045 = vld [vmem:[%s5 + $0x70] sm:$0xff]
        %v1046 = vld [vmem:[%s5 + $0x78] sm:$0xff]
        %v1047 = vld [vmem:[%s5 + $0x80] sm:$0xff]
        %v1048 = vld [vmem:[%s5 + $0x88] sm:$0xff]
        %v1049 = vld [vmem:[%s5 + $0x90] sm:$0xff]
        %v1050 = vld [vmem:[%s5 + $0x98] sm:$0xff]
        %v1051 = vld [vmem:[%s5 + $0xa0] sm:$0xff]
        %v1052 = vld [vmem:[%s5 + $0xa8] sm:$0xff]
        %v1053 = vld [vmem:[%s5 + $0xb0] sm:$0xff]
        %v1054 = vld [vmem:[%s5 + $0xb8] sm:$0xff]
        %v1055 = vld [vmem:[%s5 + $0xc0] sm:$0xff]
        %v1056 = vld [vmem:[%s5 + $0xc8] sm:$0xff]
        %v1057 = vld [vmem:[%s5 + $0xd0] sm:$0xff]
        %v1058 = vld [vmem:[%s5 + $0xd8] sm:$0xff]
        %v1059 = vld [vmem:[%s5 + $0xe0] sm:$0xff]
        %v1060 = vld [vmem:[%s5 + $0xe8] sm:$0xff]
        %v1061 = vld [vmem:[%s5 + $0xf0] sm:$0xff]
        %v1062 = vld [vmem:[%s5 + $0xf8] sm:$0xff]
        %v1063 = vld [vmem:[%s5 + $0x100] sm:$0xff]
        %v1064 = vld [vmem:[%s5 + $0x108] sm:$0xff]
        %v1065 = vld [vmem:[%s5 + $0x110] sm:$0xff]
        %v1066 = vld [vmem:[%s5 + $0x118] sm:$0xff]
        %v1067 = vld [vmem:[%s5 + $0x120] sm:$0xff]
        %v1068 = vld [vmem:[%s5 + $0x128] sm:$0xff]
        %v1069 = vld [vmem:[%s5 + $0x130] sm:$0xff]
        %v1070 = vld [vmem:[%s5 + $0x138] sm:$0xff]
        %v1071 = vld [vmem:[%s5 + $0x140] sm:$0xff]
        %v1072 = vld [vmem:[%s5 + $0x148] sm:$0xff]
        %v1073 = vld [vmem:[%s5 + $0x150] sm:$0xff]
        %v1074 = vld [vmem:[%s5 + $0x158] sm:$0xff]
        %v1075 = vld [vmem:[%s5 + $0x160] sm:$0xff]
        %v1076 = vld [vmem:[%s5 + $0x168] sm:$0xff]
        %v1077 = vld [vmem:[%s5 + $0x170] sm:$0xff]
        %v1078 = vld [vmem:[%s5 + $0x178] sm:$0xff]
        %v1079 = vld [vmem:[%s5 + $0x180] sm:$0xff]
        %v1080 = vld [vmem:[%s5 + $0x188] sm:$0xff]
        %v1081 = vld [vmem:[%s5 + $0x190] sm:$0xff]
        %v1082 = vld [vmem:[%s5 + $0x198] sm:$0xff]
        %v1083 = vld [vmem:[%s5 + $0x1a0] sm:$0xff]
        %v1084 = vld [vmem:[%s5 + $0x1a8] sm:$0xff]
        %v1085 = vld [vmem:[%s5 + $0x1b0] sm:$0xff]
        %v1086 = vld [vmem:[%s5 + $0x1b8] sm:$0xff]
        %v1087 = vld [vmem:[%s5 + $0x1c0] sm:$0xff]
        %v1088 = vld [vmem:[%s5 + $0x1c8] sm:$0xff]
        %v1089 = vld [vmem:[%s5 + $0x1d0] sm:$0xff]
        %v1090 = vld [vmem:[%s5 + $0x1d8] sm:$0xff]
        %v1091 = vld [vmem:[%s5 + $0x1e0] sm:$0xff]
        %v1092 = vld [vmem:[%s5 + $0x1e8] sm:$0xff]
        %v1093 = vld [vmem:[%s5 + $0x1f0] sm:$0xff]
        %v1094 = vld [vmem:[%s5 + $0x1f8] sm:$0xff]
        %v1095 = vld [vmem:[#allocation7] sm:$0xff]
        %v1097 = vlaneseq
        %v1098 = vshrl.u32 %v1097, 7
        %v1099 = vsub.s32 0, %v1098
        %v1100 = vrot.slane %v1095, %v1099
        %v1101 = vlaneseq
        %v1102 = vshrl.u32 %v1101, 7
        %v1103 = vsub.s32 1, %v1102
        %v1104 = vrot.slane %v1095, %v1103
        %v1105 = vlaneseq
        %v1106 = vshrl.u32 %v1105, 7
        %v1107 = vsub.s32 2, %v1106
        %v1108 = vrot.slane %v1095, %v1107
        %v1109 = vlaneseq
        %v1110 = vshrl.u32 %v1109, 7
        %v1111 = vsub.s32 3, %v1110
        %v1112 = vrot.slane %v1095, %v1111
        %v1113 = vlaneseq
        %v1114 = vshrl.u32 %v1113, 7
        %v1115 = vsub.s32 4, %v1114
        %v1116 = vrot.slane %v1095, %v1115
        %v1117 = vlaneseq
        %v1118 = vshrl.u32 %v1117, 7
        %v1119 = vsub.s32 5, %v1118
        %v1120 = vrot.slane %v1095, %v1119
        %v1121 = vlaneseq
        %v1122 = vshrl.u32 %v1121, 7
        %v1123 = vsub.s32 6, %v1122
        %v1124 = vrot.slane %v1095, %v1123
        %v1125 = vlaneseq
        %v1126 = vshrl.u32 %v1125, 7
        %v1127 = vsub.s32 7, %v1126
        %v1128 = vrot.slane %v1095, %v1127
        %v1201 = vunpack.c.l.b16 %v1031
        %v1202 = vunpack.c.h.b16 %v1031
        %v1203 = vunpack.c.l.b16 %v1032
        %v1204 = vunpack.c.h.b16 %v1032
        %v1205 = vunpack.c.l.b16 %v1033
        %v1206 = vunpack.c.h.b16 %v1033
        %v1207 = vunpack.c.l.b16 %v1034
        %v1208 = vunpack.c.h.b16 %v1034
        %v1209 = vunpack.c.l.b16 %v1035
        %v1210 = vunpack.c.h.b16 %v1035
        %v1211 = vunpack.c.l.b16 %v1036
        %v1212 = vunpack.c.h.b16 %v1036
        %v1213 = vunpack.c.l.b16 %v1037
        %v1214 = vunpack.c.h.b16 %v1037
        %v1215 = vunpack.c.l.b16 %v1038
        %v1216 = vunpack.c.h.b16 %v1038
        %v1217 = vunpack.c.l.b16 %v1039
        %v1218 = vunpack.c.h.b16 %v1039
        %v1219 = vunpack.c.l.b16 %v1040
        %v1220 = vunpack.c.h.b16 %v1040
        %v1221 = vunpack.c.l.b16 %v1041
        %v1222 = vunpack.c.h.b16 %v1041
        %v1223 = vunpack.c.l.b16 %v1042
        %v1224 = vunpack.c.h.b16 %v1042
        %v1225 = vunpack.c.l.b16 %v1043
        %v1226 = vunpack.c.h.b16 %v1043
        %v1227 = vunpack.c.l.b16 %v1044
        %v1228 = vunpack.c.h.b16 %v1044
        %v1229 = vunpack.c.l.b16 %v1045
        %v1230 = vunpack.c.h.b16 %v1045
        %v1231 = vunpack.c.l.b16 %v1046
        %v1232 = vunpack.c.h.b16 %v1046
        %v1233 = vunpack.c.l.b16 %v1047
        %v1234 = vunpack.c.h.b16 %v1047
        %v1235 = vunpack.c.l.b16 %v1048
        %v1236 = vunpack.c.h.b16 %v1048
        %v1237 = vunpack.c.l.b16 %v1049
        %v1238 = vunpack.c.h.b16 %v1049
        %v1239 = vunpack.c.l.b16 %v1050
        %v1240 = vunpack.c.h.b16 %v1050
        %v1241 = vunpack.c.l.b16 %v1051
        %v1242 = vunpack.c.h.b16 %v1051
        %v1243 = vunpack.c.l.b16 %v1052
        %v1244 = vunpack.c.h.b16 %v1052
        %v1245 = vunpack.c.l.b16 %v1053
        %v1246 = vunpack.c.h.b16 %v1053
        %v1247 = vunpack.c.l.b16 %v1054
        %v1248 = vunpack.c.h.b16 %v1054
        %v1249 = vunpack.c.l.b16 %v1055
        %v1250 = vunpack.c.h.b16 %v1055
        %v1251 = vunpack.c.l.b16 %v1056
        %v1252 = vunpack.c.h.b16 %v1056
        %v1253 = vunpack.c.l.b16 %v1057
        %v1254 = vunpack.c.h.b16 %v1057
        %v1255 = vunpack.c.l.b16 %v1058
        %v1256 = vunpack.c.h.b16 %v1058
        %v1257 = vunpack.c.l.b16 %v1059
        %v1258 = vunpack.c.h.b16 %v1059
        %v1259 = vunpack.c.l.b16 %v1060
        %v1260 = vunpack.c.h.b16 %v1060
        %v1261 = vunpack.c.l.b16 %v1061
        %v1262 = vunpack.c.h.b16 %v1061
        %v1263 = vunpack.c.l.b16 %v1062
        %v1264 = vunpack.c.h.b16 %v1062
        %v1265 = vunpack.c.l.b16 %v1063
        %v1266 = vunpack.c.h.b16 %v1063
        %v1267 = vunpack.c.l.b16 %v1064
        %v1268 = vunpack.c.h.b16 %v1064
        %v1269 = vunpack.c.l.b16 %v1065
        %v1270 = vunpack.c.h.b16 %v1065
        %v1271 = vunpack.c.l.b16 %v1066
        %v1272 = vunpack.c.h.b16 %v1066
        %v1273 = vunpack.c.l.b16 %v1067
        %v1274 = vunpack.c.h.b16 %v1067
        %v1275 = vunpack.c.l.b16 %v1068
        %v1276 = vunpack.c.h.b16 %v1068
        %v1277 = vunpack.c.l.b16 %v1069
        %v1278 = vunpack.c.h.b16 %v1069
        %v1279 = vunpack.c.l.b16 %v1070
        %v1280 = vunpack.c.h.b16 %v1070
        %v1281 = vunpack.c.l.b16 %v1071
        %v1282 = vunpack.c.h.b16 %v1071
        %v1283 = vunpack.c.l.b16 %v1072
        %v1284 = vunpack.c.h.b16 %v1072
        %v1285 = vunpack.c.l.b16 %v1073
        %v1286 = vunpack.c.h.b16 %v1073
        %v1287 = vunpack.c.l.b16 %v1074
        %v1288 = vunpack.c.h.b16 %v1074
        %v1289 = vunpack.c.l.b16 %v1075
        %v1290 = vunpack.c.h.b16 %v1075
        %v1291 = vunpack.c.l.b16 %v1076
        %v1292 = vunpack.c.h.b16 %v1076
        %v1293 = vunpack.c.l.b16 %v1077
        %v1294 = vunpack.c.h.b16 %v1077
        %v1295 = vunpack.c.l.b16 %v1078
        %v1296 = vunpack.c.h.b16 %v1078
        %v1297 = vunpack.c.l.b16 %v1079
        %v1298 = vunpack.c.h.b16 %v1079
        %v1299 = vunpack.c.l.b16 %v1080
        %v1300 = vunpack.c.h.b16 %v1080
        %v1301 = vunpack.c.l.b16 %v1081
        %v1302 = vunpack.c.h.b16 %v1081
        %v1303 = vunpack.c.l.b16 %v1082
        %v1304 = vunpack.c.h.b16 %v1082
        %v1305 = vunpack.c.l.b16 %v1083
        %v1306 = vunpack.c.h.b16 %v1083
        %v1307 = vunpack.c.l.b16 %v1084
        %v1308 = vunpack.c.h.b16 %v1084
        %v1309 = vunpack.c.l.b16 %v1085
        %v1310 = vunpack.c.h.b16 %v1085
        %v1311 = vunpack.c.l.b16 %v1086
        %v1312 = vunpack.c.h.b16 %v1086
        %v1313 = vunpack.c.l.b16 %v1087
        %v1314 = vunpack.c.h.b16 %v1087
        %v1315 = vunpack.c.l.b16 %v1088
        %v1316 = vunpack.c.h.b16 %v1088
        %v1317 = vunpack.c.l.b16 %v1089
        %v1318 = vunpack.c.h.b16 %v1089
        %v1319 = vunpack.c.l.b16 %v1090
        %v1320 = vunpack.c.h.b16 %v1090
        %v1321 = vunpack.c.l.b16 %v1091
        %v1322 = vunpack.c.h.b16 %v1091
        %v1323 = vunpack.c.l.b16 %v1092
        %v1324 = vunpack.c.h.b16 %v1092
        %v1325 = vunpack.c.l.b16 %v1093
        %v1326 = vunpack.c.h.b16 %v1093
        %v1327 = vunpack.c.l.b16 %v1094
        %v1328 = vunpack.c.h.b16 %v1094
        %v1329 = vpack.c.b16 %v1209, %v1201
        %v1330 = vpack.c.b16 %v1210, %v1202
        %v1331 = vpack.c.b16 %v1211, %v1203
        %v1332 = vpack.c.b16 %v1212, %v1204
        %v1333 = vpack.c.b16 %v1213, %v1205
        %v1334 = vpack.c.b16 %v1214, %v1206
        %v1335 = vpack.c.b16 %v1215, %v1207
        %v1336 = vpack.c.b16 %v1216, %v1208
        %v1337 = vpack.c.b16 %v1225, %v1217
        %v1338 = vpack.c.b16 %v1226, %v1218
        %v1339 = vpack.c.b16 %v1227, %v1219
        %v1340 = vpack.c.b16 %v1228, %v1220
        %v1341 = vpack.c.b16 %v1229, %v1221
        %v1342 = vpack.c.b16 %v1230, %v1222
        %v1343 = vpack.c.b16 %v1231, %v1223
        %v1344 = vpack.c.b16 %v1232, %v1224
        %v1345 = vpack.c.b16 %v1241, %v1233
        %v1346 = vpack.c.b16 %v1242, %v1234
        %v1347 = vpack.c.b16 %v1243, %v1235
        %v1348 = vpack.c.b16 %v1244, %v1236
        %v1349 = vpack.c.b16 %v1245, %v1237
        %v1350 = vpack.c.b16 %v1246, %v1238
        %v1351 = vpack.c.b16 %v1247, %v1239
        %v1352 = vpack.c.b16 %v1248, %v1240
        %v1353 = vpack.c.b16 %v1257, %v1249
        %v1354 = vpack.c.b16 %v1258, %v1250
        %v1355 = vpack.c.b16 %v1259, %v1251
        %v1356 = vpack.c.b16 %v1260, %v1252
        %v1357 = vpack.c.b16 %v1261, %v1253
        %v1358 = vpack.c.b16 %v1262, %v1254
        %v1359 = vpack.c.b16 %v1263, %v1255
        %v1360 = vpack.c.b16 %v1264, %v1256
        %v1361 = vpack.c.b16 %v1273, %v1265
        %v1362 = vpack.c.b16 %v1274, %v1266
        %v1363 = vpack.c.b16 %v1275, %v1267
        %v1364 = vpack.c.b16 %v1276, %v1268
        %v1365 = vpack.c.b16 %v1277, %v1269
        %v1366 = vpack.c.b16 %v1278, %v1270
        %v1367 = vpack.c.b16 %v1279, %v1271
        %v1368 = vpack.c.b16 %v1280, %v1272
        %v1369 = vpack.c.b16 %v1289, %v1281
        %v1370 = vpack.c.b16 %v1290, %v1282
        %v1371 = vpack.c.b16 %v1291, %v1283
        %v1372 = vpack.c.b16 %v1292, %v1284
        %v1373 = vpack.c.b16 %v1293, %v1285
        %v1374 = vpack.c.b16 %v1294, %v1286
        %v1375 = vpack.c.b16 %v1295, %v1287
        %v1376 = vpack.c.b16 %v1296, %v1288
        %v1377 = vpack.c.b16 %v1305, %v1297
        %v1378 = vpack.c.b16 %v1306, %v1298
        %v1379 = vpack.c.b16 %v1307, %v1299
        %v1380 = vpack.c.b16 %v1308, %v1300
        %v1381 = vpack.c.b16 %v1309, %v1301
        %v1382 = vpack.c.b16 %v1310, %v1302
        %v1383 = vpack.c.b16 %v1311, %v1303
        %v1384 = vpack.c.b16 %v1312, %v1304
        %v1385 = vpack.c.b16 %v1321, %v1313
        %v1386 = vpack.c.b16 %v1322, %v1314
        %v1387 = vpack.c.b16 %v1323, %v1315
        %v1388 = vpack.c.b16 %v1324, %v1316
        %v1389 = vpack.c.b16 %v1325, %v1317
        %v1390 = vpack.c.b16 %v1326, %v1318
        %v1391 = vpack.c.b16 %v1327, %v1319
        %v1392 = vpack.c.b16 %v1328, %v1320
        %1457 = vmatprep.subr.bf16.mxu0 %v1330
        %1458 = vmatpush1.bf16.msra.mxu0 %v1329
        %1459 = vmatprep.subr.bf16.mxu0 %v1338
        %1460 = vmatpush1.bf16.msra.mxu0 %v1337
        %1461 = vmatprep.subr.bf16.mxu0 %v1346
        %1462 = vmatpush1.bf16.msra.mxu0 %v1345
        %1463 = vmatprep.subr.bf16.mxu0 %v1354
        %1464 = vmatpush1.bf16.msra.mxu0 %v1353
        %1465 = vmatprep.subr.bf16.mxu0 %v1362
        %1466 = vmatpush1.bf16.msra.mxu0 %v1361
        %1467 = vmatprep.subr.bf16.mxu0 %v1370
        %1468 = vmatpush1.bf16.msra.mxu0 %v1369
        %1469 = vmatprep.subr.bf16.mxu0 %v1378
        %1470 = vmatpush1.bf16.msra.mxu0 %v1377
        %1471 = vmatprep.subr.bf16.mxu0 %v1386
        %1472 = vmatpush1.bf16.msra.mxu0 %v1385
        %1473 = vmatprep.subr.bf16.mxu0 0
        %1474 = vmatpush1.bf16.msra.mxu0 0
        %1475 = vmatprep.subr.bf16.mxu0 0
        %1476 = vmatpush1.bf16.msra.mxu0 0
        %1477 = vmatprep.subr.bf16.mxu0 0
        %1478 = vmatpush1.bf16.msra.mxu0 0
        %1479 = vmatprep.subr.bf16.mxu0 0
        %1480 = vmatpush1.bf16.msra.mxu0 0
        %1481 = vmatprep.subr.bf16.mxu0 0
        %1482 = vmatpush1.bf16.msra.mxu0 0
        %1483 = vmatprep.subr.bf16.mxu0 0
        %1484 = vmatpush1.bf16.msra.mxu0 0
        %1485 = vmatprep.subr.bf16.mxu0 0
        %1486 = vmatpush1.bf16.msra.mxu0 0
        %1487 = vmatprep.subr.bf16.mxu0 0
        %1488 = vmatpush1.bf16.msra.mxu0 0
        %1489 = vmatprep.mubr.bf16.mxu0 0
        %1490 = vmatmul.mubr.bf16.gmra.mrb[0].mxu0 %v1015
        %v1491 = vpop.f32.mrb[0].mxu0
        %v1492 = vadd.f32 %v1100, %v1491
        %v1493 = vpop.f32.mrb[0].mxu0
        %v1494 = vadd.f32 %v1104, %v1493
        %v1495 = vpop.f32.mrb[0].mxu0
        %v1496 = vadd.f32 %v1100, %v1495
        %v1497 = vpop.f32.mrb[0].mxu0
        %v1498 = vadd.f32 %v1104, %v1497
        %1499 = vmatprep.mubr.bf16.mxu0 0
        %1500 = vmatmul.mubr.bf16.gmra.mrb[0].mxu0 %v1016
        %v1501 = vpop.f32.mrb[0].mxu0
        %v1502 = vadd.f32 %v1100, %v1501
        %v1503 = vpop.f32.mrb[0].mxu0
        %v1504 = vadd.f32 %v1104, %v1503
        %v1505 = vpop.f32.mrb[0].mxu0
        %v1506 = vadd.f32 %v1100, %v1505
        %v1507 = vpop.f32.mrb[0].mxu0
        %v1508 = vadd.f32 %v1104, %v1507
        %1509 = vmatprep.mubr.bf16.mxu0 0
        %1510 = vmatmul.mubr.bf16.gmra.mrb[0].mxu0 %v1017
        %v1511 = vpop.f32.mrb[0].mxu0
        %v1512 = vadd.f32 %v1100, %v1511
        %v1513 = vpop.f32.mrb[0].mxu0
        %v1514 = vadd.f32 %v1104, %v1513
        %v1515 = vpop.f32.mrb[0].mxu0
        %v1516 = vadd.f32 %v1100, %v1515
        %v1517 = vpop.f32.mrb[0].mxu0
        %v1518 = vadd.f32 %v1104, %v1517
        %1519 = vmatprep.mubr.bf16.mxu0 0
        %1520 = vmatmul.mubr.bf16.gmra.mrb[0].mxu0 %v1018
        %v1521 = vpop.f32.mrb[0].mxu0
        %v1522 = vadd.f32 %v1100, %v1521
        %v1523 = vpop.f32.mrb[0].mxu0
        %v1524 = vadd.f32 %v1104, %v1523
        %v1525 = vpop.f32.mrb[0].mxu0
        %v1526 = vadd.f32 %v1100, %v1525
        %v1527 = vpop.f32.mrb[0].mxu0
        %v1528 = vadd.f32 %v1104, %v1527
        %1529 = vmatprep.mubr.bf16.mxu0 0
        %1530 = vmatmul.mubr.bf16.gmra.mrb[0].mxu0 %v1019
        %v1531 = vpop.f32.mrb[0].mxu0
        %v1532 = vadd.f32 %v1100, %v1531
        %v1533 = vpop.f32.mrb[0].mxu0
        %v1534 = vadd.f32 %v1104, %v1533
        %v1535 = vpop.f32.mrb[0].mxu0
        %v1536 = vadd.f32 %v1100, %v1535
        %v1537 = vpop.f32.mrb[0].mxu0
        %v1538 = vadd.f32 %v1104, %v1537
        %1539 = vmatprep.mubr.bf16.mxu0 0
        %1540 = vmatmul.mubr.bf16.gmra.mrb[0].mxu0 %v1020
        %v1541 = vpop.f32.mrb[0].mxu0
        %v1542 = vadd.f32 %v1100, %v1541
        %v1543 = vpop.f32.mrb[0].mxu0
        %v1544 = vadd.f32 %v1104, %v1543
        %v1545 = vpop.f32.mrb[0].mxu0
        %v1546 = vadd.f32 %v1100, %v1545
        %v1547 = vpop.f32.mrb[0].mxu0
        %v1548 = vadd.f32 %v1104, %v1547
        %1549 = vmatprep.mubr.bf16.mxu0 0
        %1550 = vmatmul.mubr.bf16.gmra.mrb[0].mxu0 %v1021
        %v1551 = vpop.f32.mrb[0].mxu0
        %v1552 = vadd.f32 %v1100, %v1551
        %v1553 = vpop.f32.mrb[0].mxu0
        %v1554 = vadd.f32 %v1104, %v1553
        %v1555 = vpop.f32.mrb[0].mxu0
        %v1556 = vadd.f32 %v1100, %v1555
        %v1557 = vpop.f32.mrb[0].mxu0
        %v1558 = vadd.f32 %v1104, %v1557
        %1559 = vmatprep.mubr.bf16.mxu0 0
        %1560 = vmatmul.mubr.bf16.gmra.mrb[0].mxu0 %v1022
        %v1561 = vpop.f32.mrb[0].mxu0
        %v1562 = vadd.f32 %v1100, %v1561
        %v1563 = vpop.f32.mrb[0].mxu0
        %v1564 = vadd.f32 %v1104, %v1563
        %v1565 = vpop.f32.mrb[0].mxu0
        %v1566 = vadd.f32 %v1100, %v1565
        %v1567 = vpop.f32.mrb[0].mxu0
        %v1568 = vadd.f32 %v1104, %v1567
        %1569 = vmatprep.mubr.bf16.mxu0 0
        %1570 = vmatmul.mubr.bf16.gmra.mrb[0].mxu0 %v1023
        %v1571 = vpop.f32.mrb[0].mxu0
        %v1572 = vadd.f32 %v1100, %v1571
        %v1573 = vpop.f32.mrb[0].mxu0
        %v1574 = vadd.f32 %v1104, %v1573
        %v1575 = vpop.f32.mrb[0].mxu0
        %v1576 = vadd.f32 %v1100, %v1575
        %v1577 = vpop.f32.mrb[0].mxu0
        %v1578 = vadd.f32 %v1104, %v1577
        %1579 = vmatprep.mubr.bf16.mxu0 0
        %1580 = vmatmul.mubr.bf16.gmra.mrb[0].mxu0 %v1024
        %v1581 = vpop.f32.mrb[0].mxu0
        %v1582 = vadd.f32 %v1100, %v1581
        %v1583 = vpop.f32.mrb[0].mxu0
        %v1584 = vadd.f32 %v1104, %v1583
        %v1585 = vpop.f32.mrb[0].mxu0
        %v1586 = vadd.f32 %v1100, %v1585
        %v1587 = vpop.f32.mrb[0].mxu0
        %v1588 = vadd.f32 %v1104, %v1587
        %1589 = vmatprep.mubr.bf16.mxu0 0
        %1590 = vmatmul.mubr.bf16.gmra.mrb[0].mxu0 %v1025
        %v1591 = vpop.f32.mrb[0].mxu0
        %v1592 = vadd.f32 %v1100, %v1591
        %v1593 = vpop.f32.mrb[0].mxu0
        %v1594 = vadd.f32 %v1104, %v1593
        %v1595 = vpop.f32.mrb[0].mxu0
        %v1596 = vadd.f32 %v1100, %v1595
        %v1597 = vpop.f32.mrb[0].mxu0
        %v1598 = vadd.f32 %v1104, %v1597
        %1599 = vmatprep.mubr.bf16.mxu0 0
        %1600 = vmatmul.mubr.bf16.gmra.mrb[0].mxu0 %v1026
        %v1601 = vpop.f32.mrb[0].mxu0
        %v1602 = vadd.f32 %v1100, %v1601
        %v1603 = vpop.f32.mrb[0].mxu0
        %v1604 = vadd.f32 %v1104, %v1603
        %v1605 = vpop.f32.mrb[0].mxu0
        %v1606 = vadd.f32 %v1100, %v1605
        %v1607 = vpop.f32.mrb[0].mxu0
        %v1608 = vadd.f32 %v1104, %v1607
        %1609 = vmatprep.mubr.bf16.mxu0 0
        %1610 = vmatmul.mubr.bf16.gmra.mrb[0].mxu0 %v1027
        %v1611 = vpop.f32.mrb[0].mxu0
        %v1612 = vadd.f32 %v1100, %v1611
        %v1613 = vpop.f32.mrb[0].mxu0
        %v1614 = vadd.f32 %v1104, %v1613
        %v1615 = vpop.f32.mrb[0].mxu0
        %v1616 = vadd.f32 %v1100, %v1615
        %v1617 = vpop.f32.mrb[0].mxu0
        %v1618 = vadd.f32 %v1104, %v1617
        %1619 = vmatprep.mubr.bf16.mxu0 0
        %1620 = vmatmul.mubr.bf16.gmra.mrb[0].mxu0 %v1028
        %v1621 = vpop.f32.mrb[0].mxu0
        %v1622 = vadd.f32 %v1100, %v1621
        %v1623 = vpop.f32.mrb[0].mxu0
        %v1624 = vadd.f32 %v1104, %v1623
        %v1625 = vpop.f32.mrb[0].mxu0
        %v1626 = vadd.f32 %v1100, %v1625
        %v1627 = vpop.f32.mrb[0].mxu0
        %v1628 = vadd.f32 %v1104, %v1627
        %1629 = vmatprep.mubr.bf16.mxu0 0
        %1630 = vmatmul.mubr.bf16.gmra.mrb[0].mxu0 %v1029
        %v1631 = vpop.f32.mrb[0].mxu0
        %v1632 = vadd.f32 %v1100, %v1631
        %v1633 = vpop.f32.mrb[0].mxu0
        %v1634 = vadd.f32 %v1104, %v1633
        %v1635 = vpop.f32.mrb[0].mxu0
        %v1636 = vadd.f32 %v1100, %v1635
        %v1637 = vpop.f32.mrb[0].mxu0
        %v1638 = vadd.f32 %v1104, %v1637
        %1639 = vmatprep.mubr.bf16.mxu0 0
        %1640 = vmatmul.mubr.bf16.gmra.mrb[0].mxu0 %v1030
        %v1641 = vpop.f32.mrb[0].mxu0
        %v1642 = vadd.f32 %v1100, %v1641
        %v1643 = vpop.f32.mrb[0].mxu0
        %v1644 = vadd.f32 %v1104, %v1643
        %v1645 = vpop.f32.mrb[0].mxu0
        %v1646 = vadd.f32 %v1100, %v1645
        %v1647 = vpop.f32.mrb[0].mxu0
        %v1648 = vadd.f32 %v1104, %v1647
        %1649 = vdwg.mxu0
        %1650 = vmatprep.subr.bf16.mxu0 %v1332
        %1651 = vmatpush1.bf16.msra.mxu0 %v1331
        %1652 = vmatprep.subr.bf16.mxu0 %v1340
        %1653 = vmatpush1.bf16.msra.mxu0 %v1339
        %1654 = vmatprep.subr.bf16.mxu0 %v1348
        %1655 = vmatpush1.bf16.msra.mxu0 %v1347
        %1656 = vmatprep.subr.bf16.mxu0 %v1356
        %1657 = vmatpush1.bf16.msra.mxu0 %v1355
        %1658 = vmatprep.subr.bf16.mxu0 %v1364
        %1659 = vmatpush1.bf16.msra.mxu0 %v1363
        %1660 = vmatprep.subr.bf16.mxu0 %v1372
        %1661 = vmatpush1.bf16.msra.mxu0 %v1371
        %1662 = vmatprep.subr.bf16.mxu0 %v1380
        %1663 = vmatpush1.bf16.msra.mxu0 %v1379
        %1664 = vmatprep.subr.bf16.mxu0 %v1388
        %1665 = vmatpush1.bf16.msra.mxu0 %v1387
        %1666 = vmatprep.subr.bf16.mxu0 0
        %1667 = vmatpush1.bf16.msra.mxu0 0
        %1668 = vmatprep.subr.bf16.mxu0 0
        %1669 = vmatpush1.bf16.msra.mxu0 0
        %1670 = vmatprep.subr.bf16.mxu0 0
        %1671 = vmatpush1.bf16.msra.mxu0 0
        %1672 = vmatprep.subr.bf16.mxu0 0
        %1673 = vmatpush1.bf16.msra.mxu0 0
        %1674 = vmatprep.subr.bf16.mxu0 0
        %1675 = vmatpush1.bf16.msra.mxu0 0
        %1676 = vmatprep.subr.bf16.mxu0 0
        %1677 = vmatpush1.bf16.msra.mxu0 0
        %1678 = vmatprep.subr.bf16.mxu0 0
        %1679 = vmatpush1.bf16.msra.mxu0 0
        %1680 = vmatprep.subr.bf16.mxu0 0
        %1681 = vmatpush1.bf16.msra.mxu0 0
        %1682 = vmatprep.mubr.bf16.mxu0 0
        %1683 = vmatmul.mubr.bf16.gmra.mrb[0].mxu0 %v1015
        %v1684 = vpop.f32.mrb[0].mxu0
        %v1685 = vadd.f32 %v1108, %v1684
        %v1686 = vpop.f32.mrb[0].mxu0
        %v1687 = vadd.f32 %v1112, %v1686
        %v1688 = vpop.f32.mrb[0].mxu0
        %v1689 = vadd.f32 %v1108, %v1688
        %v1690 = vpop.f32.mrb[0].mxu0
        %v1691 = vadd.f32 %v1112, %v1690
        %1692 = vmatprep.mubr.bf16.mxu0 0
        %1693 = vmatmul.mubr.bf16.gmra.mrb[0].mxu0 %v1016
        %v1694 = vpop.f32.mrb[0].mxu0
        %v1695 = vadd.f32 %v1108, %v1694
        %v1696 = vpop.f32.mrb[0].mxu0
        %v1697 = vadd.f32 %v1112, %v1696
        %v1698 = vpop.f32.mrb[0].mxu0
        %v1699 = vadd.f32 %v1108, %v1698
        %v1700 = vpop.f32.mrb[0].mxu0
        %v1701 = vadd.f32 %v1112, %v1700
        %1702 = vmatprep.mubr.bf16.mxu0 0
        %1703 = vmatmul.mubr.bf16.gmra.mrb[0].mxu0 %v1017
        %v1704 = vpop.f32.mrb[0].mxu0
        %v1705 = vadd.f32 %v1108, %v1704
        %v1706 = vpop.f32.mrb[0].mxu0
        %v1707 = vadd.f32 %v1112, %v1706
        %v1708 = vpop.f32.mrb[0].mxu0
        %v1709 = vadd.f32 %v1108, %v1708
        %v1710 = vpop.f32.mrb[0].mxu0
        %v1711 = vadd.f32 %v1112, %v1710
        %1712 = vmatprep.mubr.bf16.mxu0 0
        %1713 = vmatmul.mubr.bf16.gmra.mrb[0].mxu0 %v1018
        %v1714 = vpop.f32.mrb[0].mxu0
        %v1715 = vadd.f32 %v1108, %v1714
        %v1716 = vpop.f32.mrb[0].mxu0
        %v1717 = vadd.f32 %v1112, %v1716
        %v1718 = vpop.f32.mrb[0].mxu0
        %v1719 = vadd.f32 %v1108, %v1718
        %v1720 = vpop.f32.mrb[0].mxu0
        %v1721 = vadd.f32 %v1112, %v1720
        %1722 = vmatprep.mubr.bf16.mxu0 0
        %1723 = vmatmul.mubr.bf16.gmra.mrb[0].mxu0 %v1019
        %v1724 = vpop.f32.mrb[0].mxu0
        %v1725 = vadd.f32 %v1108, %v1724
        %v1726 = vpop.f32.mrb[0].mxu0
        %v1727 = vadd.f32 %v1112, %v1726
        %v1728 = vpop.f32.mrb[0].mxu0
        %v1729 = vadd.f32 %v1108, %v1728
        %v1730 = vpop.f32.mrb[0].mxu0
        %v1731 = vadd.f32 %v1112, %v1730
        %1732 = vmatprep.mubr.bf16.mxu0 0
        %1733 = vmatmul.mubr.bf16.gmra.mrb[0].mxu0 %v1020
        %v1734 = vpop.f32.mrb[0].mxu0
        %v1735 = vadd.f32 %v1108, %v1734
        %v1736 = vpop.f32.mrb[0].mxu0
        %v1737 = vadd.f32 %v1112, %v1736
        %v1738 = vpop.f32.mrb[0].mxu0
        %v1739 = vadd.f32 %v1108, %v1738
        %v1740 = vpop.f32.mrb[0].mxu0
        %v1741 = vadd.f32 %v1112, %v1740
        %1742 = vmatprep.mubr.bf16.mxu0 0
        %1743 = vmatmul.mubr.bf16.gmra.mrb[0].mxu0 %v1021
        %v1744 = vpop.f32.mrb[0].mxu0
        %v1745 = vadd.f32 %v1108, %v1744
        %v1746 = vpop.f32.mrb[0].mxu0
        %v1747 = vadd.f32 %v1112, %v1746
        %v1748 = vpop.f32.mrb[0].mxu0
        %v1749 = vadd.f32 %v1108, %v1748
        %v1750 = vpop.f32.mrb[0].mxu0
        %v1751 = vadd.f32 %v1112, %v1750
        %1752 = vmatprep.mubr.bf16.mxu0 0
        %1753 = vmatmul.mubr.bf16.gmra.mrb[0].mxu0 %v1022
        %v1754 = vpop.f32.mrb[0].mxu0
        %v1755 = vadd.f32 %v1108, %v1754
        %v1756 = vpop.f32.mrb[0].mxu0
        %v1757 = vadd.f32 %v1112, %v1756
        %v1758 = vpop.f32.mrb[0].mxu0
        %v1759 = vadd.f32 %v1108, %v1758
        %v1760 = vpop.f32.mrb[0].mxu0
        %v1761 = vadd.f32 %v1112, %v1760
        %1762 = vmatprep.mubr.bf16.mxu0 0
        %1763 = vmatmul.mubr.bf16.gmra.mrb[0].mxu0 %v1023
        %v1764 = vpop.f32.mrb[0].mxu0
        %v1765 = vadd.f32 %v1108, %v1764
        %v1766 = vpop.f32.mrb[0].mxu0
        %v1767 = vadd.f32 %v1112, %v1766
        %v1768 = vpop.f32.mrb[0].mxu0
        %v1769 = vadd.f32 %v1108, %v1768
        %v1770 = vpop.f32.mrb[0].mxu0
        %v1771 = vadd.f32 %v1112, %v1770
        %1772 = vmatprep.mubr.bf16.mxu0 0
        %1773 = vmatmul.mubr.bf16.gmra.mrb[0].mxu0 %v1024
        %v1774 = vpop.f32.mrb[0].mxu0
        %v1775 = vadd.f32 %v1108, %v1774
        %v1776 = vpop.f32.mrb[0].mxu0
        %v1777 = vadd.f32 %v1112, %v1776
        %v1778 = vpop.f32.mrb[0].mxu0
        %v1779 = vadd.f32 %v1108, %v1778
        %v1780 = vpop.f32.mrb[0].mxu0
        %v1781 = vadd.f32 %v1112, %v1780
        %1782 = vmatprep.mubr.bf16.mxu0 0
        %1783 = vmatmul.mubr.bf16.gmra.mrb[0].mxu0 %v1025
        %v1784 = vpop.f32.mrb[0].mxu0
        %v1785 = vadd.f32 %v1108, %v1784
        %v1786 = vpop.f32.mrb[0].mxu0
        %v1787 = vadd.f32 %v1112, %v1786
        %v1788 = vpop.f32.mrb[0].mxu0
        %v1789 = vadd.f32 %v1108, %v1788
        %v1790 = vpop.f32.mrb[0].mxu0
        %v1791 = vadd.f32 %v1112, %v1790
        %1792 = vmatprep.mubr.bf16.mxu0 0
        %1793 = vmatmul.mubr.bf16.gmra.mrb[0].mxu0 %v1026
        %v1794 = vpop.f32.mrb[0].mxu0
        %v1795 = vadd.f32 %v1108, %v1794
        %v1796 = vpop.f32.mrb[0].mxu0
        %v1797 = vadd.f32 %v1112, %v1796
        %v1798 = vpop.f32.mrb[0].mxu0
        %v1799 = vadd.f32 %v1108, %v1798
        %v1800 = vpop.f32.mrb[0].mxu0
        %v1801 = vadd.f32 %v1112, %v1800
        %1802 = vmatprep.mubr.bf16.mxu0 0
        %1803 = vmatmul.mubr.bf16.gmra.mrb[0].mxu0 %v1027
        %v1804 = vpop.f32.mrb[0].mxu0
        %v1805 = vadd.f32 %v1108, %v1804
        %v1806 = vpop.f32.mrb[0].mxu0
        %v1807 = vadd.f32 %v1112, %v1806
        %v1808 = vpop.f32.mrb[0].mxu0
        %v1809 = vadd.f32 %v1108, %v1808
        %v1810 = vpop.f32.mrb[0].mxu0
        %v1811 = vadd.f32 %v1112, %v1810
        %1812 = vmatprep.mubr.bf16.mxu0 0
        %1813 = vmatmul.mubr.bf16.gmra.mrb[0].mxu0 %v1028
        %v1814 = vpop.f32.mrb[0].mxu0
        %v1815 = vadd.f32 %v1108, %v1814
        %v1816 = vpop.f32.mrb[0].mxu0
        %v1817 = vadd.f32 %v1112, %v1816
        %v1818 = vpop.f32.mrb[0].mxu0
        %v1819 = vadd.f32 %v1108, %v1818
        %v1820 = vpop.f32.mrb[0].mxu0
        %v1821 = vadd.f32 %v1112, %v1820
        %1822 = vmatprep.mubr.bf16.mxu0 0
        %1823 = vmatmul.mubr.bf16.gmra.mrb[0].mxu0 %v1029
        %v1824 = vpop.f32.mrb[0].mxu0
        %v1825 = vadd.f32 %v1108, %v1824
        %v1826 = vpop.f32.mrb[0].mxu0
        %v1827 = vadd.f32 %v1112, %v1826
        %v1828 = vpop.f32.mrb[0].mxu0
        %v1829 = vadd.f32 %v1108, %v1828
        %v1830 = vpop.f32.mrb[0].mxu0
        %v1831 = vadd.f32 %v1112, %v1830
        %1832 = vmatprep.mubr.bf16.mxu0 0
        %1833 = vmatmul.mubr.bf16.gmra.mrb[0].mxu0 %v1030
        %v1834 = vpop.f32.mrb[0].mxu0
        %v1835 = vadd.f32 %v1108, %v1834
        %v1836 = vpop.f32.mrb[0].mxu0
        %v1837 = vadd.f32 %v1112, %v1836
        %v1838 = vpop.f32.mrb[0].mxu0
        %v1839 = vadd.f32 %v1108, %v1838
        %v1840 = vpop.f32.mrb[0].mxu0
        %v1841 = vadd.f32 %v1112, %v1840
        %1842 = vdwg.mxu0
        %1843 = vmatprep.subr.bf16.mxu0 %v1334
        %1844 = vmatpush1.bf16.msra.mxu0 %v1333
        %1845 = vmatprep.subr.bf16.mxu0 %v1342
        %1846 = vmatpush1.bf16.msra.mxu0 %v1341
        %1847 = vmatprep.subr.bf16.mxu0 %v1350
        %1848 = vmatpush1.bf16.msra.mxu0 %v1349
        %1849 = vmatprep.subr.bf16.mxu0 %v1358
        %1850 = vmatpush1.bf16.msra.mxu0 %v1357
        %1851 = vmatprep.subr.bf16.mxu0 %v1366
        %1852 = vmatpush1.bf16.msra.mxu0 %v1365
        %1853 = vmatprep.subr.bf16.mxu0 %v1374
        %1854 = vmatpush1.bf16.msra.mxu0 %v1373
        %1855 = vmatprep.subr.bf16.mxu0 %v1382
        %1856 = vmatpush1.bf16.msra.mxu0 %v1381
        %1857 = vmatprep.subr.bf16.mxu0 %v1390
        %1858 = vmatpush1.bf16.msra.mxu0 %v1389
        %1859 = vmatprep.subr.bf16.mxu0 0
        %1860 = vmatpush1.bf16.msra.mxu0 0
        %1861 = vmatprep.subr.bf16.mxu0 0
        %1862 = vmatpush1.bf16.msra.mxu0 0
        %1863 = vmatprep.subr.bf16.mxu0 0
        %1864 = vmatpush1.bf16.msra.mxu0 0
        %1865 = vmatprep.subr.bf16.mxu0 0
        %1866 = vmatpush1.bf16.msra.mxu0 0
        %1867 = vmatprep.subr.bf16.mxu0 0
        %1868 = vmatpush1.bf16.msra.mxu0 0
        %1869 = vmatprep.subr.bf16.mxu0 0
        %1870 = vmatpush1.bf16.msra.mxu0 0
        %1871 = vmatprep.subr.bf16.mxu0 0
        %1872 = vmatpush1.bf16.msra.mxu0 0
        %1873 = vmatprep.subr.bf16.mxu0 0
        %1874 = vmatpush1.bf16.msra.mxu0 0
        %1875 = vmatprep.mubr.bf16.mxu0 0
        %1876 = vmatmul.mubr.bf16.gmra.mrb[0].mxu0 %v1015
        %v1877 = vpop.f32.mrb[0].mxu0
        %v1878 = vadd.f32 %v1116, %v1877
        %v1879 = vpop.f32.mrb[0].mxu0
        %v1880 = vadd.f32 %v1120, %v1879
        %v1881 = vpop.f32.mrb[0].mxu0
        %v1882 = vadd.f32 %v1116, %v1881
        %v1883 = vpop.f32.mrb[0].mxu0
        %v1884 = vadd.f32 %v1120, %v1883
        %1885 = vmatprep.mubr.bf16.mxu0 0
        %1886 = vmatmul.mubr.bf16.gmra.mrb[0].mxu0 %v1016
        %v1887 = vpop.f32.mrb[0].mxu0
        %v1888 = vadd.f32 %v1116, %v1887
        %v1889 = vpop.f32.mrb[0].mxu0
        %v1890 = vadd.f32 %v1120, %v1889
        %v1891 = vpop.f32.mrb[0].mxu0
        %v1892 = vadd.f32 %v1116, %v1891
        %v1893 = vpop.f32.mrb[0].mxu0
        %v1894 = vadd.f32 %v1120, %v1893
        %1895 = vmatprep.mubr.bf16.mxu0 0
        %1896 = vmatmul.mubr.bf16.gmra.mrb[0].mxu0 %v1017
        %v1897 = vpop.f32.mrb[0].mxu0
        %v1898 = vadd.f32 %v1116, %v1897
        %v1899 = vpop.f32.mrb[0].mxu0
        %v1900 = vadd.f32 %v1120, %v1899
        %v1901 = vpop.f32.mrb[0].mxu0
        %v1902 = vadd.f32 %v1116, %v1901
        %v1903 = vpop.f32.mrb[0].mxu0
        %v1904 = vadd.f32 %v1120, %v1903
        %1905 = vmatprep.mubr.bf16.mxu0 0
        %1906 = vmatmul.mubr.bf16.gmra.mrb[0].mxu0 %v1018
        %v1907 = vpop.f32.mrb[0].mxu0
        %v1908 = vadd.f32 %v1116, %v1907
        %v1909 = vpop.f32.mrb[0].mxu0
        %v1910 = vadd.f32 %v1120, %v1909
        %v1911 = vpop.f32.mrb[0].mxu0
        %v1912 = vadd.f32 %v1116, %v1911
        %v1913 = vpop.f32.mrb[0].mxu0
        %v1914 = vadd.f32 %v1120, %v1913
        %1915 = vmatprep.mubr.bf16.mxu0 0
        %1916 = vmatmul.mubr.bf16.gmra.mrb[0].mxu0 %v1019
        %v1917 = vpop.f32.mrb[0].mxu0
        %v1918 = vadd.f32 %v1116, %v1917
        %v1919 = vpop.f32.mrb[0].mxu0
        %v1920 = vadd.f32 %v1120, %v1919
        %v1921 = vpop.f32.mrb[0].mxu0
        %v1922 = vadd.f32 %v1116, %v1921
        %v1923 = vpop.f32.mrb[0].mxu0
        %v1924 = vadd.f32 %v1120, %v1923
        %1925 = vmatprep.mubr.bf16.mxu0 0
        %1926 = vmatmul.mubr.bf16.gmra.mrb[0].mxu0 %v1020
        %v1927 = vpop.f32.mrb[0].mxu0
        %v1928 = vadd.f32 %v1116, %v1927
        %v1929 = vpop.f32.mrb[0].mxu0
        %v1930 = vadd.f32 %v1120, %v1929
        %v1931 = vpop.f32.mrb[0].mxu0
        %v1932 = vadd.f32 %v1116, %v1931
        %v1933 = vpop.f32.mrb[0].mxu0
        %v1934 = vadd.f32 %v1120, %v1933
        %1935 = vmatprep.mubr.bf16.mxu0 0
        %1936 = vmatmul.mubr.bf16.gmra.mrb[0].mxu0 %v1021
        %v1937 = vpop.f32.mrb[0].mxu0
        %v1938 = vadd.f32 %v1116, %v1937
        %v1939 = vpop.f32.mrb[0].mxu0
        %v1940 = vadd.f32 %v1120, %v1939
        %v1941 = vpop.f32.mrb[0].mxu0
        %v1942 = vadd.f32 %v1116, %v1941
        %v1943 = vpop.f32.mrb[0].mxu0
        %v1944 = vadd.f32 %v1120, %v1943
        %1945 = vmatprep.mubr.bf16.mxu0 0
        %1946 = vmatmul.mubr.bf16.gmra.mrb[0].mxu0 %v1022
        %v1947 = vpop.f32.mrb[0].mxu0
        %v1948 = vadd.f32 %v1116, %v1947
        %v1949 = vpop.f32.mrb[0].mxu0
        %v1950 = vadd.f32 %v1120, %v1949
        %v1951 = vpop.f32.mrb[0].mxu0
        %v1952 = vadd.f32 %v1116, %v1951
        %v1953 = vpop.f32.mrb[0].mxu0
        %v1954 = vadd.f32 %v1120, %v1953
        %1955 = vmatprep.mubr.bf16.mxu0 0
        %1956 = vmatmul.mubr.bf16.gmra.mrb[0].mxu0 %v1023
        %v1957 = vpop.f32.mrb[0].mxu0
        %v1958 = vadd.f32 %v1116, %v1957
        %v1959 = vpop.f32.mrb[0].mxu0
        %v1960 = vadd.f32 %v1120, %v1959
        %v1961 = vpop.f32.mrb[0].mxu0
        %v1962 = vadd.f32 %v1116, %v1961
        %v1963 = vpop.f32.mrb[0].mxu0
        %v1964 = vadd.f32 %v1120, %v1963
        %1965 = vmatprep.mubr.bf16.mxu0 0
        %1966 = vmatmul.mubr.bf16.gmra.mrb[0].mxu0 %v1024
        %v1967 = vpop.f32.mrb[0].mxu0
        %v1968 = vadd.f32 %v1116, %v1967
        %v1969 = vpop.f32.mrb[0].mxu0
        %v1970 = vadd.f32 %v1120, %v1969
        %v1971 = vpop.f32.mrb[0].mxu0
        %v1972 = vadd.f32 %v1116, %v1971
        %v1973 = vpop.f32.mrb[0].mxu0
        %v1974 = vadd.f32 %v1120, %v1973
        %1975 = vmatprep.mubr.bf16.mxu0 0
        %1976 = vmatmul.mubr.bf16.gmra.mrb[0].mxu0 %v1025
        %v1977 = vpop.f32.mrb[0].mxu0
        %v1978 = vadd.f32 %v1116, %v1977
        %v1979 = vpop.f32.mrb[0].mxu0
        %v1980 = vadd.f32 %v1120, %v1979
        %v1981 = vpop.f32.mrb[0].mxu0
        %v1982 = vadd.f32 %v1116, %v1981
        %v1983 = vpop.f32.mrb[0].mxu0
        %v1984 = vadd.f32 %v1120, %v1983
        %1985 = vmatprep.mubr.bf16.mxu0 0
        %1986 = vmatmul.mubr.bf16.gmra.mrb[0].mxu0 %v1026
        %v1987 = vpop.f32.mrb[0].mxu0
        %v1988 = vadd.f32 %v1116, %v1987
        %v1989 = vpop.f32.mrb[0].mxu0
        %v1990 = vadd.f32 %v1120, %v1989
        %v1991 = vpop.f32.mrb[0].mxu0
        %v1992 = vadd.f32 %v1116, %v1991
        %v1993 = vpop.f32.mrb[0].mxu0
        %v1994 = vadd.f32 %v1120, %v1993
        %1995 = vmatprep.mubr.bf16.mxu0 0
        %1996 = vmatmul.mubr.bf16.gmra.mrb[0].mxu0 %v1027
        %v1997 = vpop.f32.mrb[0].mxu0
        %v1998 = vadd.f32 %v1116, %v1997
        %v1999 = vpop.f32.mrb[0].mxu0
        %v2000 = vadd.f32 %v1120, %v1999
        %v2001 = vpop.f32.mrb[0].mxu0
        %v2002 = vadd.f32 %v1116, %v2001
        %v2003 = vpop.f32.mrb[0].mxu0
        %v2004 = vadd.f32 %v1120, %v2003
        %2005 = vmatprep.mubr.bf16.mxu0 0
        %2006 = vmatmul.mubr.bf16.gmra.mrb[0].mxu0 %v1028
        %v2007 = vpop.f32.mrb[0].mxu0
        %v2008 = vadd.f32 %v1116, %v2007
        %v2009 = vpop.f32.mrb[0].mxu0
        %v2010 = vadd.f32 %v1120, %v2009
        %v2011 = vpop.f32.mrb[0].mxu0
        %v2012 = vadd.f32 %v1116, %v2011
        %v2013 = vpop.f32.mrb[0].mxu0
        %v2014 = vadd.f32 %v1120, %v2013
        %2015 = vmatprep.mubr.bf16.mxu0 0
        %2016 = vmatmul.mubr.bf16.gmra.mrb[0].mxu0 %v1029
        %v2017 = vpop.f32.mrb[0].mxu0
        %v2018 = vadd.f32 %v1116, %v2017
        %v2019 = vpop.f32.mrb[0].mxu0
        %v2020 = vadd.f32 %v1120, %v2019
        %v2021 = vpop.f32.mrb[0].mxu0
        %v2022 = vadd.f32 %v1116, %v2021
        %v2023 = vpop.f32.mrb[0].mxu0
        %v2024 = vadd.f32 %v1120, %v2023
        %2025 = vmatprep.mubr.bf16.mxu0 0
        %2026 = vmatmul.mubr.bf16.gmra.mrb[0].mxu0 %v1030
        %v2027 = vpop.f32.mrb[0].mxu0
        %v2028 = vadd.f32 %v1116, %v2027
        %v2029 = vpop.f32.mrb[0].mxu0
        %v2030 = vadd.f32 %v1120, %v2029
        %v2031 = vpop.f32.mrb[0].mxu0
        %v2032 = vadd.f32 %v1116, %v2031
        %v2033 = vpop.f32.mrb[0].mxu0
        %v2034 = vadd.f32 %v1120, %v2033
        %2035 = vdwg.mxu0
        %2036 = vmatprep.subr.bf16.mxu0 %v1336
        %2037 = vmatpush1.bf16.msra.mxu0 %v1335
        %2038 = vmatprep.subr.bf16.mxu0 %v1344
        %2039 = vmatpush1.bf16.msra.mxu0 %v1343
        %2040 = vmatprep.subr.bf16.mxu0 %v1352
        %2041 = vmatpush1.bf16.msra.mxu0 %v1351
        %2042 = vmatprep.subr.bf16.mxu0 %v1360
        %2043 = vmatpush1.bf16.msra.mxu0 %v1359
        %2044 = vmatprep.subr.bf16.mxu0 %v1368
        %2045 = vmatpush1.bf16.msra.mxu0 %v1367
        %2046 = vmatprep.subr.bf16.mxu0 %v1376
        %2047 = vmatpush1.bf16.msra.mxu0 %v1375
        %2048 = vmatprep.subr.bf16.mxu0 %v1384
        %2049 = vmatpush1.bf16.msra.mxu0 %v1383
        %2050 = vmatprep.subr.bf16.mxu0 %v1392
        %2051 = vmatpush1.bf16.msra.mxu0 %v1391
        %2052 = vmatprep.subr.bf16.mxu0 0
        %2053 = vmatpush1.bf16.msra.mxu0 0
        %2054 = vmatprep.subr.bf16.mxu0 0
        %2055 = vmatpush1.bf16.msra.mxu0 0
        %2056 = vmatprep.subr.bf16.mxu0 0
        %2057 = vmatpush1.bf16.msra.mxu0 0
        %2058 = vmatprep.subr.bf16.mxu0 0
        %2059 = vmatpush1.bf16.msra.mxu0 0
        %2060 = vmatprep.subr.bf16.mxu0 0
        %2061 = vmatpush1.bf16.msra.mxu0 0
        %2062 = vmatprep.subr.bf16.mxu0 0
        %2063 = vmatpush1.bf16.msra.mxu0 0
        %2064 = vmatprep.subr.bf16.mxu0 0
        %2065 = vmatpush1.bf16.msra.mxu0 0
        %2066 = vmatprep.subr.bf16.mxu0 0
        %2067 = vmatpush1.bf16.msra.mxu0 0
        %2068 = vmatprep.mubr.bf16.mxu0 0
        %2069 = vmatmul.mubr.bf16.gmra.mrb[0].mxu0 %v1015
        %v2070 = vpop.f32.mrb[0].mxu0
        %v2071 = vadd.f32 %v1124, %v2070
        %v2072 = vpop.f32.mrb[0].mxu0
        %v2073 = vadd.f32 %v1128, %v2072
        %v2074 = vpop.f32.mrb[0].mxu0
        %v2075 = vadd.f32 %v1124, %v2074
        %v2076 = vpop.f32.mrb[0].mxu0
        %v2077 = vadd.f32 %v1128, %v2076
        %2078 = vmatprep.mubr.bf16.mxu0 0
        %2079 = vmatmul.mubr.bf16.gmra.mrb[0].mxu0 %v1016
        %v2080 = vpop.f32.mrb[0].mxu0
        %v2081 = vadd.f32 %v1124, %v2080
        %v2082 = vpop.f32.mrb[0].mxu0
        %v2083 = vadd.f32 %v1128, %v2082
        %v2084 = vpop.f32.mrb[0].mxu0
        %v2085 = vadd.f32 %v1124, %v2084
        %v2086 = vpop.f32.mrb[0].mxu0
        %v2087 = vadd.f32 %v1128, %v2086
        %2088 = vmatprep.mubr.bf16.mxu0 0
        %2089 = vmatmul.mubr.bf16.gmra.mrb[0].mxu0 %v1017
        %v2090 = vpop.f32.mrb[0].mxu0
        %v2091 = vadd.f32 %v1124, %v2090
        %v2092 = vpop.f32.mrb[0].mxu0
        %v2093 = vadd.f32 %v1128, %v2092
        %v2094 = vpop.f32.mrb[0].mxu0
        %v2095 = vadd.f32 %v1124, %v2094
        %v2096 = vpop.f32.mrb[0].mxu0
        %v2097 = vadd.f32 %v1128, %v2096
        %2098 = vmatprep.mubr.bf16.mxu0 0
        %2099 = vmatmul.mubr.bf16.gmra.mrb[0].mxu0 %v1018
        %v2100 = vpop.f32.mrb[0].mxu0
        %v2101 = vadd.f32 %v1124, %v2100
        %v2102 = vpop.f32.mrb[0].mxu0
        %v2103 = vadd.f32 %v1128, %v2102
        %v2104 = vpop.f32.mrb[0].mxu0
        %v2105 = vadd.f32 %v1124, %v2104
        %v2106 = vpop.f32.mrb[0].mxu0
        %v2107 = vadd.f32 %v1128, %v2106
        %2108 = vmatprep.mubr.bf16.mxu0 0
        %2109 = vmatmul.mubr.bf16.gmra.mrb[0].mxu0 %v1019
        %v2110 = vpop.f32.mrb[0].mxu0
        %v2111 = vadd.f32 %v1124, %v2110
        %v2112 = vpop.f32.mrb[0].mxu0
        %v2113 = vadd.f32 %v1128, %v2112
        %v2114 = vpop.f32.mrb[0].mxu0
        %v2115 = vadd.f32 %v1124, %v2114
        %v2116 = vpop.f32.mrb[0].mxu0
        %v2117 = vadd.f32 %v1128, %v2116
        %2118 = vmatprep.mubr.bf16.mxu0 0
        %2119 = vmatmul.mubr.bf16.gmra.mrb[0].mxu0 %v1020
        %v2120 = vpop.f32.mrb[0].mxu0
        %v2121 = vadd.f32 %v1124, %v2120
        %v2122 = vpop.f32.mrb[0].mxu0
        %v2123 = vadd.f32 %v1128, %v2122
        %v2124 = vpop.f32.mrb[0].mxu0
        %v2125 = vadd.f32 %v1124, %v2124
        %v2126 = vpop.f32.mrb[0].mxu0
        %v2127 = vadd.f32 %v1128, %v2126
        %2128 = vmatprep.mubr.bf16.mxu0 0
        %2129 = vmatmul.mubr.bf16.gmra.mrb[0].mxu0 %v1021
        %v2130 = vpop.f32.mrb[0].mxu0
        %v2131 = vadd.f32 %v1124, %v2130
        %v2132 = vpop.f32.mrb[0].mxu0
        %v2133 = vadd.f32 %v1128, %v2132
        %v2134 = vpop.f32.mrb[0].mxu0
        %v2135 = vadd.f32 %v1124, %v2134
        %v2136 = vpop.f32.mrb[0].mxu0
        %v2137 = vadd.f32 %v1128, %v2136
        %2138 = vmatprep.mubr.bf16.mxu0 0
        %2139 = vmatmul.mubr.bf16.gmra.mrb[0].mxu0 %v1022
        %v2140 = vpop.f32.mrb[0].mxu0
        %v2141 = vadd.f32 %v1124, %v2140
        %v2142 = vpop.f32.mrb[0].mxu0
        %v2143 = vadd.f32 %v1128, %v2142
        %v2144 = vpop.f32.mrb[0].mxu0
        %v2145 = vadd.f32 %v1124, %v2144
        %v2146 = vpop.f32.mrb[0].mxu0
        %v2147 = vadd.f32 %v1128, %v2146
        %2148 = vmatprep.mubr.bf16.mxu0 0
        %2149 = vmatmul.mubr.bf16.gmra.mrb[0].mxu0 %v1023
        %v2150 = vpop.f32.mrb[0].mxu0
        %v2151 = vadd.f32 %v1124, %v2150
        %v2152 = vpop.f32.mrb[0].mxu0
        %v2153 = vadd.f32 %v1128, %v2152
        %v2154 = vpop.f32.mrb[0].mxu0
        %v2155 = vadd.f32 %v1124, %v2154
        %v2156 = vpop.f32.mrb[0].mxu0
        %v2157 = vadd.f32 %v1128, %v2156
        %2158 = vmatprep.mubr.bf16.mxu0 0
        %2159 = vmatmul.mubr.bf16.gmra.mrb[0].mxu0 %v1024
        %v2160 = vpop.f32.mrb[0].mxu0
        %v2161 = vadd.f32 %v1124, %v2160
        %v2162 = vpop.f32.mrb[0].mxu0
        %v2163 = vadd.f32 %v1128, %v2162
        %v2164 = vpop.f32.mrb[0].mxu0
        %v2165 = vadd.f32 %v1124, %v2164
        %v2166 = vpop.f32.mrb[0].mxu0
        %v2167 = vadd.f32 %v1128, %v2166
        %2168 = vmatprep.mubr.bf16.mxu0 0
        %2169 = vmatmul.mubr.bf16.gmra.mrb[0].mxu0 %v1025
        %v2170 = vpop.f32.mrb[0].mxu0
        %v2171 = vadd.f32 %v1124, %v2170
        %v2172 = vpop.f32.mrb[0].mxu0
        %v2173 = vadd.f32 %v1128, %v2172
        %v2174 = vpop.f32.mrb[0].mxu0
        %v2175 = vadd.f32 %v1124, %v2174
        %v2176 = vpop.f32.mrb[0].mxu0
        %v2177 = vadd.f32 %v1128, %v2176
        %2178 = vmatprep.mubr.bf16.mxu0 0
        %2179 = vmatmul.mubr.bf16.gmra.mrb[0].mxu0 %v1026
        %v2180 = vpop.f32.mrb[0].mxu0
        %v2181 = vadd.f32 %v1124, %v2180
        %v2182 = vpop.f32.mrb[0].mxu0
        %v2183 = vadd.f32 %v1128, %v2182
        %v2184 = vpop.f32.mrb[0].mxu0
        %v2185 = vadd.f32 %v1124, %v2184
        %v2186 = vpop.f32.mrb[0].mxu0
        %v2187 = vadd.f32 %v1128, %v2186
        %2188 = vmatprep.mubr.bf16.mxu0 0
        %2189 = vmatmul.mubr.bf16.gmra.mrb[0].mxu0 %v1027
        %v2190 = vpop.f32.mrb[0].mxu0
        %v2191 = vadd.f32 %v1124, %v2190
        %v2192 = vpop.f32.mrb[0].mxu0
        %v2193 = vadd.f32 %v1128, %v2192
        %v2194 = vpop.f32.mrb[0].mxu0
        %v2195 = vadd.f32 %v1124, %v2194
        %v2196 = vpop.f32.mrb[0].mxu0
        %v2197 = vadd.f32 %v1128, %v2196
        %2198 = vmatprep.mubr.bf16.mxu0 0
        %2199 = vmatmul.mubr.bf16.gmra.mrb[0].mxu0 %v1028
        %v2200 = vpop.f32.mrb[0].mxu0
        %v2201 = vadd.f32 %v1124, %v2200
        %v2202 = vpop.f32.mrb[0].mxu0
        %v2203 = vadd.f32 %v1128, %v2202
        %v2204 = vpop.f32.mrb[0].mxu0
        %v2205 = vadd.f32 %v1124, %v2204
        %v2206 = vpop.f32.mrb[0].mxu0
        %v2207 = vadd.f32 %v1128, %v2206
        %2208 = vmatprep.mubr.bf16.mxu0 0
        %2209 = vmatmul.mubr.bf16.gmra.mrb[0].mxu0 %v1029
        %v2210 = vpop.f32.mrb[0].mxu0
        %v2211 = vadd.f32 %v1124, %v2210
        %v2212 = vpop.f32.mrb[0].mxu0
        %v2213 = vadd.f32 %v1128, %v2212
        %v2214 = vpop.f32.mrb[0].mxu0
        %v2215 = vadd.f32 %v1124, %v2214
        %v2216 = vpop.f32.mrb[0].mxu0
        %v2217 = vadd.f32 %v1128, %v2216
        %2218 = vmatprep.mubr.bf16.mxu0 0
        %2219 = vmatmul.mubr.bf16.gmra.mrb[0].mxu0 %v1030
        %v2220 = vpop.f32.mrb[0].mxu0
        %v2221 = vadd.f32 %v1124, %v2220
        %v2222 = vpop.f32.mrb[0].mxu0
        %v2223 = vadd.f32 %v1128, %v2222
        %v2224 = vpop.f32.mrb[0].mxu0
        %v2225 = vadd.f32 %v1124, %v2224
        %v2226 = vpop.f32.mrb[0].mxu0
        %v2227 = vadd.f32 %v1128, %v2226
        %2228 = vdwg.mxu0
        %v2229 = vmax.f32 %v1492, 0.0
        %v2230 = vmax.f32 %v1494, 0.0
        %v2231 = vmax.f32 %v1685, 0.0
        %v2232 = vmax.f32 %v1687, 0.0
        %v2233 = vmax.f32 %v1878, 0.0
        %v2234 = vmax.f32 %v1880, 0.0
        %v2235 = vmax.f32 %v2071, 0.0
        %v2236 = vmax.f32 %v2073, 0.0
        %v2237 = vmax.f32 %v1496, 0.0
        %v2238 = vmax.f32 %v1498, 0.0
        %v2239 = vmax.f32 %v1689, 0.0
        %v2240 = vmax.f32 %v1691, 0.0
        %v2241 = vmax.f32 %v1882, 0.0
        %v2242 = vmax.f32 %v1884, 0.0
        %v2243 = vmax.f32 %v2075, 0.0
        %v2244 = vmax.f32 %v2077, 0.0
        %v2245 = vmax.f32 %v1502, 0.0
        %v2246 = vmax.f32 %v1504, 0.0
        %v2247 = vmax.f32 %v1695, 0.0
        %v2248 = vmax.f32 %v1697, 0.0
        %v2249 = vmax.f32 %v1888, 0.0
        %v2250 = vmax.f32 %v1890, 0.0
        %v2251 = vmax.f32 %v2081, 0.0
        %v2252 = vmax.f32 %v2083, 0.0
        %v2253 = vmax.f32 %v1506, 0.0
        %v2254 = vmax.f32 %v1508, 0.0
        %v2255 = vmax.f32 %v1699, 0.0
        %v2256 = vmax.f32 %v1701, 0.0
        %v2257 = vmax.f32 %v1892, 0.0
        %v2258 = vmax.f32 %v1894, 0.0
        %v2259 = vmax.f32 %v2085, 0.0
        %v2260 = vmax.f32 %v2087, 0.0
        %v2261 = vmax.f32 %v1512, 0.0
        %v2262 = vmax.f32 %v1514, 0.0
        %v2263 = vmax.f32 %v1705, 0.0
        %v2264 = vmax.f32 %v1707, 0.0
        %v2265 = vmax.f32 %v1898, 0.0
        %v2266 = vmax.f32 %v1900, 0.0
        %v2267 = vmax.f32 %v2091, 0.0
        %v2268 = vmax.f32 %v2093, 0.0
        %v2269 = vmax.f32 %v1516, 0.0
        %v2270 = vmax.f32 %v1518, 0.0
        %v2271 = vmax.f32 %v1709, 0.0
        %v2272 = vmax.f32 %v1711, 0.0
        %v2273 = vmax.f32 %v1902, 0.0
        %v2274 = vmax.f32 %v1904, 0.0
        %v2275 = vmax.f32 %v2095, 0.0
        %v2276 = vmax.f32 %v2097, 0.0
        %v2277 = vmax.f32 %v1522, 0.0
        %v2278 = vmax.f32 %v1524, 0.0
        %v2279 = vmax.f32 %v1715, 0.0
        %v2280 = vmax.f32 %v1717, 0.0
        %v2281 = vmax.f32 %v1908, 0.0
        %v2282 = vmax.f32 %v1910, 0.0
        %v2283 = vmax.f32 %v2101, 0.0
        %v2284 = vmax.f32 %v2103, 0.0
        %v2285 = vmax.f32 %v1526, 0.0
        %v2286 = vmax.f32 %v1528, 0.0
        %v2287 = vmax.f32 %v1719, 0.0
        %v2288 = vmax.f32 %v1721, 0.0
        %v2289 = vmax.f32 %v1912, 0.0
        %v2290 = vmax.f32 %v1914, 0.0
        %v2291 = vmax.f32 %v2105, 0.0
        %v2292 = vmax.f32 %v2107, 0.0
        %v2293 = vmax.f32 %v1532, 0.0
        %v2294 = vmax.f32 %v1534, 0.0
        %v2295 = vmax.f32 %v1725, 0.0
        %v2296 = vmax.f32 %v1727, 0.0
        %v2297 = vmax.f32 %v1918, 0.0
        %v2298 = vmax.f32 %v1920, 0.0
        %v2299 = vmax.f32 %v2111, 0.0
        %v2300 = vmax.f32 %v2113, 0.0
        %v2301 = vmax.f32 %v1536, 0.0
        %v2302 = vmax.f32 %v1538, 0.0
        %v2303 = vmax.f32 %v1729, 0.0
        %v2304 = vmax.f32 %v1731, 0.0
        %v2305 = vmax.f32 %v1922, 0.0
        %v2306 = vmax.f32 %v1924, 0.0
        %v2307 = vmax.f32 %v2115, 0.0
        %v2308 = vmax.f32 %v2117, 0.0
        %v2309 = vmax.f32 %v1542, 0.0
        %v2310 = vmax.f32 %v1544, 0.0
        %v2311 = vmax.f32 %v1735, 0.0
        %v2312 = vmax.f32 %v1737, 0.0
        %v2313 = vmax.f32 %v1928, 0.0
        %v2314 = vmax.f32 %v1930, 0.0
        %v2315 = vmax.f32 %v2121, 0.0
        %v2316 = vmax.f32 %v2123, 0.0
        %v2317 = vmax.f32 %v1546, 0.0
        %v2318 = vmax.f32 %v1548, 0.0
        %v2319 = vmax.f32 %v1739, 0.0
        %v2320 = vmax.f32 %v1741, 0.0
        %v2321 = vmax.f32 %v1932, 0.0
        %v2322 = vmax.f32 %v1934, 0.0
        %v2323 = vmax.f32 %v2125, 0.0
        %v2324 = vmax.f32 %v2127, 0.0
        %v2325 = vmax.f32 %v1552, 0.0
        %v2326 = vmax.f32 %v1554, 0.0
        %v2327 = vmax.f32 %v1745, 0.0
        %v2328 = vmax.f32 %v1747, 0.0
        %v2329 = vmax.f32 %v1938, 0.0
        %v2330 = vmax.f32 %v1940, 0.0
        %v2331 = vmax.f32 %v2131, 0.0
        %v2332 = vmax.f32 %v2133, 0.0
        %v2333 = vmax.f32 %v1556, 0.0
        %v2334 = vmax.f32 %v1558, 0.0
        %v2335 = vmax.f32 %v1749, 0.0
        %v2336 = vmax.f32 %v1751, 0.0
        %v2337 = vmax.f32 %v1942, 0.0
        %v2338 = vmax.f32 %v1944, 0.0
        %v2339 = vmax.f32 %v2135, 0.0
        %v2340 = vmax.f32 %v2137, 0.0
        %v2341 = vmax.f32 %v1562, 0.0
        %v2342 = vmax.f32 %v1564, 0.0
        %v2343 = vmax.f32 %v1755, 0.0
        %v2344 = vmax.f32 %v1757, 0.0
        %v2345 = vmax.f32 %v1948, 0.0
        %v2346 = vmax.f32 %v1950, 0.0
        %v2347 = vmax.f32 %v2141, 0.0
        %v2348 = vmax.f32 %v2143, 0.0
        %v2349 = vmax.f32 %v1566, 0.0
        %v2350 = vmax.f32 %v1568, 0.0
        %v2351 = vmax.f32 %v1759, 0.0
        %v2352 = vmax.f32 %v1761, 0.0
        %v2353 = vmax.f32 %v1952, 0.0
        %v2354 = vmax.f32 %v1954, 0.0
        %v2355 = vmax.f32 %v2145, 0.0
        %v2356 = vmax.f32 %v2147, 0.0
        %v2357 = vmax.f32 %v1572, 0.0
        %v2358 = vmax.f32 %v1574, 0.0
        %v2359 = vmax.f32 %v1765, 0.0
        %v2360 = vmax.f32 %v1767, 0.0
        %v2361 = vmax.f32 %v1958, 0.0
        %v2362 = vmax.f32 %v1960, 0.0
        %v2363 = vmax.f32 %v2151, 0.0
        %v2364 = vmax.f32 %v2153, 0.0
        %v2365 = vmax.f32 %v1576, 0.0
        %v2366 = vmax.f32 %v1578, 0.0
        %v2367 = vmax.f32 %v1769, 0.0
        %v2368 = vmax.f32 %v1771, 0.0
        %v2369 = vmax.f32 %v1962, 0.0
        %v2370 = vmax.f32 %v1964, 0.0
        %v2371 = vmax.f32 %v2155, 0.0
        %v2372 = vmax.f32 %v2157, 0.0
        %v2373 = vmax.f32 %v1582, 0.0
        %v2374 = vmax.f32 %v1584, 0.0
        %v2375 = vmax.f32 %v1775, 0.0
        %v2376 = vmax.f32 %v1777, 0.0
        %v2377 = vmax.f32 %v1968, 0.0
        %v2378 = vmax.f32 %v1970, 0.0
        %v2379 = vmax.f32 %v2161, 0.0
        %v2380 = vmax.f32 %v2163, 0.0
        %v2381 = vmax.f32 %v1586, 0.0
        %v2382 = vmax.f32 %v1588, 0.0
        %v2383 = vmax.f32 %v1779, 0.0
        %v2384 = vmax.f32 %v1781, 0.0
        %v2385 = vmax.f32 %v1972, 0.0
        %v2386 = vmax.f32 %v1974, 0.0
        %v2387 = vmax.f32 %v2165, 0.0
        %v2388 = vmax.f32 %v2167, 0.0
        %v2389 = vmax.f32 %v1592, 0.0
        %v2390 = vmax.f32 %v1594, 0.0
        %v2391 = vmax.f32 %v1785, 0.0
        %v2392 = vmax.f32 %v1787, 0.0
        %v2393 = vmax.f32 %v1978, 0.0
        %v2394 = vmax.f32 %v1980, 0.0
        %v2395 = vmax.f32 %v2171, 0.0
        %v2396 = vmax.f32 %v2173, 0.0
        %v2397 = vmax.f32 %v1596, 0.0
        %v2398 = vmax.f32 %v1598, 0.0
        %v2399 = vmax.f32 %v1789, 0.0
        %v2400 = vmax.f32 %v1791, 0.0
        %v2401 = vmax.f32 %v1982, 0.0
        %v2402 = vmax.f32 %v1984, 0.0
        %v2403 = vmax.f32 %v2175, 0.0
        %v2404 = vmax.f32 %v2177, 0.0
        %v2405 = vmax.f32 %v1602, 0.0
        %v2406 = vmax.f32 %v1604, 0.0
        %v2407 = vmax.f32 %v1795, 0.0
        %v2408 = vmax.f32 %v1797, 0.0
        %v2409 = vmax.f32 %v1988, 0.0
        %v2410 = vmax.f32 %v1990, 0.0
        %v2411 = vmax.f32 %v2181, 0.0
        %v2412 = vmax.f32 %v2183, 0.0
        %v2413 = vmax.f32 %v1606, 0.0
        %v2414 = vmax.f32 %v1608, 0.0
        %v2415 = vmax.f32 %v1799, 0.0
        %v2416 = vmax.f32 %v1801, 0.0
        %v2417 = vmax.f32 %v1992, 0.0
        %v2418 = vmax.f32 %v1994, 0.0
        %v2419 = vmax.f32 %v2185, 0.0
        %v2420 = vmax.f32 %v2187, 0.0
        %v2421 = vmax.f32 %v1612, 0.0
        %v2422 = vmax.f32 %v1614, 0.0
        %v2423 = vmax.f32 %v1805, 0.0
        %v2424 = vmax.f32 %v1807, 0.0
        %v2425 = vmax.f32 %v1998, 0.0
        %v2426 = vmax.f32 %v2000, 0.0
        %v2427 = vmax.f32 %v2191, 0.0
        %v2428 = vmax.f32 %v2193, 0.0
        %v2429 = vmax.f32 %v1616, 0.0
        %v2430 = vmax.f32 %v1618, 0.0
        %v2431 = vmax.f32 %v1809, 0.0
        %v2432 = vmax.f32 %v1811, 0.0
        %v2433 = vmax.f32 %v2002, 0.0
        %v2434 = vmax.f32 %v2004, 0.0
        %v2435 = vmax.f32 %v2195, 0.0
        %v2436 = vmax.f32 %v2197, 0.0
        %v2437 = vmax.f32 %v1622, 0.0
        %v2438 = vmax.f32 %v1624, 0.0
        %v2439 = vmax.f32 %v1815, 0.0
        %v2440 = vmax.f32 %v1817, 0.0
        %v2441 = vmax.f32 %v2008, 0.0
        %v2442 = vmax.f32 %v2010, 0.0
        %v2443 = vmax.f32 %v2201, 0.0
        %v2444 = vmax.f32 %v2203, 0.0
        %v2445 = vmax.f32 %v1626, 0.0
        %v2446 = vmax.f32 %v1628, 0.0
        %v2447 = vmax.f32 %v1819, 0.0
        %v2448 = vmax.f32 %v1821, 0.0
        %v2449 = vmax.f32 %v2012, 0.0
        %v2450 = vmax.f32 %v2014, 0.0
        %v2451 = vmax.f32 %v2205, 0.0
        %v2452 = vmax.f32 %v2207, 0.0
        %v2453 = vmax.f32 %v1632, 0.0
        %v2454 = vmax.f32 %v1634, 0.0
        %v2455 = vmax.f32 %v1825, 0.0
        %v2456 = vmax.f32 %v1827, 0.0
        %v2457 = vmax.f32 %v2018, 0.0
        %v2458 = vmax.f32 %v2020, 0.0
        %v2459 = vmax.f32 %v2211, 0.0
        %v2460 = vmax.f32 %v2213, 0.0
        %v2461 = vmax.f32 %v1636, 0.0
        %v2462 = vmax.f32 %v1638, 0.0
        %v2463 = vmax.f32 %v1829, 0.0
        %v2464 = vmax.f32 %v1831, 0.0
        %v2465 = vmax.f32 %v2022, 0.0
        %v2466 = vmax.f32 %v2024, 0.0
        %v2467 = vmax.f32 %v2215, 0.0
        %v2468 = vmax.f32 %v2217, 0.0
        %v2469 = vmax.f32 %v1642, 0.0
        %v2470 = vmax.f32 %v1644, 0.0
        %v2471 = vmax.f32 %v1835, 0.0
        %v2472 = vmax.f32 %v1837, 0.0
        %v2473 = vmax.f32 %v2028, 0.0
        %v2474 = vmax.f32 %v2030, 0.0
        %v2475 = vmax.f32 %v2221, 0.0
        %v2476 = vmax.f32 %v2223, 0.0
        %v2477 = vmax.f32 %v1646, 0.0
        %v2478 = vmax.f32 %v1648, 0.0
        %v2479 = vmax.f32 %v1839, 0.0
        %v2480 = vmax.f32 %v1841, 0.0
        %v2481 = vmax.f32 %v2032, 0.0
        %v2482 = vmax.f32 %v2034, 0.0
        %v2483 = vmax.f32 %v2225, 0.0
        %v2484 = vmax.f32 %v2227, 0.0
        %v2485 = vlaneseq
        %v2486 = vshrl.u32 %v2485, 7
        %v2487 = vadd.s32 %v2486, 8
        %v2488 = vadd.s32 %v2486, 16
        %v2489 = vadd.s32 %v2486, 24
        %v2490 = vadd.s32 %v2486, 32
        %v2491 = vadd.s32 %v2486, 40
        %v2492 = vadd.s32 %v2486, 48
        %v2493 = vadd.s32 %v2486, 56
        %v2494 = vadd.s32 %v2486, 64
        %v2495 = vadd.s32 %v2486, 72
        %v2496 = vadd.s32 %v2486, 80
        %v2497 = vadd.s32 %v2486, 88
        %v2498 = vadd.s32 %v2486, 96
        %v2499 = vadd.s32 %v2486, 104
        %v2500 = vadd.s32 %v2486, 112
        %v2501 = vadd.s32 %v2486, 120
        %v2502 = vadd.s32 %v2486, 128
        %v2503 = vadd.s32 %v2486, 136
        %v2504 = vadd.s32 %v2486, 144
        %v2505 = vadd.s32 %v2486, 152
        %v2506 = vadd.s32 %v2486, 160
        %v2507 = vadd.s32 %v2486, 168
        %v2508 = vadd.s32 %v2486, 176
        %v2509 = vadd.s32 %v2486, 184
        %v2510 = vadd.s32 %v2486, 192
        %v2511 = vadd.s32 %v2486, 200
        %v2512 = vadd.s32 %v2486, 208
        %v2513 = vadd.s32 %v2486, 216
        %v2514 = vadd.s32 %v2486, 224
        %v2515 = vadd.s32 %v2486, 232
        %v2516 = vadd.s32 %v2486, 240
        %v2517 = vadd.s32 %v2486, 248
        %vm2518 = vcmp.ge.s32.totalorder %v2486, 64
        %vm2519 = vcmp.ge.s32.totalorder %v2487, 64
        %vm2520 = vcmp.ge.s32.totalorder %v2488, 64
        %vm2521 = vcmp.ge.s32.totalorder %v2489, 64
        %vm2522 = vcmp.ge.s32.totalorder %v2490, 64
        %vm2523 = vcmp.ge.s32.totalorder %v2491, 64
        %vm2524 = vcmp.ge.s32.totalorder %v2492, 64
        %vm2525 = vcmp.ge.s32.totalorder %v2493, 64
        %vm2526 = vcmp.ge.s32.totalorder %v2494, 64
        %vm2527 = vcmp.ge.s32.totalorder %v2495, 64
        %vm2528 = vcmp.ge.s32.totalorder %v2496, 64
        %vm2529 = vcmp.ge.s32.totalorder %v2497, 64
        %vm2530 = vcmp.ge.s32.totalorder %v2498, 64
        %vm2531 = vcmp.ge.s32.totalorder %v2499, 64
        %vm2532 = vcmp.ge.s32.totalorder %v2500, 64
        %vm2533 = vcmp.ge.s32.totalorder %v2501, 64
        %vm2534 = vcmp.ge.s32.totalorder %v2502, 64
        %vm2535 = vcmp.ge.s32.totalorder %v2503, 64
        %vm2536 = vcmp.ge.s32.totalorder %v2504, 64
        %vm2537 = vcmp.ge.s32.totalorder %v2505, 64
        %vm2538 = vcmp.ge.s32.totalorder %v2506, 64
        %vm2539 = vcmp.ge.s32.totalorder %v2507, 64
        %vm2540 = vcmp.ge.s32.totalorder %v2508, 64
        %vm2541 = vcmp.ge.s32.totalorder %v2509, 64
        %vm2542 = vcmp.ge.s32.totalorder %v2510, 64
        %vm2543 = vcmp.ge.s32.totalorder %v2511, 64
        %vm2544 = vcmp.ge.s32.totalorder %v2512, 64
        %vm2545 = vcmp.ge.s32.totalorder %v2513, 64
        %vm2546 = vcmp.ge.s32.totalorder %v2514, 64
        %vm2547 = vcmp.ge.s32.totalorder %v2515, 64
        %vm2548 = vcmp.ge.s32.totalorder %v2516, 64
        %vm2549 = vcmp.ge.s32.totalorder %v2517, 64
        %s2550 = scalar_select %p344, 1, 0
        %v2551 = vstv %s2550
        %vm2552 = vcmp.eq.s32.totalorder %v2551, 1
        %vm2553 = vmand %vm2518, %vm2552
        %vm2554 = vmand %vm2519, %vm2552
        %vm2555 = vmand %vm2520, %vm2552
        %vm2556 = vmand %vm2521, %vm2552
        %vm2557 = vmand %vm2522, %vm2552
        %vm2558 = vmand %vm2523, %vm2552
        %vm2559 = vmand %vm2524, %vm2552
        %vm2560 = vmand %vm2525, %vm2552
        %vm2561 = vmand %vm2526, %vm2552
        %vm2562 = vmand %vm2527, %vm2552
        %vm2563 = vmand %vm2528, %vm2552
        %vm2564 = vmand %vm2529, %vm2552
        %vm2565 = vmand %vm2530, %vm2552
        %vm2566 = vmand %vm2531, %vm2552
        %vm2567 = vmand %vm2532, %vm2552
        %vm2568 = vmand %vm2533, %vm2552
        %vm2569 = vmand %vm2534, %vm2552
        %vm2570 = vmand %vm2535, %vm2552
        %vm2571 = vmand %vm2536, %vm2552
        %vm2572 = vmand %vm2537, %vm2552
        %vm2573 = vmand %vm2538, %vm2552
        %vm2574 = vmand %vm2539, %vm2552
        %vm2575 = vmand %vm2540, %vm2552
        %vm2576 = vmand %vm2541, %vm2552
        %vm2577 = vmand %vm2542, %vm2552
        %vm2578 = vmand %vm2543, %vm2552
        %vm2579 = vmand %vm2544, %vm2552
        %vm2580 = vmand %vm2545, %vm2552
        %vm2581 = vmand %vm2546, %vm2552
        %vm2582 = vmand %vm2547, %vm2552
        %vm2583 = vmand %vm2548, %vm2552
        %vm2584 = vmand %vm2549, %vm2552
        %v2585 = vsel %vm2553, -inf, %v2229
        %v2586 = vsel %vm2553, -inf, %v2230
        %v2587 = vsel %vm2553, -inf, %v2231
        %v2588 = vsel %vm2553, -inf, %v2232
        %v2589 = vsel %vm2553, -inf, %v2233
        %v2590 = vsel %vm2553, -inf, %v2234
        %v2591 = vsel %vm2553, -inf, %v2235
        %v2592 = vsel %vm2553, -inf, %v2236
        %v2593 = vsel %vm2554, -inf, %v2237
        %v2594 = vsel %vm2554, -inf, %v2238
        %v2595 = vsel %vm2554, -inf, %v2239
        %v2596 = vsel %vm2554, -inf, %v2240
        %v2597 = vsel %vm2554, -inf, %v2241
        %v2598 = vsel %vm2554, -inf, %v2242
        %v2599 = vsel %vm2554, -inf, %v2243
        %v2600 = vsel %vm2554, -inf, %v2244
        %v2601 = vsel %vm2555, -inf, %v2245
        %v2602 = vsel %vm2555, -inf, %v2246
        %v2603 = vsel %vm2555, -inf, %v2247
        %v2604 = vsel %vm2555, -inf, %v2248
        %v2605 = vsel %vm2555, -inf, %v2249
        %v2606 = vsel %vm2555, -inf, %v2250
        %v2607 = vsel %vm2555, -inf, %v2251
        %v2608 = vsel %vm2555, -inf, %v2252
        %v2609 = vsel %vm2556, -inf, %v2253
        %v2610 = vsel %vm2556, -inf, %v2254
        %v2611 = vsel %vm2556, -inf, %v2255
        %v2612 = vsel %vm2556, -inf, %v2256
        %v2613 = vsel %vm2556, -inf, %v2257
        %v2614 = vsel %vm2556, -inf, %v2258
        %v2615 = vsel %vm2556, -inf, %v2259
        %v2616 = vsel %vm2556, -inf, %v2260
        %v2617 = vsel %vm2557, -inf, %v2261
        %v2618 = vsel %vm2557, -inf, %v2262
        %v2619 = vsel %vm2557, -inf, %v2263
        %v2620 = vsel %vm2557, -inf, %v2264
        %v2621 = vsel %vm2557, -inf, %v2265
        %v2622 = vsel %vm2557, -inf, %v2266
        %v2623 = vsel %vm2557, -inf, %v2267
        %v2624 = vsel %vm2557, -inf, %v2268
        %v2625 = vsel %vm2558, -inf, %v2269
        %v2626 = vsel %vm2558, -inf, %v2270
        %v2627 = vsel %vm2558, -inf, %v2271
        %v2628 = vsel %vm2558, -inf, %v2272
        %v2629 = vsel %vm2558, -inf, %v2273
        %v2630 = vsel %vm2558, -inf, %v2274
        %v2631 = vsel %vm2558, -inf, %v2275
        %v2632 = vsel %vm2558, -inf, %v2276
        %v2633 = vsel %vm2559, -inf, %v2277
        %v2634 = vsel %vm2559, -inf, %v2278
        %v2635 = vsel %vm2559, -inf, %v2279
        %v2636 = vsel %vm2559, -inf, %v2280
        %v2637 = vsel %vm2559, -inf, %v2281
        %v2638 = vsel %vm2559, -inf, %v2282
        %v2639 = vsel %vm2559, -inf, %v2283
        %v2640 = vsel %vm2559, -inf, %v2284
        %v2641 = vsel %vm2560, -inf, %v2285
        %v2642 = vsel %vm2560, -inf, %v2286
        %v2643 = vsel %vm2560, -inf, %v2287
        %v2644 = vsel %vm2560, -inf, %v2288
        %v2645 = vsel %vm2560, -inf, %v2289
        %v2646 = vsel %vm2560, -inf, %v2290
        %v2647 = vsel %vm2560, -inf, %v2291
        %v2648 = vsel %vm2560, -inf, %v2292
        %v2649 = vsel %vm2561, -inf, %v2293
        %v2650 = vsel %vm2561, -inf, %v2294
        %v2651 = vsel %vm2561, -inf, %v2295
        %v2652 = vsel %vm2561, -inf, %v2296
        %v2653 = vsel %vm2561, -inf, %v2297
        %v2654 = vsel %vm2561, -inf, %v2298
        %v2655 = vsel %vm2561, -inf, %v2299
        %v2656 = vsel %vm2561, -inf, %v2300
        %v2657 = vsel %vm2562, -inf, %v2301
        %v2658 = vsel %vm2562, -inf, %v2302
        %v2659 = vsel %vm2562, -inf, %v2303
        %v2660 = vsel %vm2562, -inf, %v2304
        %v2661 = vsel %vm2562, -inf, %v2305
        %v2662 = vsel %vm2562, -inf, %v2306
        %v2663 = vsel %vm2562, -inf, %v2307
        %v2664 = vsel %vm2562, -inf, %v2308
        %v2665 = vsel %vm2563, -inf, %v2309
        %v2666 = vsel %vm2563, -inf, %v2310
        %v2667 = vsel %vm2563, -inf, %v2311
        %v2668 = vsel %vm2563, -inf, %v2312
        %v2669 = vsel %vm2563, -inf, %v2313
        %v2670 = vsel %vm2563, -inf, %v2314
        %v2671 = vsel %vm2563, -inf, %v2315
        %v2672 = vsel %vm2563, -inf, %v2316
        %v2673 = vsel %vm2564, -inf, %v2317
        %v2674 = vsel %vm2564, -inf, %v2318
        %v2675 = vsel %vm2564, -inf, %v2319
        %v2676 = vsel %vm2564, -inf, %v2320
        %v2677 = vsel %vm2564, -inf, %v2321
        %v2678 = vsel %vm2564, -inf, %v2322
        %v2679 = vsel %vm2564, -inf, %v2323
        %v2680 = vsel %vm2564, -inf, %v2324
        %v2681 = vsel %vm2565, -inf, %v2325
        %v2682 = vsel %vm2565, -inf, %v2326
        %v2683 = vsel %vm2565, -inf, %v2327
        %v2684 = vsel %vm2565, -inf, %v2328
        %v2685 = vsel %vm2565, -inf, %v2329
        %v2686 = vsel %vm2565, -inf, %v2330
        %v2687 = vsel %vm2565, -inf, %v2331
        %v2688 = vsel %vm2565, -inf, %v2332
        %v2689 = vsel %vm2566, -inf, %v2333
        %v2690 = vsel %vm2566, -inf, %v2334
        %v2691 = vsel %vm2566, -inf, %v2335
        %v2692 = vsel %vm2566, -inf, %v2336
        %v2693 = vsel %vm2566, -inf, %v2337
        %v2694 = vsel %vm2566, -inf, %v2338
        %v2695 = vsel %vm2566, -inf, %v2339
        %v2696 = vsel %vm2566, -inf, %v2340
        %v2697 = vsel %vm2567, -inf, %v2341
        %v2698 = vsel %vm2567, -inf, %v2342
        %v2699 = vsel %vm2567, -inf, %v2343
        %v2700 = vsel %vm2567, -inf, %v2344
        %v2701 = vsel %vm2567, -inf, %v2345
        %v2702 = vsel %vm2567, -inf, %v2346
        %v2703 = vsel %vm2567, -inf, %v2347
        %v2704 = vsel %vm2567, -inf, %v2348
        %v2705 = vsel %vm2568, -inf, %v2349
        %v2706 = vsel %vm2568, -inf, %v2350
        %v2707 = vsel %vm2568, -inf, %v2351
        %v2708 = vsel %vm2568, -inf, %v2352
        %v2709 = vsel %vm2568, -inf, %v2353
        %v2710 = vsel %vm2568, -inf, %v2354
        %v2711 = vsel %vm2568, -inf, %v2355
        %v2712 = vsel %vm2568, -inf, %v2356
        %v2713 = vsel %vm2569, -inf, %v2357
        %v2714 = vsel %vm2569, -inf, %v2358
        %v2715 = vsel %vm2569, -inf, %v2359
        %v2716 = vsel %vm2569, -inf, %v2360
        %v2717 = vsel %vm2569, -inf, %v2361
        %v2718 = vsel %vm2569, -inf, %v2362
        %v2719 = vsel %vm2569, -inf, %v2363
        %v2720 = vsel %vm2569, -inf, %v2364
        %v2721 = vsel %vm2570, -inf, %v2365
        %v2722 = vsel %vm2570, -inf, %v2366
        %v2723 = vsel %vm2570, -inf, %v2367
        %v2724 = vsel %vm2570, -inf, %v2368
        %v2725 = vsel %vm2570, -inf, %v2369
        %v2726 = vsel %vm2570, -inf, %v2370
        %v2727 = vsel %vm2570, -inf, %v2371
        %v2728 = vsel %vm2570, -inf, %v2372
        %v2729 = vsel %vm2571, -inf, %v2373
        %v2730 = vsel %vm2571, -inf, %v2374
        %v2731 = vsel %vm2571, -inf, %v2375
        %v2732 = vsel %vm2571, -inf, %v2376
        %v2733 = vsel %vm2571, -inf, %v2377
        %v2734 = vsel %vm2571, -inf, %v2378
        %v2735 = vsel %vm2571, -inf, %v2379
        %v2736 = vsel %vm2571, -inf, %v2380
        %v2737 = vsel %vm2572, -inf, %v2381
        %v2738 = vsel %vm2572, -inf, %v2382
        %v2739 = vsel %vm2572, -inf, %v2383
        %v2740 = vsel %vm2572, -inf, %v2384
        %v2741 = vsel %vm2572, -inf, %v2385
        %v2742 = vsel %vm2572, -inf, %v2386
        %v2743 = vsel %vm2572, -inf, %v2387
        %v2744 = vsel %vm2572, -inf, %v2388
        %v2745 = vsel %vm2573, -inf, %v2389
        %v2746 = vsel %vm2573, -inf, %v2390
        %v2747 = vsel %vm2573, -inf, %v2391
        %v2748 = vsel %vm2573, -inf, %v2392
        %v2749 = vsel %vm2573, -inf, %v2393
        %v2750 = vsel %vm2573, -inf, %v2394
        %v2751 = vsel %vm2573, -inf, %v2395
        %v2752 = vsel %vm2573, -inf, %v2396
        %v2753 = vsel %vm2574, -inf, %v2397
        %v2754 = vsel %vm2574, -inf, %v2398
        %v2755 = vsel %vm2574, -inf, %v2399
        %v2756 = vsel %vm2574, -inf, %v2400
        %v2757 = vsel %vm2574, -inf, %v2401
        %v2758 = vsel %vm2574, -inf, %v2402
        %v2759 = vsel %vm2574, -inf, %v2403
        %v2760 = vsel %vm2574, -inf, %v2404
        %v2761 = vsel %vm2575, -inf, %v2405
        %v2762 = vsel %vm2575, -inf, %v2406
        %v2763 = vsel %vm2575, -inf, %v2407
        %v2764 = vsel %vm2575, -inf, %v2408
        %v2765 = vsel %vm2575, -inf, %v2409
        %v2766 = vsel %vm2575, -inf, %v2410
        %v2767 = vsel %vm2575, -inf, %v2411
        %v2768 = vsel %vm2575, -inf, %v2412
        %v2769 = vsel %vm2576, -inf, %v2413
        %v2770 = vsel %vm2576, -inf, %v2414
        %v2771 = vsel %vm2576, -inf, %v2415
        %v2772 = vsel %vm2576, -inf, %v2416
        %v2773 = vsel %vm2576, -inf, %v2417
        %v2774 = vsel %vm2576, -inf, %v2418
        %v2775 = vsel %vm2576, -inf, %v2419
        %v2776 = vsel %vm2576, -inf, %v2420
        %v2777 = vsel %vm2577, -inf, %v2421
        %v2778 = vsel %vm2577, -inf, %v2422
        %v2779 = vsel %vm2577, -inf, %v2423
        %v2780 = vsel %vm2577, -inf, %v2424
        %v2781 = vsel %vm2577, -inf, %v2425
        %v2782 = vsel %vm2577, -inf, %v2426
        %v2783 = vsel %vm2577, -inf, %v2427
        %v2784 = vsel %vm2577, -inf, %v2428
        %v2785 = vsel %vm2578, -inf, %v2429
        %v2786 = vsel %vm2578, -inf, %v2430
        %v2787 = vsel %vm2578, -inf, %v2431
        %v2788 = vsel %vm2578, -inf, %v2432
        %v2789 = vsel %vm2578, -inf, %v2433
        %v2790 = vsel %vm2578, -inf, %v2434
        %v2791 = vsel %vm2578, -inf, %v2435
        %v2792 = vsel %vm2578, -inf, %v2436
        %v2793 = vsel %vm2579, -inf, %v2437
        %v2794 = vsel %vm2579, -inf, %v2438
        %v2795 = vsel %vm2579, -inf, %v2439
        %v2796 = vsel %vm2579, -inf, %v2440
        %v2797 = vsel %vm2579, -inf, %v2441
        %v2798 = vsel %vm2579, -inf, %v2442
        %v2799 = vsel %vm2579, -inf, %v2443
        %v2800 = vsel %vm2579, -inf, %v2444
        %v2801 = vsel %vm2580, -inf, %v2445
        %v2802 = vsel %vm2580, -inf, %v2446
        %v2803 = vsel %vm2580, -inf, %v2447
        %v2804 = vsel %vm2580, -inf, %v2448
        %v2805 = vsel %vm2580, -inf, %v2449
        %v2806 = vsel %vm2580, -inf, %v2450
        %v2807 = vsel %vm2580, -inf, %v2451
        %v2808 = vsel %vm2580, -inf, %v2452
        %v2809 = vsel %vm2581, -inf, %v2453
        %v2810 = vsel %vm2581, -inf, %v2454
        %v2811 = vsel %vm2581, -inf, %v2455
        %v2812 = vsel %vm2581, -inf, %v2456
        %v2813 = vsel %vm2581, -inf, %v2457
        %v2814 = vsel %vm2581, -inf, %v2458
        %v2815 = vsel %vm2581, -inf, %v2459
        %v2816 = vsel %vm2581, -inf, %v2460
        %v2817 = vsel %vm2582, -inf, %v2461
        %v2818 = vsel %vm2582, -inf, %v2462
        %v2819 = vsel %vm2582, -inf, %v2463
        %v2820 = vsel %vm2582, -inf, %v2464
        %v2821 = vsel %vm2582, -inf, %v2465
        %v2822 = vsel %vm2582, -inf, %v2466
        %v2823 = vsel %vm2582, -inf, %v2467
        %v2824 = vsel %vm2582, -inf, %v2468
        %v2825 = vsel %vm2583, -inf, %v2469
        %v2826 = vsel %vm2583, -inf, %v2470
        %v2827 = vsel %vm2583, -inf, %v2471
        %v2828 = vsel %vm2583, -inf, %v2472
        %v2829 = vsel %vm2583, -inf, %v2473
        %v2830 = vsel %vm2583, -inf, %v2474
        %v2831 = vsel %vm2583, -inf, %v2475
        %v2832 = vsel %vm2583, -inf, %v2476
        %v2833 = vsel %vm2584, -inf, %v2477
        %v2834 = vsel %vm2584, -inf, %v2478
        %v2835 = vsel %vm2584, -inf, %v2479
        %v2836 = vsel %vm2584, -inf, %v2480
        %v2837 = vsel %vm2584, -inf, %v2481
        %v2838 = vsel %vm2584, -inf, %v2482
        %v2839 = vsel %vm2584, -inf, %v2483
        %v2840 = vsel %vm2584, -inf, %v2484
        %v2841 = vld [vmem:[#allocation2] sm:$0xff]
        %v2842 = vmax.f32 %v2585, %v2593
        %v2843 = vmax.f32 %v2842, %v2601
        %v2844 = vmax.f32 %v2843, %v2609
        %v2845 = vmax.f32 %v2844, %v2617
        %v2846 = vmax.f32 %v2845, %v2625
        %v2847 = vmax.f32 %v2846, %v2633
        %v2848 = vmax.f32 %v2847, %v2641
        %v2849 = vmax.f32 %v2848, %v2649
        %v2850 = vmax.f32 %v2849, %v2657
        %v2851 = vmax.f32 %v2850, %v2665
        %v2852 = vmax.f32 %v2851, %v2673
        %v2853 = vmax.f32 %v2852, %v2681
        %v2854 = vmax.f32 %v2853, %v2689
        %v2855 = vmax.f32 %v2854, %v2697
        %v2856 = vmax.f32 %v2855, %v2705
        %v2857 = vmax.f32 %v2856, %v2713
        %v2858 = vmax.f32 %v2857, %v2721
        %v2859 = vmax.f32 %v2858, %v2729
        %v2860 = vmax.f32 %v2859, %v2737
        %v2861 = vmax.f32 %v2860, %v2745
        %v2862 = vmax.f32 %v2861, %v2753
        %v2863 = vmax.f32 %v2862, %v2761
        %v2864 = vmax.f32 %v2863, %v2769
        %v2865 = vmax.f32 %v2864, %v2777
        %v2866 = vmax.f32 %v2865, %v2785
        %v2867 = vmax.f32 %v2866, %v2793
        %v2868 = vmax.f32 %v2867, %v2801
        %v2869 = vmax.f32 %v2868, %v2809
        %v2870 = vmax.f32 %v2869, %v2817
        %v2871 = vmax.f32 %v2870, %v2825
        %v2872 = vmax.f32 %v2871, %v2833
        %v2873 = vrot.slane %v2872, 4
        %v2874 = vmax.f32 %v2872, %v2873
        %v2875 = vrot.slane %v2874, 2
        %v2876 = vmax.f32 %v2874, %v2875
        %v2877 = vrot.slane %v2876, 1
        %v2878 = vmax.f32 %v2876, %v2877
        %v2879 = vmax.f32 %v2586, %v2594
        %v2880 = vmax.f32 %v2879, %v2602
        %v2881 = vmax.f32 %v2880, %v2610
        %v2882 = vmax.f32 %v2881, %v2618
        %v2883 = vmax.f32 %v2882, %v2626
        %v2884 = vmax.f32 %v2883, %v2634
        %v2885 = vmax.f32 %v2884, %v2642
        %v2886 = vmax.f32 %v2885, %v2650
        %v2887 = vmax.f32 %v2886, %v2658
        %v2888 = vmax.f32 %v2887, %v2666
        %v2889 = vmax.f32 %v2888, %v2674
        %v2890 = vmax.f32 %v2889, %v2682
        %v2891 = vmax.f32 %v2890, %v2690
        %v2892 = vmax.f32 %v2891, %v2698
        %v2893 = vmax.f32 %v2892, %v2706
        %v2894 = vmax.f32 %v2893, %v2714
        %v2895 = vmax.f32 %v2894, %v2722
        %v2896 = vmax.f32 %v2895, %v2730
        %v2897 = vmax.f32 %v2896, %v2738
        %v2898 = vmax.f32 %v2897, %v2746
        %v2899 = vmax.f32 %v2898, %v2754
        %v2900 = vmax.f32 %v2899, %v2762
        %v2901 = vmax.f32 %v2900, %v2770
        %v2902 = vmax.f32 %v2901, %v2778
        %v2903 = vmax.f32 %v2902, %v2786
        %v2904 = vmax.f32 %v2903, %v2794
        %v2905 = vmax.f32 %v2904, %v2802
        %v2906 = vmax.f32 %v2905, %v2810
        %v2907 = vmax.f32 %v2906, %v2818
        %v2908 = vmax.f32 %v2907, %v2826
        %v2909 = vmax.f32 %v2908, %v2834
        %v2910 = vrot.slane %v2909, 4
        %v2911 = vmax.f32 %v2909, %v2910
        %v2912 = vrot.slane %v2911, 2
        %v2913 = vmax.f32 %v2911, %v2912
        %v2914 = vrot.slane %v2913, 1
        %v2915 = vmax.f32 %v2913, %v2914
        %v2916 = vmax.f32 %v2587, %v2595
        %v2917 = vmax.f32 %v2916, %v2603
        %v2918 = vmax.f32 %v2917, %v2611
        %v2919 = vmax.f32 %v2918, %v2619
        %v2920 = vmax.f32 %v2919, %v2627
        %v2921 = vmax.f32 %v2920, %v2635
        %v2922 = vmax.f32 %v2921, %v2643
        %v2923 = vmax.f32 %v2922, %v2651
        %v2924 = vmax.f32 %v2923, %v2659
        %v2925 = vmax.f32 %v2924, %v2667
        %v2926 = vmax.f32 %v2925, %v2675
        %v2927 = vmax.f32 %v2926, %v2683
        %v2928 = vmax.f32 %v2927, %v2691
        %v2929 = vmax.f32 %v2928, %v2699
        %v2930 = vmax.f32 %v2929, %v2707
        %v2931 = vmax.f32 %v2930, %v2715
        %v2932 = vmax.f32 %v2931, %v2723
        %v2933 = vmax.f32 %v2932, %v2731
        %v2934 = vmax.f32 %v2933, %v2739
        %v2935 = vmax.f32 %v2934, %v2747
        %v2936 = vmax.f32 %v2935, %v2755
        %v2937 = vmax.f32 %v2936, %v2763
        %v2938 = vmax.f32 %v2937, %v2771
        %v2939 = vmax.f32 %v2938, %v2779
        %v2940 = vmax.f32 %v2939, %v2787
        %v2941 = vmax.f32 %v2940, %v2795
        %v2942 = vmax.f32 %v2941, %v2803
        %v2943 = vmax.f32 %v2942, %v2811
        %v2944 = vmax.f32 %v2943, %v2819
        %v2945 = vmax.f32 %v2944, %v2827
        %v2946 = vmax.f32 %v2945, %v2835
        %v2947 = vrot.slane %v2946, 4
        %v2948 = vmax.f32 %v2946, %v2947
        %v2949 = vrot.slane %v2948, 2
        %v2950 = vmax.f32 %v2948, %v2949
        %v2951 = vrot.slane %v2950, 1
        %v2952 = vmax.f32 %v2950, %v2951
        %v2953 = vmax.f32 %v2588, %v2596
        %v2954 = vmax.f32 %v2953, %v2604
        %v2955 = vmax.f32 %v2954, %v2612
        %v2956 = vmax.f32 %v2955, %v2620
        %v2957 = vmax.f32 %v2956, %v2628
        %v2958 = vmax.f32 %v2957, %v2636
        %v2959 = vmax.f32 %v2958, %v2644
        %v2960 = vmax.f32 %v2959, %v2652
        %v2961 = vmax.f32 %v2960, %v2660
        %v2962 = vmax.f32 %v2961, %v2668
        %v2963 = vmax.f32 %v2962, %v2676
        %v2964 = vmax.f32 %v2963, %v2684
        %v2965 = vmax.f32 %v2964, %v2692
        %v2966 = vmax.f32 %v2965, %v2700
        %v2967 = vmax.f32 %v2966, %v2708
        %v2968 = vmax.f32 %v2967, %v2716
        %v2969 = vmax.f32 %v2968, %v2724
        %v2970 = vmax.f32 %v2969, %v2732
        %v2971 = vmax.f32 %v2970, %v2740
        %v2972 = vmax.f32 %v2971, %v2748
        %v2973 = vmax.f32 %v2972, %v2756
        %v2974 = vmax.f32 %v2973, %v2764
        %v2975 = vmax.f32 %v2974, %v2772
        %v2976 = vmax.f32 %v2975, %v2780
        %v2977 = vmax.f32 %v2976, %v2788
        %v2978 = vmax.f32 %v2977, %v2796
        %v2979 = vmax.f32 %v2978, %v2804
        %v2980 = vmax.f32 %v2979, %v2812
        %v2981 = vmax.f32 %v2980, %v2820
        %v2982 = vmax.f32 %v2981, %v2828
        %v2983 = vmax.f32 %v2982, %v2836
        %v2984 = vrot.slane %v2983, 4
        %v2985 = vmax.f32 %v2983, %v2984
        %v2986 = vrot.slane %v2985, 2
        %v2987 = vmax.f32 %v2985, %v2986
        %v2988 = vrot.slane %v2987, 1
        %v2989 = vmax.f32 %v2987, %v2988
        %v2990 = vmax.f32 %v2589, %v2597
        %v2991 = vmax.f32 %v2990, %v2605
        %v2992 = vmax.f32 %v2991, %v2613
        %v2993 = vmax.f32 %v2992, %v2621
        %v2994 = vmax.f32 %v2993, %v2629
        %v2995 = vmax.f32 %v2994, %v2637
        %v2996 = vmax.f32 %v2995, %v2645
        %v2997 = vmax.f32 %v2996, %v2653
        %v2998 = vmax.f32 %v2997, %v2661
        %v2999 = vmax.f32 %v2998, %v2669
        %v3000 = vmax.f32 %v2999, %v2677
        %v3001 = vmax.f32 %v3000, %v2685
        %v3002 = vmax.f32 %v3001, %v2693
        %v3003 = vmax.f32 %v3002, %v2701
        %v3004 = vmax.f32 %v3003, %v2709
        %v3005 = vmax.f32 %v3004, %v2717
        %v3006 = vmax.f32 %v3005, %v2725
        %v3007 = vmax.f32 %v3006, %v2733
        %v3008 = vmax.f32 %v3007, %v2741
        %v3009 = vmax.f32 %v3008, %v2749
        %v3010 = vmax.f32 %v3009, %v2757
        %v3011 = vmax.f32 %v3010, %v2765
        %v3012 = vmax.f32 %v3011, %v2773
        %v3013 = vmax.f32 %v3012, %v2781
        %v3014 = vmax.f32 %v3013, %v2789
        %v3015 = vmax.f32 %v3014, %v2797
        %v3016 = vmax.f32 %v3015, %v2805
        %v3017 = vmax.f32 %v3016, %v2813
        %v3018 = vmax.f32 %v3017, %v2821
        %v3019 = vmax.f32 %v3018, %v2829
        %v3020 = vmax.f32 %v3019, %v2837
        %v3021 = vrot.slane %v3020, 4
        %v3022 = vmax.f32 %v3020, %v3021
        %v3023 = vrot.slane %v3022, 2
        %v3024 = vmax.f32 %v3022, %v3023
        %v3025 = vrot.slane %v3024, 1
        %v3026 = vmax.f32 %v3024, %v3025
        %v3027 = vmax.f32 %v2590, %v2598
        %v3028 = vmax.f32 %v3027, %v2606
        %v3029 = vmax.f32 %v3028, %v2614
        %v3030 = vmax.f32 %v3029, %v2622
        %v3031 = vmax.f32 %v3030, %v2630
        %v3032 = vmax.f32 %v3031, %v2638
        %v3033 = vmax.f32 %v3032, %v2646
        %v3034 = vmax.f32 %v3033, %v2654
        %v3035 = vmax.f32 %v3034, %v2662
        %v3036 = vmax.f32 %v3035, %v2670
        %v3037 = vmax.f32 %v3036, %v2678
        %v3038 = vmax.f32 %v3037, %v2686
        %v3039 = vmax.f32 %v3038, %v2694
        %v3040 = vmax.f32 %v3039, %v2702
        %v3041 = vmax.f32 %v3040, %v2710
        %v3042 = vmax.f32 %v3041, %v2718
        %v3043 = vmax.f32 %v3042, %v2726
        %v3044 = vmax.f32 %v3043, %v2734
        %v3045 = vmax.f32 %v3044, %v2742
        %v3046 = vmax.f32 %v3045, %v2750
        %v3047 = vmax.f32 %v3046, %v2758
        %v3048 = vmax.f32 %v3047, %v2766
        %v3049 = vmax.f32 %v3048, %v2774
        %v3050 = vmax.f32 %v3049, %v2782
        %v3051 = vmax.f32 %v3050, %v2790
        %v3052 = vmax.f32 %v3051, %v2798
        %v3053 = vmax.f32 %v3052, %v2806
        %v3054 = vmax.f32 %v3053, %v2814
        %v3055 = vmax.f32 %v3054, %v2822
        %v3056 = vmax.f32 %v3055, %v2830
        %v3057 = vmax.f32 %v3056, %v2838
        %v3058 = vrot.slane %v3057, 4
        %v3059 = vmax.f32 %v3057, %v3058
        %v3060 = vrot.slane %v3059, 2
        %v3061 = vmax.f32 %v3059, %v3060
        %v3062 = vrot.slane %v3061, 1
        %v3063 = vmax.f32 %v3061, %v3062
        %v3064 = vmax.f32 %v2591, %v2599
        %v3065 = vmax.f32 %v3064, %v2607
        %v3066 = vmax.f32 %v3065, %v2615
        %v3067 = vmax.f32 %v3066, %v2623
        %v3068 = vmax.f32 %v3067, %v2631
        %v3069 = vmax.f32 %v3068, %v2639
        %v3070 = vmax.f32 %v3069, %v2647
        %v3071 = vmax.f32 %v3070, %v2655
        %v3072 = vmax.f32 %v3071, %v2663
        %v3073 = vmax.f32 %v3072, %v2671
        %v3074 = vmax.f32 %v3073, %v2679
        %v3075 = vmax.f32 %v3074, %v2687
        %v3076 = vmax.f32 %v3075, %v2695
        %v3077 = vmax.f32 %v3076, %v2703
        %v3078 = vmax.f32 %v3077, %v2711
        %v3079 = vmax.f32 %v3078, %v2719
        %v3080 = vmax.f32 %v3079, %v2727
        %v3081 = vmax.f32 %v3080, %v2735
        %v3082 = vmax.f32 %v3081, %v2743
        %v3083 = vmax.f32 %v3082, %v2751
        %v3084 = vmax.f32 %v3083, %v2759
        %v3085 = vmax.f32 %v3084, %v2767
        %v3086 = vmax.f32 %v3085, %v2775
        %v3087 = vmax.f32 %v3086, %v2783
        %v3088 = vmax.f32 %v3087, %v2791
        %v3089 = vmax.f32 %v3088, %v2799
        %v3090 = vmax.f32 %v3089, %v2807
        %v3091 = vmax.f32 %v3090, %v2815
        %v3092 = vmax.f32 %v3091, %v2823
        %v3093 = vmax.f32 %v3092, %v2831
        %v3094 = vmax.f32 %v3093, %v2839
        %v3095 = vrot.slane %v3094, 4
        %v3096 = vmax.f32 %v3094, %v3095
        %v3097 = vrot.slane %v3096, 2
        %v3098 = vmax.f32 %v3096, %v3097
        %v3099 = vrot.slane %v3098, 1
        %v3100 = vmax.f32 %v3098, %v3099
        %v3101 = vmax.f32 %v2592, %v2600
        %v3102 = vmax.f32 %v3101, %v2608
        %v3103 = vmax.f32 %v3102, %v2616
        %v3104 = vmax.f32 %v3103, %v2624
        %v3105 = vmax.f32 %v3104, %v2632
        %v3106 = vmax.f32 %v3105, %v2640
        %v3107 = vmax.f32 %v3106, %v2648
        %v3108 = vmax.f32 %v3107, %v2656
        %v3109 = vmax.f32 %v3108, %v2664
        %v3110 = vmax.f32 %v3109, %v2672
        %v3111 = vmax.f32 %v3110, %v2680
        %v3112 = vmax.f32 %v3111, %v2688
        %v3113 = vmax.f32 %v3112, %v2696
        %v3114 = vmax.f32 %v3113, %v2704
        %v3115 = vmax.f32 %v3114, %v2712
        %v3116 = vmax.f32 %v3115, %v2720
        %v3117 = vmax.f32 %v3116, %v2728
        %v3118 = vmax.f32 %v3117, %v2736
        %v3119 = vmax.f32 %v3118, %v2744
        %v3120 = vmax.f32 %v3119, %v2752
        %v3121 = vmax.f32 %v3120, %v2760
        %v3122 = vmax.f32 %v3121, %v2768
        %v3123 = vmax.f32 %v3122, %v2776
        %v3124 = vmax.f32 %v3123, %v2784
        %v3125 = vmax.f32 %v3124, %v2792
        %v3126 = vmax.f32 %v3125, %v2800
        %v3127 = vmax.f32 %v3126, %v2808
        %v3128 = vmax.f32 %v3127, %v2816
        %v3129 = vmax.f32 %v3128, %v2824
        %v3130 = vmax.f32 %v3129, %v2832
        %v3131 = vmax.f32 %v3130, %v2840
        %v3132 = vrot.slane %v3131, 4
        %v3133 = vmax.f32 %v3131, %v3132
        %v3134 = vrot.slane %v3133, 2
        %v3135 = vmax.f32 %v3133, %v3134
        %v3136 = vrot.slane %v3135, 1
        %v3137 = vmax.f32 %v3135, %v3136
        %v3146 = vcombine.low %v2878, %v2915
        %v3147 = vcombine.low %v2952, %v2989
        %v3148 = vcombine.low %v3026, %v3063
        %v3149 = vcombine.low %v3100, %v3137
        %v3151 = vunpack.c.l.s4 1966171168
        %v3152 = vunpack.c.0.s8 %v3151
        %v3153 = vlaneseq
        %v3154 = vshrl.u32 %v3153, 7
        %v3155 = vsub.s32 %v3152, %v3154
        %v3156 = vrot.slane %v3146, %v3155
        %v3158 = vunpack.c.l.s4 1966171168
        %v3159 = vunpack.c.0.s8 %v3158
        %v3160 = vlaneseq
        %v3161 = vshrl.u32 %v3160, 7
        %v3162 = vsub.s32 %v3159, %v3161
        %v3163 = vrot.slane %v3147, %v3162
        %v3165 = vunpack.c.l.s4 1966171168
        %v3166 = vunpack.c.0.s8 %v3165
        %v3167 = vlaneseq
        %v3168 = vshrl.u32 %v3167, 7
        %v3169 = vsub.s32 %v3166, %v3168
        %v3170 = vrot.slane %v3148, %v3169
        %v3172 = vunpack.c.l.s4 1966171168
        %v3173 = vunpack.c.0.s8 %v3172
        %v3174 = vlaneseq
        %v3175 = vshrl.u32 %v3174, 7
        %v3176 = vsub.s32 %v3173, %v3175
        %v3177 = vrot.slane %v3149, %v3176
        %v3178 = vcombine.low %v3156, %v3163
        %v3179 = vcombine.low %v3170, %v3177
        %v3181 = vunpack.c.l.s4 1966171168
        %v3182 = vunpack.c.0.s8 %v3181
        %v3183 = vlaneseq
        %v3184 = vshrl.u32 %v3183, 7
        %v3185 = vsub.s32 %v3182, %v3184
        %v3186 = vrot.slane %v3178, %v3185
        %v3188 = vunpack.c.l.s4 1966171168
        %v3189 = vunpack.c.0.s8 %v3188
        %v3190 = vlaneseq
        %v3191 = vshrl.u32 %v3190, 7
        %v3192 = vsub.s32 %v3189, %v3191
        %v3193 = vrot.slane %v3179, %v3192
        %v3194 = vcombine.low %v3186, %v3193
        %v3196 = vmax.f32 %v2841, %v3194
        %3197 = vst [vmem:[#allocation2] sm:$0xff] %v3196
        // Predicated region
        $region65: #{pointnetfeat_forward.3} parent=47 // pred_check
          %p3198 = pneg %p344
        $region66: #{pointnetfeat_forward.3} parent=47 // pred_check_branch
          %3200 = sbr.rel (%p3198) target = $region68
        $region67: #{pointnetfeat_forward.3} parent=47 // pred_region
          %v3201 = vld [vmem:[#allocation2] sm:$0xff]
          %v3202 = vadd.f32 %v3201, 0.0
          %3203 = vst [vmem:[%s342] sm:$0xff] %v3202
        $region68: #{pointnetfeat_forward.3} parent=47 // pred_fallthru
          _
        %p3204 = scmp.lt.s32.totalorder %s24, 1
        %s3205 = scalar_select %p3204, %s24, 1
        %s3206 = smul.addr %s3205, 8
        %s3207 = scalar_lea.vmem %s7, %s3206
        // Predicated region
        $region69: #{pointnetfeat_forward.3} parent=47 // pred_check
          %p3208 = pneg %p204
        $region70: #{pointnetfeat_forward.3} parent=47 // pred_check_branch
          %3210 = sbr.rel (%p3208) target = $region72
        $region71: #{pointnetfeat_forward.3} parent=47 // pred_region
          _
        $region72: #{pointnetfeat_forward.3} parent=47 // pred_fallthru
          _
      $region48: #{pointnetfeat_forward.3} parent=5 // pred_fallthru
        _
      %p3211 = scmp.le.s32.totalorder 2, %s15
      // Predicated region
      $region73: #{pointnetfeat_forward.3} parent=5 // pred_check
        %p3212 = pneg %p3211
      $region74: #{pointnetfeat_forward.3} parent=5 // pred_check_branch
        %3214 = sbr.rel (%p3212) target = $region76
      $region75: #{pointnetfeat_forward.3} parent=5 // pred_region
        %s3215 = ssub.s32 %s15, 2
        // Predicated region
        $region77: #{pointnetfeat_forward.3} parent=75 // pred_check
          %p3216 = pneg %p210
        $region78: #{pointnetfeat_forward.3} parent=75 // pred_check_branch
          %3218 = sbr.rel (%p3216) target = $region80
        $region79: #{pointnetfeat_forward.3} parent=75 // pred_region
          %p3219 = scmp.lt.s32.totalorder %s26, 1
          %s3220 = scalar_select %p3219, %s26, 1
          %s3221 = smul.addr %s3220, 8
          %s3222 = scalar_lea.vmem %s7, %s3221
        $region80: #{pointnetfeat_forward.3} parent=75 // pred_fallthru
          _
      $region76: #{pointnetfeat_forward.3} parent=5 // pred_fallthru
        _
    $region6: #{pointnetfeat_forward.3} parent=1 // loop_footer
      %s19 = sadd.s32 1, %s15
    $region7: #{pointnetfeat_forward.3} parent=1 // loop_footer_branch
      %14 = sbr.rel target = $region3
    $region8: #{pointnetfeat_forward.3} parent=1 // loop_exit
      _
    %3223 = vsyncpa [#allocation4], 1
    %s3224 = scalar_lea.sflag [#allocation4], 1
    %3225 = vsyncpa %s3224, 1
    %3226 = vsyncpa [#allocation6], 1

// kernel: pointnetfeat_forward.4
$region0: #{pointnetfeat_forward.4}
  #allocation0 [shape = 'u32[]', space=smem, size = 0x4, offset = 0x4, fixed_abs, tag = 'smem constant byte address 0x4 - core index']
  #allocation1 [shape = 'u32[144,128]{1,0:T(1,128)}', space=vmem, size = 0x12000, scoped, tag = 'internal scratch']
  %s0 = inlined_call_operand.vmem [shape: f32[2,1024], index: 0, kind: input, shape index: {}]
  %s1 = inlined_call_operand.vmem [shape: bf16[1024,512], index: 1, kind: input, shape index: {}]
  %s2 = inlined_call_operand.vmem [shape: f32[1,512], index: 2, kind: input, shape index: {}]
  %s3 = inlined_call_operand.vmem [shape: bf16[512,256], index: 3, kind: input, shape index: {}]
  %s4 = inlined_call_operand.vmem [shape: f32[1,256], index: 4, kind: input, shape index: {}]
  %s5 = inlined_call_operand.vmem [shape: bf16[256,128], index: 5, kind: input, shape index: {}]
  %s6 = inlined_call_operand.vmem [shape: f32[1,128], index: 6, kind: input, shape index: {}]
  %s7 = inlined_call_operand.vmem [shape: f32[2,128], index: 7, kind: output, shape index: {}]
  %s8 = sld [smem:[#allocation0]]
  $region38: #{pointnetfeat_forward.4} parent=0
    _
  %s10 = ssub.s32 1, %s8
  %s11 = scalar_select 0, %s10, %s8
  // Predicated region
  $region2: #{pointnetfeat_forward.4} parent=0 // pred_check
    _
  $region3: #{pointnetfeat_forward.4} parent=0 // pred_check_branch
    %13 = sbr.rel (0) target = $region5
  $region4: #{pointnetfeat_forward.4} parent=0 // pred_region
    _
  $region5: #{pointnetfeat_forward.4} parent=0 // pred_fallthru
    _
  // Predicated region
  $region6: #{pointnetfeat_forward.4} parent=0 // pred_check
    _
  $region7: #{pointnetfeat_forward.4} parent=0 // pred_check_branch
    %15 = sbr.rel (0) target = $region9
  $region8: #{pointnetfeat_forward.4} parent=0 // pred_region
    _
  $region9: #{pointnetfeat_forward.4} parent=0 // pred_fallthru
    _
  // Predicated region
  $region10: #{pointnetfeat_forward.4} parent=0 // pred_check
    _
  $region11: #{pointnetfeat_forward.4} parent=0 // pred_check_branch
    %17 = sbr.rel (0) target = $region13
  $region12: #{pointnetfeat_forward.4} parent=0 // pred_region
    _
  $region13: #{pointnetfeat_forward.4} parent=0 // pred_fallthru
    _
  // Predicated region
  $region14: #{pointnetfeat_forward.4} parent=0 // pred_check
    _
  $region15: #{pointnetfeat_forward.4} parent=0 // pred_check_branch
    %19 = sbr.rel (0) target = $region17
  $region16: #{pointnetfeat_forward.4} parent=0 // pred_region
    _
  $region17: #{pointnetfeat_forward.4} parent=0 // pred_fallthru
    _
  // Predicated region
  $region18: #{pointnetfeat_forward.4} parent=0 // pred_check
    _
  $region19: #{pointnetfeat_forward.4} parent=0 // pred_check_branch
    %21 = sbr.rel (0) target = $region21
  $region20: #{pointnetfeat_forward.4} parent=0 // pred_region
    _
  $region21: #{pointnetfeat_forward.4} parent=0 // pred_fallthru
    _
  // Predicated region
  $region22: #{pointnetfeat_forward.4} parent=0 // pred_check
    _
  $region23: #{pointnetfeat_forward.4} parent=0 // pred_check_branch
    %23 = sbr.rel (0) target = $region25
  $region24: #{pointnetfeat_forward.4} parent=0 // pred_region
    _
  $region25: #{pointnetfeat_forward.4} parent=0 // pred_fallthru
    _
  // Predicated region
  $region26: #{pointnetfeat_forward.4} parent=0 // pred_check
    _
  $region27: #{pointnetfeat_forward.4} parent=0 // pred_check_branch
    %25 = sbr.rel (0) target = $region29
  $region28: #{pointnetfeat_forward.4} parent=0 // pred_region
    _
  $region29: #{pointnetfeat_forward.4} parent=0 // pred_fallthru
    _
  %v27 = vld [vmem:[%s0] sm:$0xff]
  %v28 = vld [vmem:[%s0 + $0x8] sm:$0xff]
  %v31 = vcombine.high %v27, %v27
  %v33 = vunpack.c.l.s4 1983009808
  %v34 = vunpack.c.0.s8 %v33
  %v35 = vlaneseq
  %v36 = vshrl.u32 %v35, 7
  %v37 = vsub.s32 %v34, %v36
  %v38 = vrot.slane %v27, %v37
  %v40 = vunpack.c.l.s4 1983009808
  %v41 = vunpack.c.0.s8 %v40
  %v42 = vlaneseq
  %v43 = vshrl.u32 %v42, 7
  %v44 = vsub.s32 %v41, %v43
  %v45 = vrot.slane %v31, %v44
  %v46 = vcombine.high %v38, %v38
  %v47 = vcombine.high %v45, %v45
  %v48 = vcombine.high %v28, %v28
  %v50 = vunpack.c.l.s4 1983009808
  %v51 = vunpack.c.0.s8 %v50
  %v52 = vlaneseq
  %v53 = vshrl.u32 %v52, 7
  %v54 = vsub.s32 %v51, %v53
  %v55 = vrot.slane %v28, %v54
  %v57 = vunpack.c.l.s4 1983009808
  %v58 = vunpack.c.0.s8 %v57
  %v59 = vlaneseq
  %v60 = vshrl.u32 %v59, 7
  %v61 = vsub.s32 %v58, %v60
  %v62 = vrot.slane %v48, %v61
  %v63 = vcombine.high %v55, %v55
  %v64 = vcombine.high %v62, %v62
  %v73 = vpack.c.bf16 %v38, %v38
  %v74 = vpack.c.bf16 %v46, %v46
  %v75 = vpack.c.bf16 %v45, %v45
  %v76 = vpack.c.bf16 %v47, %v47
  %v77 = vpack.c.bf16 %v55, %v55
  %v78 = vpack.c.bf16 %v63, %v63
  %v79 = vpack.c.bf16 %v62, %v62
  %v80 = vpack.c.bf16 %v64, %v64
  %v81 = vld [vmem:[%s1] sm:$0xff]
  %v82 = vld [vmem:[%s1 + $0x8] sm:$0xff]
  %v83 = vld [vmem:[%s1 + $0x10] sm:$0xff]
  %v84 = vld [vmem:[%s1 + $0x18] sm:$0xff]
  %v85 = vld [vmem:[%s1 + $0x20] sm:$0xff]
  %v86 = vld [vmem:[%s1 + $0x28] sm:$0xff]
  %v87 = vld [vmem:[%s1 + $0x30] sm:$0xff]
  %v88 = vld [vmem:[%s1 + $0x38] sm:$0xff]
  %v89 = vld [vmem:[%s1 + $0x40] sm:$0xff]
  %v90 = vld [vmem:[%s1 + $0x48] sm:$0xff]
  %v91 = vld [vmem:[%s1 + $0x50] sm:$0xff]
  %v92 = vld [vmem:[%s1 + $0x58] sm:$0xff]
  %v93 = vld [vmem:[%s1 + $0x60] sm:$0xff]
  %v94 = vld [vmem:[%s1 + $0x68] sm:$0xff]
  %v95 = vld [vmem:[%s1 + $0x70] sm:$0xff]
  %v96 = vld [vmem:[%s1 + $0x78] sm:$0xff]
  %v97 = vld [vmem:[%s1 + $0x80] sm:$0xff]
  %v98 = vld [vmem:[%s1 + $0x88] sm:$0xff]
  %v99 = vld [vmem:[%s1 + $0x90] sm:$0xff]
  %v100 = vld [vmem:[%s1 + $0x98] sm:$0xff]
  %v101 = vld [vmem:[%s1 + $0xa0] sm:$0xff]
  %v102 = vld [vmem:[%s1 + $0xa8] sm:$0xff]
  %v103 = vld [vmem:[%s1 + $0xb0] sm:$0xff]
  %v104 = vld [vmem:[%s1 + $0xb8] sm:$0xff]
  %v105 = vld [vmem:[%s1 + $0xc0] sm:$0xff]
  %v106 = vld [vmem:[%s1 + $0xc8] sm:$0xff]
  %v107 = vld [vmem:[%s1 + $0xd0] sm:$0xff]
  %v108 = vld [vmem:[%s1 + $0xd8] sm:$0xff]
  %v109 = vld [vmem:[%s1 + $0xe0] sm:$0xff]
  %v110 = vld [vmem:[%s1 + $0xe8] sm:$0xff]
  %v111 = vld [vmem:[%s1 + $0xf0] sm:$0xff]
  %v112 = vld [vmem:[%s1 + $0xf8] sm:$0xff]
  %v113 = vld [vmem:[%s1 + $0x100] sm:$0xff]
  %v114 = vld [vmem:[%s1 + $0x108] sm:$0xff]
  %v115 = vld [vmem:[%s1 + $0x110] sm:$0xff]
  %v116 = vld [vmem:[%s1 + $0x118] sm:$0xff]
  %v117 = vld [vmem:[%s1 + $0x120] sm:$0xff]
  %v118 = vld [vmem:[%s1 + $0x128] sm:$0xff]
  %v119 = vld [vmem:[%s1 + $0x130] sm:$0xff]
  %v120 = vld [vmem:[%s1 + $0x138] sm:$0xff]
  %v121 = vld [vmem:[%s1 + $0x140] sm:$0xff]
  %v122 = vld [vmem:[%s1 + $0x148] sm:$0xff]
  %v123 = vld [vmem:[%s1 + $0x150] sm:$0xff]
  %v124 = vld [vmem:[%s1 + $0x158] sm:$0xff]
  %v125 = vld [vmem:[%s1 + $0x160] sm:$0xff]
  %v126 = vld [vmem:[%s1 + $0x168] sm:$0xff]
  %v127 = vld [vmem:[%s1 + $0x170] sm:$0xff]
  %v128 = vld [vmem:[%s1 + $0x178] sm:$0xff]
  %v129 = vld [vmem:[%s1 + $0x180] sm:$0xff]
  %v130 = vld [vmem:[%s1 + $0x188] sm:$0xff]
  %v131 = vld [vmem:[%s1 + $0x190] sm:$0xff]
  %v132 = vld [vmem:[%s1 + $0x198] sm:$0xff]
  %v133 = vld [vmem:[%s1 + $0x1a0] sm:$0xff]
  %v134 = vld [vmem:[%s1 + $0x1a8] sm:$0xff]
  %v135 = vld [vmem:[%s1 + $0x1b0] sm:$0xff]
  %v136 = vld [vmem:[%s1 + $0x1b8] sm:$0xff]
  %v137 = vld [vmem:[%s1 + $0x1c0] sm:$0xff]
  %v138 = vld [vmem:[%s1 + $0x1c8] sm:$0xff]
  %v139 = vld [vmem:[%s1 + $0x1d0] sm:$0xff]
  %v140 = vld [vmem:[%s1 + $0x1d8] sm:$0xff]
  %v141 = vld [vmem:[%s1 + $0x1e0] sm:$0xff]
  %v142 = vld [vmem:[%s1 + $0x1e8] sm:$0xff]
  %v143 = vld [vmem:[%s1 + $0x1f0] sm:$0xff]
  %v144 = vld [vmem:[%s1 + $0x1f8] sm:$0xff]
  %v145 = vld [vmem:[%s1 + $0x200] sm:$0xff]
  %v146 = vld [vmem:[%s1 + $0x208] sm:$0xff]
  %v147 = vld [vmem:[%s1 + $0x210] sm:$0xff]
  %v148 = vld [vmem:[%s1 + $0x218] sm:$0xff]
  %v149 = vld [vmem:[%s1 + $0x220] sm:$0xff]
  %v150 = vld [vmem:[%s1 + $0x228] sm:$0xff]
  %v151 = vld [vmem:[%s1 + $0x230] sm:$0xff]
  %v152 = vld [vmem:[%s1 + $0x238] sm:$0xff]
  %v153 = vld [vmem:[%s1 + $0x240] sm:$0xff]
  %v154 = vld [vmem:[%s1 + $0x248] sm:$0xff]
  %v155 = vld [vmem:[%s1 + $0x250] sm:$0xff]
  %v156 = vld [vmem:[%s1 + $0x258] sm:$0xff]
  %v157 = vld [vmem:[%s1 + $0x260] sm:$0xff]
  %v158 = vld [vmem:[%s1 + $0x268] sm:$0xff]
  %v159 = vld [vmem:[%s1 + $0x270] sm:$0xff]
  %v160 = vld [vmem:[%s1 + $0x278] sm:$0xff]
  %v161 = vld [vmem:[%s1 + $0x280] sm:$0xff]
  %v162 = vld [vmem:[%s1 + $0x288] sm:$0xff]
  %v163 = vld [vmem:[%s1 + $0x290] sm:$0xff]
  %v164 = vld [vmem:[%s1 + $0x298] sm:$0xff]
  %v165 = vld [vmem:[%s1 + $0x2a0] sm:$0xff]
  %v166 = vld [vmem:[%s1 + $0x2a8] sm:$0xff]
  %v167 = vld [vmem:[%s1 + $0x2b0] sm:$0xff]
  %v168 = vld [vmem:[%s1 + $0x2b8] sm:$0xff]
  %v169 = vld [vmem:[%s1 + $0x2c0] sm:$0xff]
  %v170 = vld [vmem:[%s1 + $0x2c8] sm:$0xff]
  %v171 = vld [vmem:[%s1 + $0x2d0] sm:$0xff]
  %v172 = vld [vmem:[%s1 + $0x2d8] sm:$0xff]
  %v173 = vld [vmem:[%s1 + $0x2e0] sm:$0xff]
  %v174 = vld [vmem:[%s1 + $0x2e8] sm:$0xff]
  %v175 = vld [vmem:[%s1 + $0x2f0] sm:$0xff]
  %v176 = vld [vmem:[%s1 + $0x2f8] sm:$0xff]
  %v177 = vld [vmem:[%s1 + $0x300] sm:$0xff]
  %v178 = vld [vmem:[%s1 + $0x308] sm:$0xff]
  %v179 = vld [vmem:[%s1 + $0x310] sm:$0xff]
  %v180 = vld [vmem:[%s1 + $0x318] sm:$0xff]
  %v181 = vld [vmem:[%s1 + $0x320] sm:$0xff]
  %v182 = vld [vmem:[%s1 + $0x328] sm:$0xff]
  %v183 = vld [vmem:[%s1 + $0x330] sm:$0xff]
  %v184 = vld [vmem:[%s1 + $0x338] sm:$0xff]
  %v185 = vld [vmem:[%s1 + $0x340] sm:$0xff]
  %v186 = vld [vmem:[%s1 + $0x348] sm:$0xff]
  %v187 = vld [vmem:[%s1 + $0x350] sm:$0xff]
  %v188 = vld [vmem:[%s1 + $0x358] sm:$0xff]
  %v189 = vld [vmem:[%s1 + $0x360] sm:$0xff]
  %v190 = vld [vmem:[%s1 + $0x368] sm:$0xff]
  %v191 = vld [vmem:[%s1 + $0x370] sm:$0xff]
  %v192 = vld [vmem:[%s1 + $0x378] sm:$0xff]
  %v193 = vld [vmem:[%s1 + $0x380] sm:$0xff]
  %v194 = vld [vmem:[%s1 + $0x388] sm:$0xff]
  %v195 = vld [vmem:[%s1 + $0x390] sm:$0xff]
  %v196 = vld [vmem:[%s1 + $0x398] sm:$0xff]
  %v197 = vld [vmem:[%s1 + $0x3a0] sm:$0xff]
  %v198 = vld [vmem:[%s1 + $0x3a8] sm:$0xff]
  %v199 = vld [vmem:[%s1 + $0x3b0] sm:$0xff]
  %v200 = vld [vmem:[%s1 + $0x3b8] sm:$0xff]
  %v201 = vld [vmem:[%s1 + $0x3c0] sm:$0xff]
  %v202 = vld [vmem:[%s1 + $0x3c8] sm:$0xff]
  %v203 = vld [vmem:[%s1 + $0x3d0] sm:$0xff]
  %v204 = vld [vmem:[%s1 + $0x3d8] sm:$0xff]
  %v205 = vld [vmem:[%s1 + $0x3e0] sm:$0xff]
  %v206 = vld [vmem:[%s1 + $0x3e8] sm:$0xff]
  %v207 = vld [vmem:[%s1 + $0x3f0] sm:$0xff]
  %v208 = vld [vmem:[%s1 + $0x3f8] sm:$0xff]
  %v209 = vld [vmem:[%s1 + $0x400] sm:$0xff]
  %v210 = vld [vmem:[%s1 + $0x408] sm:$0xff]
  %v211 = vld [vmem:[%s1 + $0x410] sm:$0xff]
  %v212 = vld [vmem:[%s1 + $0x418] sm:$0xff]
  %v213 = vld [vmem:[%s1 + $0x420] sm:$0xff]
  %v214 = vld [vmem:[%s1 + $0x428] sm:$0xff]
  %v215 = vld [vmem:[%s1 + $0x430] sm:$0xff]
  %v216 = vld [vmem:[%s1 + $0x438] sm:$0xff]
  %v217 = vld [vmem:[%s1 + $0x440] sm:$0xff]
  %v218 = vld [vmem:[%s1 + $0x448] sm:$0xff]
  %v219 = vld [vmem:[%s1 + $0x450] sm:$0xff]
  %v220 = vld [vmem:[%s1 + $0x458] sm:$0xff]
  %v221 = vld [vmem:[%s1 + $0x460] sm:$0xff]
  %v222 = vld [vmem:[%s1 + $0x468] sm:$0xff]
  %v223 = vld [vmem:[%s1 + $0x470] sm:$0xff]
  %v224 = vld [vmem:[%s1 + $0x478] sm:$0xff]
  %v225 = vld [vmem:[%s1 + $0x480] sm:$0xff]
  %v226 = vld [vmem:[%s1 + $0x488] sm:$0xff]
  %v227 = vld [vmem:[%s1 + $0x490] sm:$0xff]
  %v228 = vld [vmem:[%s1 + $0x498] sm:$0xff]
  %v229 = vld [vmem:[%s1 + $0x4a0] sm:$0xff]
  %v230 = vld [vmem:[%s1 + $0x4a8] sm:$0xff]
  %v231 = vld [vmem:[%s1 + $0x4b0] sm:$0xff]
  %v232 = vld [vmem:[%s1 + $0x4b8] sm:$0xff]
  %v233 = vld [vmem:[%s1 + $0x4c0] sm:$0xff]
  %v234 = vld [vmem:[%s1 + $0x4c8] sm:$0xff]
  %v235 = vld [vmem:[%s1 + $0x4d0] sm:$0xff]
  %v236 = vld [vmem:[%s1 + $0x4d8] sm:$0xff]
  %v237 = vld [vmem:[%s1 + $0x4e0] sm:$0xff]
  %v238 = vld [vmem:[%s1 + $0x4e8] sm:$0xff]
  %v239 = vld [vmem:[%s1 + $0x4f0] sm:$0xff]
  %v240 = vld [vmem:[%s1 + $0x4f8] sm:$0xff]
  %v241 = vld [vmem:[%s1 + $0x500] sm:$0xff]
  %v242 = vld [vmem:[%s1 + $0x508] sm:$0xff]
  %v243 = vld [vmem:[%s1 + $0x510] sm:$0xff]
  %v244 = vld [vmem:[%s1 + $0x518] sm:$0xff]
  %v245 = vld [vmem:[%s1 + $0x520] sm:$0xff]
  %v246 = vld [vmem:[%s1 + $0x528] sm:$0xff]
  %v247 = vld [vmem:[%s1 + $0x530] sm:$0xff]
  %v248 = vld [vmem:[%s1 + $0x538] sm:$0xff]
  %v249 = vld [vmem:[%s1 + $0x540] sm:$0xff]
  %v250 = vld [vmem:[%s1 + $0x548] sm:$0xff]
  %v251 = vld [vmem:[%s1 + $0x550] sm:$0xff]
  %v252 = vld [vmem:[%s1 + $0x558] sm:$0xff]
  %v253 = vld [vmem:[%s1 + $0x560] sm:$0xff]
  %v254 = vld [vmem:[%s1 + $0x568] sm:$0xff]
  %v255 = vld [vmem:[%s1 + $0x570] sm:$0xff]
  %v256 = vld [vmem:[%s1 + $0x578] sm:$0xff]
  %v257 = vld [vmem:[%s1 + $0x580] sm:$0xff]
  %v258 = vld [vmem:[%s1 + $0x588] sm:$0xff]
  %v259 = vld [vmem:[%s1 + $0x590] sm:$0xff]
  %v260 = vld [vmem:[%s1 + $0x598] sm:$0xff]
  %v261 = vld [vmem:[%s1 + $0x5a0] sm:$0xff]
  %v262 = vld [vmem:[%s1 + $0x5a8] sm:$0xff]
  %v263 = vld [vmem:[%s1 + $0x5b0] sm:$0xff]
  %v264 = vld [vmem:[%s1 + $0x5b8] sm:$0xff]
  %v265 = vld [vmem:[%s1 + $0x5c0] sm:$0xff]
  %v266 = vld [vmem:[%s1 + $0x5c8] sm:$0xff]
  %v267 = vld [vmem:[%s1 + $0x5d0] sm:$0xff]
  %v268 = vld [vmem:[%s1 + $0x5d8] sm:$0xff]
  %v269 = vld [vmem:[%s1 + $0x5e0] sm:$0xff]
  %v270 = vld [vmem:[%s1 + $0x5e8] sm:$0xff]
  %v271 = vld [vmem:[%s1 + $0x5f0] sm:$0xff]
  %v272 = vld [vmem:[%s1 + $0x5f8] sm:$0xff]
  %v273 = vld [vmem:[%s1 + $0x600] sm:$0xff]
  %v274 = vld [vmem:[%s1 + $0x608] sm:$0xff]
  %v275 = vld [vmem:[%s1 + $0x610] sm:$0xff]
  %v276 = vld [vmem:[%s1 + $0x618] sm:$0xff]
  %v277 = vld [vmem:[%s1 + $0x620] sm:$0xff]
  %v278 = vld [vmem:[%s1 + $0x628] sm:$0xff]
  %v279 = vld [vmem:[%s1 + $0x630] sm:$0xff]
  %v280 = vld [vmem:[%s1 + $0x638] sm:$0xff]
  %v281 = vld [vmem:[%s1 + $0x640] sm:$0xff]
  %v282 = vld [vmem:[%s1 + $0x648] sm:$0xff]
  %v283 = vld [vmem:[%s1 + $0x650] sm:$0xff]
  %v284 = vld [vmem:[%s1 + $0x658] sm:$0xff]
  %v285 = vld [vmem:[%s1 + $0x660] sm:$0xff]
  %v286 = vld [vmem:[%s1 + $0x668] sm:$0xff]
  %v287 = vld [vmem:[%s1 + $0x670] sm:$0xff]
  %v288 = vld [vmem:[%s1 + $0x678] sm:$0xff]
  %v289 = vld [vmem:[%s1 + $0x680] sm:$0xff]
  %v290 = vld [vmem:[%s1 + $0x688] sm:$0xff]
  %v291 = vld [vmem:[%s1 + $0x690] sm:$0xff]
  %v292 = vld [vmem:[%s1 + $0x698] sm:$0xff]
  %v293 = vld [vmem:[%s1 + $0x6a0] sm:$0xff]
  %v294 = vld [vmem:[%s1 + $0x6a8] sm:$0xff]
  %v295 = vld [vmem:[%s1 + $0x6b0] sm:$0xff]
  %v296 = vld [vmem:[%s1 + $0x6b8] sm:$0xff]
  %v297 = vld [vmem:[%s1 + $0x6c0] sm:$0xff]
  %v298 = vld [vmem:[%s1 + $0x6c8] sm:$0xff]
  %v299 = vld [vmem:[%s1 + $0x6d0] sm:$0xff]
  %v300 = vld [vmem:[%s1 + $0x6d8] sm:$0xff]
  %v301 = vld [vmem:[%s1 + $0x6e0] sm:$0xff]
  %v302 = vld [vmem:[%s1 + $0x6e8] sm:$0xff]
  %v303 = vld [vmem:[%s1 + $0x6f0] sm:$0xff]
  %v304 = vld [vmem:[%s1 + $0x6f8] sm:$0xff]
  %v305 = vld [vmem:[%s1 + $0x700] sm:$0xff]
  %v306 = vld [vmem:[%s1 + $0x708] sm:$0xff]
  %v307 = vld [vmem:[%s1 + $0x710] sm:$0xff]
  %v308 = vld [vmem:[%s1 + $0x718] sm:$0xff]
  %v309 = vld [vmem:[%s1 + $0x720] sm:$0xff]
  %v310 = vld [vmem:[%s1 + $0x728] sm:$0xff]
  %v311 = vld [vmem:[%s1 + $0x730] sm:$0xff]
  %v312 = vld [vmem:[%s1 + $0x738] sm:$0xff]
  %v313 = vld [vmem:[%s1 + $0x740] sm:$0xff]
  %v314 = vld [vmem:[%s1 + $0x748] sm:$0xff]
  %v315 = vld [vmem:[%s1 + $0x750] sm:$0xff]
  %v316 = vld [vmem:[%s1 + $0x758] sm:$0xff]
  %v317 = vld [vmem:[%s1 + $0x760] sm:$0xff]
  %v318 = vld [vmem:[%s1 + $0x768] sm:$0xff]
  %v319 = vld [vmem:[%s1 + $0x770] sm:$0xff]
  %v320 = vld [vmem:[%s1 + $0x778] sm:$0xff]
  %v321 = vld [vmem:[%s1 + $0x780] sm:$0xff]
  %v322 = vld [vmem:[%s1 + $0x788] sm:$0xff]
  %v323 = vld [vmem:[%s1 + $0x790] sm:$0xff]
  %v324 = vld [vmem:[%s1 + $0x798] sm:$0xff]
  %v325 = vld [vmem:[%s1 + $0x7a0] sm:$0xff]
  %v326 = vld [vmem:[%s1 + $0x7a8] sm:$0xff]
  %v327 = vld [vmem:[%s1 + $0x7b0] sm:$0xff]
  %v328 = vld [vmem:[%s1 + $0x7b8] sm:$0xff]
  %v329 = vld [vmem:[%s1 + $0x7c0] sm:$0xff]
  %v330 = vld [vmem:[%s1 + $0x7c8] sm:$0xff]
  %v331 = vld [vmem:[%s1 + $0x7d0] sm:$0xff]
  %v332 = vld [vmem:[%s1 + $0x7d8] sm:$0xff]
  %v333 = vld [vmem:[%s1 + $0x7e0] sm:$0xff]
  %v334 = vld [vmem:[%s1 + $0x7e8] sm:$0xff]
  %v335 = vld [vmem:[%s1 + $0x7f0] sm:$0xff]
  %v336 = vld [vmem:[%s1 + $0x7f8] sm:$0xff]
  %v337 = vld [vmem:[%s2] sm:$0xf]
  %v339 = vlaneseq
  %v340 = vshrl.u32 %v339, 7
  %v341 = vsub.s32 0, %v340
  %v342 = vrot.slane %v337, %v341
  %v343 = vlaneseq
  %v344 = vshrl.u32 %v343, 7
  %v345 = vsub.s32 1, %v344
  %v346 = vrot.slane %v337, %v345
  %v347 = vlaneseq
  %v348 = vshrl.u32 %v347, 7
  %v349 = vsub.s32 2, %v348
  %v350 = vrot.slane %v337, %v349
  %v351 = vlaneseq
  %v352 = vshrl.u32 %v351, 7
  %v353 = vsub.s32 3, %v352
  %v354 = vrot.slane %v337, %v353
  %v615 = vunpack.c.l.b16 %v81
  %v616 = vunpack.c.h.b16 %v81
  %v617 = vunpack.c.l.b16 %v82
  %v618 = vunpack.c.h.b16 %v82
  %v619 = vunpack.c.l.b16 %v83
  %v620 = vunpack.c.h.b16 %v83
  %v621 = vunpack.c.l.b16 %v84
  %v622 = vunpack.c.h.b16 %v84
  %v623 = vunpack.c.l.b16 %v85
  %v624 = vunpack.c.h.b16 %v85
  %v625 = vunpack.c.l.b16 %v86
  %v626 = vunpack.c.h.b16 %v86
  %v627 = vunpack.c.l.b16 %v87
  %v628 = vunpack.c.h.b16 %v87
  %v629 = vunpack.c.l.b16 %v88
  %v630 = vunpack.c.h.b16 %v88
  %v631 = vunpack.c.l.b16 %v89
  %v632 = vunpack.c.h.b16 %v89
  %v633 = vunpack.c.l.b16 %v90
  %v634 = vunpack.c.h.b16 %v90
  %v635 = vunpack.c.l.b16 %v91
  %v636 = vunpack.c.h.b16 %v91
  %v637 = vunpack.c.l.b16 %v92
  %v638 = vunpack.c.h.b16 %v92
  %v639 = vunpack.c.l.b16 %v93
  %v640 = vunpack.c.h.b16 %v93
  %v641 = vunpack.c.l.b16 %v94
  %v642 = vunpack.c.h.b16 %v94
  %v643 = vunpack.c.l.b16 %v95
  %v644 = vunpack.c.h.b16 %v95
  %v645 = vunpack.c.l.b16 %v96
  %v646 = vunpack.c.h.b16 %v96
  %v647 = vunpack.c.l.b16 %v97
  %v648 = vunpack.c.h.b16 %v97
  %v649 = vunpack.c.l.b16 %v98
  %v650 = vunpack.c.h.b16 %v98
  %v651 = vunpack.c.l.b16 %v99
  %v652 = vunpack.c.h.b16 %v99
  %v653 = vunpack.c.l.b16 %v100
  %v654 = vunpack.c.h.b16 %v100
  %v655 = vunpack.c.l.b16 %v101
  %v656 = vunpack.c.h.b16 %v101
  %v657 = vunpack.c.l.b16 %v102
  %v658 = vunpack.c.h.b16 %v102
  %v659 = vunpack.c.l.b16 %v103
  %v660 = vunpack.c.h.b16 %v103
  %v661 = vunpack.c.l.b16 %v104
  %v662 = vunpack.c.h.b16 %v104
  %v663 = vunpack.c.l.b16 %v105
  %v664 = vunpack.c.h.b16 %v105
  %v665 = vunpack.c.l.b16 %v106
  %v666 = vunpack.c.h.b16 %v106
  %v667 = vunpack.c.l.b16 %v107
  %v668 = vunpack.c.h.b16 %v107
  %v669 = vunpack.c.l.b16 %v108
  %v670 = vunpack.c.h.b16 %v108
  %v671 = vunpack.c.l.b16 %v109
  %v672 = vunpack.c.h.b16 %v109
  %v673 = vunpack.c.l.b16 %v110
  %v674 = vunpack.c.h.b16 %v110
  %v675 = vunpack.c.l.b16 %v111
  %v676 = vunpack.c.h.b16 %v111
  %v677 = vunpack.c.l.b16 %v112
  %v678 = vunpack.c.h.b16 %v112
  %v679 = vunpack.c.l.b16 %v113
  %v680 = vunpack.c.h.b16 %v113
  %v681 = vunpack.c.l.b16 %v114
  %v682 = vunpack.c.h.b16 %v114
  %v683 = vunpack.c.l.b16 %v115
  %v684 = vunpack.c.h.b16 %v115
  %v685 = vunpack.c.l.b16 %v116
  %v686 = vunpack.c.h.b16 %v116
  %v687 = vunpack.c.l.b16 %v117
  %v688 = vunpack.c.h.b16 %v117
  %v689 = vunpack.c.l.b16 %v118
  %v690 = vunpack.c.h.b16 %v118
  %v691 = vunpack.c.l.b16 %v119
  %v692 = vunpack.c.h.b16 %v119
  %v693 = vunpack.c.l.b16 %v120
  %v694 = vunpack.c.h.b16 %v120
  %v695 = vunpack.c.l.b16 %v121
  %v696 = vunpack.c.h.b16 %v121
  %v697 = vunpack.c.l.b16 %v122
  %v698 = vunpack.c.h.b16 %v122
  %v699 = vunpack.c.l.b16 %v123
  %v700 = vunpack.c.h.b16 %v123
  %v701 = vunpack.c.l.b16 %v124
  %v702 = vunpack.c.h.b16 %v124
  %v703 = vunpack.c.l.b16 %v125
  %v704 = vunpack.c.h.b16 %v125
  %v705 = vunpack.c.l.b16 %v126
  %v706 = vunpack.c.h.b16 %v126
  %v707 = vunpack.c.l.b16 %v127
  %v708 = vunpack.c.h.b16 %v127
  %v709 = vunpack.c.l.b16 %v128
  %v710 = vunpack.c.h.b16 %v128
  %v711 = vunpack.c.l.b16 %v129
  %v712 = vunpack.c.h.b16 %v129
  %v713 = vunpack.c.l.b16 %v130
  %v714 = vunpack.c.h.b16 %v130
  %v715 = vunpack.c.l.b16 %v131
  %v716 = vunpack.c.h.b16 %v131
  %v717 = vunpack.c.l.b16 %v132
  %v718 = vunpack.c.h.b16 %v132
  %v719 = vunpack.c.l.b16 %v133
  %v720 = vunpack.c.h.b16 %v133
  %v721 = vunpack.c.l.b16 %v134
  %v722 = vunpack.c.h.b16 %v134
  %v723 = vunpack.c.l.b16 %v135
  %v724 = vunpack.c.h.b16 %v135
  %v725 = vunpack.c.l.b16 %v136
  %v726 = vunpack.c.h.b16 %v136
  %v727 = vunpack.c.l.b16 %v137
  %v728 = vunpack.c.h.b16 %v137
  %v729 = vunpack.c.l.b16 %v138
  %v730 = vunpack.c.h.b16 %v138
  %v731 = vunpack.c.l.b16 %v139
  %v732 = vunpack.c.h.b16 %v139
  %v733 = vunpack.c.l.b16 %v140
  %v734 = vunpack.c.h.b16 %v140
  %v735 = vunpack.c.l.b16 %v141
  %v736 = vunpack.c.h.b16 %v141
  %v737 = vunpack.c.l.b16 %v142
  %v738 = vunpack.c.h.b16 %v142
  %v739 = vunpack.c.l.b16 %v143
  %v740 = vunpack.c.h.b16 %v143
  %v741 = vunpack.c.l.b16 %v144
  %v742 = vunpack.c.h.b16 %v144
  %v743 = vunpack.c.l.b16 %v145
  %v744 = vunpack.c.h.b16 %v145
  %v745 = vunpack.c.l.b16 %v146
  %v746 = vunpack.c.h.b16 %v146
  %v747 = vunpack.c.l.b16 %v147
  %v748 = vunpack.c.h.b16 %v147
  %v749 = vunpack.c.l.b16 %v148
  %v750 = vunpack.c.h.b16 %v148
  %v751 = vunpack.c.l.b16 %v149
  %v752 = vunpack.c.h.b16 %v149
  %v753 = vunpack.c.l.b16 %v150
  %v754 = vunpack.c.h.b16 %v150
  %v755 = vunpack.c.l.b16 %v151
  %v756 = vunpack.c.h.b16 %v151
  %v757 = vunpack.c.l.b16 %v152
  %v758 = vunpack.c.h.b16 %v152
  %v759 = vunpack.c.l.b16 %v153
  %v760 = vunpack.c.h.b16 %v153
  %v761 = vunpack.c.l.b16 %v154
  %v762 = vunpack.c.h.b16 %v154
  %v763 = vunpack.c.l.b16 %v155
  %v764 = vunpack.c.h.b16 %v155
  %v765 = vunpack.c.l.b16 %v156
  %v766 = vunpack.c.h.b16 %v156
  %v767 = vunpack.c.l.b16 %v157
  %v768 = vunpack.c.h.b16 %v157
  %v769 = vunpack.c.l.b16 %v158
  %v770 = vunpack.c.h.b16 %v158
  %v771 = vunpack.c.l.b16 %v159
  %v772 = vunpack.c.h.b16 %v159
  %v773 = vunpack.c.l.b16 %v160
  %v774 = vunpack.c.h.b16 %v160
  %v775 = vunpack.c.l.b16 %v161
  %v776 = vunpack.c.h.b16 %v161
  %v777 = vunpack.c.l.b16 %v162
  %v778 = vunpack.c.h.b16 %v162
  %v779 = vunpack.c.l.b16 %v163
  %v780 = vunpack.c.h.b16 %v163
  %v781 = vunpack.c.l.b16 %v164
  %v782 = vunpack.c.h.b16 %v164
  %v783 = vunpack.c.l.b16 %v165
  %v784 = vunpack.c.h.b16 %v165
  %v785 = vunpack.c.l.b16 %v166
  %v786 = vunpack.c.h.b16 %v166
  %v787 = vunpack.c.l.b16 %v167
  %v788 = vunpack.c.h.b16 %v167
  %v789 = vunpack.c.l.b16 %v168
  %v790 = vunpack.c.h.b16 %v168
  %v791 = vunpack.c.l.b16 %v169
  %v792 = vunpack.c.h.b16 %v169
  %v793 = vunpack.c.l.b16 %v170
  %v794 = vunpack.c.h.b16 %v170
  %v795 = vunpack.c.l.b16 %v171
  %v796 = vunpack.c.h.b16 %v171
  %v797 = vunpack.c.l.b16 %v172
  %v798 = vunpack.c.h.b16 %v172
  %v799 = vunpack.c.l.b16 %v173
  %v800 = vunpack.c.h.b16 %v173
  %v801 = vunpack.c.l.b16 %v174
  %v802 = vunpack.c.h.b16 %v174
  %v803 = vunpack.c.l.b16 %v175
  %v804 = vunpack.c.h.b16 %v175
  %v805 = vunpack.c.l.b16 %v176
  %v806 = vunpack.c.h.b16 %v176
  %v807 = vunpack.c.l.b16 %v177
  %v808 = vunpack.c.h.b16 %v177
  %v809 = vunpack.c.l.b16 %v178
  %v810 = vunpack.c.h.b16 %v178
  %v811 = vunpack.c.l.b16 %v179
  %v812 = vunpack.c.h.b16 %v179
  %v813 = vunpack.c.l.b16 %v180
  %v814 = vunpack.c.h.b16 %v180
  %v815 = vunpack.c.l.b16 %v181
  %v816 = vunpack.c.h.b16 %v181
  %v817 = vunpack.c.l.b16 %v182
  %v818 = vunpack.c.h.b16 %v182
  %v819 = vunpack.c.l.b16 %v183
  %v820 = vunpack.c.h.b16 %v183
  %v821 = vunpack.c.l.b16 %v184
  %v822 = vunpack.c.h.b16 %v184
  %v823 = vunpack.c.l.b16 %v185
  %v824 = vunpack.c.h.b16 %v185
  %v825 = vunpack.c.l.b16 %v186
  %v826 = vunpack.c.h.b16 %v186
  %v827 = vunpack.c.l.b16 %v187
  %v828 = vunpack.c.h.b16 %v187
  %v829 = vunpack.c.l.b16 %v188
  %v830 = vunpack.c.h.b16 %v188
  %v831 = vunpack.c.l.b16 %v189
  %v832 = vunpack.c.h.b16 %v189
  %v833 = vunpack.c.l.b16 %v190
  %v834 = vunpack.c.h.b16 %v190
  %v835 = vunpack.c.l.b16 %v191
  %v836 = vunpack.c.h.b16 %v191
  %v837 = vunpack.c.l.b16 %v192
  %v838 = vunpack.c.h.b16 %v192
  %v839 = vunpack.c.l.b16 %v193
  %v840 = vunpack.c.h.b16 %v193
  %v841 = vunpack.c.l.b16 %v194
  %v842 = vunpack.c.h.b16 %v194
  %v843 = vunpack.c.l.b16 %v195
  %v844 = vunpack.c.h.b16 %v195
  %v845 = vunpack.c.l.b16 %v196
  %v846 = vunpack.c.h.b16 %v196
  %v847 = vunpack.c.l.b16 %v197
  %v848 = vunpack.c.h.b16 %v197
  %v849 = vunpack.c.l.b16 %v198
  %v850 = vunpack.c.h.b16 %v198
  %v851 = vunpack.c.l.b16 %v199
  %v852 = vunpack.c.h.b16 %v199
  %v853 = vunpack.c.l.b16 %v200
  %v854 = vunpack.c.h.b16 %v200
  %v855 = vunpack.c.l.b16 %v201
  %v856 = vunpack.c.h.b16 %v201
  %v857 = vunpack.c.l.b16 %v202
  %v858 = vunpack.c.h.b16 %v202
  %v859 = vunpack.c.l.b16 %v203
  %v860 = vunpack.c.h.b16 %v203
  %v861 = vunpack.c.l.b16 %v204
  %v862 = vunpack.c.h.b16 %v204
  %v863 = vunpack.c.l.b16 %v205
  %v864 = vunpack.c.h.b16 %v205
  %v865 = vunpack.c.l.b16 %v206
  %v866 = vunpack.c.h.b16 %v206
  %v867 = vunpack.c.l.b16 %v207
  %v868 = vunpack.c.h.b16 %v207
  %v869 = vunpack.c.l.b16 %v208
  %v870 = vunpack.c.h.b16 %v208
  %v871 = vunpack.c.l.b16 %v209
  %v872 = vunpack.c.h.b16 %v209
  %v873 = vunpack.c.l.b16 %v210
  %v874 = vunpack.c.h.b16 %v210
  %v875 = vunpack.c.l.b16 %v211
  %v876 = vunpack.c.h.b16 %v211
  %v877 = vunpack.c.l.b16 %v212
  %v878 = vunpack.c.h.b16 %v212
  %v879 = vunpack.c.l.b16 %v213
  %v880 = vunpack.c.h.b16 %v213
  %v881 = vunpack.c.l.b16 %v214
  %v882 = vunpack.c.h.b16 %v214
  %v883 = vunpack.c.l.b16 %v215
  %v884 = vunpack.c.h.b16 %v215
  %v885 = vunpack.c.l.b16 %v216
  %v886 = vunpack.c.h.b16 %v216
  %v887 = vunpack.c.l.b16 %v217
  %v888 = vunpack.c.h.b16 %v217
  %v889 = vunpack.c.l.b16 %v218
  %v890 = vunpack.c.h.b16 %v218
  %v891 = vunpack.c.l.b16 %v219
  %v892 = vunpack.c.h.b16 %v219
  %v893 = vunpack.c.l.b16 %v220
  %v894 = vunpack.c.h.b16 %v220
  %v895 = vunpack.c.l.b16 %v221
  %v896 = vunpack.c.h.b16 %v221
  %v897 = vunpack.c.l.b16 %v222
  %v898 = vunpack.c.h.b16 %v222
  %v899 = vunpack.c.l.b16 %v223
  %v900 = vunpack.c.h.b16 %v223
  %v901 = vunpack.c.l.b16 %v224
  %v902 = vunpack.c.h.b16 %v224
  %v903 = vunpack.c.l.b16 %v225
  %v904 = vunpack.c.h.b16 %v225
  %v905 = vunpack.c.l.b16 %v226
  %v906 = vunpack.c.h.b16 %v226
  %v907 = vunpack.c.l.b16 %v227
  %v908 = vunpack.c.h.b16 %v227
  %v909 = vunpack.c.l.b16 %v228
  %v910 = vunpack.c.h.b16 %v228
  %v911 = vunpack.c.l.b16 %v229
  %v912 = vunpack.c.h.b16 %v229
  %v913 = vunpack.c.l.b16 %v230
  %v914 = vunpack.c.h.b16 %v230
  %v915 = vunpack.c.l.b16 %v231
  %v916 = vunpack.c.h.b16 %v231
  %v917 = vunpack.c.l.b16 %v232
  %v918 = vunpack.c.h.b16 %v232
  %v919 = vunpack.c.l.b16 %v233
  %v920 = vunpack.c.h.b16 %v233
  %v921 = vunpack.c.l.b16 %v234
  %v922 = vunpack.c.h.b16 %v234
  %v923 = vunpack.c.l.b16 %v235
  %v924 = vunpack.c.h.b16 %v235
  %v925 = vunpack.c.l.b16 %v236
  %v926 = vunpack.c.h.b16 %v236
  %v927 = vunpack.c.l.b16 %v237
  %v928 = vunpack.c.h.b16 %v237
  %v929 = vunpack.c.l.b16 %v238
  %v930 = vunpack.c.h.b16 %v238
  %v931 = vunpack.c.l.b16 %v239
  %v932 = vunpack.c.h.b16 %v239
  %v933 = vunpack.c.l.b16 %v240
  %v934 = vunpack.c.h.b16 %v240
  %v935 = vunpack.c.l.b16 %v241
  %v936 = vunpack.c.h.b16 %v241
  %v937 = vunpack.c.l.b16 %v242
  %v938 = vunpack.c.h.b16 %v242
  %v939 = vunpack.c.l.b16 %v243
  %v940 = vunpack.c.h.b16 %v243
  %v941 = vunpack.c.l.b16 %v244
  %v942 = vunpack.c.h.b16 %v244
  %v943 = vunpack.c.l.b16 %v245
  %v944 = vunpack.c.h.b16 %v245
  %v945 = vunpack.c.l.b16 %v246
  %v946 = vunpack.c.h.b16 %v246
  %v947 = vunpack.c.l.b16 %v247
  %v948 = vunpack.c.h.b16 %v247
  %v949 = vunpack.c.l.b16 %v248
  %v950 = vunpack.c.h.b16 %v248
  %v951 = vunpack.c.l.b16 %v249
  %v952 = vunpack.c.h.b16 %v249
  %v953 = vunpack.c.l.b16 %v250
  %v954 = vunpack.c.h.b16 %v250
  %v955 = vunpack.c.l.b16 %v251
  %v956 = vunpack.c.h.b16 %v251
  %v957 = vunpack.c.l.b16 %v252
  %v958 = vunpack.c.h.b16 %v252
  %v959 = vunpack.c.l.b16 %v253
  %v960 = vunpack.c.h.b16 %v253
  %v961 = vunpack.c.l.b16 %v254
  %v962 = vunpack.c.h.b16 %v254
  %v963 = vunpack.c.l.b16 %v255
  %v964 = vunpack.c.h.b16 %v255
  %v965 = vunpack.c.l.b16 %v256
  %v966 = vunpack.c.h.b16 %v256
  %v967 = vunpack.c.l.b16 %v257
  %v968 = vunpack.c.h.b16 %v257
  %v969 = vunpack.c.l.b16 %v258
  %v970 = vunpack.c.h.b16 %v258
  %v971 = vunpack.c.l.b16 %v259
  %v972 = vunpack.c.h.b16 %v259
  %v973 = vunpack.c.l.b16 %v260
  %v974 = vunpack.c.h.b16 %v260
  %v975 = vunpack.c.l.b16 %v261
  %v976 = vunpack.c.h.b16 %v261
  %v977 = vunpack.c.l.b16 %v262
  %v978 = vunpack.c.h.b16 %v262
  %v979 = vunpack.c.l.b16 %v263
  %v980 = vunpack.c.h.b16 %v263
  %v981 = vunpack.c.l.b16 %v264
  %v982 = vunpack.c.h.b16 %v264
  %v983 = vunpack.c.l.b16 %v265
  %v984 = vunpack.c.h.b16 %v265
  %v985 = vunpack.c.l.b16 %v266
  %v986 = vunpack.c.h.b16 %v266
  %v987 = vunpack.c.l.b16 %v267
  %v988 = vunpack.c.h.b16 %v267
  %v989 = vunpack.c.l.b16 %v268
  %v990 = vunpack.c.h.b16 %v268
  %v991 = vunpack.c.l.b16 %v269
  %v992 = vunpack.c.h.b16 %v269
  %v993 = vunpack.c.l.b16 %v270
  %v994 = vunpack.c.h.b16 %v270
  %v995 = vunpack.c.l.b16 %v271
  %v996 = vunpack.c.h.b16 %v271
  %v997 = vunpack.c.l.b16 %v272
  %v998 = vunpack.c.h.b16 %v272
  %v999 = vunpack.c.l.b16 %v273
  %v1000 = vunpack.c.h.b16 %v273
  %v1001 = vunpack.c.l.b16 %v274
  %v1002 = vunpack.c.h.b16 %v274
  %v1003 = vunpack.c.l.b16 %v275
  %v1004 = vunpack.c.h.b16 %v275
  %v1005 = vunpack.c.l.b16 %v276
  %v1006 = vunpack.c.h.b16 %v276
  %v1007 = vunpack.c.l.b16 %v277
  %v1008 = vunpack.c.h.b16 %v277
  %v1009 = vunpack.c.l.b16 %v278
  %v1010 = vunpack.c.h.b16 %v278
  %v1011 = vunpack.c.l.b16 %v279
  %v1012 = vunpack.c.h.b16 %v279
  %v1013 = vunpack.c.l.b16 %v280
  %v1014 = vunpack.c.h.b16 %v280
  %v1015 = vunpack.c.l.b16 %v281
  %v1016 = vunpack.c.h.b16 %v281
  %v1017 = vunpack.c.l.b16 %v282
  %v1018 = vunpack.c.h.b16 %v282
  %v1019 = vunpack.c.l.b16 %v283
  %v1020 = vunpack.c.h.b16 %v283
  %v1021 = vunpack.c.l.b16 %v284
  %v1022 = vunpack.c.h.b16 %v284
  %v1023 = vunpack.c.l.b16 %v285
  %v1024 = vunpack.c.h.b16 %v285
  %v1025 = vunpack.c.l.b16 %v286
  %v1026 = vunpack.c.h.b16 %v286
  %v1027 = vunpack.c.l.b16 %v287
  %v1028 = vunpack.c.h.b16 %v287
  %v1029 = vunpack.c.l.b16 %v288
  %v1030 = vunpack.c.h.b16 %v288
  %v1031 = vunpack.c.l.b16 %v289
  %v1032 = vunpack.c.h.b16 %v289
  %v1033 = vunpack.c.l.b16 %v290
  %v1034 = vunpack.c.h.b16 %v290
  %v1035 = vunpack.c.l.b16 %v291
  %v1036 = vunpack.c.h.b16 %v291
  %v1037 = vunpack.c.l.b16 %v292
  %v1038 = vunpack.c.h.b16 %v292
  %v1039 = vunpack.c.l.b16 %v293
  %v1040 = vunpack.c.h.b16 %v293
  %v1041 = vunpack.c.l.b16 %v294
  %v1042 = vunpack.c.h.b16 %v294
  %v1043 = vunpack.c.l.b16 %v295
  %v1044 = vunpack.c.h.b16 %v295
  %v1045 = vunpack.c.l.b16 %v296
  %v1046 = vunpack.c.h.b16 %v296
  %v1047 = vunpack.c.l.b16 %v297
  %v1048 = vunpack.c.h.b16 %v297
  %v1049 = vunpack.c.l.b16 %v298
  %v1050 = vunpack.c.h.b16 %v298
  %v1051 = vunpack.c.l.b16 %v299
  %v1052 = vunpack.c.h.b16 %v299
  %v1053 = vunpack.c.l.b16 %v300
  %v1054 = vunpack.c.h.b16 %v300
  %v1055 = vunpack.c.l.b16 %v301
  %v1056 = vunpack.c.h.b16 %v301
  %v1057 = vunpack.c.l.b16 %v302
  %v1058 = vunpack.c.h.b16 %v302
  %v1059 = vunpack.c.l.b16 %v303
  %v1060 = vunpack.c.h.b16 %v303
  %v1061 = vunpack.c.l.b16 %v304
  %v1062 = vunpack.c.h.b16 %v304
  %v1063 = vunpack.c.l.b16 %v305
  %v1064 = vunpack.c.h.b16 %v305
  %v1065 = vunpack.c.l.b16 %v306
  %v1066 = vunpack.c.h.b16 %v306
  %v1067 = vunpack.c.l.b16 %v307
  %v1068 = vunpack.c.h.b16 %v307
  %v1069 = vunpack.c.l.b16 %v308
  %v1070 = vunpack.c.h.b16 %v308
  %v1071 = vunpack.c.l.b16 %v309
  %v1072 = vunpack.c.h.b16 %v309
  %v1073 = vunpack.c.l.b16 %v310
  %v1074 = vunpack.c.h.b16 %v310
  %v1075 = vunpack.c.l.b16 %v311
  %v1076 = vunpack.c.h.b16 %v311
  %v1077 = vunpack.c.l.b16 %v312
  %v1078 = vunpack.c.h.b16 %v312
  %v1079 = vunpack.c.l.b16 %v313
  %v1080 = vunpack.c.h.b16 %v313
  %v1081 = vunpack.c.l.b16 %v314
  %v1082 = vunpack.c.h.b16 %v314
  %v1083 = vunpack.c.l.b16 %v315
  %v1084 = vunpack.c.h.b16 %v315
  %v1085 = vunpack.c.l.b16 %v316
  %v1086 = vunpack.c.h.b16 %v316
  %v1087 = vunpack.c.l.b16 %v317
  %v1088 = vunpack.c.h.b16 %v317
  %v1089 = vunpack.c.l.b16 %v318
  %v1090 = vunpack.c.h.b16 %v318
  %v1091 = vunpack.c.l.b16 %v319
  %v1092 = vunpack.c.h.b16 %v319
  %v1093 = vunpack.c.l.b16 %v320
  %v1094 = vunpack.c.h.b16 %v320
  %v1095 = vunpack.c.l.b16 %v321
  %v1096 = vunpack.c.h.b16 %v321
  %v1097 = vunpack.c.l.b16 %v322
  %v1098 = vunpack.c.h.b16 %v322
  %v1099 = vunpack.c.l.b16 %v323
  %v1100 = vunpack.c.h.b16 %v323
  %v1101 = vunpack.c.l.b16 %v324
  %v1102 = vunpack.c.h.b16 %v324
  %v1103 = vunpack.c.l.b16 %v325
  %v1104 = vunpack.c.h.b16 %v325
  %v1105 = vunpack.c.l.b16 %v326
  %v1106 = vunpack.c.h.b16 %v326
  %v1107 = vunpack.c.l.b16 %v327
  %v1108 = vunpack.c.h.b16 %v327
  %v1109 = vunpack.c.l.b16 %v328
  %v1110 = vunpack.c.h.b16 %v328
  %v1111 = vunpack.c.l.b16 %v329
  %v1112 = vunpack.c.h.b16 %v329
  %v1113 = vunpack.c.l.b16 %v330
  %v1114 = vunpack.c.h.b16 %v330
  %v1115 = vunpack.c.l.b16 %v331
  %v1116 = vunpack.c.h.b16 %v331
  %v1117 = vunpack.c.l.b16 %v332
  %v1118 = vunpack.c.h.b16 %v332
  %v1119 = vunpack.c.l.b16 %v333
  %v1120 = vunpack.c.h.b16 %v333
  %v1121 = vunpack.c.l.b16 %v334
  %v1122 = vunpack.c.h.b16 %v334
  %v1123 = vunpack.c.l.b16 %v335
  %v1124 = vunpack.c.h.b16 %v335
  %v1125 = vunpack.c.l.b16 %v336
  %v1126 = vunpack.c.h.b16 %v336
  %v1127 = vpack.c.b16 %v619, %v615
  %v1128 = vpack.c.b16 %v620, %v616
  %v1129 = vpack.c.b16 %v621, %v617
  %v1130 = vpack.c.b16 %v622, %v618
  %v1131 = vpack.c.b16 %v627, %v623
  %v1132 = vpack.c.b16 %v628, %v624
  %v1133 = vpack.c.b16 %v629, %v625
  %v1134 = vpack.c.b16 %v630, %v626
  %v1135 = vpack.c.b16 %v635, %v631
  %v1136 = vpack.c.b16 %v636, %v632
  %v1137 = vpack.c.b16 %v637, %v633
  %v1138 = vpack.c.b16 %v638, %v634
  %v1139 = vpack.c.b16 %v643, %v639
  %v1140 = vpack.c.b16 %v644, %v640
  %v1141 = vpack.c.b16 %v645, %v641
  %v1142 = vpack.c.b16 %v646, %v642
  %v1143 = vpack.c.b16 %v651, %v647
  %v1144 = vpack.c.b16 %v652, %v648
  %v1145 = vpack.c.b16 %v653, %v649
  %v1146 = vpack.c.b16 %v654, %v650
  %v1147 = vpack.c.b16 %v659, %v655
  %v1148 = vpack.c.b16 %v660, %v656
  %v1149 = vpack.c.b16 %v661, %v657
  %v1150 = vpack.c.b16 %v662, %v658
  %v1151 = vpack.c.b16 %v667, %v663
  %v1152 = vpack.c.b16 %v668, %v664
  %v1153 = vpack.c.b16 %v669, %v665
  %v1154 = vpack.c.b16 %v670, %v666
  %v1155 = vpack.c.b16 %v675, %v671
  %v1156 = vpack.c.b16 %v676, %v672
  %v1157 = vpack.c.b16 %v677, %v673
  %v1158 = vpack.c.b16 %v678, %v674
  %v1159 = vpack.c.b16 %v683, %v679
  %v1160 = vpack.c.b16 %v684, %v680
  %v1161 = vpack.c.b16 %v685, %v681
  %v1162 = vpack.c.b16 %v686, %v682
  %v1163 = vpack.c.b16 %v691, %v687
  %v1164 = vpack.c.b16 %v692, %v688
  %v1165 = vpack.c.b16 %v693, %v689
  %v1166 = vpack.c.b16 %v694, %v690
  %v1167 = vpack.c.b16 %v699, %v695
  %v1168 = vpack.c.b16 %v700, %v696
  %v1169 = vpack.c.b16 %v701, %v697
  %v1170 = vpack.c.b16 %v702, %v698
  %v1171 = vpack.c.b16 %v707, %v703
  %v1172 = vpack.c.b16 %v708, %v704
  %v1173 = vpack.c.b16 %v709, %v705
  %v1174 = vpack.c.b16 %v710, %v706
  %v1175 = vpack.c.b16 %v715, %v711
  %v1176 = vpack.c.b16 %v716, %v712
  %v1177 = vpack.c.b16 %v717, %v713
  %v1178 = vpack.c.b16 %v718, %v714
  %v1179 = vpack.c.b16 %v723, %v719
  %v1180 = vpack.c.b16 %v724, %v720
  %v1181 = vpack.c.b16 %v725, %v721
  %v1182 = vpack.c.b16 %v726, %v722
  %v1183 = vpack.c.b16 %v731, %v727
  %v1184 = vpack.c.b16 %v732, %v728
  %v1185 = vpack.c.b16 %v733, %v729
  %v1186 = vpack.c.b16 %v734, %v730
  %v1187 = vpack.c.b16 %v739, %v735
  %v1188 = vpack.c.b16 %v740, %v736
  %v1189 = vpack.c.b16 %v741, %v737
  %v1190 = vpack.c.b16 %v742, %v738
  %v1191 = vpack.c.b16 %v747, %v743
  %v1192 = vpack.c.b16 %v748, %v744
  %v1193 = vpack.c.b16 %v749, %v745
  %v1194 = vpack.c.b16 %v750, %v746
  %v1195 = vpack.c.b16 %v755, %v751
  %v1196 = vpack.c.b16 %v756, %v752
  %v1197 = vpack.c.b16 %v757, %v753
  %v1198 = vpack.c.b16 %v758, %v754
  %v1199 = vpack.c.b16 %v763, %v759
  %v1200 = vpack.c.b16 %v764, %v760
  %v1201 = vpack.c.b16 %v765, %v761
  %v1202 = vpack.c.b16 %v766, %v762
  %v1203 = vpack.c.b16 %v771, %v767
  %v1204 = vpack.c.b16 %v772, %v768
  %v1205 = vpack.c.b16 %v773, %v769
  %v1206 = vpack.c.b16 %v774, %v770
  %v1207 = vpack.c.b16 %v779, %v775
  %v1208 = vpack.c.b16 %v780, %v776
  %v1209 = vpack.c.b16 %v781, %v777
  %v1210 = vpack.c.b16 %v782, %v778
  %v1211 = vpack.c.b16 %v787, %v783
  %v1212 = vpack.c.b16 %v788, %v784
  %v1213 = vpack.c.b16 %v789, %v785
  %v1214 = vpack.c.b16 %v790, %v786
  %v1215 = vpack.c.b16 %v795, %v791
  %v1216 = vpack.c.b16 %v796, %v792
  %v1217 = vpack.c.b16 %v797, %v793
  %v1218 = vpack.c.b16 %v798, %v794
  %v1219 = vpack.c.b16 %v803, %v799
  %v1220 = vpack.c.b16 %v804, %v800
  %v1221 = vpack.c.b16 %v805, %v801
  %v1222 = vpack.c.b16 %v806, %v802
  %v1223 = vpack.c.b16 %v811, %v807
  %v1224 = vpack.c.b16 %v812, %v808
  %v1225 = vpack.c.b16 %v813, %v809
  %v1226 = vpack.c.b16 %v814, %v810
  %v1227 = vpack.c.b16 %v819, %v815
  %v1228 = vpack.c.b16 %v820, %v816
  %v1229 = vpack.c.b16 %v821, %v817
  %v1230 = vpack.c.b16 %v822, %v818
  %v1231 = vpack.c.b16 %v827, %v823
  %v1232 = vpack.c.b16 %v828, %v824
  %v1233 = vpack.c.b16 %v829, %v825
  %v1234 = vpack.c.b16 %v830, %v826
  %v1235 = vpack.c.b16 %v835, %v831
  %v1236 = vpack.c.b16 %v836, %v832
  %v1237 = vpack.c.b16 %v837, %v833
  %v1238 = vpack.c.b16 %v838, %v834
  %v1239 = vpack.c.b16 %v843, %v839
  %v1240 = vpack.c.b16 %v844, %v840
  %v1241 = vpack.c.b16 %v845, %v841
  %v1242 = vpack.c.b16 %v846, %v842
  %v1243 = vpack.c.b16 %v851, %v847
  %v1244 = vpack.c.b16 %v852, %v848
  %v1245 = vpack.c.b16 %v853, %v849
  %v1246 = vpack.c.b16 %v854, %v850
  %v1247 = vpack.c.b16 %v859, %v855
  %v1248 = vpack.c.b16 %v860, %v856
  %v1249 = vpack.c.b16 %v861, %v857
  %v1250 = vpack.c.b16 %v862, %v858
  %v1251 = vpack.c.b16 %v867, %v863
  %v1252 = vpack.c.b16 %v868, %v864
  %v1253 = vpack.c.b16 %v869, %v865
  %v1254 = vpack.c.b16 %v870, %v866
  %v1255 = vpack.c.b16 %v875, %v871
  %v1256 = vpack.c.b16 %v876, %v872
  %v1257 = vpack.c.b16 %v877, %v873
  %v1258 = vpack.c.b16 %v878, %v874
  %v1259 = vpack.c.b16 %v883, %v879
  %v1260 = vpack.c.b16 %v884, %v880
  %v1261 = vpack.c.b16 %v885, %v881
  %v1262 = vpack.c.b16 %v886, %v882
  %v1263 = vpack.c.b16 %v891, %v887
  %v1264 = vpack.c.b16 %v892, %v888
  %v1265 = vpack.c.b16 %v893, %v889
  %v1266 = vpack.c.b16 %v894, %v890
  %v1267 = vpack.c.b16 %v899, %v895
  %v1268 = vpack.c.b16 %v900, %v896
  %v1269 = vpack.c.b16 %v901, %v897
  %v1270 = vpack.c.b16 %v902, %v898
  %v1271 = vpack.c.b16 %v907, %v903
  %v1272 = vpack.c.b16 %v908, %v904
  %v1273 = vpack.c.b16 %v909, %v905
  %v1274 = vpack.c.b16 %v910, %v906
  %v1275 = vpack.c.b16 %v915, %v911
  %v1276 = vpack.c.b16 %v916, %v912
  %v1277 = vpack.c.b16 %v917, %v913
  %v1278 = vpack.c.b16 %v918, %v914
  %v1279 = vpack.c.b16 %v923, %v919
  %v1280 = vpack.c.b16 %v924, %v920
  %v1281 = vpack.c.b16 %v925, %v921
  %v1282 = vpack.c.b16 %v926, %v922
  %v1283 = vpack.c.b16 %v931, %v927
  %v1284 = vpack.c.b16 %v932, %v928
  %v1285 = vpack.c.b16 %v933, %v929
  %v1286 = vpack.c.b16 %v934, %v930
  %v1287 = vpack.c.b16 %v939, %v935
  %v1288 = vpack.c.b16 %v940, %v936
  %v1289 = vpack.c.b16 %v941, %v937
  %v1290 = vpack.c.b16 %v942, %v938
  %v1291 = vpack.c.b16 %v947, %v943
  %v1292 = vpack.c.b16 %v948, %v944
  %v1293 = vpack.c.b16 %v949, %v945
  %v1294 = vpack.c.b16 %v950, %v946
  %v1295 = vpack.c.b16 %v955, %v951
  %v1296 = vpack.c.b16 %v956, %v952
  %v1297 = vpack.c.b16 %v957, %v953
  %v1298 = vpack.c.b16 %v958, %v954
  %v1299 = vpack.c.b16 %v963, %v959
  %v1300 = vpack.c.b16 %v964, %v960
  %v1301 = vpack.c.b16 %v965, %v961
  %v1302 = vpack.c.b16 %v966, %v962
  %v1303 = vpack.c.b16 %v971, %v967
  %v1304 = vpack.c.b16 %v972, %v968
  %v1305 = vpack.c.b16 %v973, %v969
  %v1306 = vpack.c.b16 %v974, %v970
  %v1307 = vpack.c.b16 %v979, %v975
  %v1308 = vpack.c.b16 %v980, %v976
  %v1309 = vpack.c.b16 %v981, %v977
  %v1310 = vpack.c.b16 %v982, %v978
  %v1311 = vpack.c.b16 %v987, %v983
  %v1312 = vpack.c.b16 %v988, %v984
  %v1313 = vpack.c.b16 %v989, %v985
  %v1314 = vpack.c.b16 %v990, %v986
  %v1315 = vpack.c.b16 %v995, %v991
  %v1316 = vpack.c.b16 %v996, %v992
  %v1317 = vpack.c.b16 %v997, %v993
  %v1318 = vpack.c.b16 %v998, %v994
  %v1319 = vpack.c.b16 %v1003, %v999
  %v1320 = vpack.c.b16 %v1004, %v1000
  %v1321 = vpack.c.b16 %v1005, %v1001
  %v1322 = vpack.c.b16 %v1006, %v1002
  %v1323 = vpack.c.b16 %v1011, %v1007
  %v1324 = vpack.c.b16 %v1012, %v1008
  %v1325 = vpack.c.b16 %v1013, %v1009
  %v1326 = vpack.c.b16 %v1014, %v1010
  %v1327 = vpack.c.b16 %v1019, %v1015
  %v1328 = vpack.c.b16 %v1020, %v1016
  %v1329 = vpack.c.b16 %v1021, %v1017
  %v1330 = vpack.c.b16 %v1022, %v1018
  %v1331 = vpack.c.b16 %v1027, %v1023
  %v1332 = vpack.c.b16 %v1028, %v1024
  %v1333 = vpack.c.b16 %v1029, %v1025
  %v1334 = vpack.c.b16 %v1030, %v1026
  %v1335 = vpack.c.b16 %v1035, %v1031
  %v1336 = vpack.c.b16 %v1036, %v1032
  %v1337 = vpack.c.b16 %v1037, %v1033
  %v1338 = vpack.c.b16 %v1038, %v1034
  %v1339 = vpack.c.b16 %v1043, %v1039
  %v1340 = vpack.c.b16 %v1044, %v1040
  %v1341 = vpack.c.b16 %v1045, %v1041
  %v1342 = vpack.c.b16 %v1046, %v1042
  %v1343 = vpack.c.b16 %v1051, %v1047
  %v1344 = vpack.c.b16 %v1052, %v1048
  %v1345 = vpack.c.b16 %v1053, %v1049
  %v1346 = vpack.c.b16 %v1054, %v1050
  %v1347 = vpack.c.b16 %v1059, %v1055
  %v1348 = vpack.c.b16 %v1060, %v1056
  %v1349 = vpack.c.b16 %v1061, %v1057
  %v1350 = vpack.c.b16 %v1062, %v1058
  %v1351 = vpack.c.b16 %v1067, %v1063
  %v1352 = vpack.c.b16 %v1068, %v1064
  %v1353 = vpack.c.b16 %v1069, %v1065
  %v1354 = vpack.c.b16 %v1070, %v1066
  %v1355 = vpack.c.b16 %v1075, %v1071
  %v1356 = vpack.c.b16 %v1076, %v1072
  %v1357 = vpack.c.b16 %v1077, %v1073
  %v1358 = vpack.c.b16 %v1078, %v1074
  %v1359 = vpack.c.b16 %v1083, %v1079
  %v1360 = vpack.c.b16 %v1084, %v1080
  %v1361 = vpack.c.b16 %v1085, %v1081
  %v1362 = vpack.c.b16 %v1086, %v1082
  %v1363 = vpack.c.b16 %v1091, %v1087
  %v1364 = vpack.c.b16 %v1092, %v1088
  %v1365 = vpack.c.b16 %v1093, %v1089
  %v1366 = vpack.c.b16 %v1094, %v1090
  %v1367 = vpack.c.b16 %v1099, %v1095
  %v1368 = vpack.c.b16 %v1100, %v1096
  %v1369 = vpack.c.b16 %v1101, %v1097
  %v1370 = vpack.c.b16 %v1102, %v1098
  %v1371 = vpack.c.b16 %v1107, %v1103
  %v1372 = vpack.c.b16 %v1108, %v1104
  %v1373 = vpack.c.b16 %v1109, %v1105
  %v1374 = vpack.c.b16 %v1110, %v1106
  %v1375 = vpack.c.b16 %v1115, %v1111
  %v1376 = vpack.c.b16 %v1116, %v1112
  %v1377 = vpack.c.b16 %v1117, %v1113
  %v1378 = vpack.c.b16 %v1118, %v1114
  %v1379 = vpack.c.b16 %v1123, %v1119
  %v1380 = vpack.c.b16 %v1124, %v1120
  %v1381 = vpack.c.b16 %v1125, %v1121
  %v1382 = vpack.c.b16 %v1126, %v1122
  %1639 = vmatprep.subr.bf16.mxu0 %v1128
  %1640 = vmatpush1.bf16.msra.mxu0 %v1127
  %1641 = vmatprep.subr.bf16.mxu0 %v1132
  %1642 = vmatpush1.bf16.msra.mxu0 %v1131
  %1643 = vmatprep.subr.bf16.mxu0 %v1136
  %1644 = vmatpush1.bf16.msra.mxu0 %v1135
  %1645 = vmatprep.subr.bf16.mxu0 %v1140
  %1646 = vmatpush1.bf16.msra.mxu0 %v1139
  %1647 = vmatprep.subr.bf16.mxu0 %v1144
  %1648 = vmatpush1.bf16.msra.mxu0 %v1143
  %1649 = vmatprep.subr.bf16.mxu0 %v1148
  %1650 = vmatpush1.bf16.msra.mxu0 %v1147
  %1651 = vmatprep.subr.bf16.mxu0 %v1152
  %1652 = vmatpush1.bf16.msra.mxu0 %v1151
  %1653 = vmatprep.subr.bf16.mxu0 %v1156
  %1654 = vmatpush1.bf16.msra.mxu0 %v1155
  %1655 = vmatprep.subr.bf16.mxu0 %v1160
  %1656 = vmatpush1.bf16.msra.mxu0 %v1159
  %1657 = vmatprep.subr.bf16.mxu0 %v1164
  %1658 = vmatpush1.bf16.msra.mxu0 %v1163
  %1659 = vmatprep.subr.bf16.mxu0 %v1168
  %1660 = vmatpush1.bf16.msra.mxu0 %v1167
  %1661 = vmatprep.subr.bf16.mxu0 %v1172
  %1662 = vmatpush1.bf16.msra.mxu0 %v1171
  %1663 = vmatprep.subr.bf16.mxu0 %v1176
  %1664 = vmatpush1.bf16.msra.mxu0 %v1175
  %1665 = vmatprep.subr.bf16.mxu0 %v1180
  %1666 = vmatpush1.bf16.msra.mxu0 %v1179
  %1667 = vmatprep.subr.bf16.mxu0 %v1184
  %1668 = vmatpush1.bf16.msra.mxu0 %v1183
  %1669 = vmatprep.subr.bf16.mxu0 %v1188
  %1670 = vmatpush1.bf16.msra.mxu0 %v1187
  %1671 = vmatprep.mubr.bf16.mxu0 %v74
  %1672 = vmatmul.mubr.bf16.gmra.mrb[0].mxu0 %v73
  %v1673 = vpop.f32.mrb[0].mxu0
  %v1674 = vadd.f32 %v342, %v1673
  %v1675 = vpop.f32.mrb[0].mxu0
  %v1676 = vadd.f32 %v346, %v1675
  %v1677 = vpop.f32.mrb[0].mxu0
  %v1678 = vpop.f32.mrb[0].mxu0
  %1679 = vdwg.mxu0
  %1680 = vmatprep.subr.bf16.mxu0 %v1192
  %1681 = vmatpush1.bf16.msra.mxu0 %v1191
  %1682 = vmatprep.subr.bf16.mxu0 %v1196
  %1683 = vmatpush1.bf16.msra.mxu0 %v1195
  %1684 = vmatprep.subr.bf16.mxu0 %v1200
  %1685 = vmatpush1.bf16.msra.mxu0 %v1199
  %1686 = vmatprep.subr.bf16.mxu0 %v1204
  %1687 = vmatpush1.bf16.msra.mxu0 %v1203
  %1688 = vmatprep.subr.bf16.mxu0 %v1208
  %1689 = vmatpush1.bf16.msra.mxu0 %v1207
  %1690 = vmatprep.subr.bf16.mxu0 %v1212
  %1691 = vmatpush1.bf16.msra.mxu0 %v1211
  %1692 = vmatprep.subr.bf16.mxu0 %v1216
  %1693 = vmatpush1.bf16.msra.mxu0 %v1215
  %1694 = vmatprep.subr.bf16.mxu0 %v1220
  %1695 = vmatpush1.bf16.msra.mxu0 %v1219
  %1696 = vmatprep.subr.bf16.mxu0 %v1224
  %1697 = vmatpush1.bf16.msra.mxu0 %v1223
  %1698 = vmatprep.subr.bf16.mxu0 %v1228
  %1699 = vmatpush1.bf16.msra.mxu0 %v1227
  %1700 = vmatprep.subr.bf16.mxu0 %v1232
  %1701 = vmatpush1.bf16.msra.mxu0 %v1231
  %1702 = vmatprep.subr.bf16.mxu0 %v1236
  %1703 = vmatpush1.bf16.msra.mxu0 %v1235
  %1704 = vmatprep.subr.bf16.mxu0 %v1240
  %1705 = vmatpush1.bf16.msra.mxu0 %v1239
  %1706 = vmatprep.subr.bf16.mxu0 %v1244
  %1707 = vmatpush1.bf16.msra.mxu0 %v1243
  %1708 = vmatprep.subr.bf16.mxu0 %v1248
  %1709 = vmatpush1.bf16.msra.mxu0 %v1247
  %1710 = vmatprep.subr.bf16.mxu0 %v1252
  %1711 = vmatpush1.bf16.msra.mxu0 %v1251
  %1712 = vmatprep.mubr.bf16.mxu0 %v76
  %1713 = vmatmul.mubr.bf16.gmra.mrb[0].mxu0 %v75
  %v1714 = vpop.f32.mrb[0].mxu0
  %v1715 = vadd.f32 %v1674, %v1714
  %v1716 = vpop.f32.mrb[0].mxu0
  %v1717 = vadd.f32 %v1676, %v1716
  %v1718 = vpop.f32.mrb[0].mxu0
  %v1719 = vpop.f32.mrb[0].mxu0
  %1720 = vdwg.mxu0
  %1721 = vmatprep.subr.bf16.mxu0 %v1256
  %1722 = vmatpush1.bf16.msra.mxu0 %v1255
  %1723 = vmatprep.subr.bf16.mxu0 %v1260
  %1724 = vmatpush1.bf16.msra.mxu0 %v1259
  %1725 = vmatprep.subr.bf16.mxu0 %v1264
  %1726 = vmatpush1.bf16.msra.mxu0 %v1263
  %1727 = vmatprep.subr.bf16.mxu0 %v1268
  %1728 = vmatpush1.bf16.msra.mxu0 %v1267
  %1729 = vmatprep.subr.bf16.mxu0 %v1272
  %1730 = vmatpush1.bf16.msra.mxu0 %v1271
  %1731 = vmatprep.subr.bf16.mxu0 %v1276
  %1732 = vmatpush1.bf16.msra.mxu0 %v1275
  %1733 = vmatprep.subr.bf16.mxu0 %v1280
  %1734 = vmatpush1.bf16.msra.mxu0 %v1279
  %1735 = vmatprep.subr.bf16.mxu0 %v1284
  %1736 = vmatpush1.bf16.msra.mxu0 %v1283
  %1737 = vmatprep.subr.bf16.mxu0 %v1288
  %1738 = vmatpush1.bf16.msra.mxu0 %v1287
  %1739 = vmatprep.subr.bf16.mxu0 %v1292
  %1740 = vmatpush1.bf16.msra.mxu0 %v1291
  %1741 = vmatprep.subr.bf16.mxu0 %v1296
  %1742 = vmatpush1.bf16.msra.mxu0 %v1295
  %1743 = vmatprep.subr.bf16.mxu0 %v1300
  %1744 = vmatpush1.bf16.msra.mxu0 %v1299
  %1745 = vmatprep.subr.bf16.mxu0 %v1304
  %1746 = vmatpush1.bf16.msra.mxu0 %v1303
  %1747 = vmatprep.subr.bf16.mxu0 %v1308
  %1748 = vmatpush1.bf16.msra.mxu0 %v1307
  %1749 = vmatprep.subr.bf16.mxu0 %v1312
  %1750 = vmatpush1.bf16.msra.mxu0 %v1311
  %1751 = vmatprep.subr.bf16.mxu0 %v1316
  %1752 = vmatpush1.bf16.msra.mxu0 %v1315
  %1753 = vmatprep.mubr.bf16.mxu0 %v78
  %1754 = vmatmul.mubr.bf16.gmra.mrb[0].mxu0 %v77
  %v1755 = vpop.f32.mrb[0].mxu0
  %v1756 = vadd.f32 %v1715, %v1755
  %v1757 = vpop.f32.mrb[0].mxu0
  %v1758 = vadd.f32 %v1717, %v1757
  %v1759 = vpop.f32.mrb[0].mxu0
  %v1760 = vpop.f32.mrb[0].mxu0
  %1761 = vdwg.mxu0
  %1762 = vmatprep.subr.bf16.mxu0 %v1320
  %1763 = vmatpush1.bf16.msra.mxu0 %v1319
  %1764 = vmatprep.subr.bf16.mxu0 %v1324
  %1765 = vmatpush1.bf16.msra.mxu0 %v1323
  %1766 = vmatprep.subr.bf16.mxu0 %v1328
  %1767 = vmatpush1.bf16.msra.mxu0 %v1327
  %1768 = vmatprep.subr.bf16.mxu0 %v1332
  %1769 = vmatpush1.bf16.msra.mxu0 %v1331
  %1770 = vmatprep.subr.bf16.mxu0 %v1336
  %1771 = vmatpush1.bf16.msra.mxu0 %v1335
  %1772 = vmatprep.subr.bf16.mxu0 %v1340
  %1773 = vmatpush1.bf16.msra.mxu0 %v1339
  %1774 = vmatprep.subr.bf16.mxu0 %v1344
  %1775 = vmatpush1.bf16.msra.mxu0 %v1343
  %1776 = vmatprep.subr.bf16.mxu0 %v1348
  %1777 = vmatpush1.bf16.msra.mxu0 %v1347
  %1778 = vmatprep.subr.bf16.mxu0 %v1352
  %1779 = vmatpush1.bf16.msra.mxu0 %v1351
  %1780 = vmatprep.subr.bf16.mxu0 %v1356
  %1781 = vmatpush1.bf16.msra.mxu0 %v1355
  %1782 = vmatprep.subr.bf16.mxu0 %v1360
  %1783 = vmatpush1.bf16.msra.mxu0 %v1359
  %1784 = vmatprep.subr.bf16.mxu0 %v1364
  %1785 = vmatpush1.bf16.msra.mxu0 %v1363
  %1786 = vmatprep.subr.bf16.mxu0 %v1368
  %1787 = vmatpush1.bf16.msra.mxu0 %v1367
  %1788 = vmatprep.subr.bf16.mxu0 %v1372
  %1789 = vmatpush1.bf16.msra.mxu0 %v1371
  %1790 = vmatprep.subr.bf16.mxu0 %v1376
  %1791 = vmatpush1.bf16.msra.mxu0 %v1375
  %1792 = vmatprep.subr.bf16.mxu0 %v1380
  %1793 = vmatpush1.bf16.msra.mxu0 %v1379
  %1794 = vmatprep.mubr.bf16.mxu0 %v80
  %1795 = vmatmul.mubr.bf16.gmra.mrb[0].mxu0 %v79
  %v1796 = vpop.f32.mrb[0].mxu0
  %v1797 = vadd.f32 %v1756, %v1796
  %v1798 = vpop.f32.mrb[0].mxu0
  %v1799 = vadd.f32 %v1758, %v1798
  %v1800 = vpop.f32.mrb[0].mxu0
  %v1801 = vpop.f32.mrb[0].mxu0
  %1802 = vdwg.mxu0
  %1803 = vmatprep.subr.bf16.mxu0 %v1130
  %1804 = vmatpush1.bf16.msra.mxu0 %v1129
  %1805 = vmatprep.subr.bf16.mxu0 %v1134
  %1806 = vmatpush1.bf16.msra.mxu0 %v1133
  %1807 = vmatprep.subr.bf16.mxu0 %v1138
  %1808 = vmatpush1.bf16.msra.mxu0 %v1137
  %1809 = vmatprep.subr.bf16.mxu0 %v1142
  %1810 = vmatpush1.bf16.msra.mxu0 %v1141
  %1811 = vmatprep.subr.bf16.mxu0 %v1146
  %1812 = vmatpush1.bf16.msra.mxu0 %v1145
  %1813 = vmatprep.subr.bf16.mxu0 %v1150
  %1814 = vmatpush1.bf16.msra.mxu0 %v1149
  %1815 = vmatprep.subr.bf16.mxu0 %v1154
  %1816 = vmatpush1.bf16.msra.mxu0 %v1153
  %1817 = vmatprep.subr.bf16.mxu0 %v1158
  %1818 = vmatpush1.bf16.msra.mxu0 %v1157
  %1819 = vmatprep.subr.bf16.mxu0 %v1162
  %1820 = vmatpush1.bf16.msra.mxu0 %v1161
  %1821 = vmatprep.subr.bf16.mxu0 %v1166
  %1822 = vmatpush1.bf16.msra.mxu0 %v1165
  %1823 = vmatprep.subr.bf16.mxu0 %v1170
  %1824 = vmatpush1.bf16.msra.mxu0 %v1169
  %1825 = vmatprep.subr.bf16.mxu0 %v1174
  %1826 = vmatpush1.bf16.msra.mxu0 %v1173
  %1827 = vmatprep.subr.bf16.mxu0 %v1178
  %1828 = vmatpush1.bf16.msra.mxu0 %v1177
  %1829 = vmatprep.subr.bf16.mxu0 %v1182
  %1830 = vmatpush1.bf16.msra.mxu0 %v1181
  %1831 = vmatprep.subr.bf16.mxu0 %v1186
  %1832 = vmatpush1.bf16.msra.mxu0 %v1185
  %1833 = vmatprep.subr.bf16.mxu0 %v1190
  %1834 = vmatpush1.bf16.msra.mxu0 %v1189
  %1835 = vmatprep.mubr.bf16.mxu0 %v74
  %1836 = vmatmul.mubr.bf16.gmra.mrb[0].mxu0 %v73
  %v1837 = vpop.f32.mrb[0].mxu0
  %v1838 = vadd.f32 %v350, %v1837
  %v1839 = vpop.f32.mrb[0].mxu0
  %v1840 = vadd.f32 %v354, %v1839
  %v1841 = vpop.f32.mrb[0].mxu0
  %v1842 = vpop.f32.mrb[0].mxu0
  %1843 = vdwg.mxu0
  %1844 = vmatprep.subr.bf16.mxu0 %v1194
  %1845 = vmatpush1.bf16.msra.mxu0 %v1193
  %1846 = vmatprep.subr.bf16.mxu0 %v1198
  %1847 = vmatpush1.bf16.msra.mxu0 %v1197
  %1848 = vmatprep.subr.bf16.mxu0 %v1202
  %1849 = vmatpush1.bf16.msra.mxu0 %v1201
  %1850 = vmatprep.subr.bf16.mxu0 %v1206
  %1851 = vmatpush1.bf16.msra.mxu0 %v1205
  %1852 = vmatprep.subr.bf16.mxu0 %v1210
  %1853 = vmatpush1.bf16.msra.mxu0 %v1209
  %1854 = vmatprep.subr.bf16.mxu0 %v1214
  %1855 = vmatpush1.bf16.msra.mxu0 %v1213
  %1856 = vmatprep.subr.bf16.mxu0 %v1218
  %1857 = vmatpush1.bf16.msra.mxu0 %v1217
  %1858 = vmatprep.subr.bf16.mxu0 %v1222
  %1859 = vmatpush1.bf16.msra.mxu0 %v1221
  %1860 = vmatprep.subr.bf16.mxu0 %v1226
  %1861 = vmatpush1.bf16.msra.mxu0 %v1225
  %1862 = vmatprep.subr.bf16.mxu0 %v1230
  %1863 = vmatpush1.bf16.msra.mxu0 %v1229
  %1864 = vmatprep.subr.bf16.mxu0 %v1234
  %1865 = vmatpush1.bf16.msra.mxu0 %v1233
  %1866 = vmatprep.subr.bf16.mxu0 %v1238
  %1867 = vmatpush1.bf16.msra.mxu0 %v1237
  %1868 = vmatprep.subr.bf16.mxu0 %v1242
  %1869 = vmatpush1.bf16.msra.mxu0 %v1241
  %1870 = vmatprep.subr.bf16.mxu0 %v1246
  %1871 = vmatpush1.bf16.msra.mxu0 %v1245
  %1872 = vmatprep.subr.bf16.mxu0 %v1250
  %1873 = vmatpush1.bf16.msra.mxu0 %v1249
  %1874 = vmatprep.subr.bf16.mxu0 %v1254
  %1875 = vmatpush1.bf16.msra.mxu0 %v1253
  %1876 = vmatprep.mubr.bf16.mxu0 %v76
  %1877 = vmatmul.mubr.bf16.gmra.mrb[0].mxu0 %v75
  %v1878 = vpop.f32.mrb[0].mxu0
  %v1879 = vadd.f32 %v1838, %v1878
  %v1880 = vpop.f32.mrb[0].mxu0
  %v1881 = vadd.f32 %v1840, %v1880
  %v1882 = vpop.f32.mrb[0].mxu0
  %v1883 = vpop.f32.mrb[0].mxu0
  %1884 = vdwg.mxu0
  %1885 = vmatprep.subr.bf16.mxu0 %v1258
  %1886 = vmatpush1.bf16.msra.mxu0 %v1257
  %1887 = vmatprep.subr.bf16.mxu0 %v1262
  %1888 = vmatpush1.bf16.msra.mxu0 %v1261
  %1889 = vmatprep.subr.bf16.mxu0 %v1266
  %1890 = vmatpush1.bf16.msra.mxu0 %v1265
  %1891 = vmatprep.subr.bf16.mxu0 %v1270
  %1892 = vmatpush1.bf16.msra.mxu0 %v1269
  %1893 = vmatprep.subr.bf16.mxu0 %v1274
  %1894 = vmatpush1.bf16.msra.mxu0 %v1273
  %1895 = vmatprep.subr.bf16.mxu0 %v1278
  %1896 = vmatpush1.bf16.msra.mxu0 %v1277
  %1897 = vmatprep.subr.bf16.mxu0 %v1282
  %1898 = vmatpush1.bf16.msra.mxu0 %v1281
  %1899 = vmatprep.subr.bf16.mxu0 %v1286
  %1900 = vmatpush1.bf16.msra.mxu0 %v1285
  %1901 = vmatprep.subr.bf16.mxu0 %v1290
  %1902 = vmatpush1.bf16.msra.mxu0 %v1289
  %1903 = vmatprep.subr.bf16.mxu0 %v1294
  %1904 = vmatpush1.bf16.msra.mxu0 %v1293
  %1905 = vmatprep.subr.bf16.mxu0 %v1298
  %1906 = vmatpush1.bf16.msra.mxu0 %v1297
  %1907 = vmatprep.subr.bf16.mxu0 %v1302
  %1908 = vmatpush1.bf16.msra.mxu0 %v1301
  %1909 = vmatprep.subr.bf16.mxu0 %v1306
  %1910 = vmatpush1.bf16.msra.mxu0 %v1305
  %1911 = vmatprep.subr.bf16.mxu0 %v1310
  %1912 = vmatpush1.bf16.msra.mxu0 %v1309
  %1913 = vmatprep.subr.bf16.mxu0 %v1314
  %1914 = vmatpush1.bf16.msra.mxu0 %v1313
  %1915 = vmatprep.subr.bf16.mxu0 %v1318
  %1916 = vmatpush1.bf16.msra.mxu0 %v1317
  %1917 = vmatprep.mubr.bf16.mxu0 %v78
  %1918 = vmatmul.mubr.bf16.gmra.mrb[0].mxu0 %v77
  %v1919 = vpop.f32.mrb[0].mxu0
  %v1920 = vadd.f32 %v1879, %v1919
  %v1921 = vpop.f32.mrb[0].mxu0
  %v1922 = vadd.f32 %v1881, %v1921
  %v1923 = vpop.f32.mrb[0].mxu0
  %v1924 = vpop.f32.mrb[0].mxu0
  %1925 = vdwg.mxu0
  %1926 = vmatprep.subr.bf16.mxu0 %v1322
  %1927 = vmatpush1.bf16.msra.mxu0 %v1321
  %1928 = vmatprep.subr.bf16.mxu0 %v1326
  %1929 = vmatpush1.bf16.msra.mxu0 %v1325
  %1930 = vmatprep.subr.bf16.mxu0 %v1330
  %1931 = vmatpush1.bf16.msra.mxu0 %v1329
  %1932 = vmatprep.subr.bf16.mxu0 %v1334
  %1933 = vmatpush1.bf16.msra.mxu0 %v1333
  %1934 = vmatprep.subr.bf16.mxu0 %v1338
  %1935 = vmatpush1.bf16.msra.mxu0 %v1337
  %1936 = vmatprep.subr.bf16.mxu0 %v1342
  %1937 = vmatpush1.bf16.msra.mxu0 %v1341
  %1938 = vmatprep.subr.bf16.mxu0 %v1346
  %1939 = vmatpush1.bf16.msra.mxu0 %v1345
  %1940 = vmatprep.subr.bf16.mxu0 %v1350
  %1941 = vmatpush1.bf16.msra.mxu0 %v1349
  %1942 = vmatprep.subr.bf16.mxu0 %v1354
  %1943 = vmatpush1.bf16.msra.mxu0 %v1353
  %1944 = vmatprep.subr.bf16.mxu0 %v1358
  %1945 = vmatpush1.bf16.msra.mxu0 %v1357
  %1946 = vmatprep.subr.bf16.mxu0 %v1362
  %1947 = vmatpush1.bf16.msra.mxu0 %v1361
  %1948 = vmatprep.subr.bf16.mxu0 %v1366
  %1949 = vmatpush1.bf16.msra.mxu0 %v1365
  %1950 = vmatprep.subr.bf16.mxu0 %v1370
  %1951 = vmatpush1.bf16.msra.mxu0 %v1369
  %1952 = vmatprep.subr.bf16.mxu0 %v1374
  %1953 = vmatpush1.bf16.msra.mxu0 %v1373
  %1954 = vmatprep.subr.bf16.mxu0 %v1378
  %1955 = vmatpush1.bf16.msra.mxu0 %v1377
  %1956 = vmatprep.subr.bf16.mxu0 %v1382
  %1957 = vmatpush1.bf16.msra.mxu0 %v1381
  %1958 = vmatprep.mubr.bf16.mxu0 %v80
  %1959 = vmatmul.mubr.bf16.gmra.mrb[0].mxu0 %v79
  %v1960 = vpop.f32.mrb[0].mxu0
  %v1961 = vadd.f32 %v1920, %v1960
  %v1962 = vpop.f32.mrb[0].mxu0
  %v1963 = vadd.f32 %v1922, %v1962
  %v1964 = vpop.f32.mrb[0].mxu0
  %v1965 = vpop.f32.mrb[0].mxu0
  %1966 = vdwg.mxu0
  %v1967 = vmax.f32 %v1797, 0.0
  %v1968 = vmax.f32 %v1799, 0.0
  %v1969 = vmax.f32 %v1961, 0.0
  %v1970 = vmax.f32 %v1963, 0.0
  %v1971 = vpack.c.bf16 %v1967, %v1967
  %v1972 = vpack.c.bf16 %v1968, %v1968
  %v1973 = vpack.c.bf16 %v1969, %v1969
  %v1974 = vpack.c.bf16 %v1970, %v1970
  %v1975 = vld [vmem:[%s3] sm:$0xff]
  %v1976 = vld [vmem:[%s3 + $0x8] sm:$0xff]
  %v1977 = vld [vmem:[%s3 + $0x10] sm:$0xff]
  %v1978 = vld [vmem:[%s3 + $0x18] sm:$0xff]
  %v1979 = vld [vmem:[%s3 + $0x20] sm:$0xff]
  %v1980 = vld [vmem:[%s3 + $0x28] sm:$0xff]
  %v1981 = vld [vmem:[%s3 + $0x30] sm:$0xff]
  %v1982 = vld [vmem:[%s3 + $0x38] sm:$0xff]
  %v1983 = vld [vmem:[%s3 + $0x40] sm:$0xff]
  %v1984 = vld [vmem:[%s3 + $0x48] sm:$0xff]
  %v1985 = vld [vmem:[%s3 + $0x50] sm:$0xff]
  %v1986 = vld [vmem:[%s3 + $0x58] sm:$0xff]
  %v1987 = vld [vmem:[%s3 + $0x60] sm:$0xff]
  %v1988 = vld [vmem:[%s3 + $0x68] sm:$0xff]
  %v1989 = vld [vmem:[%s3 + $0x70] sm:$0xff]
  %v1990 = vld [vmem:[%s3 + $0x78] sm:$0xff]
  %v1991 = vld [vmem:[%s3 + $0x80] sm:$0xff]
  %v1992 = vld [vmem:[%s3 + $0x88] sm:$0xff]
  %v1993 = vld [vmem:[%s3 + $0x90] sm:$0xff]
  %v1994 = vld [vmem:[%s3 + $0x98] sm:$0xff]
  %v1995 = vld [vmem:[%s3 + $0xa0] sm:$0xff]
  %v1996 = vld [vmem:[%s3 + $0xa8] sm:$0xff]
  %v1997 = vld [vmem:[%s3 + $0xb0] sm:$0xff]
  %v1998 = vld [vmem:[%s3 + $0xb8] sm:$0xff]
  %v1999 = vld [vmem:[%s3 + $0xc0] sm:$0xff]
  %v2000 = vld [vmem:[%s3 + $0xc8] sm:$0xff]
  %v2001 = vld [vmem:[%s3 + $0xd0] sm:$0xff]
  %v2002 = vld [vmem:[%s3 + $0xd8] sm:$0xff]
  %v2003 = vld [vmem:[%s3 + $0xe0] sm:$0xff]
  %v2004 = vld [vmem:[%s3 + $0xe8] sm:$0xff]
  %v2005 = vld [vmem:[%s3 + $0xf0] sm:$0xff]
  %v2006 = vld [vmem:[%s3 + $0xf8] sm:$0xff]
  %v2007 = vld [vmem:[%s3 + $0x100] sm:$0xff]
  %v2008 = vld [vmem:[%s3 + $0x108] sm:$0xff]
  %v2009 = vld [vmem:[%s3 + $0x110] sm:$0xff]
  %v2010 = vld [vmem:[%s3 + $0x118] sm:$0xff]
  %v2011 = vld [vmem:[%s3 + $0x120] sm:$0xff]
  %v2012 = vld [vmem:[%s3 + $0x128] sm:$0xff]
  %v2013 = vld [vmem:[%s3 + $0x130] sm:$0xff]
  %v2014 = vld [vmem:[%s3 + $0x138] sm:$0xff]
  %v2015 = vld [vmem:[%s3 + $0x140] sm:$0xff]
  %v2016 = vld [vmem:[%s3 + $0x148] sm:$0xff]
  %v2017 = vld [vmem:[%s3 + $0x150] sm:$0xff]
  %v2018 = vld [vmem:[%s3 + $0x158] sm:$0xff]
  %v2019 = vld [vmem:[%s3 + $0x160] sm:$0xff]
  %v2020 = vld [vmem:[%s3 + $0x168] sm:$0xff]
  %v2021 = vld [vmem:[%s3 + $0x170] sm:$0xff]
  %v2022 = vld [vmem:[%s3 + $0x178] sm:$0xff]
  %v2023 = vld [vmem:[%s3 + $0x180] sm:$0xff]
  %v2024 = vld [vmem:[%s3 + $0x188] sm:$0xff]
  %v2025 = vld [vmem:[%s3 + $0x190] sm:$0xff]
  %v2026 = vld [vmem:[%s3 + $0x198] sm:$0xff]
  %v2027 = vld [vmem:[%s3 + $0x1a0] sm:$0xff]
  %v2028 = vld [vmem:[%s3 + $0x1a8] sm:$0xff]
  %v2029 = vld [vmem:[%s3 + $0x1b0] sm:$0xff]
  %v2030 = vld [vmem:[%s3 + $0x1b8] sm:$0xff]
  %v2031 = vld [vmem:[%s3 + $0x1c0] sm:$0xff]
  %v2032 = vld [vmem:[%s3 + $0x1c8] sm:$0xff]
  %v2033 = vld [vmem:[%s3 + $0x1d0] sm:$0xff]
  %v2034 = vld [vmem:[%s3 + $0x1d8] sm:$0xff]
  %v2035 = vld [vmem:[%s3 + $0x1e0] sm:$0xff]
  %v2036 = vld [vmem:[%s3 + $0x1e8] sm:$0xff]
  %v2037 = vld [vmem:[%s3 + $0x1f0] sm:$0xff]
  %v2038 = vld [vmem:[%s3 + $0x1f8] sm:$0xff]
  %v2039 = vld [vmem:[%s4] sm:$0x3]
  %v2041 = vlaneseq
  %v2042 = vshrl.u32 %v2041, 7
  %v2043 = vsub.s32 0, %v2042
  %v2044 = vrot.slane %v2039, %v2043
  %v2045 = vlaneseq
  %v2046 = vshrl.u32 %v2045, 7
  %v2047 = vsub.s32 1, %v2046
  %v2048 = vrot.slane %v2039, %v2047
  %v2115 = vunpack.c.l.b16 %v1975
  %v2116 = vunpack.c.h.b16 %v1975
  %v2117 = vunpack.c.l.b16 %v1976
  %v2118 = vunpack.c.h.b16 %v1976
  %v2119 = vunpack.c.l.b16 %v1977
  %v2120 = vunpack.c.h.b16 %v1977
  %v2121 = vunpack.c.l.b16 %v1978
  %v2122 = vunpack.c.h.b16 %v1978
  %v2123 = vunpack.c.l.b16 %v1979
  %v2124 = vunpack.c.h.b16 %v1979
  %v2125 = vunpack.c.l.b16 %v1980
  %v2126 = vunpack.c.h.b16 %v1980
  %v2127 = vunpack.c.l.b16 %v1981
  %v2128 = vunpack.c.h.b16 %v1981
  %v2129 = vunpack.c.l.b16 %v1982
  %v2130 = vunpack.c.h.b16 %v1982
  %v2131 = vunpack.c.l.b16 %v1983
  %v2132 = vunpack.c.h.b16 %v1983
  %v2133 = vunpack.c.l.b16 %v1984
  %v2134 = vunpack.c.h.b16 %v1984
  %v2135 = vunpack.c.l.b16 %v1985
  %v2136 = vunpack.c.h.b16 %v1985
  %v2137 = vunpack.c.l.b16 %v1986
  %v2138 = vunpack.c.h.b16 %v1986
  %v2139 = vunpack.c.l.b16 %v1987
  %v2140 = vunpack.c.h.b16 %v1987
  %v2141 = vunpack.c.l.b16 %v1988
  %v2142 = vunpack.c.h.b16 %v1988
  %v2143 = vunpack.c.l.b16 %v1989
  %v2144 = vunpack.c.h.b16 %v1989
  %v2145 = vunpack.c.l.b16 %v1990
  %v2146 = vunpack.c.h.b16 %v1990
  %v2147 = vunpack.c.l.b16 %v1991
  %v2148 = vunpack.c.h.b16 %v1991
  %v2149 = vunpack.c.l.b16 %v1992
  %v2150 = vunpack.c.h.b16 %v1992
  %v2151 = vunpack.c.l.b16 %v1993
  %v2152 = vunpack.c.h.b16 %v1993
  %v2153 = vunpack.c.l.b16 %v1994
  %v2154 = vunpack.c.h.b16 %v1994
  %v2155 = vunpack.c.l.b16 %v1995
  %v2156 = vunpack.c.h.b16 %v1995
  %v2157 = vunpack.c.l.b16 %v1996
  %v2158 = vunpack.c.h.b16 %v1996
  %v2159 = vunpack.c.l.b16 %v1997
  %v2160 = vunpack.c.h.b16 %v1997
  %v2161 = vunpack.c.l.b16 %v1998
  %v2162 = vunpack.c.h.b16 %v1998
  %v2163 = vunpack.c.l.b16 %v1999
  %v2164 = vunpack.c.h.b16 %v1999
  %v2165 = vunpack.c.l.b16 %v2000
  %v2166 = vunpack.c.h.b16 %v2000
  %v2167 = vunpack.c.l.b16 %v2001
  %v2168 = vunpack.c.h.b16 %v2001
  %v2169 = vunpack.c.l.b16 %v2002
  %v2170 = vunpack.c.h.b16 %v2002
  %v2171 = vunpack.c.l.b16 %v2003
  %v2172 = vunpack.c.h.b16 %v2003
  %v2173 = vunpack.c.l.b16 %v2004
  %v2174 = vunpack.c.h.b16 %v2004
  %v2175 = vunpack.c.l.b16 %v2005
  %v2176 = vunpack.c.h.b16 %v2005
  %v2177 = vunpack.c.l.b16 %v2006
  %v2178 = vunpack.c.h.b16 %v2006
  %v2179 = vunpack.c.l.b16 %v2007
  %v2180 = vunpack.c.h.b16 %v2007
  %v2181 = vunpack.c.l.b16 %v2008
  %v2182 = vunpack.c.h.b16 %v2008
  %v2183 = vunpack.c.l.b16 %v2009
  %v2184 = vunpack.c.h.b16 %v2009
  %v2185 = vunpack.c.l.b16 %v2010
  %v2186 = vunpack.c.h.b16 %v2010
  %v2187 = vunpack.c.l.b16 %v2011
  %v2188 = vunpack.c.h.b16 %v2011
  %v2189 = vunpack.c.l.b16 %v2012
  %v2190 = vunpack.c.h.b16 %v2012
  %v2191 = vunpack.c.l.b16 %v2013
  %v2192 = vunpack.c.h.b16 %v2013
  %v2193 = vunpack.c.l.b16 %v2014
  %v2194 = vunpack.c.h.b16 %v2014
  %v2195 = vunpack.c.l.b16 %v2015
  %v2196 = vunpack.c.h.b16 %v2015
  %v2197 = vunpack.c.l.b16 %v2016
  %v2198 = vunpack.c.h.b16 %v2016
  %v2199 = vunpack.c.l.b16 %v2017
  %v2200 = vunpack.c.h.b16 %v2017
  %v2201 = vunpack.c.l.b16 %v2018
  %v2202 = vunpack.c.h.b16 %v2018
  %v2203 = vunpack.c.l.b16 %v2019
  %v2204 = vunpack.c.h.b16 %v2019
  %v2205 = vunpack.c.l.b16 %v2020
  %v2206 = vunpack.c.h.b16 %v2020
  %v2207 = vunpack.c.l.b16 %v2021
  %v2208 = vunpack.c.h.b16 %v2021
  %v2209 = vunpack.c.l.b16 %v2022
  %v2210 = vunpack.c.h.b16 %v2022
  %v2211 = vunpack.c.l.b16 %v2023
  %v2212 = vunpack.c.h.b16 %v2023
  %v2213 = vunpack.c.l.b16 %v2024
  %v2214 = vunpack.c.h.b16 %v2024
  %v2215 = vunpack.c.l.b16 %v2025
  %v2216 = vunpack.c.h.b16 %v2025
  %v2217 = vunpack.c.l.b16 %v2026
  %v2218 = vunpack.c.h.b16 %v2026
  %v2219 = vunpack.c.l.b16 %v2027
  %v2220 = vunpack.c.h.b16 %v2027
  %v2221 = vunpack.c.l.b16 %v2028
  %v2222 = vunpack.c.h.b16 %v2028
  %v2223 = vunpack.c.l.b16 %v2029
  %v2224 = vunpack.c.h.b16 %v2029
  %v2225 = vunpack.c.l.b16 %v2030
  %v2226 = vunpack.c.h.b16 %v2030
  %v2227 = vunpack.c.l.b16 %v2031
  %v2228 = vunpack.c.h.b16 %v2031
  %v2229 = vunpack.c.l.b16 %v2032
  %v2230 = vunpack.c.h.b16 %v2032
  %v2231 = vunpack.c.l.b16 %v2033
  %v2232 = vunpack.c.h.b16 %v2033
  %v2233 = vunpack.c.l.b16 %v2034
  %v2234 = vunpack.c.h.b16 %v2034
  %v2235 = vunpack.c.l.b16 %v2035
  %v2236 = vunpack.c.h.b16 %v2035
  %v2237 = vunpack.c.l.b16 %v2036
  %v2238 = vunpack.c.h.b16 %v2036
  %v2239 = vunpack.c.l.b16 %v2037
  %v2240 = vunpack.c.h.b16 %v2037
  %v2241 = vunpack.c.l.b16 %v2038
  %v2242 = vunpack.c.h.b16 %v2038
  %v2243 = vpack.c.b16 %v2117, %v2115
  %v2244 = vpack.c.b16 %v2118, %v2116
  %v2245 = vpack.c.b16 %v2121, %v2119
  %v2246 = vpack.c.b16 %v2122, %v2120
  %v2247 = vpack.c.b16 %v2125, %v2123
  %v2248 = vpack.c.b16 %v2126, %v2124
  %v2249 = vpack.c.b16 %v2129, %v2127
  %v2250 = vpack.c.b16 %v2130, %v2128
  %v2251 = vpack.c.b16 %v2133, %v2131
  %v2252 = vpack.c.b16 %v2134, %v2132
  %v2253 = vpack.c.b16 %v2137, %v2135
  %v2254 = vpack.c.b16 %v2138, %v2136
  %v2255 = vpack.c.b16 %v2141, %v2139
  %v2256 = vpack.c.b16 %v2142, %v2140
  %v2257 = vpack.c.b16 %v2145, %v2143
  %v2258 = vpack.c.b16 %v2146, %v2144
  %v2259 = vpack.c.b16 %v2149, %v2147
  %v2260 = vpack.c.b16 %v2150, %v2148
  %v2261 = vpack.c.b16 %v2153, %v2151
  %v2262 = vpack.c.b16 %v2154, %v2152
  %v2263 = vpack.c.b16 %v2157, %v2155
  %v2264 = vpack.c.b16 %v2158, %v2156
  %v2265 = vpack.c.b16 %v2161, %v2159
  %v2266 = vpack.c.b16 %v2162, %v2160
  %v2267 = vpack.c.b16 %v2165, %v2163
  %v2268 = vpack.c.b16 %v2166, %v2164
  %v2269 = vpack.c.b16 %v2169, %v2167
  %v2270 = vpack.c.b16 %v2170, %v2168
  %v2271 = vpack.c.b16 %v2173, %v2171
  %v2272 = vpack.c.b16 %v2174, %v2172
  %v2273 = vpack.c.b16 %v2177, %v2175
  %v2274 = vpack.c.b16 %v2178, %v2176
  %v2275 = vpack.c.b16 %v2181, %v2179
  %v2276 = vpack.c.b16 %v2182, %v2180
  %v2277 = vpack.c.b16 %v2185, %v2183
  %v2278 = vpack.c.b16 %v2186, %v2184
  %v2279 = vpack.c.b16 %v2189, %v2187
  %v2280 = vpack.c.b16 %v2190, %v2188
  %v2281 = vpack.c.b16 %v2193, %v2191
  %v2282 = vpack.c.b16 %v2194, %v2192
  %v2283 = vpack.c.b16 %v2197, %v2195
  %v2284 = vpack.c.b16 %v2198, %v2196
  %v2285 = vpack.c.b16 %v2201, %v2199
  %v2286 = vpack.c.b16 %v2202, %v2200
  %v2287 = vpack.c.b16 %v2205, %v2203
  %v2288 = vpack.c.b16 %v2206, %v2204
  %v2289 = vpack.c.b16 %v2209, %v2207
  %v2290 = vpack.c.b16 %v2210, %v2208
  %v2291 = vpack.c.b16 %v2213, %v2211
  %v2292 = vpack.c.b16 %v2214, %v2212
  %v2293 = vpack.c.b16 %v2217, %v2215
  %v2294 = vpack.c.b16 %v2218, %v2216
  %v2295 = vpack.c.b16 %v2221, %v2219
  %v2296 = vpack.c.b16 %v2222, %v2220
  %v2297 = vpack.c.b16 %v2225, %v2223
  %v2298 = vpack.c.b16 %v2226, %v2224
  %v2299 = vpack.c.b16 %v2229, %v2227
  %v2300 = vpack.c.b16 %v2230, %v2228
  %v2301 = vpack.c.b16 %v2233, %v2231
  %v2302 = vpack.c.b16 %v2234, %v2232
  %v2303 = vpack.c.b16 %v2237, %v2235
  %v2304 = vpack.c.b16 %v2238, %v2236
  %v2305 = vpack.c.b16 %v2241, %v2239
  %v2306 = vpack.c.b16 %v2242, %v2240
  %2371 = vmatprep.subr.bf16.mxu0 %v2244
  %2372 = vmatpush1.bf16.msra.mxu0 %v2243
  %2373 = vmatprep.subr.bf16.mxu0 %v2246
  %2374 = vmatpush1.bf16.msra.mxu0 %v2245
  %2375 = vmatprep.subr.bf16.mxu0 %v2248
  %2376 = vmatpush1.bf16.msra.mxu0 %v2247
  %2377 = vmatprep.subr.bf16.mxu0 %v2250
  %2378 = vmatpush1.bf16.msra.mxu0 %v2249
  %2379 = vmatprep.subr.bf16.mxu0 %v2252
  %2380 = vmatpush1.bf16.msra.mxu0 %v2251
  %2381 = vmatprep.subr.bf16.mxu0 %v2254
  %2382 = vmatpush1.bf16.msra.mxu0 %v2253
  %2383 = vmatprep.subr.bf16.mxu0 %v2256
  %2384 = vmatpush1.bf16.msra.mxu0 %v2255
  %2385 = vmatprep.subr.bf16.mxu0 %v2258
  %2386 = vmatpush1.bf16.msra.mxu0 %v2257
  %2387 = vmatprep.subr.bf16.mxu0 %v2260
  %2388 = vmatpush1.bf16.msra.mxu0 %v2259
  %2389 = vmatprep.subr.bf16.mxu0 %v2262
  %2390 = vmatpush1.bf16.msra.mxu0 %v2261
  %2391 = vmatprep.subr.bf16.mxu0 %v2264
  %2392 = vmatpush1.bf16.msra.mxu0 %v2263
  %2393 = vmatprep.subr.bf16.mxu0 %v2266
  %2394 = vmatpush1.bf16.msra.mxu0 %v2265
  %2395 = vmatprep.subr.bf16.mxu0 %v2268
  %2396 = vmatpush1.bf16.msra.mxu0 %v2267
  %2397 = vmatprep.subr.bf16.mxu0 %v2270
  %2398 = vmatpush1.bf16.msra.mxu0 %v2269
  %2399 = vmatprep.subr.bf16.mxu0 %v2272
  %2400 = vmatpush1.bf16.msra.mxu0 %v2271
  %2401 = vmatprep.subr.bf16.mxu0 %v2274
  %2402 = vmatpush1.bf16.msra.mxu0 %v2273
  %2403 = vmatprep.mubr.bf16.mxu0 %v1972
  %2404 = vmatmul.mubr.bf16.gmra.mrb[0].mxu0 %v1971
  %v2405 = vpop.f32.mrb[0].mxu0
  %v2406 = vadd.f32 %v2044, %v2405
  %v2407 = vpop.f32.mrb[0].mxu0
  %v2408 = vadd.f32 %v2048, %v2407
  %v2409 = vpop.f32.mrb[0].mxu0
  %v2410 = vpop.f32.mrb[0].mxu0
  %2411 = vdwg.mxu0
  %2412 = vmatprep.subr.bf16.mxu0 %v2276
  %2413 = vmatpush1.bf16.msra.mxu0 %v2275
  %2414 = vmatprep.subr.bf16.mxu0 %v2278
  %2415 = vmatpush1.bf16.msra.mxu0 %v2277
  %2416 = vmatprep.subr.bf16.mxu0 %v2280
  %2417 = vmatpush1.bf16.msra.mxu0 %v2279
  %2418 = vmatprep.subr.bf16.mxu0 %v2282
  %2419 = vmatpush1.bf16.msra.mxu0 %v2281
  %2420 = vmatprep.subr.bf16.mxu0 %v2284
  %2421 = vmatpush1.bf16.msra.mxu0 %v2283
  %2422 = vmatprep.subr.bf16.mxu0 %v2286
  %2423 = vmatpush1.bf16.msra.mxu0 %v2285
  %2424 = vmatprep.subr.bf16.mxu0 %v2288
  %2425 = vmatpush1.bf16.msra.mxu0 %v2287
  %2426 = vmatprep.subr.bf16.mxu0 %v2290
  %2427 = vmatpush1.bf16.msra.mxu0 %v2289
  %2428 = vmatprep.subr.bf16.mxu0 %v2292
  %2429 = vmatpush1.bf16.msra.mxu0 %v2291
  %2430 = vmatprep.subr.bf16.mxu0 %v2294
  %2431 = vmatpush1.bf16.msra.mxu0 %v2293
  %2432 = vmatprep.subr.bf16.mxu0 %v2296
  %2433 = vmatpush1.bf16.msra.mxu0 %v2295
  %2434 = vmatprep.subr.bf16.mxu0 %v2298
  %2435 = vmatpush1.bf16.msra.mxu0 %v2297
  %2436 = vmatprep.subr.bf16.mxu0 %v2300
  %2437 = vmatpush1.bf16.msra.mxu0 %v2299
  %2438 = vmatprep.subr.bf16.mxu0 %v2302
  %2439 = vmatpush1.bf16.msra.mxu0 %v2301
  %2440 = vmatprep.subr.bf16.mxu0 %v2304
  %2441 = vmatpush1.bf16.msra.mxu0 %v2303
  %2442 = vmatprep.subr.bf16.mxu0 %v2306
  %2443 = vmatpush1.bf16.msra.mxu0 %v2305
  %2444 = vmatprep.mubr.bf16.mxu0 %v1974
  %2445 = vmatmul.mubr.bf16.gmra.mrb[0].mxu0 %v1973
  %v2446 = vpop.f32.mrb[0].mxu0
  %v2447 = vadd.f32 %v2406, %v2446
  %v2448 = vpop.f32.mrb[0].mxu0
  %v2449 = vadd.f32 %v2408, %v2448
  %v2450 = vpop.f32.mrb[0].mxu0
  %v2451 = vpop.f32.mrb[0].mxu0
  %2452 = vdwg.mxu0
  %v2453 = vmax.f32 %v2447, 0.0
  %v2454 = vmax.f32 %v2449, 0.0
  %v2455 = vpack.c.bf16 %v2453, %v2453
  %v2456 = vpack.c.bf16 %v2454, %v2454
  %v2457 = vld [vmem:[%s5] sm:$0xf]
  %v2458 = vld [vmem:[%s5 + $0x4] sm:$0xf]
  %v2459 = vld [vmem:[%s5 + $0x8] sm:$0xf]
  %v2460 = vld [vmem:[%s5 + $0xc] sm:$0xf]
  %v2461 = vld [vmem:[%s5 + $0x10] sm:$0xf]
  %v2462 = vld [vmem:[%s5 + $0x14] sm:$0xf]
  %v2463 = vld [vmem:[%s5 + $0x18] sm:$0xf]
  %v2464 = vld [vmem:[%s5 + $0x1c] sm:$0xf]
  %v2465 = vld [vmem:[%s5 + $0x20] sm:$0xf]
  %v2466 = vld [vmem:[%s5 + $0x24] sm:$0xf]
  %v2467 = vld [vmem:[%s5 + $0x28] sm:$0xf]
  %v2468 = vld [vmem:[%s5 + $0x2c] sm:$0xf]
  %v2469 = vld [vmem:[%s5 + $0x30] sm:$0xf]
  %v2470 = vld [vmem:[%s5 + $0x34] sm:$0xf]
  %v2471 = vld [vmem:[%s5 + $0x38] sm:$0xf]
  %v2472 = vld [vmem:[%s5 + $0x3c] sm:$0xf]
  %v2473 = vld [vmem:[%s5 + $0x40] sm:$0xf]
  %v2474 = vld [vmem:[%s5 + $0x44] sm:$0xf]
  %v2475 = vld [vmem:[%s5 + $0x48] sm:$0xf]
  %v2476 = vld [vmem:[%s5 + $0x4c] sm:$0xf]
  %v2477 = vld [vmem:[%s5 + $0x50] sm:$0xf]
  %v2478 = vld [vmem:[%s5 + $0x54] sm:$0xf]
  %v2479 = vld [vmem:[%s5 + $0x58] sm:$0xf]
  %v2480 = vld [vmem:[%s5 + $0x5c] sm:$0xf]
  %v2481 = vld [vmem:[%s5 + $0x60] sm:$0xf]
  %v2482 = vld [vmem:[%s5 + $0x64] sm:$0xf]
  %v2483 = vld [vmem:[%s5 + $0x68] sm:$0xf]
  %v2484 = vld [vmem:[%s5 + $0x6c] sm:$0xf]
  %v2485 = vld [vmem:[%s5 + $0x70] sm:$0xf]
  %v2486 = vld [vmem:[%s5 + $0x74] sm:$0xf]
  %v2487 = vld [vmem:[%s5 + $0x78] sm:$0xf]
  %v2488 = vld [vmem:[%s5 + $0x7c] sm:$0xf]
  %v2489 = vld [vmem:[%s6] sm:$0x1]
  %v2491 = vlaneseq
  %v2492 = vshrl.u32 %v2491, 7
  %v2493 = vsub.s32 0, %v2492
  %v2494 = vrot.slane %v2489, %v2493
  %v2528 = vunpack.c.l.b16 %v2457
  %v2529 = vunpack.c.l.b16 %v2458
  %v2530 = vunpack.c.l.b16 %v2459
  %v2531 = vunpack.c.l.b16 %v2460
  %v2532 = vunpack.c.l.b16 %v2461
  %v2533 = vunpack.c.l.b16 %v2462
  %v2534 = vunpack.c.l.b16 %v2463
  %v2535 = vunpack.c.l.b16 %v2464
  %v2536 = vunpack.c.l.b16 %v2465
  %v2537 = vunpack.c.l.b16 %v2466
  %v2538 = vunpack.c.l.b16 %v2467
  %v2539 = vunpack.c.l.b16 %v2468
  %v2540 = vunpack.c.l.b16 %v2469
  %v2541 = vunpack.c.l.b16 %v2470
  %v2542 = vunpack.c.l.b16 %v2471
  %v2543 = vunpack.c.l.b16 %v2472
  %v2544 = vunpack.c.l.b16 %v2473
  %v2545 = vunpack.c.l.b16 %v2474
  %v2546 = vunpack.c.l.b16 %v2475
  %v2547 = vunpack.c.l.b16 %v2476
  %v2548 = vunpack.c.l.b16 %v2477
  %v2549 = vunpack.c.l.b16 %v2478
  %v2550 = vunpack.c.l.b16 %v2479
  %v2551 = vunpack.c.l.b16 %v2480
  %v2552 = vunpack.c.l.b16 %v2481
  %v2553 = vunpack.c.l.b16 %v2482
  %v2554 = vunpack.c.l.b16 %v2483
  %v2555 = vunpack.c.l.b16 %v2484
  %v2556 = vunpack.c.l.b16 %v2485
  %v2557 = vunpack.c.l.b16 %v2486
  %v2558 = vunpack.c.l.b16 %v2487
  %v2559 = vunpack.c.l.b16 %v2488
  %v2560 = vpack.c.b16 %v2529, %v2528
  %v2561 = vpack.c.b16 %v2531, %v2530
  %v2562 = vpack.c.b16 %v2533, %v2532
  %v2563 = vpack.c.b16 %v2535, %v2534
  %v2564 = vpack.c.b16 %v2537, %v2536
  %v2565 = vpack.c.b16 %v2539, %v2538
  %v2566 = vpack.c.b16 %v2541, %v2540
  %v2567 = vpack.c.b16 %v2543, %v2542
  %v2568 = vpack.c.b16 %v2545, %v2544
  %v2569 = vpack.c.b16 %v2547, %v2546
  %v2570 = vpack.c.b16 %v2549, %v2548
  %v2571 = vpack.c.b16 %v2551, %v2550
  %v2572 = vpack.c.b16 %v2553, %v2552
  %v2573 = vpack.c.b16 %v2555, %v2554
  %v2574 = vpack.c.b16 %v2557, %v2556
  %v2575 = vpack.c.b16 %v2559, %v2558
  %2592 = vmatprep.subr.bf16.mxu0 0
  %2593 = vmatpush1.bf16.msra.mxu0 %v2560
  %2594 = vmatprep.subr.bf16.mxu0 0
  %2595 = vmatpush1.bf16.msra.mxu0 %v2561
  %2596 = vmatprep.subr.bf16.mxu0 0
  %2597 = vmatpush1.bf16.msra.mxu0 %v2562
  %2598 = vmatprep.subr.bf16.mxu0 0
  %2599 = vmatpush1.bf16.msra.mxu0 %v2563
  %2600 = vmatprep.subr.bf16.mxu0 0
  %2601 = vmatpush1.bf16.msra.mxu0 %v2564
  %2602 = vmatprep.subr.bf16.mxu0 0
  %2603 = vmatpush1.bf16.msra.mxu0 %v2565
  %2604 = vmatprep.subr.bf16.mxu0 0
  %2605 = vmatpush1.bf16.msra.mxu0 %v2566
  %2606 = vmatprep.subr.bf16.mxu0 0
  %2607 = vmatpush1.bf16.msra.mxu0 %v2567
  %2608 = vmatprep.subr.bf16.mxu0 0
  %2609 = vmatpush1.bf16.msra.mxu0 %v2568
  %2610 = vmatprep.subr.bf16.mxu0 0
  %2611 = vmatpush1.bf16.msra.mxu0 %v2569
  %2612 = vmatprep.subr.bf16.mxu0 0
  %2613 = vmatpush1.bf16.msra.mxu0 %v2570
  %2614 = vmatprep.subr.bf16.mxu0 0
  %2615 = vmatpush1.bf16.msra.mxu0 %v2571
  %2616 = vmatprep.subr.bf16.mxu0 0
  %2617 = vmatpush1.bf16.msra.mxu0 %v2572
  %2618 = vmatprep.subr.bf16.mxu0 0
  %2619 = vmatpush1.bf16.msra.mxu0 %v2573
  %2620 = vmatprep.subr.bf16.mxu0 0
  %2621 = vmatpush1.bf16.msra.mxu0 %v2574
  %2622 = vmatprep.subr.bf16.mxu0 0
  %2623 = vmatpush1.bf16.msra.mxu0 %v2575
  %2624 = vmatprep.mubr.bf16.mxu0 %v2456
  %2625 = vmatmul.mubr.bf16.gmra.mrb[0].mxu0 %v2455
  %v2626 = vpop.f32.mrb[0].mxu0
  %v2627 = vadd.f32 %v2494, %v2626
  %v2628 = vpop.f32.mrb[0].mxu0
  %v2629 = vpop.f32.mrb[0].mxu0
  %v2630 = vpop.f32.mrb[0].mxu0
  %2631 = vdwg.mxu0
  %v2632 = vlaneseq
  %v2633 = vand.u32 %v2632, 127
  %vm2634 = vcmp.eq.s32.totalorder %v2633, 0
  %vm2635 = vcmp.eq.s32.totalorder %v2633, 4
  %vm2636 = vmor %vm2634, %vm2635
  %vm2637 = vcmp.eq.s32.totalorder %v2633, 8
  %vm2638 = vmor %vm2636, %vm2637
  %v2639 = vsel %vm2638, 1.0, 0.0
  %v2640 = vadd.f32 %v2627, %v2639
  %2641 = vst [vmem:[%s7] sm:$0x3] %v2640
  // Predicated region
  $region30: #{pointnetfeat_forward.4} parent=0 // pred_check
    _
  $region31: #{pointnetfeat_forward.4} parent=0 // pred_check_branch
    %2643 = sbr.rel (0) target = $region33
  $region32: #{pointnetfeat_forward.4} parent=0 // pred_region
    _
  $region33: #{pointnetfeat_forward.4} parent=0 // pred_fallthru
    _
  // Predicated region
  $region34: #{pointnetfeat_forward.4} parent=0 // pred_check
    _
  $region35: #{pointnetfeat_forward.4} parent=0 // pred_check_branch
    %2645 = sbr.rel (0) target = $region37
  $region36: #{pointnetfeat_forward.4} parent=0 // pred_region
    _
  $region37: #{pointnetfeat_forward.4} parent=0 // pred_fallthru
    _

// kernel: pointnetfeat_forward.5
$region0: #{pointnetfeat_forward.5}
  #allocation0 [shape = 'u32[]', space=smem, size = 0x4, offset = 0x4, fixed_abs, tag = 'smem constant byte address 0x4 - core index']
  #allocation1 [shape = 'u32[144,128]{1,0:T(1,128)}', space=vmem, size = 0x12000, scoped, tag = 'internal scratch']
  #allocation2 [shape = 'f32[1,1024]{1,0:T(1,128)}', space=vmem, size = 0x1000, scoped, tag = 'scratch operand']
  %s0 = inlined_call_operand.vmem [shape: bf16[2,256,3], index: 0, kind: input, shape index: {}]
  %s1 = inlined_call_operand.vmem [shape: bf16[2,3,64], index: 1, kind: input, shape index: {}]
  %s2 = inlined_call_operand.vmem [shape: f32[1,64], index: 2, kind: input, shape index: {}]
  %s3 = inlined_call_operand.vmem [shape: bf16[64,128], index: 3, kind: input, shape index: {}]
  %s4 = inlined_call_operand.vmem [shape: f32[1,128], index: 4, kind: input, shape index: {}]
  %s5 = inlined_call_operand.vmem [shape: bf16[128,1024], index: 5, kind: input, shape index: {}]
  %s6 = inlined_call_operand.vmem [shape: f32[1,1024], index: 6, kind: input, shape index: {}]
  %s7 = inlined_call_operand.vmem [shape: f32[2,1,1024], index: 7, kind: output, shape index: {}]
  %s8 = sld [smem:[#allocation0]]
  $region69: #{pointnetfeat_forward.5} parent=0
    _
  %s10 = ssub.s32 1, %s8
  %s11 = scalar_select 0, %s10, %s8
  loop: start=0, step=1, limit=4
  $region2: #{pointnetfeat_forward.5} parent=0 // loop_pre_header
    _
  $region3: #{pointnetfeat_forward.5} parent=0 // loop_header
    %s13 = sphi 0, %s17
    %p14 = scmp.ge.s32.totalorder %s13, 4
    %s20 = sphi 0, %s32
    %s21 = sphi 0, %s28
    %s22 = sphi 0, %s20
    %s23 = sphi 0, %s21
    %s24 = sphi 0, %s22
    %s25 = sphi 0, %s23
    %s37 = sphi 0, %s39
    %s40 = sphi 0, %s37
    %s41 = sphi 0, %s40
    %s57 = sphi 0, %s41
    %s63 = sphi 0, %s65
    %s66 = sphi 0, %s63
    %s67 = sphi 0, %s66
    %s83 = sphi 0, %s67
    %s87 = sphi 0, %s87
    %s89 = sphi 0, %s87
    %s90 = sphi 0, %s89
    %s104 = sphi 0, %s90
    %s108 = sphi 0, %s108
    %s110 = sphi 0, %s108
    %s111 = sphi 0, %s110
    %s125 = sphi 0, %s111
    %s129 = sphi 0, %s129
    %s131 = sphi 0, %s129
    %s132 = sphi 0, %s131
    %s146 = sphi 0, %s132
    %s150 = sphi 0, %s150
    %s152 = sphi 0, %s150
    %s153 = sphi 0, %s152
    %s167 = sphi 0, %s153
    %s171 = sphi 0, %s171
    %s173 = sphi 0, %s171
    %s174 = sphi 0, %s173
    %s188 = sphi 0, %s174
    %s194 = sphi 0, %s196
    %s197 = sphi 0, %s194
    %s198 = sphi 0, %s197
    %s214 = sphi 0, %s198
  $region4: #{pointnetfeat_forward.5} parent=0 // loop_header_branch
    %16 = sbr.rel (%p14) target = $region8
  $region5: #{pointnetfeat_forward.5} parent=0 // loop_body
    %s18 = ssub.s32 %s13, 1
    %s19 = ssub.s32 %s13, 2
    %s26 = sadd.s32 1, %s21
    %p27 = scmp.ge.s32.totalorder %s26, 1
    %s28 = scalar_select %p27, 0, %s26
    %s29 = sadd.s32 1, %s20
    %s30 = scalar_select %p27, %s29, %s20
    %p31 = scmp.ge.s32.totalorder %s30, 2
    %s32 = scalar_select %p31, 0, %s30
    %s33 = ssub.s32 %s20, %s32
    %s34 = ssub.s32 %s21, %s28
    %s35 = sor.u32 %s33, %s34
    %p36 = scmp.eq.s32.totalorder %s35, 0
    %s38 = sadd.s32 %s37, 1
    %s39 = scalar_select %p36, %s37, %s38
    %p42 = pneg %p36
    %p43 = scmp.eq.s32.totalorder %s13, 1
    %p44 = por %p42, %p43
    %p45 = scmp.ne.s32.totalorder %s37, %s40
    %p46 = scmp.eq.s32.totalorder %s13, 0
    %p47 = por %p45, %p46
    %p48 = scmp.ne.s32.totalorder %s37, %s40
    %p49 = scmp.eq.s32.totalorder %s18, 1
    %p50 = por %p48, %p49
    %p51 = scmp.ne.s32.totalorder %s40, %s41
    %p52 = scmp.eq.s32.totalorder %s18, 0
    %p53 = por %p51, %p52
    %p54 = scmp.ne.s32.totalorder %s40, %s41
    %p55 = scmp.eq.s32.totalorder %s19, 1
    %p56 = por %p54, %p55
    %p58 = scmp.ne.s32.totalorder %s41, %s57
    %p59 = scmp.eq.s32.totalorder %s19, 0
    %p60 = por %p58, %p59
    %s61 = ssub.s32 %s20, %s32
    %p62 = scmp.eq.s32.totalorder %s61, 0
    %s64 = sadd.s32 %s63, 1
    %s65 = scalar_select %p62, %s63, %s64
    %p68 = pneg %p62
    %p69 = scmp.eq.s32.totalorder %s13, 1
    %p70 = por %p68, %p69
    %p71 = scmp.ne.s32.totalorder %s63, %s66
    %p72 = scmp.eq.s32.totalorder %s13, 0
    %p73 = por %p71, %p72
    %p74 = scmp.ne.s32.totalorder %s63, %s66
    %p75 = scmp.eq.s32.totalorder %s18, 1
    %p76 = por %p74, %p75
    %p77 = scmp.ne.s32.totalorder %s66, %s67
    %p78 = scmp.eq.s32.totalorder %s18, 0
    %p79 = por %p77, %p78
    %p80 = scmp.ne.s32.totalorder %s66, %s67
    %p81 = scmp.eq.s32.totalorder %s19, 1
    %p82 = por %p80, %p81
    %p84 = scmp.ne.s32.totalorder %s67, %s83
    %p85 = scmp.eq.s32.totalorder %s19, 0
    %p86 = por %p84, %p85
    %s88 = sadd.s32 %s87, 1
    %p91 = scmp.eq.s32.totalorder %s13, 1
    %p92 = scmp.ne.s32.totalorder %s87, %s89
    %p93 = scmp.eq.s32.totalorder %s13, 0
    %p94 = por %p92, %p93
    %p95 = scmp.ne.s32.totalorder %s87, %s89
    %p96 = scmp.eq.s32.totalorder %s18, 1
    %p97 = por %p95, %p96
    %p98 = scmp.ne.s32.totalorder %s89, %s90
    %p99 = scmp.eq.s32.totalorder %s18, 0
    %p100 = por %p98, %p99
    %p101 = scmp.ne.s32.totalorder %s89, %s90
    %p102 = scmp.eq.s32.totalorder %s19, 1
    %p103 = por %p101, %p102
    %p105 = scmp.ne.s32.totalorder %s90, %s104
    %p106 = scmp.eq.s32.totalorder %s19, 0
    %p107 = por %p105, %p106
    %s109 = sadd.s32 %s108, 1
    %p112 = scmp.eq.s32.totalorder %s13, 1
    %p113 = scmp.ne.s32.totalorder %s108, %s110
    %p114 = scmp.eq.s32.totalorder %s13, 0
    %p115 = por %p113, %p114
    %p116 = scmp.ne.s32.totalorder %s108, %s110
    %p117 = scmp.eq.s32.totalorder %s18, 1
    %p118 = por %p116, %p117
    %p119 = scmp.ne.s32.totalorder %s110, %s111
    %p120 = scmp.eq.s32.totalorder %s18, 0
    %p121 = por %p119, %p120
    %p122 = scmp.ne.s32.totalorder %s110, %s111
    %p123 = scmp.eq.s32.totalorder %s19, 1
    %p124 = por %p122, %p123
    %p126 = scmp.ne.s32.totalorder %s111, %s125
    %p127 = scmp.eq.s32.totalorder %s19, 0
    %p128 = por %p126, %p127
    %s130 = sadd.s32 %s129, 1
    %p133 = scmp.eq.s32.totalorder %s13, 1
    %p134 = scmp.ne.s32.totalorder %s129, %s131
    %p135 = scmp.eq.s32.totalorder %s13, 0
    %p136 = por %p134, %p135
    %p137 = scmp.ne.s32.totalorder %s129, %s131
    %p138 = scmp.eq.s32.totalorder %s18, 1
    %p139 = por %p137, %p138
    %p140 = scmp.ne.s32.totalorder %s131, %s132
    %p141 = scmp.eq.s32.totalorder %s18, 0
    %p142 = por %p140, %p141
    %p143 = scmp.ne.s32.totalorder %s131, %s132
    %p144 = scmp.eq.s32.totalorder %s19, 1
    %p145 = por %p143, %p144
    %p147 = scmp.ne.s32.totalorder %s132, %s146
    %p148 = scmp.eq.s32.totalorder %s19, 0
    %p149 = por %p147, %p148
    %s151 = sadd.s32 %s150, 1
    %p154 = scmp.eq.s32.totalorder %s13, 1
    %p155 = scmp.ne.s32.totalorder %s150, %s152
    %p156 = scmp.eq.s32.totalorder %s13, 0
    %p157 = por %p155, %p156
    %p158 = scmp.ne.s32.totalorder %s150, %s152
    %p159 = scmp.eq.s32.totalorder %s18, 1
    %p160 = por %p158, %p159
    %p161 = scmp.ne.s32.totalorder %s152, %s153
    %p162 = scmp.eq.s32.totalorder %s18, 0
    %p163 = por %p161, %p162
    %p164 = scmp.ne.s32.totalorder %s152, %s153
    %p165 = scmp.eq.s32.totalorder %s19, 1
    %p166 = por %p164, %p165
    %p168 = scmp.ne.s32.totalorder %s153, %s167
    %p169 = scmp.eq.s32.totalorder %s19, 0
    %p170 = por %p168, %p169
    %s172 = sadd.s32 %s171, 1
    %p175 = scmp.eq.s32.totalorder %s13, 1
    %p176 = scmp.ne.s32.totalorder %s171, %s173
    %p177 = scmp.eq.s32.totalorder %s13, 0
    %p178 = por %p176, %p177
    %p179 = scmp.ne.s32.totalorder %s171, %s173
    %p180 = scmp.eq.s32.totalorder %s18, 1
    %p181 = por %p179, %p180
    %p182 = scmp.ne.s32.totalorder %s173, %s174
    %p183 = scmp.eq.s32.totalorder %s18, 0
    %p184 = por %p182, %p183
    %p185 = scmp.ne.s32.totalorder %s173, %s174
    %p186 = scmp.eq.s32.totalorder %s19, 1
    %p187 = por %p185, %p186
    %p189 = scmp.ne.s32.totalorder %s174, %s188
    %p190 = scmp.eq.s32.totalorder %s19, 0
    %p191 = por %p189, %p190
    %s192 = ssub.s32 %s20, %s32
    %p193 = scmp.eq.s32.totalorder %s192, 0
    %s195 = sadd.s32 %s194, 1
    %s196 = scalar_select %p193, %s194, %s195
    %p199 = pneg %p193
    %p200 = scmp.eq.s32.totalorder %s13, 1
    %p201 = por %p199, %p200
    %p202 = scmp.ne.s32.totalorder %s194, %s197
    %p203 = scmp.eq.s32.totalorder %s13, 0
    %p204 = por %p202, %p203
    %p205 = scmp.ne.s32.totalorder %s194, %s197
    %p206 = scmp.eq.s32.totalorder %s18, 1
    %p207 = por %p205, %p206
    %p208 = scmp.ne.s32.totalorder %s197, %s198
    %p209 = scmp.eq.s32.totalorder %s18, 0
    %p210 = por %p208, %p209
    %p211 = scmp.ne.s32.totalorder %s197, %s198
    %p212 = scmp.eq.s32.totalorder %s19, 1
    %p213 = por %p211, %p212
    %p215 = scmp.ne.s32.totalorder %s198, %s214
    %p216 = scmp.eq.s32.totalorder %s19, 0
    %p217 = por %p215, %p216
    %p218 = scmp.le.s32.totalorder 1, %s13
    %p219 = scmp.lt.s32.totalorder %s13, 3
    %p220 = pnand %p218, %p219
    %p221 = pneg %p220
    // Predicated region
    $region9: #{pointnetfeat_forward.5} parent=5 // pred_check
      _
    $region10: #{pointnetfeat_forward.5} parent=5 // pred_check_branch
      %223 = sbr.rel (%p220) target = $region12
    $region11: #{pointnetfeat_forward.5} parent=5 // pred_region
      %s224 = ssub.s32 %s13, 1
      // Predicated region
      $region13: #{pointnetfeat_forward.5} parent=11 // pred_check
        %p225 = pneg %p100
      $region14: #{pointnetfeat_forward.5} parent=11 // pred_check_branch
        %227 = sbr.rel (%p225) target = $region16
      $region15: #{pointnetfeat_forward.5} parent=11 // pred_region
        _
      $region16: #{pointnetfeat_forward.5} parent=11 // pred_fallthru
        _
      // Predicated region
      $region17: #{pointnetfeat_forward.5} parent=11 // pred_check
        %p228 = pneg %p121
      $region18: #{pointnetfeat_forward.5} parent=11 // pred_check_branch
        %230 = sbr.rel (%p228) target = $region20
      $region19: #{pointnetfeat_forward.5} parent=11 // pred_region
        _
      $region20: #{pointnetfeat_forward.5} parent=11 // pred_fallthru
        _
      // Predicated region
      $region21: #{pointnetfeat_forward.5} parent=11 // pred_check
        %p231 = pneg %p142
      $region22: #{pointnetfeat_forward.5} parent=11 // pred_check_branch
        %233 = sbr.rel (%p231) target = $region24
      $region23: #{pointnetfeat_forward.5} parent=11 // pred_region
        _
      $region24: #{pointnetfeat_forward.5} parent=11 // pred_fallthru
        _
      // Predicated region
      $region25: #{pointnetfeat_forward.5} parent=11 // pred_check
        %p234 = pneg %p163
      $region26: #{pointnetfeat_forward.5} parent=11 // pred_check_branch
        %236 = sbr.rel (%p234) target = $region28
      $region27: #{pointnetfeat_forward.5} parent=11 // pred_region
        _
      $region28: #{pointnetfeat_forward.5} parent=11 // pred_fallthru
        _
      // Predicated region
      $region29: #{pointnetfeat_forward.5} parent=11 // pred_check
        %p237 = pneg %p184
      $region30: #{pointnetfeat_forward.5} parent=11 // pred_check_branch
        %239 = sbr.rel (%p237) target = $region32
      $region31: #{pointnetfeat_forward.5} parent=11 // pred_region
        _
      $region32: #{pointnetfeat_forward.5} parent=11 // pred_fallthru
        _
    $region12: #{pointnetfeat_forward.5} parent=5 // pred_fallthru
      _
    %p240 = scmp.lt.s32.totalorder %s13, 2
    // Predicated region
    $region33: #{pointnetfeat_forward.5} parent=5 // pred_check
      %p241 = pneg %p240
    $region34: #{pointnetfeat_forward.5} parent=5 // pred_check_branch
      %243 = sbr.rel (%p241) target = $region36
    $region35: #{pointnetfeat_forward.5} parent=5 // pred_region
      // Predicated region
      $region37: #{pointnetfeat_forward.5} parent=35 // pred_check
        %p244 = pneg %p47
      $region38: #{pointnetfeat_forward.5} parent=35 // pred_check_branch
        %246 = sbr.rel (%p244) target = $region40
      $region39: #{pointnetfeat_forward.5} parent=35 // pred_region
        %s247 = smul.u32 32, %s21
        %p248 = scmp.lt.s32.totalorder %s20, 1
        %s249 = scalar_select %p248, %s20, 1
        %p250 = scmp.lt.s32.totalorder %s247, 31
        %s251 = scalar_select %p250, %s247, 31
        %s252 = smul.addr %s249, 32
        %s253 = sadd.s32 %s251, %s252
        %s254 = smul.addr %s253, 4
        %s255 = scalar_lea.vmem %s0, %s254
        %s256 = smul.u32 32, %s21
      $region40: #{pointnetfeat_forward.5} parent=35 // pred_fallthru
        _
      // Predicated region
      $region41: #{pointnetfeat_forward.5} parent=35 // pred_check
        %p257 = pneg %p73
      $region42: #{pointnetfeat_forward.5} parent=35 // pred_check_branch
        %259 = sbr.rel (%p257) target = $region44
      $region43: #{pointnetfeat_forward.5} parent=35 // pred_region
        %p260 = scmp.lt.s32.totalorder %s20, 1
        %s261 = scalar_select %p260, %s20, 1
        %s262 = smul.addr %s261, 2
        %s263 = scalar_lea.vmem %s1, %s262
      $region44: #{pointnetfeat_forward.5} parent=35 // pred_fallthru
        _
    $region36: #{pointnetfeat_forward.5} parent=5 // pred_fallthru
      _
    %p264 = scmp.le.s32.totalorder 1, %s13
    %p265 = scmp.lt.s32.totalorder %s13, 3
    %p266 = pnand %p264, %p265
    %p267 = pneg %p266
    // Predicated region
    $region45: #{pointnetfeat_forward.5} parent=5 // pred_check
      _
    $region46: #{pointnetfeat_forward.5} parent=5 // pred_check_branch
      %269 = sbr.rel (%p266) target = $region48
    $region47: #{pointnetfeat_forward.5} parent=5 // pred_region
      %s270 = ssub.s32 %s13, 1
      %s271 = smul.u32 32, %s23
      %p272 = scmp.lt.s32.totalorder %s22, 1
      %s273 = scalar_select %p272, %s22, 1
      %p274 = scmp.lt.s32.totalorder %s271, 31
      %s275 = scalar_select %p274, %s271, 31
      %s276 = smul.addr %s273, 32
      %s277 = sadd.s32 %s275, %s276
      %s278 = smul.addr %s277, 4
      %s279 = scalar_lea.vmem %s0, %s278
      %p280 = pneg %p53
      %p281 = pneg %p50
      %p282 = scmp.lt.s32.totalorder %s22, 1
      %s283 = scalar_select %p282, %s22, 1
      %s284 = smul.addr %s283, 2
      %s285 = scalar_lea.vmem %s1, %s284
      %p286 = pneg %p79
      %p287 = pneg %p76
      %p288 = pneg %p100
      %p289 = pneg %p97
      %p290 = pneg %p121
      %p291 = pneg %p118
      %p292 = pneg %p142
      %p293 = pneg %p139
      %p294 = pneg %p163
      %p295 = pneg %p160
      %p296 = pneg %p184
      %p297 = pneg %p181
      %p298 = pneg %p210
      %p299 = pneg %p207
      %p300 = scmp.lt.s32.totalorder %s22, 1
      %s301 = scalar_select %p300, %s22, 1
      %s302 = smul.addr %s301, 8
      %s303 = scalar_lea.vmem %s7, %s302
      %s304 = smul.u32 32, %s23
      %p305 = scmp.lt.s32.totalorder %s22, 1
      %s306 = scalar_select %p305, %s22, 1
      %p307 = scmp.lt.s32.totalorder %s304, 31
      %s308 = scalar_select %p307, %s304, 31
      %s309 = smul.addr %s306, 32
      %s310 = sadd.s32 %s308, %s309
      %s311 = smul.addr %s310, 4
      %s312 = scalar_lea.vmem %s0, %s311
      %s313 = smul.u32 32, %s23
      %p314 = scmp.lt.s32.totalorder %s22, 1
      %s315 = scalar_select %p314, %s22, 1
      %s316 = smul.addr %s315, 2
      %s317 = scalar_lea.vmem %s1, %s316
      %p318 = scmp.lt.s32.totalorder %s22, 1
      %s319 = scalar_select %p318, %s22, 1
      %s320 = smul.addr %s319, 8
      %s321 = scalar_lea.vmem %s7, %s320
      %p323 = scmp.eq.s32.totalorder %s23, 0
      // Predicated region
      $region49: #{pointnetfeat_forward.5} parent=47 // pred_check
        %p324 = pneg %p323
      $region50: #{pointnetfeat_forward.5} parent=47 // pred_check_branch
        %326 = sbr.rel (%p324) target = $region52
      $region51: #{pointnetfeat_forward.5} parent=47 // pred_region
        %327 = vst [vmem:[#allocation2] sm:$0xff] -inf
      $region52: #{pointnetfeat_forward.5} parent=47 // pred_fallthru
        _
      %v328 = vld [vmem:[%s312] sm:$0xf]
      %v329 = vld [vmem:[%s312 + $0x4] sm:$0xf]
      %v330 = vld [vmem:[%s312 + $0x8] sm:$0xf]
      %v331 = vld [vmem:[%s312 + $0xc] sm:$0xf]
      %v332 = vld [vmem:[%s312 + $0x10] sm:$0xf]
      %v333 = vld [vmem:[%s312 + $0x14] sm:$0xf]
      %v334 = vld [vmem:[%s312 + $0x18] sm:$0xf]
      %v335 = vld [vmem:[%s312 + $0x1c] sm:$0xf]
      %v336 = vld [vmem:[%s312 + $0x20] sm:$0xf]
      %v337 = vld [vmem:[%s312 + $0x24] sm:$0xf]
      %v338 = vld [vmem:[%s312 + $0x28] sm:$0xf]
      %v339 = vld [vmem:[%s312 + $0x2c] sm:$0xf]
      %v340 = vld [vmem:[%s312 + $0x30] sm:$0xf]
      %v341 = vld [vmem:[%s312 + $0x34] sm:$0xf]
      %v342 = vld [vmem:[%s312 + $0x38] sm:$0xf]
      %v343 = vld [vmem:[%s312 + $0x3c] sm:$0xf]
      %v344 = vld [vmem:[%s312 + $0x40] sm:$0xf]
      %v345 = vld [vmem:[%s312 + $0x44] sm:$0xf]
      %v346 = vld [vmem:[%s312 + $0x48] sm:$0xf]
      %v347 = vld [vmem:[%s312 + $0x4c] sm:$0xf]
      %v348 = vld [vmem:[%s312 + $0x50] sm:$0xf]
      %v349 = vld [vmem:[%s312 + $0x54] sm:$0xf]
      %v350 = vld [vmem:[%s312 + $0x58] sm:$0xf]
      %v351 = vld [vmem:[%s312 + $0x5c] sm:$0xf]
      %v352 = vld [vmem:[%s312 + $0x60] sm:$0xf]
      %v353 = vld [vmem:[%s312 + $0x64] sm:$0xf]
      %v354 = vld [vmem:[%s312 + $0x68] sm:$0xf]
      %v355 = vld [vmem:[%s312 + $0x6c] sm:$0xf]
      %v356 = vld [vmem:[%s312 + $0x70] sm:$0xf]
      %v357 = vld [vmem:[%s312 + $0x74] sm:$0xf]
      %v358 = vld [vmem:[%s312 + $0x78] sm:$0xf]
      %v359 = vld [vmem:[%s312 + $0x7c] sm:$0xf]
      %v360 = vld [vmem:[%s317] sm:$0x3]
      %v361 = vld [vmem:[%s2] sm:$0x1]
      %v363 = vlaneseq
      %v364 = vshrl.u32 %v363, 7
      %v365 = vsub.s32 0, %v364
      %v366 = vrot.slane %v361, %v365
      %v400 = vunpack.c.l.b16 %v328
      %v401 = vunpack.c.l.b16 %v329
      %v402 = vunpack.c.l.b16 %v330
      %v403 = vunpack.c.l.b16 %v331
      %v404 = vunpack.c.l.b16 %v332
      %v405 = vunpack.c.l.b16 %v333
      %v406 = vunpack.c.l.b16 %v334
      %v407 = vunpack.c.l.b16 %v335
      %v408 = vunpack.c.l.b16 %v336
      %v409 = vunpack.c.l.b16 %v337
      %v410 = vunpack.c.l.b16 %v338
      %v411 = vunpack.c.l.b16 %v339
      %v412 = vunpack.c.l.b16 %v340
      %v413 = vunpack.c.l.b16 %v341
      %v414 = vunpack.c.l.b16 %v342
      %v415 = vunpack.c.l.b16 %v343
      %v416 = vunpack.c.l.b16 %v344
      %v417 = vunpack.c.l.b16 %v345
      %v418 = vunpack.c.l.b16 %v346
      %v419 = vunpack.c.l.b16 %v347
      %v420 = vunpack.c.l.b16 %v348
      %v421 = vunpack.c.l.b16 %v349
      %v422 = vunpack.c.l.b16 %v350
      %v423 = vunpack.c.l.b16 %v351
      %v424 = vunpack.c.l.b16 %v352
      %v425 = vunpack.c.l.b16 %v353
      %v426 = vunpack.c.l.b16 %v354
      %v427 = vunpack.c.l.b16 %v355
      %v428 = vunpack.c.l.b16 %v356
      %v429 = vunpack.c.l.b16 %v357
      %v430 = vunpack.c.l.b16 %v358
      %v431 = vunpack.c.l.b16 %v359
      %v432 = vpack.c.b16 %v401, %v400
      %v433 = vpack.c.b16 %v403, %v402
      %v434 = vpack.c.b16 %v405, %v404
      %v435 = vpack.c.b16 %v407, %v406
      %v436 = vpack.c.b16 %v409, %v408
      %v437 = vpack.c.b16 %v411, %v410
      %v438 = vpack.c.b16 %v413, %v412
      %v439 = vpack.c.b16 %v415, %v414
      %v440 = vpack.c.b16 %v417, %v416
      %v441 = vpack.c.b16 %v419, %v418
      %v442 = vpack.c.b16 %v421, %v420
      %v443 = vpack.c.b16 %v423, %v422
      %v444 = vpack.c.b16 %v425, %v424
      %v445 = vpack.c.b16 %v427, %v426
      %v446 = vpack.c.b16 %v429, %v428
      %v447 = vpack.c.b16 %v431, %v430
      %vm448 = vcmask 23552
      %v450 = vsel %vm448, %v432, 0
      %v453 = vsel %vm448, %v433, 0
      %v456 = vsel %vm448, %v434, 0
      %v459 = vsel %vm448, %v435, 0
      %v462 = vsel %vm448, %v436, 0
      %v465 = vsel %vm448, %v437, 0
      %v468 = vsel %vm448, %v438, 0
      %v471 = vsel %vm448, %v439, 0
      %v474 = vsel %vm448, %v440, 0
      %v477 = vsel %vm448, %v441, 0
      %v480 = vsel %vm448, %v442, 0
      %v483 = vsel %vm448, %v443, 0
      %v486 = vsel %vm448, %v444, 0
      %v489 = vsel %vm448, %v445, 0
      %v492 = vsel %vm448, %v446, 0
      %v495 = vsel %vm448, %v447, 0
      %vm497 = vcmask 1040384
      %vm498 = vcmask 1041408
      %v499 = vsel %vm497, 4294967295, 65535
      %v500 = vsel %vm498, %v499, 0
      %v502 = vand.u32 %v360, %v500
      %504 = vmatprep.subr.bf16.mxu0 0
      %505 = vmatpush1.bf16.msra.mxu0 %v502
      %506 = vmatprep.subr.bf16.mxu0 0
      %507 = vmatpush1.bf16.msra.mxu0 0
      %508 = vmatprep.subr.bf16.mxu0 0
      %509 = vmatpush1.bf16.msra.mxu0 0
      %510 = vmatprep.subr.bf16.mxu0 0
      %511 = vmatpush1.bf16.msra.mxu0 0
      %512 = vmatprep.subr.bf16.mxu0 0
      %513 = vmatpush1.bf16.msra.mxu0 0
      %514 = vmatprep.subr.bf16.mxu0 0
      %515 = vmatpush1.bf16.msra.mxu0 0
      %516 = vmatprep.subr.bf16.mxu0 0
      %517 = vmatpush1.bf16.msra.mxu0 0
      %518 = vmatprep.subr.bf16.mxu0 0
      %519 = vmatpush1.bf16.msra.mxu0 0
      %520 = vmatprep.subr.bf16.mxu0 0
      %521 = vmatpush1.bf16.msra.mxu0 0
      %522 = vmatprep.subr.bf16.mxu0 0
      %523 = vmatpush1.bf16.msra.mxu0 0
      %524 = vmatprep.subr.bf16.mxu0 0
      %525 = vmatpush1.bf16.msra.mxu0 0
      %526 = vmatprep.subr.bf16.mxu0 0
      %527 = vmatpush1.bf16.msra.mxu0 0
      %528 = vmatprep.subr.bf16.mxu0 0
      %529 = vmatpush1.bf16.msra.mxu0 0
      %530 = vmatprep.subr.bf16.mxu0 0
      %531 = vmatpush1.bf16.msra.mxu0 0
      %532 = vmatprep.subr.bf16.mxu0 0
      %533 = vmatpush1.bf16.msra.mxu0 0
      %534 = vmatprep.subr.bf16.mxu0 0
      %535 = vmatpush1.bf16.msra.mxu0 0
      %536 = vmatprep.mubr.bf16.mxu0 0
      %537 = vmatmul.mubr.bf16.gmra.mrb[0].mxu0 %v450
      %v538 = vpop.f32.mrb[0].mxu0
      %v539 = vadd.f32 %v366, %v538
      %v540 = vpop.f32.mrb[0].mxu0
      %v541 = vpop.f32.mrb[0].mxu0
      %v542 = vadd.f32 %v366, %v541
      %v543 = vpop.f32.mrb[0].mxu0
      %544 = vmatprep.mubr.bf16.mxu0 0
      %545 = vmatmul.mubr.bf16.gmra.mrb[0].mxu0 %v453
      %v546 = vpop.f32.mrb[0].mxu0
      %v547 = vadd.f32 %v366, %v546
      %v548 = vpop.f32.mrb[0].mxu0
      %v549 = vpop.f32.mrb[0].mxu0
      %v550 = vadd.f32 %v366, %v549
      %v551 = vpop.f32.mrb[0].mxu0
      %552 = vmatprep.mubr.bf16.mxu0 0
      %553 = vmatmul.mubr.bf16.gmra.mrb[0].mxu0 %v456
      %v554 = vpop.f32.mrb[0].mxu0
      %v555 = vadd.f32 %v366, %v554
      %v556 = vpop.f32.mrb[0].mxu0
      %v557 = vpop.f32.mrb[0].mxu0
      %v558 = vadd.f32 %v366, %v557
      %v559 = vpop.f32.mrb[0].mxu0
      %560 = vmatprep.mubr.bf16.mxu0 0
      %561 = vmatmul.mubr.bf16.gmra.mrb[0].mxu0 %v459
      %v562 = vpop.f32.mrb[0].mxu0
      %v563 = vadd.f32 %v366, %v562
      %v564 = vpop.f32.mrb[0].mxu0
      %v565 = vpop.f32.mrb[0].mxu0
      %v566 = vadd.f32 %v366, %v565
      %v567 = vpop.f32.mrb[0].mxu0
      %568 = vmatprep.mubr.bf16.mxu0 0
      %569 = vmatmul.mubr.bf16.gmra.mrb[0].mxu0 %v462
      %v570 = vpop.f32.mrb[0].mxu0
      %v571 = vadd.f32 %v366, %v570
      %v572 = vpop.f32.mrb[0].mxu0
      %v573 = vpop.f32.mrb[0].mxu0
      %v574 = vadd.f32 %v366, %v573
      %v575 = vpop.f32.mrb[0].mxu0
      %576 = vmatprep.mubr.bf16.mxu0 0
      %577 = vmatmul.mubr.bf16.gmra.mrb[0].mxu0 %v465
      %v578 = vpop.f32.mrb[0].mxu0
      %v579 = vadd.f32 %v366, %v578
      %v580 = vpop.f32.mrb[0].mxu0
      %v581 = vpop.f32.mrb[0].mxu0
      %v582 = vadd.f32 %v366, %v581
      %v583 = vpop.f32.mrb[0].mxu0
      %584 = vmatprep.mubr.bf16.mxu0 0
      %585 = vmatmul.mubr.bf16.gmra.mrb[0].mxu0 %v468
      %v586 = vpop.f32.mrb[0].mxu0
      %v587 = vadd.f32 %v366, %v586
      %v588 = vpop.f32.mrb[0].mxu0
      %v589 = vpop.f32.mrb[0].mxu0
      %v590 = vadd.f32 %v366, %v589
      %v591 = vpop.f32.mrb[0].mxu0
      %592 = vmatprep.mubr.bf16.mxu0 0
      %593 = vmatmul.mubr.bf16.gmra.mrb[0].mxu0 %v471
      %v594 = vpop.f32.mrb[0].mxu0
      %v595 = vadd.f32 %v366, %v594
      %v596 = vpop.f32.mrb[0].mxu0
      %v597 = vpop.f32.mrb[0].mxu0
      %v598 = vadd.f32 %v366, %v597
      %v599 = vpop.f32.mrb[0].mxu0
      %600 = vmatprep.mubr.bf16.mxu0 0
      %601 = vmatmul.mubr.bf16.gmra.mrb[0].mxu0 %v474
      %v602 = vpop.f32.mrb[0].mxu0
      %v603 = vadd.f32 %v366, %v602
      %v604 = vpop.f32.mrb[0].mxu0
      %v605 = vpop.f32.mrb[0].mxu0
      %v606 = vadd.f32 %v366, %v605
      %v607 = vpop.f32.mrb[0].mxu0
      %608 = vmatprep.mubr.bf16.mxu0 0
      %609 = vmatmul.mubr.bf16.gmra.mrb[0].mxu0 %v477
      %v610 = vpop.f32.mrb[0].mxu0
      %v611 = vadd.f32 %v366, %v610
      %v612 = vpop.f32.mrb[0].mxu0
      %v613 = vpop.f32.mrb[0].mxu0
      %v614 = vadd.f32 %v366, %v613
      %v615 = vpop.f32.mrb[0].mxu0
      %616 = vmatprep.mubr.bf16.mxu0 0
      %617 = vmatmul.mubr.bf16.gmra.mrb[0].mxu0 %v480
      %v618 = vpop.f32.mrb[0].mxu0
      %v619 = vadd.f32 %v366, %v618
      %v620 = vpop.f32.mrb[0].mxu0
      %v621 = vpop.f32.mrb[0].mxu0
      %v622 = vadd.f32 %v366, %v621
      %v623 = vpop.f32.mrb[0].mxu0
      %624 = vmatprep.mubr.bf16.mxu0 0
      %625 = vmatmul.mubr.bf16.gmra.mrb[0].mxu0 %v483
      %v626 = vpop.f32.mrb[0].mxu0
      %v627 = vadd.f32 %v366, %v626
      %v628 = vpop.f32.mrb[0].mxu0
      %v629 = vpop.f32.mrb[0].mxu0
      %v630 = vadd.f32 %v366, %v629
      %v631 = vpop.f32.mrb[0].mxu0
      %632 = vmatprep.mubr.bf16.mxu0 0
      %633 = vmatmul.mubr.bf16.gmra.mrb[0].mxu0 %v486
      %v634 = vpop.f32.mrb[0].mxu0
      %v635 = vadd.f32 %v366, %v634
      %v636 = vpop.f32.mrb[0].mxu0
      %v637 = vpop.f32.mrb[0].mxu0
      %v638 = vadd.f32 %v366, %v637
      %v639 = vpop.f32.mrb[0].mxu0
      %640 = vmatprep.mubr.bf16.mxu0 0
      %641 = vmatmul.mubr.bf16.gmra.mrb[0].mxu0 %v489
      %v642 = vpop.f32.mrb[0].mxu0
      %v643 = vadd.f32 %v366, %v642
      %v644 = vpop.f32.mrb[0].mxu0
      %v645 = vpop.f32.mrb[0].mxu0
      %v646 = vadd.f32 %v366, %v645
      %v647 = vpop.f32.mrb[0].mxu0
      %648 = vmatprep.mubr.bf16.mxu0 0
      %649 = vmatmul.mubr.bf16.gmra.mrb[0].mxu0 %v492
      %v650 = vpop.f32.mrb[0].mxu0
      %v651 = vadd.f32 %v366, %v650
      %v652 = vpop.f32.mrb[0].mxu0
      %v653 = vpop.f32.mrb[0].mxu0
      %v654 = vadd.f32 %v366, %v653
      %v655 = vpop.f32.mrb[0].mxu0
      %656 = vmatprep.mubr.bf16.mxu0 0
      %657 = vmatmul.mubr.bf16.gmra.mrb[0].mxu0 %v495
      %v658 = vpop.f32.mrb[0].mxu0
      %v659 = vadd.f32 %v366, %v658
      %v660 = vpop.f32.mrb[0].mxu0
      %v661 = vpop.f32.mrb[0].mxu0
      %v662 = vadd.f32 %v366, %v661
      %v663 = vpop.f32.mrb[0].mxu0
      %664 = vdwg.mxu0
      %v665 = vmax.f32 %v539, 0.0
      %v666 = vmax.f32 %v542, 0.0
      %v667 = vmax.f32 %v547, 0.0
      %v668 = vmax.f32 %v550, 0.0
      %v669 = vmax.f32 %v555, 0.0
      %v670 = vmax.f32 %v558, 0.0
      %v671 = vmax.f32 %v563, 0.0
      %v672 = vmax.f32 %v566, 0.0
      %v673 = vmax.f32 %v571, 0.0
      %v674 = vmax.f32 %v574, 0.0
      %v675 = vmax.f32 %v579, 0.0
      %v676 = vmax.f32 %v582, 0.0
      %v677 = vmax.f32 %v587, 0.0
      %v678 = vmax.f32 %v590, 0.0
      %v679 = vmax.f32 %v595, 0.0
      %v680 = vmax.f32 %v598, 0.0
      %v681 = vmax.f32 %v603, 0.0
      %v682 = vmax.f32 %v606, 0.0
      %v683 = vmax.f32 %v611, 0.0
      %v684 = vmax.f32 %v614, 0.0
      %v685 = vmax.f32 %v619, 0.0
      %v686 = vmax.f32 %v622, 0.0
      %v687 = vmax.f32 %v627, 0.0
      %v688 = vmax.f32 %v630, 0.0
      %v689 = vmax.f32 %v635, 0.0
      %v690 = vmax.f32 %v638, 0.0
      %v691 = vmax.f32 %v643, 0.0
      %v692 = vmax.f32 %v646, 0.0
      %v693 = vmax.f32 %v651, 0.0
      %v694 = vmax.f32 %v654, 0.0
      %v695 = vmax.f32 %v659, 0.0
      %v696 = vmax.f32 %v662, 0.0
      %v697 = vpack.c.bf16 %v666, %v665
      %v698 = vpack.c.bf16 %v668, %v667
      %v699 = vpack.c.bf16 %v670, %v669
      %v700 = vpack.c.bf16 %v672, %v671
      %v701 = vpack.c.bf16 %v674, %v673
      %v702 = vpack.c.bf16 %v676, %v675
      %v703 = vpack.c.bf16 %v678, %v677
      %v704 = vpack.c.bf16 %v680, %v679
      %v705 = vpack.c.bf16 %v682, %v681
      %v706 = vpack.c.bf16 %v684, %v683
      %v707 = vpack.c.bf16 %v686, %v685
      %v708 = vpack.c.bf16 %v688, %v687
      %v709 = vpack.c.bf16 %v690, %v689
      %v710 = vpack.c.bf16 %v692, %v691
      %v711 = vpack.c.bf16 %v694, %v693
      %v712 = vpack.c.bf16 %v696, %v695
      %v713 = vld [vmem:[%s3] sm:$0xf]
      %v714 = vld [vmem:[%s3 + $0x4] sm:$0xf]
      %v715 = vld [vmem:[%s3 + $0x8] sm:$0xf]
      %v716 = vld [vmem:[%s3 + $0xc] sm:$0xf]
      %v717 = vld [vmem:[%s3 + $0x10] sm:$0xf]
      %v718 = vld [vmem:[%s3 + $0x14] sm:$0xf]
      %v719 = vld [vmem:[%s3 + $0x18] sm:$0xf]
      %v720 = vld [vmem:[%s3 + $0x1c] sm:$0xf]
      %v721 = vld [vmem:[%s4] sm:$0x1]
      %v723 = vlaneseq
      %v724 = vshrl.u32 %v723, 7
      %v725 = vsub.s32 0, %v724
      %v726 = vrot.slane %v721, %v725
      %v736 = vunpack.c.l.b16 %v713
      %v737 = vunpack.c.l.b16 %v714
      %v738 = vunpack.c.l.b16 %v715
      %v739 = vunpack.c.l.b16 %v716
      %v740 = vunpack.c.l.b16 %v717
      %v741 = vunpack.c.l.b16 %v718
      %v742 = vunpack.c.l.b16 %v719
      %v743 = vunpack.c.l.b16 %v720
      %v744 = vpack.c.b16 %v737, %v736
      %v745 = vpack.c.b16 %v739, %v738
      %v746 = vpack.c.b16 %v741, %v740
      %v747 = vpack.c.b16 %v743, %v742
      %vm752 = vcmask 523264
      %v754 = vsel %vm752, %v697, 0
      %v757 = vsel %vm752, %v698, 0
      %v760 = vsel %vm752, %v699, 0
      %v763 = vsel %vm752, %v700, 0
      %v766 = vsel %vm752, %v701, 0
      %v769 = vsel %vm752, %v702, 0
      %v772 = vsel %vm752, %v703, 0
      %v775 = vsel %vm752, %v704, 0
      %v778 = vsel %vm752, %v705, 0
      %v781 = vsel %vm752, %v706, 0
      %v784 = vsel %vm752, %v707, 0
      %v787 = vsel %vm752, %v708, 0
      %v790 = vsel %vm752, %v709, 0
      %v793 = vsel %vm752, %v710, 0
      %v796 = vsel %vm752, %v711, 0
      %v799 = vsel %vm752, %v712, 0
      %801 = vmatprep.subr.bf16.mxu0 0
      %802 = vmatpush1.bf16.msra.mxu0 %v744
      %803 = vmatprep.subr.bf16.mxu0 0
      %804 = vmatpush1.bf16.msra.mxu0 %v745
      %805 = vmatprep.subr.bf16.mxu0 0
      %806 = vmatpush1.bf16.msra.mxu0 %v746
      %807 = vmatprep.subr.bf16.mxu0 0
      %808 = vmatpush1.bf16.msra.mxu0 %v747
      %809 = vmatprep.subr.bf16.mxu0 0
      %810 = vmatpush1.bf16.msra.mxu0 0
      %811 = vmatprep.subr.bf16.mxu0 0
      %812 = vmatpush1.bf16.msra.mxu0 0
      %813 = vmatprep.subr.bf16.mxu0 0
      %814 = vmatpush1.bf16.msra.mxu0 0
      %815 = vmatprep.subr.bf16.mxu0 0
      %816 = vmatpush1.bf16.msra.mxu0 0
      %817 = vmatprep.subr.bf16.mxu0 0
      %818 = vmatpush1.bf16.msra.mxu0 0
      %819 = vmatprep.subr.bf16.mxu0 0
      %820 = vmatpush1.bf16.msra.mxu0 0
      %821 = vmatprep.subr.bf16.mxu0 0
      %822 = vmatpush1.bf16.msra.mxu0 0
      %823 = vmatprep.subr.bf16.mxu0 0
      %824 = vmatpush1.bf16.msra.mxu0 0
      %825 = vmatprep.subr.bf16.mxu0 0
      %826 = vmatpush1.bf16.msra.mxu0 0
      %827 = vmatprep.subr.bf16.mxu0 0
      %828 = vmatpush1.bf16.msra.mxu0 0
      %829 = vmatprep.subr.bf16.mxu0 0
      %830 = vmatpush1.bf16.msra.mxu0 0
      %831 = vmatprep.subr.bf16.mxu0 0
      %832 = vmatpush1.bf16.msra.mxu0 0
      %833 = vmatprep.mubr.bf16.mxu0 0
      %834 = vmatmul.mubr.bf16.gmra.mrb[0].mxu0 %v754
      %v835 = vpop.f32.mrb[0].mxu0
      %v836 = vadd.f32 %v726, %v835
      %v837 = vpop.f32.mrb[0].mxu0
      %v838 = vpop.f32.mrb[0].mxu0
      %v839 = vadd.f32 %v726, %v838
      %v840 = vpop.f32.mrb[0].mxu0
      %841 = vmatprep.mubr.bf16.mxu0 0
      %842 = vmatmul.mubr.bf16.gmra.mrb[0].mxu0 %v757
      %v843 = vpop.f32.mrb[0].mxu0
      %v844 = vadd.f32 %v726, %v843
      %v845 = vpop.f32.mrb[0].mxu0
      %v846 = vpop.f32.mrb[0].mxu0
      %v847 = vadd.f32 %v726, %v846
      %v848 = vpop.f32.mrb[0].mxu0
      %849 = vmatprep.mubr.bf16.mxu0 0
      %850 = vmatmul.mubr.bf16.gmra.mrb[0].mxu0 %v760
      %v851 = vpop.f32.mrb[0].mxu0
      %v852 = vadd.f32 %v726, %v851
      %v853 = vpop.f32.mrb[0].mxu0
      %v854 = vpop.f32.mrb[0].mxu0
      %v855 = vadd.f32 %v726, %v854
      %v856 = vpop.f32.mrb[0].mxu0
      %857 = vmatprep.mubr.bf16.mxu0 0
      %858 = vmatmul.mubr.bf16.gmra.mrb[0].mxu0 %v763
      %v859 = vpop.f32.mrb[0].mxu0
      %v860 = vadd.f32 %v726, %v859
      %v861 = vpop.f32.mrb[0].mxu0
      %v862 = vpop.f32.mrb[0].mxu0
      %v863 = vadd.f32 %v726, %v862
      %v864 = vpop.f32.mrb[0].mxu0
      %865 = vmatprep.mubr.bf16.mxu0 0
      %866 = vmatmul.mubr.bf16.gmra.mrb[0].mxu0 %v766
      %v867 = vpop.f32.mrb[0].mxu0
      %v868 = vadd.f32 %v726, %v867
      %v869 = vpop.f32.mrb[0].mxu0
      %v870 = vpop.f32.mrb[0].mxu0
      %v871 = vadd.f32 %v726, %v870
      %v872 = vpop.f32.mrb[0].mxu0
      %873 = vmatprep.mubr.bf16.mxu0 0
      %874 = vmatmul.mubr.bf16.gmra.mrb[0].mxu0 %v769
      %v875 = vpop.f32.mrb[0].mxu0
      %v876 = vadd.f32 %v726, %v875
      %v877 = vpop.f32.mrb[0].mxu0
      %v878 = vpop.f32.mrb[0].mxu0
      %v879 = vadd.f32 %v726, %v878
      %v880 = vpop.f32.mrb[0].mxu0
      %881 = vmatprep.mubr.bf16.mxu0 0
      %882 = vmatmul.mubr.bf16.gmra.mrb[0].mxu0 %v772
      %v883 = vpop.f32.mrb[0].mxu0
      %v884 = vadd.f32 %v726, %v883
      %v885 = vpop.f32.mrb[0].mxu0
      %v886 = vpop.f32.mrb[0].mxu0
      %v887 = vadd.f32 %v726, %v886
      %v888 = vpop.f32.mrb[0].mxu0
      %889 = vmatprep.mubr.bf16.mxu0 0
      %890 = vmatmul.mubr.bf16.gmra.mrb[0].mxu0 %v775
      %v891 = vpop.f32.mrb[0].mxu0
      %v892 = vadd.f32 %v726, %v891
      %v893 = vpop.f32.mrb[0].mxu0
      %v894 = vpop.f32.mrb[0].mxu0
      %v895 = vadd.f32 %v726, %v894
      %v896 = vpop.f32.mrb[0].mxu0
      %897 = vmatprep.mubr.bf16.mxu0 0
      %898 = vmatmul.mubr.bf16.gmra.mrb[0].mxu0 %v778
      %v899 = vpop.f32.mrb[0].mxu0
      %v900 = vadd.f32 %v726, %v899
      %v901 = vpop.f32.mrb[0].mxu0
      %v902 = vpop.f32.mrb[0].mxu0
      %v903 = vadd.f32 %v726, %v902
      %v904 = vpop.f32.mrb[0].mxu0
      %905 = vmatprep.mubr.bf16.mxu0 0
      %906 = vmatmul.mubr.bf16.gmra.mrb[0].mxu0 %v781
      %v907 = vpop.f32.mrb[0].mxu0
      %v908 = vadd.f32 %v726, %v907
      %v909 = vpop.f32.mrb[0].mxu0
      %v910 = vpop.f32.mrb[0].mxu0
      %v911 = vadd.f32 %v726, %v910
      %v912 = vpop.f32.mrb[0].mxu0
      %913 = vmatprep.mubr.bf16.mxu0 0
      %914 = vmatmul.mubr.bf16.gmra.mrb[0].mxu0 %v784
      %v915 = vpop.f32.mrb[0].mxu0
      %v916 = vadd.f32 %v726, %v915
      %v917 = vpop.f32.mrb[0].mxu0
      %v918 = vpop.f32.mrb[0].mxu0
      %v919 = vadd.f32 %v726, %v918
      %v920 = vpop.f32.mrb[0].mxu0
      %921 = vmatprep.mubr.bf16.mxu0 0
      %922 = vmatmul.mubr.bf16.gmra.mrb[0].mxu0 %v787
      %v923 = vpop.f32.mrb[0].mxu0
      %v924 = vadd.f32 %v726, %v923
      %v925 = vpop.f32.mrb[0].mxu0
      %v926 = vpop.f32.mrb[0].mxu0
      %v927 = vadd.f32 %v726, %v926
      %v928 = vpop.f32.mrb[0].mxu0
      %929 = vmatprep.mubr.bf16.mxu0 0
      %930 = vmatmul.mubr.bf16.gmra.mrb[0].mxu0 %v790
      %v931 = vpop.f32.mrb[0].mxu0
      %v932 = vadd.f32 %v726, %v931
      %v933 = vpop.f32.mrb[0].mxu0
      %v934 = vpop.f32.mrb[0].mxu0
      %v935 = vadd.f32 %v726, %v934
      %v936 = vpop.f32.mrb[0].mxu0
      %937 = vmatprep.mubr.bf16.mxu0 0
      %938 = vmatmul.mubr.bf16.gmra.mrb[0].mxu0 %v793
      %v939 = vpop.f32.mrb[0].mxu0
      %v940 = vadd.f32 %v726, %v939
      %v941 = vpop.f32.mrb[0].mxu0
      %v942 = vpop.f32.mrb[0].mxu0
      %v943 = vadd.f32 %v726, %v942
      %v944 = vpop.f32.mrb[0].mxu0
      %945 = vmatprep.mubr.bf16.mxu0 0
      %946 = vmatmul.mubr.bf16.gmra.mrb[0].mxu0 %v796
      %v947 = vpop.f32.mrb[0].mxu0
      %v948 = vadd.f32 %v726, %v947
      %v949 = vpop.f32.mrb[0].mxu0
      %v950 = vpop.f32.mrb[0].mxu0
      %v951 = vadd.f32 %v726, %v950
      %v952 = vpop.f32.mrb[0].mxu0
      %953 = vmatprep.mubr.bf16.mxu0 0
      %954 = vmatmul.mubr.bf16.gmra.mrb[0].mxu0 %v799
      %v955 = vpop.f32.mrb[0].mxu0
      %v956 = vadd.f32 %v726, %v955
      %v957 = vpop.f32.mrb[0].mxu0
      %v958 = vpop.f32.mrb[0].mxu0
      %v959 = vadd.f32 %v726, %v958
      %v960 = vpop.f32.mrb[0].mxu0
      %961 = vdwg.mxu0
      %v962 = vmax.f32 %v836, 0.0
      %v963 = vmax.f32 %v839, 0.0
      %v964 = vmax.f32 %v844, 0.0
      %v965 = vmax.f32 %v847, 0.0
      %v966 = vmax.f32 %v852, 0.0
      %v967 = vmax.f32 %v855, 0.0
      %v968 = vmax.f32 %v860, 0.0
      %v969 = vmax.f32 %v863, 0.0
      %v970 = vmax.f32 %v868, 0.0
      %v971 = vmax.f32 %v871, 0.0
      %v972 = vmax.f32 %v876, 0.0
      %v973 = vmax.f32 %v879, 0.0
      %v974 = vmax.f32 %v884, 0.0
      %v975 = vmax.f32 %v887, 0.0
      %v976 = vmax.f32 %v892, 0.0
      %v977 = vmax.f32 %v895, 0.0
      %v978 = vmax.f32 %v900, 0.0
      %v979 = vmax.f32 %v903, 0.0
      %v980 = vmax.f32 %v908, 0.0
      %v981 = vmax.f32 %v911, 0.0
      %v982 = vmax.f32 %v916, 0.0
      %v983 = vmax.f32 %v919, 0.0
      %v984 = vmax.f32 %v924, 0.0
      %v985 = vmax.f32 %v927, 0.0
      %v986 = vmax.f32 %v932, 0.0
      %v987 = vmax.f32 %v935, 0.0
      %v988 = vmax.f32 %v940, 0.0
      %v989 = vmax.f32 %v943, 0.0
      %v990 = vmax.f32 %v948, 0.0
      %v991 = vmax.f32 %v951, 0.0
      %v992 = vmax.f32 %v956, 0.0
      %v993 = vmax.f32 %v959, 0.0
      %v994 = vpack.c.bf16 %v963, %v962
      %v995 = vpack.c.bf16 %v965, %v964
      %v996 = vpack.c.bf16 %v967, %v966
      %v997 = vpack.c.bf16 %v969, %v968
      %v998 = vpack.c.bf16 %v971, %v970
      %v999 = vpack.c.bf16 %v973, %v972
      %v1000 = vpack.c.bf16 %v975, %v974
      %v1001 = vpack.c.bf16 %v977, %v976
      %v1002 = vpack.c.bf16 %v979, %v978
      %v1003 = vpack.c.bf16 %v981, %v980
      %v1004 = vpack.c.bf16 %v983, %v982
      %v1005 = vpack.c.bf16 %v985, %v984
      %v1006 = vpack.c.bf16 %v987, %v986
      %v1007 = vpack.c.bf16 %v989, %v988
      %v1008 = vpack.c.bf16 %v991, %v990
      %v1009 = vpack.c.bf16 %v993, %v992
      %v1010 = vld [vmem:[%s5] sm:$0xff]
      %v1011 = vld [vmem:[%s5 + $0x8] sm:$0xff]
      %v1012 = vld [vmem:[%s5 + $0x10] sm:$0xff]
      %v1013 = vld [vmem:[%s5 + $0x18] sm:$0xff]
      %v1014 = vld [vmem:[%s5 + $0x20] sm:$0xff]
      %v1015 = vld [vmem:[%s5 + $0x28] sm:$0xff]
      %v1016 = vld [vmem:[%s5 + $0x30] sm:$0xff]
      %v1017 = vld [vmem:[%s5 + $0x38] sm:$0xff]
      %v1018 = vld [vmem:[%s5 + $0x40] sm:$0xff]
      %v1019 = vld [vmem:[%s5 + $0x48] sm:$0xff]
      %v1020 = vld [vmem:[%s5 + $0x50] sm:$0xff]
      %v1021 = vld [vmem:[%s5 + $0x58] sm:$0xff]
      %v1022 = vld [vmem:[%s5 + $0x60] sm:$0xff]
      %v1023 = vld [vmem:[%s5 + $0x68] sm:$0xff]
      %v1024 = vld [vmem:[%s5 + $0x70] sm:$0xff]
      %v1025 = vld [vmem:[%s5 + $0x78] sm:$0xff]
      %v1026 = vld [vmem:[%s5 + $0x80] sm:$0xff]
      %v1027 = vld [vmem:[%s5 + $0x88] sm:$0xff]
      %v1028 = vld [vmem:[%s5 + $0x90] sm:$0xff]
      %v1029 = vld [vmem:[%s5 + $0x98] sm:$0xff]
      %v1030 = vld [vmem:[%s5 + $0xa0] sm:$0xff]
      %v1031 = vld [vmem:[%s5 + $0xa8] sm:$0xff]
      %v1032 = vld [vmem:[%s5 + $0xb0] sm:$0xff]
      %v1033 = vld [vmem:[%s5 + $0xb8] sm:$0xff]
      %v1034 = vld [vmem:[%s5 + $0xc0] sm:$0xff]
      %v1035 = vld [vmem:[%s5 + $0xc8] sm:$0xff]
      %v1036 = vld [vmem:[%s5 + $0xd0] sm:$0xff]
      %v1037 = vld [vmem:[%s5 + $0xd8] sm:$0xff]
      %v1038 = vld [vmem:[%s5 + $0xe0] sm:$0xff]
      %v1039 = vld [vmem:[%s5 + $0xe8] sm:$0xff]
      %v1040 = vld [vmem:[%s5 + $0xf0] sm:$0xff]
      %v1041 = vld [vmem:[%s5 + $0xf8] sm:$0xff]
      %v1042 = vld [vmem:[%s5 + $0x100] sm:$0xff]
      %v1043 = vld [vmem:[%s5 + $0x108] sm:$0xff]
      %v1044 = vld [vmem:[%s5 + $0x110] sm:$0xff]
      %v1045 = vld [vmem:[%s5 + $0x118] sm:$0xff]
      %v1046 = vld [vmem:[%s5 + $0x120] sm:$0xff]
      %v1047 = vld [vmem:[%s5 + $0x128] sm:$0xff]
      %v1048 = vld [vmem:[%s5 + $0x130] sm:$0xff]
      %v1049 = vld [vmem:[%s5 + $0x138] sm:$0xff]
      %v1050 = vld [vmem:[%s5 + $0x140] sm:$0xff]
      %v1051 = vld [vmem:[%s5 + $0x148] sm:$0xff]
      %v1052 = vld [vmem:[%s5 + $0x150] sm:$0xff]
      %v1053 = vld [vmem:[%s5 + $0x158] sm:$0xff]
      %v1054 = vld [vmem:[%s5 + $0x160] sm:$0xff]
      %v1055 = vld [vmem:[%s5 + $0x168] sm:$0xff]
      %v1056 = vld [vmem:[%s5 + $0x170] sm:$0xff]
      %v1057 = vld [vmem:[%s5 + $0x178] sm:$0xff]
      %v1058 = vld [vmem:[%s5 + $0x180] sm:$0xff]
      %v1059 = vld [vmem:[%s5 + $0x188] sm:$0xff]
      %v1060 = vld [vmem:[%s5 + $0x190] sm:$0xff]
      %v1061 = vld [vmem:[%s5 + $0x198] sm:$0xff]
      %v1062 = vld [vmem:[%s5 + $0x1a0] sm:$0xff]
      %v1063 = vld [vmem:[%s5 + $0x1a8] sm:$0xff]
      %v1064 = vld [vmem:[%s5 + $0x1b0] sm:$0xff]
      %v1065 = vld [vmem:[%s5 + $0x1b8] sm:$0xff]
      %v1066 = vld [vmem:[%s5 + $0x1c0] sm:$0xff]
      %v1067 = vld [vmem:[%s5 + $0x1c8] sm:$0xff]
      %v1068 = vld [vmem:[%s5 + $0x1d0] sm:$0xff]
      %v1069 = vld [vmem:[%s5 + $0x1d8] sm:$0xff]
      %v1070 = vld [vmem:[%s5 + $0x1e0] sm:$0xff]
      %v1071 = vld [vmem:[%s5 + $0x1e8] sm:$0xff]
      %v1072 = vld [vmem:[%s5 + $0x1f0] sm:$0xff]
      %v1073 = vld [vmem:[%s5 + $0x1f8] sm:$0xff]
      %v1074 = vld [vmem:[%s6] sm:$0xff]
      %v1076 = vlaneseq
      %v1077 = vshrl.u32 %v1076, 7
      %v1078 = vsub.s32 0, %v1077
      %v1079 = vrot.slane %v1074, %v1078
      %v1080 = vlaneseq
      %v1081 = vshrl.u32 %v1080, 7
      %v1082 = vsub.s32 1, %v1081
      %v1083 = vrot.slane %v1074, %v1082
      %v1084 = vlaneseq
      %v1085 = vshrl.u32 %v1084, 7
      %v1086 = vsub.s32 2, %v1085
      %v1087 = vrot.slane %v1074, %v1086
      %v1088 = vlaneseq
      %v1089 = vshrl.u32 %v1088, 7
      %v1090 = vsub.s32 3, %v1089
      %v1091 = vrot.slane %v1074, %v1090
      %v1092 = vlaneseq
      %v1093 = vshrl.u32 %v1092, 7
      %v1094 = vsub.s32 4, %v1093
      %v1095 = vrot.slane %v1074, %v1094
      %v1096 = vlaneseq
      %v1097 = vshrl.u32 %v1096, 7
      %v1098 = vsub.s32 5, %v1097
      %v1099 = vrot.slane %v1074, %v1098
      %v1100 = vlaneseq
      %v1101 = vshrl.u32 %v1100, 7
      %v1102 = vsub.s32 6, %v1101
      %v1103 = vrot.slane %v1074, %v1102
      %v1104 = vlaneseq
      %v1105 = vshrl.u32 %v1104, 7
      %v1106 = vsub.s32 7, %v1105
      %v1107 = vrot.slane %v1074, %v1106
      %v1180 = vunpack.c.l.b16 %v1010
      %v1181 = vunpack.c.h.b16 %v1010
      %v1182 = vunpack.c.l.b16 %v1011
      %v1183 = vunpack.c.h.b16 %v1011
      %v1184 = vunpack.c.l.b16 %v1012
      %v1185 = vunpack.c.h.b16 %v1012
      %v1186 = vunpack.c.l.b16 %v1013
      %v1187 = vunpack.c.h.b16 %v1013
      %v1188 = vunpack.c.l.b16 %v1014
      %v1189 = vunpack.c.h.b16 %v1014
      %v1190 = vunpack.c.l.b16 %v1015
      %v1191 = vunpack.c.h.b16 %v1015
      %v1192 = vunpack.c.l.b16 %v1016
      %v1193 = vunpack.c.h.b16 %v1016
      %v1194 = vunpack.c.l.b16 %v1017
      %v1195 = vunpack.c.h.b16 %v1017
      %v1196 = vunpack.c.l.b16 %v1018
      %v1197 = vunpack.c.h.b16 %v1018
      %v1198 = vunpack.c.l.b16 %v1019
      %v1199 = vunpack.c.h.b16 %v1019
      %v1200 = vunpack.c.l.b16 %v1020
      %v1201 = vunpack.c.h.b16 %v1020
      %v1202 = vunpack.c.l.b16 %v1021
      %v1203 = vunpack.c.h.b16 %v1021
      %v1204 = vunpack.c.l.b16 %v1022
      %v1205 = vunpack.c.h.b16 %v1022
      %v1206 = vunpack.c.l.b16 %v1023
      %v1207 = vunpack.c.h.b16 %v1023
      %v1208 = vunpack.c.l.b16 %v1024
      %v1209 = vunpack.c.h.b16 %v1024
      %v1210 = vunpack.c.l.b16 %v1025
      %v1211 = vunpack.c.h.b16 %v1025
      %v1212 = vunpack.c.l.b16 %v1026
      %v1213 = vunpack.c.h.b16 %v1026
      %v1214 = vunpack.c.l.b16 %v1027
      %v1215 = vunpack.c.h.b16 %v1027
      %v1216 = vunpack.c.l.b16 %v1028
      %v1217 = vunpack.c.h.b16 %v1028
      %v1218 = vunpack.c.l.b16 %v1029
      %v1219 = vunpack.c.h.b16 %v1029
      %v1220 = vunpack.c.l.b16 %v1030
      %v1221 = vunpack.c.h.b16 %v1030
      %v1222 = vunpack.c.l.b16 %v1031
      %v1223 = vunpack.c.h.b16 %v1031
      %v1224 = vunpack.c.l.b16 %v1032
      %v1225 = vunpack.c.h.b16 %v1032
      %v1226 = vunpack.c.l.b16 %v1033
      %v1227 = vunpack.c.h.b16 %v1033
      %v1228 = vunpack.c.l.b16 %v1034
      %v1229 = vunpack.c.h.b16 %v1034
      %v1230 = vunpack.c.l.b16 %v1035
      %v1231 = vunpack.c.h.b16 %v1035
      %v1232 = vunpack.c.l.b16 %v1036
      %v1233 = vunpack.c.h.b16 %v1036
      %v1234 = vunpack.c.l.b16 %v1037
      %v1235 = vunpack.c.h.b16 %v1037
      %v1236 = vunpack.c.l.b16 %v1038
      %v1237 = vunpack.c.h.b16 %v1038
      %v1238 = vunpack.c.l.b16 %v1039
      %v1239 = vunpack.c.h.b16 %v1039
      %v1240 = vunpack.c.l.b16 %v1040
      %v1241 = vunpack.c.h.b16 %v1040
      %v1242 = vunpack.c.l.b16 %v1041
      %v1243 = vunpack.c.h.b16 %v1041
      %v1244 = vunpack.c.l.b16 %v1042
      %v1245 = vunpack.c.h.b16 %v1042
      %v1246 = vunpack.c.l.b16 %v1043
      %v1247 = vunpack.c.h.b16 %v1043
      %v1248 = vunpack.c.l.b16 %v1044
      %v1249 = vunpack.c.h.b16 %v1044
      %v1250 = vunpack.c.l.b16 %v1045
      %v1251 = vunpack.c.h.b16 %v1045
      %v1252 = vunpack.c.l.b16 %v1046
      %v1253 = vunpack.c.h.b16 %v1046
      %v1254 = vunpack.c.l.b16 %v1047
      %v1255 = vunpack.c.h.b16 %v1047
      %v1256 = vunpack.c.l.b16 %v1048
      %v1257 = vunpack.c.h.b16 %v1048
      %v1258 = vunpack.c.l.b16 %v1049
      %v1259 = vunpack.c.h.b16 %v1049
      %v1260 = vunpack.c.l.b16 %v1050
      %v1261 = vunpack.c.h.b16 %v1050
      %v1262 = vunpack.c.l.b16 %v1051
      %v1263 = vunpack.c.h.b16 %v1051
      %v1264 = vunpack.c.l.b16 %v1052
      %v1265 = vunpack.c.h.b16 %v1052
      %v1266 = vunpack.c.l.b16 %v1053
      %v1267 = vunpack.c.h.b16 %v1053
      %v1268 = vunpack.c.l.b16 %v1054
      %v1269 = vunpack.c.h.b16 %v1054
      %v1270 = vunpack.c.l.b16 %v1055
      %v1271 = vunpack.c.h.b16 %v1055
      %v1272 = vunpack.c.l.b16 %v1056
      %v1273 = vunpack.c.h.b16 %v1056
      %v1274 = vunpack.c.l.b16 %v1057
      %v1275 = vunpack.c.h.b16 %v1057
      %v1276 = vunpack.c.l.b16 %v1058
      %v1277 = vunpack.c.h.b16 %v1058
      %v1278 = vunpack.c.l.b16 %v1059
      %v1279 = vunpack.c.h.b16 %v1059
      %v1280 = vunpack.c.l.b16 %v1060
      %v1281 = vunpack.c.h.b16 %v1060
      %v1282 = vunpack.c.l.b16 %v1061
      %v1283 = vunpack.c.h.b16 %v1061
      %v1284 = vunpack.c.l.b16 %v1062
      %v1285 = vunpack.c.h.b16 %v1062
      %v1286 = vunpack.c.l.b16 %v1063
      %v1287 = vunpack.c.h.b16 %v1063
      %v1288 = vunpack.c.l.b16 %v1064
      %v1289 = vunpack.c.h.b16 %v1064
      %v1290 = vunpack.c.l.b16 %v1065
      %v1291 = vunpack.c.h.b16 %v1065
      %v1292 = vunpack.c.l.b16 %v1066
      %v1293 = vunpack.c.h.b16 %v1066
      %v1294 = vunpack.c.l.b16 %v1067
      %v1295 = vunpack.c.h.b16 %v1067
      %v1296 = vunpack.c.l.b16 %v1068
      %v1297 = vunpack.c.h.b16 %v1068
      %v1298 = vunpack.c.l.b16 %v1069
      %v1299 = vunpack.c.h.b16 %v1069
      %v1300 = vunpack.c.l.b16 %v1070
      %v1301 = vunpack.c.h.b16 %v1070
      %v1302 = vunpack.c.l.b16 %v1071
      %v1303 = vunpack.c.h.b16 %v1071
      %v1304 = vunpack.c.l.b16 %v1072
      %v1305 = vunpack.c.h.b16 %v1072
      %v1306 = vunpack.c.l.b16 %v1073
      %v1307 = vunpack.c.h.b16 %v1073
      %v1308 = vpack.c.b16 %v1188, %v1180
      %v1309 = vpack.c.b16 %v1189, %v1181
      %v1310 = vpack.c.b16 %v1190, %v1182
      %v1311 = vpack.c.b16 %v1191, %v1183
      %v1312 = vpack.c.b16 %v1192, %v1184
      %v1313 = vpack.c.b16 %v1193, %v1185
      %v1314 = vpack.c.b16 %v1194, %v1186
      %v1315 = vpack.c.b16 %v1195, %v1187
      %v1316 = vpack.c.b16 %v1204, %v1196
      %v1317 = vpack.c.b16 %v1205, %v1197
      %v1318 = vpack.c.b16 %v1206, %v1198
      %v1319 = vpack.c.b16 %v1207, %v1199
      %v1320 = vpack.c.b16 %v1208, %v1200
      %v1321 = vpack.c.b16 %v1209, %v1201
      %v1322 = vpack.c.b16 %v1210, %v1202
      %v1323 = vpack.c.b16 %v1211, %v1203
      %v1324 = vpack.c.b16 %v1220, %v1212
      %v1325 = vpack.c.b16 %v1221, %v1213
      %v1326 = vpack.c.b16 %v1222, %v1214
      %v1327 = vpack.c.b16 %v1223, %v1215
      %v1328 = vpack.c.b16 %v1224, %v1216
      %v1329 = vpack.c.b16 %v1225, %v1217
      %v1330 = vpack.c.b16 %v1226, %v1218
      %v1331 = vpack.c.b16 %v1227, %v1219
      %v1332 = vpack.c.b16 %v1236, %v1228
      %v1333 = vpack.c.b16 %v1237, %v1229
      %v1334 = vpack.c.b16 %v1238, %v1230
      %v1335 = vpack.c.b16 %v1239, %v1231
      %v1336 = vpack.c.b16 %v1240, %v1232
      %v1337 = vpack.c.b16 %v1241, %v1233
      %v1338 = vpack.c.b16 %v1242, %v1234
      %v1339 = vpack.c.b16 %v1243, %v1235
      %v1340 = vpack.c.b16 %v1252, %v1244
      %v1341 = vpack.c.b16 %v1253, %v1245
      %v1342 = vpack.c.b16 %v1254, %v1246
      %v1343 = vpack.c.b16 %v1255, %v1247
      %v1344 = vpack.c.b16 %v1256, %v1248
      %v1345 = vpack.c.b16 %v1257, %v1249
      %v1346 = vpack.c.b16 %v1258, %v1250
      %v1347 = vpack.c.b16 %v1259, %v1251
      %v1348 = vpack.c.b16 %v1268, %v1260
      %v1349 = vpack.c.b16 %v1269, %v1261
      %v1350 = vpack.c.b16 %v1270, %v1262
      %v1351 = vpack.c.b16 %v1271, %v1263
      %v1352 = vpack.c.b16 %v1272, %v1264
      %v1353 = vpack.c.b16 %v1273, %v1265
      %v1354 = vpack.c.b16 %v1274, %v1266
      %v1355 = vpack.c.b16 %v1275, %v1267
      %v1356 = vpack.c.b16 %v1284, %v1276
      %v1357 = vpack.c.b16 %v1285, %v1277
      %v1358 = vpack.c.b16 %v1286, %v1278
      %v1359 = vpack.c.b16 %v1287, %v1279
      %v1360 = vpack.c.b16 %v1288, %v1280
      %v1361 = vpack.c.b16 %v1289, %v1281
      %v1362 = vpack.c.b16 %v1290, %v1282
      %v1363 = vpack.c.b16 %v1291, %v1283
      %v1364 = vpack.c.b16 %v1300, %v1292
      %v1365 = vpack.c.b16 %v1301, %v1293
      %v1366 = vpack.c.b16 %v1302, %v1294
      %v1367 = vpack.c.b16 %v1303, %v1295
      %v1368 = vpack.c.b16 %v1304, %v1296
      %v1369 = vpack.c.b16 %v1305, %v1297
      %v1370 = vpack.c.b16 %v1306, %v1298
      %v1371 = vpack.c.b16 %v1307, %v1299
      %1436 = vmatprep.subr.bf16.mxu0 %v1309
      %1437 = vmatpush1.bf16.msra.mxu0 %v1308
      %1438 = vmatprep.subr.bf16.mxu0 %v1317
      %1439 = vmatpush1.bf16.msra.mxu0 %v1316
      %1440 = vmatprep.subr.bf16.mxu0 %v1325
      %1441 = vmatpush1.bf16.msra.mxu0 %v1324
      %1442 = vmatprep.subr.bf16.mxu0 %v1333
      %1443 = vmatpush1.bf16.msra.mxu0 %v1332
      %1444 = vmatprep.subr.bf16.mxu0 %v1341
      %1445 = vmatpush1.bf16.msra.mxu0 %v1340
      %1446 = vmatprep.subr.bf16.mxu0 %v1349
      %1447 = vmatpush1.bf16.msra.mxu0 %v1348
      %1448 = vmatprep.subr.bf16.mxu0 %v1357
      %1449 = vmatpush1.bf16.msra.mxu0 %v1356
      %1450 = vmatprep.subr.bf16.mxu0 %v1365
      %1451 = vmatpush1.bf16.msra.mxu0 %v1364
      %1452 = vmatprep.subr.bf16.mxu0 0
      %1453 = vmatpush1.bf16.msra.mxu0 0
      %1454 = vmatprep.subr.bf16.mxu0 0
      %1455 = vmatpush1.bf16.msra.mxu0 0
      %1456 = vmatprep.subr.bf16.mxu0 0
      %1457 = vmatpush1.bf16.msra.mxu0 0
      %1458 = vmatprep.subr.bf16.mxu0 0
      %1459 = vmatpush1.bf16.msra.mxu0 0
      %1460 = vmatprep.subr.bf16.mxu0 0
      %1461 = vmatpush1.bf16.msra.mxu0 0
      %1462 = vmatprep.subr.bf16.mxu0 0
      %1463 = vmatpush1.bf16.msra.mxu0 0
      %1464 = vmatprep.subr.bf16.mxu0 0
      %1465 = vmatpush1.bf16.msra.mxu0 0
      %1466 = vmatprep.subr.bf16.mxu0 0
      %1467 = vmatpush1.bf16.msra.mxu0 0
      %1468 = vmatprep.mubr.bf16.mxu0 0
      %1469 = vmatmul.mubr.bf16.gmra.mrb[0].mxu0 %v994
      %v1470 = vpop.f32.mrb[0].mxu0
      %v1471 = vadd.f32 %v1079, %v1470
      %v1472 = vpop.f32.mrb[0].mxu0
      %v1473 = vadd.f32 %v1083, %v1472
      %v1474 = vpop.f32.mrb[0].mxu0
      %v1475 = vadd.f32 %v1079, %v1474
      %v1476 = vpop.f32.mrb[0].mxu0
      %v1477 = vadd.f32 %v1083, %v1476
      %1478 = vmatprep.mubr.bf16.mxu0 0
      %1479 = vmatmul.mubr.bf16.gmra.mrb[0].mxu0 %v995
      %v1480 = vpop.f32.mrb[0].mxu0
      %v1481 = vadd.f32 %v1079, %v1480
      %v1482 = vpop.f32.mrb[0].mxu0
      %v1483 = vadd.f32 %v1083, %v1482
      %v1484 = vpop.f32.mrb[0].mxu0
      %v1485 = vadd.f32 %v1079, %v1484
      %v1486 = vpop.f32.mrb[0].mxu0
      %v1487 = vadd.f32 %v1083, %v1486
      %1488 = vmatprep.mubr.bf16.mxu0 0
      %1489 = vmatmul.mubr.bf16.gmra.mrb[0].mxu0 %v996
      %v1490 = vpop.f32.mrb[0].mxu0
      %v1491 = vadd.f32 %v1079, %v1490
      %v1492 = vpop.f32.mrb[0].mxu0
      %v1493 = vadd.f32 %v1083, %v1492
      %v1494 = vpop.f32.mrb[0].mxu0
      %v1495 = vadd.f32 %v1079, %v1494
      %v1496 = vpop.f32.mrb[0].mxu0
      %v1497 = vadd.f32 %v1083, %v1496
      %1498 = vmatprep.mubr.bf16.mxu0 0
      %1499 = vmatmul.mubr.bf16.gmra.mrb[0].mxu0 %v997
      %v1500 = vpop.f32.mrb[0].mxu0
      %v1501 = vadd.f32 %v1079, %v1500
      %v1502 = vpop.f32.mrb[0].mxu0
      %v1503 = vadd.f32 %v1083, %v1502
      %v1504 = vpop.f32.mrb[0].mxu0
      %v1505 = vadd.f32 %v1079, %v1504
      %v1506 = vpop.f32.mrb[0].mxu0
      %v1507 = vadd.f32 %v1083, %v1506
      %1508 = vmatprep.mubr.bf16.mxu0 0
      %1509 = vmatmul.mubr.bf16.gmra.mrb[0].mxu0 %v998
      %v1510 = vpop.f32.mrb[0].mxu0
      %v1511 = vadd.f32 %v1079, %v1510
      %v1512 = vpop.f32.mrb[0].mxu0
      %v1513 = vadd.f32 %v1083, %v1512
      %v1514 = vpop.f32.mrb[0].mxu0
      %v1515 = vadd.f32 %v1079, %v1514
      %v1516 = vpop.f32.mrb[0].mxu0
      %v1517 = vadd.f32 %v1083, %v1516
      %1518 = vmatprep.mubr.bf16.mxu0 0
      %1519 = vmatmul.mubr.bf16.gmra.mrb[0].mxu0 %v999
      %v1520 = vpop.f32.mrb[0].mxu0
      %v1521 = vadd.f32 %v1079, %v1520
      %v1522 = vpop.f32.mrb[0].mxu0
      %v1523 = vadd.f32 %v1083, %v1522
      %v1524 = vpop.f32.mrb[0].mxu0
      %v1525 = vadd.f32 %v1079, %v1524
      %v1526 = vpop.f32.mrb[0].mxu0
      %v1527 = vadd.f32 %v1083, %v1526
      %1528 = vmatprep.mubr.bf16.mxu0 0
      %1529 = vmatmul.mubr.bf16.gmra.mrb[0].mxu0 %v1000
      %v1530 = vpop.f32.mrb[0].mxu0
      %v1531 = vadd.f32 %v1079, %v1530
      %v1532 = vpop.f32.mrb[0].mxu0
      %v1533 = vadd.f32 %v1083, %v1532
      %v1534 = vpop.f32.mrb[0].mxu0
      %v1535 = vadd.f32 %v1079, %v1534
      %v1536 = vpop.f32.mrb[0].mxu0
      %v1537 = vadd.f32 %v1083, %v1536
      %1538 = vmatprep.mubr.bf16.mxu0 0
      %1539 = vmatmul.mubr.bf16.gmra.mrb[0].mxu0 %v1001
      %v1540 = vpop.f32.mrb[0].mxu0
      %v1541 = vadd.f32 %v1079, %v1540
      %v1542 = vpop.f32.mrb[0].mxu0
      %v1543 = vadd.f32 %v1083, %v1542
      %v1544 = vpop.f32.mrb[0].mxu0
      %v1545 = vadd.f32 %v1079, %v1544
      %v1546 = vpop.f32.mrb[0].mxu0
      %v1547 = vadd.f32 %v1083, %v1546
      %1548 = vmatprep.mubr.bf16.mxu0 0
      %1549 = vmatmul.mubr.bf16.gmra.mrb[0].mxu0 %v1002
      %v1550 = vpop.f32.mrb[0].mxu0
      %v1551 = vadd.f32 %v1079, %v1550
      %v1552 = vpop.f32.mrb[0].mxu0
      %v1553 = vadd.f32 %v1083, %v1552
      %v1554 = vpop.f32.mrb[0].mxu0
      %v1555 = vadd.f32 %v1079, %v1554
      %v1556 = vpop.f32.mrb[0].mxu0
      %v1557 = vadd.f32 %v1083, %v1556
      %1558 = vmatprep.mubr.bf16.mxu0 0
      %1559 = vmatmul.mubr.bf16.gmra.mrb[0].mxu0 %v1003
      %v1560 = vpop.f32.mrb[0].mxu0
      %v1561 = vadd.f32 %v1079, %v1560
      %v1562 = vpop.f32.mrb[0].mxu0
      %v1563 = vadd.f32 %v1083, %v1562
      %v1564 = vpop.f32.mrb[0].mxu0
      %v1565 = vadd.f32 %v1079, %v1564
      %v1566 = vpop.f32.mrb[0].mxu0
      %v1567 = vadd.f32 %v1083, %v1566
      %1568 = vmatprep.mubr.bf16.mxu0 0
      %1569 = vmatmul.mubr.bf16.gmra.mrb[0].mxu0 %v1004
      %v1570 = vpop.f32.mrb[0].mxu0
      %v1571 = vadd.f32 %v1079, %v1570
      %v1572 = vpop.f32.mrb[0].mxu0
      %v1573 = vadd.f32 %v1083, %v1572
      %v1574 = vpop.f32.mrb[0].mxu0
      %v1575 = vadd.f32 %v1079, %v1574
      %v1576 = vpop.f32.mrb[0].mxu0
      %v1577 = vadd.f32 %v1083, %v1576
      %1578 = vmatprep.mubr.bf16.mxu0 0
      %1579 = vmatmul.mubr.bf16.gmra.mrb[0].mxu0 %v1005
      %v1580 = vpop.f32.mrb[0].mxu0
      %v1581 = vadd.f32 %v1079, %v1580
      %v1582 = vpop.f32.mrb[0].mxu0
      %v1583 = vadd.f32 %v1083, %v1582
      %v1584 = vpop.f32.mrb[0].mxu0
      %v1585 = vadd.f32 %v1079, %v1584
      %v1586 = vpop.f32.mrb[0].mxu0
      %v1587 = vadd.f32 %v1083, %v1586
      %1588 = vmatprep.mubr.bf16.mxu0 0
      %1589 = vmatmul.mubr.bf16.gmra.mrb[0].mxu0 %v1006
      %v1590 = vpop.f32.mrb[0].mxu0
      %v1591 = vadd.f32 %v1079, %v1590
      %v1592 = vpop.f32.mrb[0].mxu0
      %v1593 = vadd.f32 %v1083, %v1592
      %v1594 = vpop.f32.mrb[0].mxu0
      %v1595 = vadd.f32 %v1079, %v1594
      %v1596 = vpop.f32.mrb[0].mxu0
      %v1597 = vadd.f32 %v1083, %v1596
      %1598 = vmatprep.mubr.bf16.mxu0 0
      %1599 = vmatmul.mubr.bf16.gmra.mrb[0].mxu0 %v1007
      %v1600 = vpop.f32.mrb[0].mxu0
      %v1601 = vadd.f32 %v1079, %v1600
      %v1602 = vpop.f32.mrb[0].mxu0
      %v1603 = vadd.f32 %v1083, %v1602
      %v1604 = vpop.f32.mrb[0].mxu0
      %v1605 = vadd.f32 %v1079, %v1604
      %v1606 = vpop.f32.mrb[0].mxu0
      %v1607 = vadd.f32 %v1083, %v1606
      %1608 = vmatprep.mubr.bf16.mxu0 0
      %1609 = vmatmul.mubr.bf16.gmra.mrb[0].mxu0 %v1008
      %v1610 = vpop.f32.mrb[0].mxu0
      %v1611 = vadd.f32 %v1079, %v1610
      %v1612 = vpop.f32.mrb[0].mxu0
      %v1613 = vadd.f32 %v1083, %v1612
      %v1614 = vpop.f32.mrb[0].mxu0
      %v1615 = vadd.f32 %v1079, %v1614
      %v1616 = vpop.f32.mrb[0].mxu0
      %v1617 = vadd.f32 %v1083, %v1616
      %1618 = vmatprep.mubr.bf16.mxu0 0
      %1619 = vmatmul.mubr.bf16.gmra.mrb[0].mxu0 %v1009
      %v1620 = vpop.f32.mrb[0].mxu0
      %v1621 = vadd.f32 %v1079, %v1620
      %v1622 = vpop.f32.mrb[0].mxu0
      %v1623 = vadd.f32 %v1083, %v1622
      %v1624 = vpop.f32.mrb[0].mxu0
      %v1625 = vadd.f32 %v1079, %v1624
      %v1626 = vpop.f32.mrb[0].mxu0
      %v1627 = vadd.f32 %v1083, %v1626
      %1628 = vdwg.mxu0
      %1629 = vmatprep.subr.bf16.mxu0 %v1311
      %1630 = vmatpush1.bf16.msra.mxu0 %v1310
      %1631 = vmatprep.subr.bf16.mxu0 %v1319
      %1632 = vmatpush1.bf16.msra.mxu0 %v1318
      %1633 = vmatprep.subr.bf16.mxu0 %v1327
      %1634 = vmatpush1.bf16.msra.mxu0 %v1326
      %1635 = vmatprep.subr.bf16.mxu0 %v1335
      %1636 = vmatpush1.bf16.msra.mxu0 %v1334
      %1637 = vmatprep.subr.bf16.mxu0 %v1343
      %1638 = vmatpush1.bf16.msra.mxu0 %v1342
      %1639 = vmatprep.subr.bf16.mxu0 %v1351
      %1640 = vmatpush1.bf16.msra.mxu0 %v1350
      %1641 = vmatprep.subr.bf16.mxu0 %v1359
      %1642 = vmatpush1.bf16.msra.mxu0 %v1358
      %1643 = vmatprep.subr.bf16.mxu0 %v1367
      %1644 = vmatpush1.bf16.msra.mxu0 %v1366
      %1645 = vmatprep.subr.bf16.mxu0 0
      %1646 = vmatpush1.bf16.msra.mxu0 0
      %1647 = vmatprep.subr.bf16.mxu0 0
      %1648 = vmatpush1.bf16.msra.mxu0 0
      %1649 = vmatprep.subr.bf16.mxu0 0
      %1650 = vmatpush1.bf16.msra.mxu0 0
      %1651 = vmatprep.subr.bf16.mxu0 0
      %1652 = vmatpush1.bf16.msra.mxu0 0
      %1653 = vmatprep.subr.bf16.mxu0 0
      %1654 = vmatpush1.bf16.msra.mxu0 0
      %1655 = vmatprep.subr.bf16.mxu0 0
      %1656 = vmatpush1.bf16.msra.mxu0 0
      %1657 = vmatprep.subr.bf16.mxu0 0
      %1658 = vmatpush1.bf16.msra.mxu0 0
      %1659 = vmatprep.subr.bf16.mxu0 0
      %1660 = vmatpush1.bf16.msra.mxu0 0
      %1661 = vmatprep.mubr.bf16.mxu0 0
      %1662 = vmatmul.mubr.bf16.gmra.mrb[0].mxu0 %v994
      %v1663 = vpop.f32.mrb[0].mxu0
      %v1664 = vadd.f32 %v1087, %v1663
      %v1665 = vpop.f32.mrb[0].mxu0
      %v1666 = vadd.f32 %v1091, %v1665
      %v1667 = vpop.f32.mrb[0].mxu0
      %v1668 = vadd.f32 %v1087, %v1667
      %v1669 = vpop.f32.mrb[0].mxu0
      %v1670 = vadd.f32 %v1091, %v1669
      %1671 = vmatprep.mubr.bf16.mxu0 0
      %1672 = vmatmul.mubr.bf16.gmra.mrb[0].mxu0 %v995
      %v1673 = vpop.f32.mrb[0].mxu0
      %v1674 = vadd.f32 %v1087, %v1673
      %v1675 = vpop.f32.mrb[0].mxu0
      %v1676 = vadd.f32 %v1091, %v1675
      %v1677 = vpop.f32.mrb[0].mxu0
      %v1678 = vadd.f32 %v1087, %v1677
      %v1679 = vpop.f32.mrb[0].mxu0
      %v1680 = vadd.f32 %v1091, %v1679
      %1681 = vmatprep.mubr.bf16.mxu0 0
      %1682 = vmatmul.mubr.bf16.gmra.mrb[0].mxu0 %v996
      %v1683 = vpop.f32.mrb[0].mxu0
      %v1684 = vadd.f32 %v1087, %v1683
      %v1685 = vpop.f32.mrb[0].mxu0
      %v1686 = vadd.f32 %v1091, %v1685
      %v1687 = vpop.f32.mrb[0].mxu0
      %v1688 = vadd.f32 %v1087, %v1687
      %v1689 = vpop.f32.mrb[0].mxu0
      %v1690 = vadd.f32 %v1091, %v1689
      %1691 = vmatprep.mubr.bf16.mxu0 0
      %1692 = vmatmul.mubr.bf16.gmra.mrb[0].mxu0 %v997
      %v1693 = vpop.f32.mrb[0].mxu0
      %v1694 = vadd.f32 %v1087, %v1693
      %v1695 = vpop.f32.mrb[0].mxu0
      %v1696 = vadd.f32 %v1091, %v1695
      %v1697 = vpop.f32.mrb[0].mxu0
      %v1698 = vadd.f32 %v1087, %v1697
      %v1699 = vpop.f32.mrb[0].mxu0
      %v1700 = vadd.f32 %v1091, %v1699
      %1701 = vmatprep.mubr.bf16.mxu0 0
      %1702 = vmatmul.mubr.bf16.gmra.mrb[0].mxu0 %v998
      %v1703 = vpop.f32.mrb[0].mxu0
      %v1704 = vadd.f32 %v1087, %v1703
      %v1705 = vpop.f32.mrb[0].mxu0
      %v1706 = vadd.f32 %v1091, %v1705
      %v1707 = vpop.f32.mrb[0].mxu0
      %v1708 = vadd.f32 %v1087, %v1707
      %v1709 = vpop.f32.mrb[0].mxu0
      %v1710 = vadd.f32 %v1091, %v1709
      %1711 = vmatprep.mubr.bf16.mxu0 0
      %1712 = vmatmul.mubr.bf16.gmra.mrb[0].mxu0 %v999
      %v1713 = vpop.f32.mrb[0].mxu0
      %v1714 = vadd.f32 %v1087, %v1713
      %v1715 = vpop.f32.mrb[0].mxu0
      %v1716 = vadd.f32 %v1091, %v1715
      %v1717 = vpop.f32.mrb[0].mxu0
      %v1718 = vadd.f32 %v1087, %v1717
      %v1719 = vpop.f32.mrb[0].mxu0
      %v1720 = vadd.f32 %v1091, %v1719
      %1721 = vmatprep.mubr.bf16.mxu0 0
      %1722 = vmatmul.mubr.bf16.gmra.mrb[0].mxu0 %v1000
      %v1723 = vpop.f32.mrb[0].mxu0
      %v1724 = vadd.f32 %v1087, %v1723
      %v1725 = vpop.f32.mrb[0].mxu0
      %v1726 = vadd.f32 %v1091, %v1725
      %v1727 = vpop.f32.mrb[0].mxu0
      %v1728 = vadd.f32 %v1087, %v1727
      %v1729 = vpop.f32.mrb[0].mxu0
      %v1730 = vadd.f32 %v1091, %v1729
      %1731 = vmatprep.mubr.bf16.mxu0 0
      %1732 = vmatmul.mubr.bf16.gmra.mrb[0].mxu0 %v1001
      %v1733 = vpop.f32.mrb[0].mxu0
      %v1734 = vadd.f32 %v1087, %v1733
      %v1735 = vpop.f32.mrb[0].mxu0
      %v1736 = vadd.f32 %v1091, %v1735
      %v1737 = vpop.f32.mrb[0].mxu0
      %v1738 = vadd.f32 %v1087, %v1737
      %v1739 = vpop.f32.mrb[0].mxu0
      %v1740 = vadd.f32 %v1091, %v1739
      %1741 = vmatprep.mubr.bf16.mxu0 0
      %1742 = vmatmul.mubr.bf16.gmra.mrb[0].mxu0 %v1002
      %v1743 = vpop.f32.mrb[0].mxu0
      %v1744 = vadd.f32 %v1087, %v1743
      %v1745 = vpop.f32.mrb[0].mxu0
      %v1746 = vadd.f32 %v1091, %v1745
      %v1747 = vpop.f32.mrb[0].mxu0
      %v1748 = vadd.f32 %v1087, %v1747
      %v1749 = vpop.f32.mrb[0].mxu0
      %v1750 = vadd.f32 %v1091, %v1749
      %1751 = vmatprep.mubr.bf16.mxu0 0
      %1752 = vmatmul.mubr.bf16.gmra.mrb[0].mxu0 %v1003
      %v1753 = vpop.f32.mrb[0].mxu0
      %v1754 = vadd.f32 %v1087, %v1753
      %v1755 = vpop.f32.mrb[0].mxu0
      %v1756 = vadd.f32 %v1091, %v1755
      %v1757 = vpop.f32.mrb[0].mxu0
      %v1758 = vadd.f32 %v1087, %v1757
      %v1759 = vpop.f32.mrb[0].mxu0
      %v1760 = vadd.f32 %v1091, %v1759
      %1761 = vmatprep.mubr.bf16.mxu0 0
      %1762 = vmatmul.mubr.bf16.gmra.mrb[0].mxu0 %v1004
      %v1763 = vpop.f32.mrb[0].mxu0
      %v1764 = vadd.f32 %v1087, %v1763
      %v1765 = vpop.f32.mrb[0].mxu0
      %v1766 = vadd.f32 %v1091, %v1765
      %v1767 = vpop.f32.mrb[0].mxu0
      %v1768 = vadd.f32 %v1087, %v1767
      %v1769 = vpop.f32.mrb[0].mxu0
      %v1770 = vadd.f32 %v1091, %v1769
      %1771 = vmatprep.mubr.bf16.mxu0 0
      %1772 = vmatmul.mubr.bf16.gmra.mrb[0].mxu0 %v1005
      %v1773 = vpop.f32.mrb[0].mxu0
      %v1774 = vadd.f32 %v1087, %v1773
      %v1775 = vpop.f32.mrb[0].mxu0
      %v1776 = vadd.f32 %v1091, %v1775
      %v1777 = vpop.f32.mrb[0].mxu0
      %v1778 = vadd.f32 %v1087, %v1777
      %v1779 = vpop.f32.mrb[0].mxu0
      %v1780 = vadd.f32 %v1091, %v1779
      %1781 = vmatprep.mubr.bf16.mxu0 0
      %1782 = vmatmul.mubr.bf16.gmra.mrb[0].mxu0 %v1006
      %v1783 = vpop.f32.mrb[0].mxu0
      %v1784 = vadd.f32 %v1087, %v1783
      %v1785 = vpop.f32.mrb[0].mxu0
      %v1786 = vadd.f32 %v1091, %v1785
      %v1787 = vpop.f32.mrb[0].mxu0
      %v1788 = vadd.f32 %v1087, %v1787
      %v1789 = vpop.f32.mrb[0].mxu0
      %v1790 = vadd.f32 %v1091, %v1789
      %1791 = vmatprep.mubr.bf16.mxu0 0
      %1792 = vmatmul.mubr.bf16.gmra.mrb[0].mxu0 %v1007
      %v1793 = vpop.f32.mrb[0].mxu0
      %v1794 = vadd.f32 %v1087, %v1793
      %v1795 = vpop.f32.mrb[0].mxu0
      %v1796 = vadd.f32 %v1091, %v1795
      %v1797 = vpop.f32.mrb[0].mxu0
      %v1798 = vadd.f32 %v1087, %v1797
      %v1799 = vpop.f32.mrb[0].mxu0
      %v1800 = vadd.f32 %v1091, %v1799
      %1801 = vmatprep.mubr.bf16.mxu0 0
      %1802 = vmatmul.mubr.bf16.gmra.mrb[0].mxu0 %v1008
      %v1803 = vpop.f32.mrb[0].mxu0
      %v1804 = vadd.f32 %v1087, %v1803
      %v1805 = vpop.f32.mrb[0].mxu0
      %v1806 = vadd.f32 %v1091, %v1805
      %v1807 = vpop.f32.mrb[0].mxu0
      %v1808 = vadd.f32 %v1087, %v1807
      %v1809 = vpop.f32.mrb[0].mxu0
      %v1810 = vadd.f32 %v1091, %v1809
      %1811 = vmatprep.mubr.bf16.mxu0 0
      %1812 = vmatmul.mubr.bf16.gmra.mrb[0].mxu0 %v1009
      %v1813 = vpop.f32.mrb[0].mxu0
      %v1814 = vadd.f32 %v1087, %v1813
      %v1815 = vpop.f32.mrb[0].mxu0
      %v1816 = vadd.f32 %v1091, %v1815
      %v1817 = vpop.f32.mrb[0].mxu0
      %v1818 = vadd.f32 %v1087, %v1817
      %v1819 = vpop.f32.mrb[0].mxu0
      %v1820 = vadd.f32 %v1091, %v1819
      %1821 = vdwg.mxu0
      %1822 = vmatprep.subr.bf16.mxu0 %v1313
      %1823 = vmatpush1.bf16.msra.mxu0 %v1312
      %1824 = vmatprep.subr.bf16.mxu0 %v1321
      %1825 = vmatpush1.bf16.msra.mxu0 %v1320
      %1826 = vmatprep.subr.bf16.mxu0 %v1329
      %1827 = vmatpush1.bf16.msra.mxu0 %v1328
      %1828 = vmatprep.subr.bf16.mxu0 %v1337
      %1829 = vmatpush1.bf16.msra.mxu0 %v1336
      %1830 = vmatprep.subr.bf16.mxu0 %v1345
      %1831 = vmatpush1.bf16.msra.mxu0 %v1344
      %1832 = vmatprep.subr.bf16.mxu0 %v1353
      %1833 = vmatpush1.bf16.msra.mxu0 %v1352
      %1834 = vmatprep.subr.bf16.mxu0 %v1361
      %1835 = vmatpush1.bf16.msra.mxu0 %v1360
      %1836 = vmatprep.subr.bf16.mxu0 %v1369
      %1837 = vmatpush1.bf16.msra.mxu0 %v1368
      %1838 = vmatprep.subr.bf16.mxu0 0
      %1839 = vmatpush1.bf16.msra.mxu0 0
      %1840 = vmatprep.subr.bf16.mxu0 0
      %1841 = vmatpush1.bf16.msra.mxu0 0
      %1842 = vmatprep.subr.bf16.mxu0 0
      %1843 = vmatpush1.bf16.msra.mxu0 0
      %1844 = vmatprep.subr.bf16.mxu0 0
      %1845 = vmatpush1.bf16.msra.mxu0 0
      %1846 = vmatprep.subr.bf16.mxu0 0
      %1847 = vmatpush1.bf16.msra.mxu0 0
      %1848 = vmatprep.subr.bf16.mxu0 0
      %1849 = vmatpush1.bf16.msra.mxu0 0
      %1850 = vmatprep.subr.bf16.mxu0 0
      %1851 = vmatpush1.bf16.msra.mxu0 0
      %1852 = vmatprep.subr.bf16.mxu0 0
      %1853 = vmatpush1.bf16.msra.mxu0 0
      %1854 = vmatprep.mubr.bf16.mxu0 0
      %1855 = vmatmul.mubr.bf16.gmra.mrb[0].mxu0 %v994
      %v1856 = vpop.f32.mrb[0].mxu0
      %v1857 = vadd.f32 %v1095, %v1856
      %v1858 = vpop.f32.mrb[0].mxu0
      %v1859 = vadd.f32 %v1099, %v1858
      %v1860 = vpop.f32.mrb[0].mxu0
      %v1861 = vadd.f32 %v1095, %v1860
      %v1862 = vpop.f32.mrb[0].mxu0
      %v1863 = vadd.f32 %v1099, %v1862
      %1864 = vmatprep.mubr.bf16.mxu0 0
      %1865 = vmatmul.mubr.bf16.gmra.mrb[0].mxu0 %v995
      %v1866 = vpop.f32.mrb[0].mxu0
      %v1867 = vadd.f32 %v1095, %v1866
      %v1868 = vpop.f32.mrb[0].mxu0
      %v1869 = vadd.f32 %v1099, %v1868
      %v1870 = vpop.f32.mrb[0].mxu0
      %v1871 = vadd.f32 %v1095, %v1870
      %v1872 = vpop.f32.mrb[0].mxu0
      %v1873 = vadd.f32 %v1099, %v1872
      %1874 = vmatprep.mubr.bf16.mxu0 0
      %1875 = vmatmul.mubr.bf16.gmra.mrb[0].mxu0 %v996
      %v1876 = vpop.f32.mrb[0].mxu0
      %v1877 = vadd.f32 %v1095, %v1876
      %v1878 = vpop.f32.mrb[0].mxu0
      %v1879 = vadd.f32 %v1099, %v1878
      %v1880 = vpop.f32.mrb[0].mxu0
      %v1881 = vadd.f32 %v1095, %v1880
      %v1882 = vpop.f32.mrb[0].mxu0
      %v1883 = vadd.f32 %v1099, %v1882
      %1884 = vmatprep.mubr.bf16.mxu0 0
      %1885 = vmatmul.mubr.bf16.gmra.mrb[0].mxu0 %v997
      %v1886 = vpop.f32.mrb[0].mxu0
      %v1887 = vadd.f32 %v1095, %v1886
      %v1888 = vpop.f32.mrb[0].mxu0
      %v1889 = vadd.f32 %v1099, %v1888
      %v1890 = vpop.f32.mrb[0].mxu0
      %v1891 = vadd.f32 %v1095, %v1890
      %v1892 = vpop.f32.mrb[0].mxu0
      %v1893 = vadd.f32 %v1099, %v1892
      %1894 = vmatprep.mubr.bf16.mxu0 0
      %1895 = vmatmul.mubr.bf16.gmra.mrb[0].mxu0 %v998
      %v1896 = vpop.f32.mrb[0].mxu0
      %v1897 = vadd.f32 %v1095, %v1896
      %v1898 = vpop.f32.mrb[0].mxu0
      %v1899 = vadd.f32 %v1099, %v1898
      %v1900 = vpop.f32.mrb[0].mxu0
      %v1901 = vadd.f32 %v1095, %v1900
      %v1902 = vpop.f32.mrb[0].mxu0
      %v1903 = vadd.f32 %v1099, %v1902
      %1904 = vmatprep.mubr.bf16.mxu0 0
      %1905 = vmatmul.mubr.bf16.gmra.mrb[0].mxu0 %v999
      %v1906 = vpop.f32.mrb[0].mxu0
      %v1907 = vadd.f32 %v1095, %v1906
      %v1908 = vpop.f32.mrb[0].mxu0
      %v1909 = vadd.f32 %v1099, %v1908
      %v1910 = vpop.f32.mrb[0].mxu0
      %v1911 = vadd.f32 %v1095, %v1910
      %v1912 = vpop.f32.mrb[0].mxu0
      %v1913 = vadd.f32 %v1099, %v1912
      %1914 = vmatprep.mubr.bf16.mxu0 0
      %1915 = vmatmul.mubr.bf16.gmra.mrb[0].mxu0 %v1000
      %v1916 = vpop.f32.mrb[0].mxu0
      %v1917 = vadd.f32 %v1095, %v1916
      %v1918 = vpop.f32.mrb[0].mxu0
      %v1919 = vadd.f32 %v1099, %v1918
      %v1920 = vpop.f32.mrb[0].mxu0
      %v1921 = vadd.f32 %v1095, %v1920
      %v1922 = vpop.f32.mrb[0].mxu0
      %v1923 = vadd.f32 %v1099, %v1922
      %1924 = vmatprep.mubr.bf16.mxu0 0
      %1925 = vmatmul.mubr.bf16.gmra.mrb[0].mxu0 %v1001
      %v1926 = vpop.f32.mrb[0].mxu0
      %v1927 = vadd.f32 %v1095, %v1926
      %v1928 = vpop.f32.mrb[0].mxu0
      %v1929 = vadd.f32 %v1099, %v1928
      %v1930 = vpop.f32.mrb[0].mxu0
      %v1931 = vadd.f32 %v1095, %v1930
      %v1932 = vpop.f32.mrb[0].mxu0
      %v1933 = vadd.f32 %v1099, %v1932
      %1934 = vmatprep.mubr.bf16.mxu0 0
      %1935 = vmatmul.mubr.bf16.gmra.mrb[0].mxu0 %v1002
      %v1936 = vpop.f32.mrb[0].mxu0
      %v1937 = vadd.f32 %v1095, %v1936
      %v1938 = vpop.f32.mrb[0].mxu0
      %v1939 = vadd.f32 %v1099, %v1938
      %v1940 = vpop.f32.mrb[0].mxu0
      %v1941 = vadd.f32 %v1095, %v1940
      %v1942 = vpop.f32.mrb[0].mxu0
      %v1943 = vadd.f32 %v1099, %v1942
      %1944 = vmatprep.mubr.bf16.mxu0 0
      %1945 = vmatmul.mubr.bf16.gmra.mrb[0].mxu0 %v1003
      %v1946 = vpop.f32.mrb[0].mxu0
      %v1947 = vadd.f32 %v1095, %v1946
      %v1948 = vpop.f32.mrb[0].mxu0
      %v1949 = vadd.f32 %v1099, %v1948
      %v1950 = vpop.f32.mrb[0].mxu0
      %v1951 = vadd.f32 %v1095, %v1950
      %v1952 = vpop.f32.mrb[0].mxu0
      %v1953 = vadd.f32 %v1099, %v1952
      %1954 = vmatprep.mubr.bf16.mxu0 0
      %1955 = vmatmul.mubr.bf16.gmra.mrb[0].mxu0 %v1004
      %v1956 = vpop.f32.mrb[0].mxu0
      %v1957 = vadd.f32 %v1095, %v1956
      %v1958 = vpop.f32.mrb[0].mxu0
      %v1959 = vadd.f32 %v1099, %v1958
      %v1960 = vpop.f32.mrb[0].mxu0
      %v1961 = vadd.f32 %v1095, %v1960
      %v1962 = vpop.f32.mrb[0].mxu0
      %v1963 = vadd.f32 %v1099, %v1962
      %1964 = vmatprep.mubr.bf16.mxu0 0
      %1965 = vmatmul.mubr.bf16.gmra.mrb[0].mxu0 %v1005
      %v1966 = vpop.f32.mrb[0].mxu0
      %v1967 = vadd.f32 %v1095, %v1966
      %v1968 = vpop.f32.mrb[0].mxu0
      %v1969 = vadd.f32 %v1099, %v1968
      %v1970 = vpop.f32.mrb[0].mxu0
      %v1971 = vadd.f32 %v1095, %v1970
      %v1972 = vpop.f32.mrb[0].mxu0
      %v1973 = vadd.f32 %v1099, %v1972
      %1974 = vmatprep.mubr.bf16.mxu0 0
      %1975 = vmatmul.mubr.bf16.gmra.mrb[0].mxu0 %v1006
      %v1976 = vpop.f32.mrb[0].mxu0
      %v1977 = vadd.f32 %v1095, %v1976
      %v1978 = vpop.f32.mrb[0].mxu0
      %v1979 = vadd.f32 %v1099, %v1978
      %v1980 = vpop.f32.mrb[0].mxu0
      %v1981 = vadd.f32 %v1095, %v1980
      %v1982 = vpop.f32.mrb[0].mxu0
      %v1983 = vadd.f32 %v1099, %v1982
      %1984 = vmatprep.mubr.bf16.mxu0 0
      %1985 = vmatmul.mubr.bf16.gmra.mrb[0].mxu0 %v1007
      %v1986 = vpop.f32.mrb[0].mxu0
      %v1987 = vadd.f32 %v1095, %v1986
      %v1988 = vpop.f32.mrb[0].mxu0
      %v1989 = vadd.f32 %v1099, %v1988
      %v1990 = vpop.f32.mrb[0].mxu0
      %v1991 = vadd.f32 %v1095, %v1990
      %v1992 = vpop.f32.mrb[0].mxu0
      %v1993 = vadd.f32 %v1099, %v1992
      %1994 = vmatprep.mubr.bf16.mxu0 0
      %1995 = vmatmul.mubr.bf16.gmra.mrb[0].mxu0 %v1008
      %v1996 = vpop.f32.mrb[0].mxu0
      %v1997 = vadd.f32 %v1095, %v1996
      %v1998 = vpop.f32.mrb[0].mxu0
      %v1999 = vadd.f32 %v1099, %v1998
      %v2000 = vpop.f32.mrb[0].mxu0
      %v2001 = vadd.f32 %v1095, %v2000
      %v2002 = vpop.f32.mrb[0].mxu0
      %v2003 = vadd.f32 %v1099, %v2002
      %2004 = vmatprep.mubr.bf16.mxu0 0
      %2005 = vmatmul.mubr.bf16.gmra.mrb[0].mxu0 %v1009
      %v2006 = vpop.f32.mrb[0].mxu0
      %v2007 = vadd.f32 %v1095, %v2006
      %v2008 = vpop.f32.mrb[0].mxu0
      %v2009 = vadd.f32 %v1099, %v2008
      %v2010 = vpop.f32.mrb[0].mxu0
      %v2011 = vadd.f32 %v1095, %v2010
      %v2012 = vpop.f32.mrb[0].mxu0
      %v2013 = vadd.f32 %v1099, %v2012
      %2014 = vdwg.mxu0
      %2015 = vmatprep.subr.bf16.mxu0 %v1315
      %2016 = vmatpush1.bf16.msra.mxu0 %v1314
      %2017 = vmatprep.subr.bf16.mxu0 %v1323
      %2018 = vmatpush1.bf16.msra.mxu0 %v1322
      %2019 = vmatprep.subr.bf16.mxu0 %v1331
      %2020 = vmatpush1.bf16.msra.mxu0 %v1330
      %2021 = vmatprep.subr.bf16.mxu0 %v1339
      %2022 = vmatpush1.bf16.msra.mxu0 %v1338
      %2023 = vmatprep.subr.bf16.mxu0 %v1347
      %2024 = vmatpush1.bf16.msra.mxu0 %v1346
      %2025 = vmatprep.subr.bf16.mxu0 %v1355
      %2026 = vmatpush1.bf16.msra.mxu0 %v1354
      %2027 = vmatprep.subr.bf16.mxu0 %v1363
      %2028 = vmatpush1.bf16.msra.mxu0 %v1362
      %2029 = vmatprep.subr.bf16.mxu0 %v1371
      %2030 = vmatpush1.bf16.msra.mxu0 %v1370
      %2031 = vmatprep.subr.bf16.mxu0 0
      %2032 = vmatpush1.bf16.msra.mxu0 0
      %2033 = vmatprep.subr.bf16.mxu0 0
      %2034 = vmatpush1.bf16.msra.mxu0 0
      %2035 = vmatprep.subr.bf16.mxu0 0
      %2036 = vmatpush1.bf16.msra.mxu0 0
      %2037 = vmatprep.subr.bf16.mxu0 0
      %2038 = vmatpush1.bf16.msra.mxu0 0
      %2039 = vmatprep.subr.bf16.mxu0 0
      %2040 = vmatpush1.bf16.msra.mxu0 0
      %2041 = vmatprep.subr.bf16.mxu0 0
      %2042 = vmatpush1.bf16.msra.mxu0 0
      %2043 = vmatprep.subr.bf16.mxu0 0
      %2044 = vmatpush1.bf16.msra.mxu0 0
      %2045 = vmatprep.subr.bf16.mxu0 0
      %2046 = vmatpush1.bf16.msra.mxu0 0
      %2047 = vmatprep.mubr.bf16.mxu0 0
      %2048 = vmatmul.mubr.bf16.gmra.mrb[0].mxu0 %v994
      %v2049 = vpop.f32.mrb[0].mxu0
      %v2050 = vadd.f32 %v1103, %v2049
      %v2051 = vpop.f32.mrb[0].mxu0
      %v2052 = vadd.f32 %v1107, %v2051
      %v2053 = vpop.f32.mrb[0].mxu0
      %v2054 = vadd.f32 %v1103, %v2053
      %v2055 = vpop.f32.mrb[0].mxu0
      %v2056 = vadd.f32 %v1107, %v2055
      %2057 = vmatprep.mubr.bf16.mxu0 0
      %2058 = vmatmul.mubr.bf16.gmra.mrb[0].mxu0 %v995
      %v2059 = vpop.f32.mrb[0].mxu0
      %v2060 = vadd.f32 %v1103, %v2059
      %v2061 = vpop.f32.mrb[0].mxu0
      %v2062 = vadd.f32 %v1107, %v2061
      %v2063 = vpop.f32.mrb[0].mxu0
      %v2064 = vadd.f32 %v1103, %v2063
      %v2065 = vpop.f32.mrb[0].mxu0
      %v2066 = vadd.f32 %v1107, %v2065
      %2067 = vmatprep.mubr.bf16.mxu0 0
      %2068 = vmatmul.mubr.bf16.gmra.mrb[0].mxu0 %v996
      %v2069 = vpop.f32.mrb[0].mxu0
      %v2070 = vadd.f32 %v1103, %v2069
      %v2071 = vpop.f32.mrb[0].mxu0
      %v2072 = vadd.f32 %v1107, %v2071
      %v2073 = vpop.f32.mrb[0].mxu0
      %v2074 = vadd.f32 %v1103, %v2073
      %v2075 = vpop.f32.mrb[0].mxu0
      %v2076 = vadd.f32 %v1107, %v2075
      %2077 = vmatprep.mubr.bf16.mxu0 0
      %2078 = vmatmul.mubr.bf16.gmra.mrb[0].mxu0 %v997
      %v2079 = vpop.f32.mrb[0].mxu0
      %v2080 = vadd.f32 %v1103, %v2079
      %v2081 = vpop.f32.mrb[0].mxu0
      %v2082 = vadd.f32 %v1107, %v2081
      %v2083 = vpop.f32.mrb[0].mxu0
      %v2084 = vadd.f32 %v1103, %v2083
      %v2085 = vpop.f32.mrb[0].mxu0
      %v2086 = vadd.f32 %v1107, %v2085
      %2087 = vmatprep.mubr.bf16.mxu0 0
      %2088 = vmatmul.mubr.bf16.gmra.mrb[0].mxu0 %v998
      %v2089 = vpop.f32.mrb[0].mxu0
      %v2090 = vadd.f32 %v1103, %v2089
      %v2091 = vpop.f32.mrb[0].mxu0
      %v2092 = vadd.f32 %v1107, %v2091
      %v2093 = vpop.f32.mrb[0].mxu0
      %v2094 = vadd.f32 %v1103, %v2093
      %v2095 = vpop.f32.mrb[0].mxu0
      %v2096 = vadd.f32 %v1107, %v2095
      %2097 = vmatprep.mubr.bf16.mxu0 0
      %2098 = vmatmul.mubr.bf16.gmra.mrb[0].mxu0 %v999
      %v2099 = vpop.f32.mrb[0].mxu0
      %v2100 = vadd.f32 %v1103, %v2099
      %v2101 = vpop.f32.mrb[0].mxu0
      %v2102 = vadd.f32 %v1107, %v2101
      %v2103 = vpop.f32.mrb[0].mxu0
      %v2104 = vadd.f32 %v1103, %v2103
      %v2105 = vpop.f32.mrb[0].mxu0
      %v2106 = vadd.f32 %v1107, %v2105
      %2107 = vmatprep.mubr.bf16.mxu0 0
      %2108 = vmatmul.mubr.bf16.gmra.mrb[0].mxu0 %v1000
      %v2109 = vpop.f32.mrb[0].mxu0
      %v2110 = vadd.f32 %v1103, %v2109
      %v2111 = vpop.f32.mrb[0].mxu0
      %v2112 = vadd.f32 %v1107, %v2111
      %v2113 = vpop.f32.mrb[0].mxu0
      %v2114 = vadd.f32 %v1103, %v2113
      %v2115 = vpop.f32.mrb[0].mxu0
      %v2116 = vadd.f32 %v1107, %v2115
      %2117 = vmatprep.mubr.bf16.mxu0 0
      %2118 = vmatmul.mubr.bf16.gmra.mrb[0].mxu0 %v1001
      %v2119 = vpop.f32.mrb[0].mxu0
      %v2120 = vadd.f32 %v1103, %v2119
      %v2121 = vpop.f32.mrb[0].mxu0
      %v2122 = vadd.f32 %v1107, %v2121
      %v2123 = vpop.f32.mrb[0].mxu0
      %v2124 = vadd.f32 %v1103, %v2123
      %v2125 = vpop.f32.mrb[0].mxu0
      %v2126 = vadd.f32 %v1107, %v2125
      %2127 = vmatprep.mubr.bf16.mxu0 0
      %2128 = vmatmul.mubr.bf16.gmra.mrb[0].mxu0 %v1002
      %v2129 = vpop.f32.mrb[0].mxu0
      %v2130 = vadd.f32 %v1103, %v2129
      %v2131 = vpop.f32.mrb[0].mxu0
      %v2132 = vadd.f32 %v1107, %v2131
      %v2133 = vpop.f32.mrb[0].mxu0
      %v2134 = vadd.f32 %v1103, %v2133
      %v2135 = vpop.f32.mrb[0].mxu0
      %v2136 = vadd.f32 %v1107, %v2135
      %2137 = vmatprep.mubr.bf16.mxu0 0
      %2138 = vmatmul.mubr.bf16.gmra.mrb[0].mxu0 %v1003
      %v2139 = vpop.f32.mrb[0].mxu0
      %v2140 = vadd.f32 %v1103, %v2139
      %v2141 = vpop.f32.mrb[0].mxu0
      %v2142 = vadd.f32 %v1107, %v2141
      %v2143 = vpop.f32.mrb[0].mxu0
      %v2144 = vadd.f32 %v1103, %v2143
      %v2145 = vpop.f32.mrb[0].mxu0
      %v2146 = vadd.f32 %v1107, %v2145
      %2147 = vmatprep.mubr.bf16.mxu0 0
      %2148 = vmatmul.mubr.bf16.gmra.mrb[0].mxu0 %v1004
      %v2149 = vpop.f32.mrb[0].mxu0
      %v2150 = vadd.f32 %v1103, %v2149
      %v2151 = vpop.f32.mrb[0].mxu0
      %v2152 = vadd.f32 %v1107, %v2151
      %v2153 = vpop.f32.mrb[0].mxu0
      %v2154 = vadd.f32 %v1103, %v2153
      %v2155 = vpop.f32.mrb[0].mxu0
      %v2156 = vadd.f32 %v1107, %v2155
      %2157 = vmatprep.mubr.bf16.mxu0 0
      %2158 = vmatmul.mubr.bf16.gmra.mrb[0].mxu0 %v1005
      %v2159 = vpop.f32.mrb[0].mxu0
      %v2160 = vadd.f32 %v1103, %v2159
      %v2161 = vpop.f32.mrb[0].mxu0
      %v2162 = vadd.f32 %v1107, %v2161
      %v2163 = vpop.f32.mrb[0].mxu0
      %v2164 = vadd.f32 %v1103, %v2163
      %v2165 = vpop.f32.mrb[0].mxu0
      %v2166 = vadd.f32 %v1107, %v2165
      %2167 = vmatprep.mubr.bf16.mxu0 0
      %2168 = vmatmul.mubr.bf16.gmra.mrb[0].mxu0 %v1006
      %v2169 = vpop.f32.mrb[0].mxu0
      %v2170 = vadd.f32 %v1103, %v2169
      %v2171 = vpop.f32.mrb[0].mxu0
      %v2172 = vadd.f32 %v1107, %v2171
      %v2173 = vpop.f32.mrb[0].mxu0
      %v2174 = vadd.f32 %v1103, %v2173
      %v2175 = vpop.f32.mrb[0].mxu0
      %v2176 = vadd.f32 %v1107, %v2175
      %2177 = vmatprep.mubr.bf16.mxu0 0
      %2178 = vmatmul.mubr.bf16.gmra.mrb[0].mxu0 %v1007
      %v2179 = vpop.f32.mrb[0].mxu0
      %v2180 = vadd.f32 %v1103, %v2179
      %v2181 = vpop.f32.mrb[0].mxu0
      %v2182 = vadd.f32 %v1107, %v2181
      %v2183 = vpop.f32.mrb[0].mxu0
      %v2184 = vadd.f32 %v1103, %v2183
      %v2185 = vpop.f32.mrb[0].mxu0
      %v2186 = vadd.f32 %v1107, %v2185
      %2187 = vmatprep.mubr.bf16.mxu0 0
      %2188 = vmatmul.mubr.bf16.gmra.mrb[0].mxu0 %v1008
      %v2189 = vpop.f32.mrb[0].mxu0
      %v2190 = vadd.f32 %v1103, %v2189
      %v2191 = vpop.f32.mrb[0].mxu0
      %v2192 = vadd.f32 %v1107, %v2191
      %v2193 = vpop.f32.mrb[0].mxu0
      %v2194 = vadd.f32 %v1103, %v2193
      %v2195 = vpop.f32.mrb[0].mxu0
      %v2196 = vadd.f32 %v1107, %v2195
      %2197 = vmatprep.mubr.bf16.mxu0 0
      %2198 = vmatmul.mubr.bf16.gmra.mrb[0].mxu0 %v1009
      %v2199 = vpop.f32.mrb[0].mxu0
      %v2200 = vadd.f32 %v1103, %v2199
      %v2201 = vpop.f32.mrb[0].mxu0
      %v2202 = vadd.f32 %v1107, %v2201
      %v2203 = vpop.f32.mrb[0].mxu0
      %v2204 = vadd.f32 %v1103, %v2203
      %v2205 = vpop.f32.mrb[0].mxu0
      %v2206 = vadd.f32 %v1107, %v2205
      %2207 = vdwg.mxu0
      %v2208 = vlaneseq
      %v2209 = vshrl.u32 %v2208, 7
      %v2210 = vadd.s32 %v2209, 8
      %v2211 = vadd.s32 %v2209, 16
      %v2212 = vadd.s32 %v2209, 24
      %v2213 = vadd.s32 %v2209, 32
      %v2214 = vadd.s32 %v2209, 40
      %v2215 = vadd.s32 %v2209, 48
      %v2216 = vadd.s32 %v2209, 56
      %v2217 = vadd.s32 %v2209, 64
      %v2218 = vadd.s32 %v2209, 72
      %v2219 = vadd.s32 %v2209, 80
      %v2220 = vadd.s32 %v2209, 88
      %v2221 = vadd.s32 %v2209, 96
      %v2222 = vadd.s32 %v2209, 104
      %v2223 = vadd.s32 %v2209, 112
      %v2224 = vadd.s32 %v2209, 120
      %v2225 = vadd.s32 %v2209, 128
      %v2226 = vadd.s32 %v2209, 136
      %v2227 = vadd.s32 %v2209, 144
      %v2228 = vadd.s32 %v2209, 152
      %v2229 = vadd.s32 %v2209, 160
      %v2230 = vadd.s32 %v2209, 168
      %v2231 = vadd.s32 %v2209, 176
      %v2232 = vadd.s32 %v2209, 184
      %v2233 = vadd.s32 %v2209, 192
      %v2234 = vadd.s32 %v2209, 200
      %v2235 = vadd.s32 %v2209, 208
      %v2236 = vadd.s32 %v2209, 216
      %v2237 = vadd.s32 %v2209, 224
      %v2238 = vadd.s32 %v2209, 232
      %v2239 = vadd.s32 %v2209, 240
      %v2240 = vadd.s32 %v2209, 248
      %vm2241 = vcmp.ge.s32.totalorder %v2209, 64
      %vm2242 = vcmp.ge.s32.totalorder %v2210, 64
      %vm2243 = vcmp.ge.s32.totalorder %v2211, 64
      %vm2244 = vcmp.ge.s32.totalorder %v2212, 64
      %vm2245 = vcmp.ge.s32.totalorder %v2213, 64
      %vm2246 = vcmp.ge.s32.totalorder %v2214, 64
      %vm2247 = vcmp.ge.s32.totalorder %v2215, 64
      %vm2248 = vcmp.ge.s32.totalorder %v2216, 64
      %vm2249 = vcmp.ge.s32.totalorder %v2217, 64
      %vm2250 = vcmp.ge.s32.totalorder %v2218, 64
      %vm2251 = vcmp.ge.s32.totalorder %v2219, 64
      %vm2252 = vcmp.ge.s32.totalorder %v2220, 64
      %vm2253 = vcmp.ge.s32.totalorder %v2221, 64
      %vm2254 = vcmp.ge.s32.totalorder %v2222, 64
      %vm2255 = vcmp.ge.s32.totalorder %v2223, 64
      %vm2256 = vcmp.ge.s32.totalorder %v2224, 64
      %vm2257 = vcmp.ge.s32.totalorder %v2225, 64
      %vm2258 = vcmp.ge.s32.totalorder %v2226, 64
      %vm2259 = vcmp.ge.s32.totalorder %v2227, 64
      %vm2260 = vcmp.ge.s32.totalorder %v2228, 64
      %vm2261 = vcmp.ge.s32.totalorder %v2229, 64
      %vm2262 = vcmp.ge.s32.totalorder %v2230, 64
      %vm2263 = vcmp.ge.s32.totalorder %v2231, 64
      %vm2264 = vcmp.ge.s32.totalorder %v2232, 64
      %vm2265 = vcmp.ge.s32.totalorder %v2233, 64
      %vm2266 = vcmp.ge.s32.totalorder %v2234, 64
      %vm2267 = vcmp.ge.s32.totalorder %v2235, 64
      %vm2268 = vcmp.ge.s32.totalorder %v2236, 64
      %vm2269 = vcmp.ge.s32.totalorder %v2237, 64
      %vm2270 = vcmp.ge.s32.totalorder %v2238, 64
      %vm2271 = vcmp.ge.s32.totalorder %v2239, 64
      %vm2272 = vcmp.ge.s32.totalorder %v2240, 64
      %s2273 = scalar_select %p323, 1, 0
      %v2274 = vstv %s2273
      %vm2275 = vcmp.eq.s32.totalorder %v2274, 1
      %vm2276 = vmand %vm2241, %vm2275
      %vm2277 = vmand %vm2242, %vm2275
      %vm2278 = vmand %vm2243, %vm2275
      %vm2279 = vmand %vm2244, %vm2275
      %vm2280 = vmand %vm2245, %vm2275
      %vm2281 = vmand %vm2246, %vm2275
      %vm2282 = vmand %vm2247, %vm2275
      %vm2283 = vmand %vm2248, %vm2275
      %vm2284 = vmand %vm2249, %vm2275
      %vm2285 = vmand %vm2250, %vm2275
      %vm2286 = vmand %vm2251, %vm2275
      %vm2287 = vmand %vm2252, %vm2275
      %vm2288 = vmand %vm2253, %vm2275
      %vm2289 = vmand %vm2254, %vm2275
      %vm2290 = vmand %vm2255, %vm2275
      %vm2291 = vmand %vm2256, %vm2275
      %vm2292 = vmand %vm2257, %vm2275
      %vm2293 = vmand %vm2258, %vm2275
      %vm2294 = vmand %vm2259, %vm2275
      %vm2295 = vmand %vm2260, %vm2275
      %vm2296 = vmand %vm2261, %vm2275
      %vm2297 = vmand %vm2262, %vm2275
      %vm2298 = vmand %vm2263, %vm2275
      %vm2299 = vmand %vm2264, %vm2275
      %vm2300 = vmand %vm2265, %vm2275
      %vm2301 = vmand %vm2266, %vm2275
      %vm2302 = vmand %vm2267, %vm2275
      %vm2303 = vmand %vm2268, %vm2275
      %vm2304 = vmand %vm2269, %vm2275
      %vm2305 = vmand %vm2270, %vm2275
      %vm2306 = vmand %vm2271, %vm2275
      %vm2307 = vmand %vm2272, %vm2275
      %v2308 = vsel %vm2276, -inf, %v1471
      %v2309 = vsel %vm2276, -inf, %v1473
      %v2310 = vsel %vm2276, -inf, %v1664
      %v2311 = vsel %vm2276, -inf, %v1666
      %v2312 = vsel %vm2276, -inf, %v1857
      %v2313 = vsel %vm2276, -inf, %v1859
      %v2314 = vsel %vm2276, -inf, %v2050
      %v2315 = vsel %vm2276, -inf, %v2052
      %v2316 = vsel %vm2277, -inf, %v1475
      %v2317 = vsel %vm2277, -inf, %v1477
      %v2318 = vsel %vm2277, -inf, %v1668
      %v2319 = vsel %vm2277, -inf, %v1670
      %v2320 = vsel %vm2277, -inf, %v1861
      %v2321 = vsel %vm2277, -inf, %v1863
      %v2322 = vsel %vm2277, -inf, %v2054
      %v2323 = vsel %vm2277, -inf, %v2056
      %v2324 = vsel %vm2278, -inf, %v1481
      %v2325 = vsel %vm2278, -inf, %v1483
      %v2326 = vsel %vm2278, -inf, %v1674
      %v2327 = vsel %vm2278, -inf, %v1676
      %v2328 = vsel %vm2278, -inf, %v1867
      %v2329 = vsel %vm2278, -inf, %v1869
      %v2330 = vsel %vm2278, -inf, %v2060
      %v2331 = vsel %vm2278, -inf, %v2062
      %v2332 = vsel %vm2279, -inf, %v1485
      %v2333 = vsel %vm2279, -inf, %v1487
      %v2334 = vsel %vm2279, -inf, %v1678
      %v2335 = vsel %vm2279, -inf, %v1680
      %v2336 = vsel %vm2279, -inf, %v1871
      %v2337 = vsel %vm2279, -inf, %v1873
      %v2338 = vsel %vm2279, -inf, %v2064
      %v2339 = vsel %vm2279, -inf, %v2066
      %v2340 = vsel %vm2280, -inf, %v1491
      %v2341 = vsel %vm2280, -inf, %v1493
      %v2342 = vsel %vm2280, -inf, %v1684
      %v2343 = vsel %vm2280, -inf, %v1686
      %v2344 = vsel %vm2280, -inf, %v1877
      %v2345 = vsel %vm2280, -inf, %v1879
      %v2346 = vsel %vm2280, -inf, %v2070
      %v2347 = vsel %vm2280, -inf, %v2072
      %v2348 = vsel %vm2281, -inf, %v1495
      %v2349 = vsel %vm2281, -inf, %v1497
      %v2350 = vsel %vm2281, -inf, %v1688
      %v2351 = vsel %vm2281, -inf, %v1690
      %v2352 = vsel %vm2281, -inf, %v1881
      %v2353 = vsel %vm2281, -inf, %v1883
      %v2354 = vsel %vm2281, -inf, %v2074
      %v2355 = vsel %vm2281, -inf, %v2076
      %v2356 = vsel %vm2282, -inf, %v1501
      %v2357 = vsel %vm2282, -inf, %v1503
      %v2358 = vsel %vm2282, -inf, %v1694
      %v2359 = vsel %vm2282, -inf, %v1696
      %v2360 = vsel %vm2282, -inf, %v1887
      %v2361 = vsel %vm2282, -inf, %v1889
      %v2362 = vsel %vm2282, -inf, %v2080
      %v2363 = vsel %vm2282, -inf, %v2082
      %v2364 = vsel %vm2283, -inf, %v1505
      %v2365 = vsel %vm2283, -inf, %v1507
      %v2366 = vsel %vm2283, -inf, %v1698
      %v2367 = vsel %vm2283, -inf, %v1700
      %v2368 = vsel %vm2283, -inf, %v1891
      %v2369 = vsel %vm2283, -inf, %v1893
      %v2370 = vsel %vm2283, -inf, %v2084
      %v2371 = vsel %vm2283, -inf, %v2086
      %v2372 = vsel %vm2284, -inf, %v1511
      %v2373 = vsel %vm2284, -inf, %v1513
      %v2374 = vsel %vm2284, -inf, %v1704
      %v2375 = vsel %vm2284, -inf, %v1706
      %v2376 = vsel %vm2284, -inf, %v1897
      %v2377 = vsel %vm2284, -inf, %v1899
      %v2378 = vsel %vm2284, -inf, %v2090
      %v2379 = vsel %vm2284, -inf, %v2092
      %v2380 = vsel %vm2285, -inf, %v1515
      %v2381 = vsel %vm2285, -inf, %v1517
      %v2382 = vsel %vm2285, -inf, %v1708
      %v2383 = vsel %vm2285, -inf, %v1710
      %v2384 = vsel %vm2285, -inf, %v1901
      %v2385 = vsel %vm2285, -inf, %v1903
      %v2386 = vsel %vm2285, -inf, %v2094
      %v2387 = vsel %vm2285, -inf, %v2096
      %v2388 = vsel %vm2286, -inf, %v1521
      %v2389 = vsel %vm2286, -inf, %v1523
      %v2390 = vsel %vm2286, -inf, %v1714
      %v2391 = vsel %vm2286, -inf, %v1716
      %v2392 = vsel %vm2286, -inf, %v1907
      %v2393 = vsel %vm2286, -inf, %v1909
      %v2394 = vsel %vm2286, -inf, %v2100
      %v2395 = vsel %vm2286, -inf, %v2102
      %v2396 = vsel %vm2287, -inf, %v1525
      %v2397 = vsel %vm2287, -inf, %v1527
      %v2398 = vsel %vm2287, -inf, %v1718
      %v2399 = vsel %vm2287, -inf, %v1720
      %v2400 = vsel %vm2287, -inf, %v1911
      %v2401 = vsel %vm2287, -inf, %v1913
      %v2402 = vsel %vm2287, -inf, %v2104
      %v2403 = vsel %vm2287, -inf, %v2106
      %v2404 = vsel %vm2288, -inf, %v1531
      %v2405 = vsel %vm2288, -inf, %v1533
      %v2406 = vsel %vm2288, -inf, %v1724
      %v2407 = vsel %vm2288, -inf, %v1726
      %v2408 = vsel %vm2288, -inf, %v1917
      %v2409 = vsel %vm2288, -inf, %v1919
      %v2410 = vsel %vm2288, -inf, %v2110
      %v2411 = vsel %vm2288, -inf, %v2112
      %v2412 = vsel %vm2289, -inf, %v1535
      %v2413 = vsel %vm2289, -inf, %v1537
      %v2414 = vsel %vm2289, -inf, %v1728
      %v2415 = vsel %vm2289, -inf, %v1730
      %v2416 = vsel %vm2289, -inf, %v1921
      %v2417 = vsel %vm2289, -inf, %v1923
      %v2418 = vsel %vm2289, -inf, %v2114
      %v2419 = vsel %vm2289, -inf, %v2116
      %v2420 = vsel %vm2290, -inf, %v1541
      %v2421 = vsel %vm2290, -inf, %v1543
      %v2422 = vsel %vm2290, -inf, %v1734
      %v2423 = vsel %vm2290, -inf, %v1736
      %v2424 = vsel %vm2290, -inf, %v1927
      %v2425 = vsel %vm2290, -inf, %v1929
      %v2426 = vsel %vm2290, -inf, %v2120
      %v2427 = vsel %vm2290, -inf, %v2122
      %v2428 = vsel %vm2291, -inf, %v1545
      %v2429 = vsel %vm2291, -inf, %v1547
      %v2430 = vsel %vm2291, -inf, %v1738
      %v2431 = vsel %vm2291, -inf, %v1740
      %v2432 = vsel %vm2291, -inf, %v1931
      %v2433 = vsel %vm2291, -inf, %v1933
      %v2434 = vsel %vm2291, -inf, %v2124
      %v2435 = vsel %vm2291, -inf, %v2126
      %v2436 = vsel %vm2292, -inf, %v1551
      %v2437 = vsel %vm2292, -inf, %v1553
      %v2438 = vsel %vm2292, -inf, %v1744
      %v2439 = vsel %vm2292, -inf, %v1746
      %v2440 = vsel %vm2292, -inf, %v1937
      %v2441 = vsel %vm2292, -inf, %v1939
      %v2442 = vsel %vm2292, -inf, %v2130
      %v2443 = vsel %vm2292, -inf, %v2132
      %v2444 = vsel %vm2293, -inf, %v1555
      %v2445 = vsel %vm2293, -inf, %v1557
      %v2446 = vsel %vm2293, -inf, %v1748
      %v2447 = vsel %vm2293, -inf, %v1750
      %v2448 = vsel %vm2293, -inf, %v1941
      %v2449 = vsel %vm2293, -inf, %v1943
      %v2450 = vsel %vm2293, -inf, %v2134
      %v2451 = vsel %vm2293, -inf, %v2136
      %v2452 = vsel %vm2294, -inf, %v1561
      %v2453 = vsel %vm2294, -inf, %v1563
      %v2454 = vsel %vm2294, -inf, %v1754
      %v2455 = vsel %vm2294, -inf, %v1756
      %v2456 = vsel %vm2294, -inf, %v1947
      %v2457 = vsel %vm2294, -inf, %v1949
      %v2458 = vsel %vm2294, -inf, %v2140
      %v2459 = vsel %vm2294, -inf, %v2142
      %v2460 = vsel %vm2295, -inf, %v1565
      %v2461 = vsel %vm2295, -inf, %v1567
      %v2462 = vsel %vm2295, -inf, %v1758
      %v2463 = vsel %vm2295, -inf, %v1760
      %v2464 = vsel %vm2295, -inf, %v1951
      %v2465 = vsel %vm2295, -inf, %v1953
      %v2466 = vsel %vm2295, -inf, %v2144
      %v2467 = vsel %vm2295, -inf, %v2146
      %v2468 = vsel %vm2296, -inf, %v1571
      %v2469 = vsel %vm2296, -inf, %v1573
      %v2470 = vsel %vm2296, -inf, %v1764
      %v2471 = vsel %vm2296, -inf, %v1766
      %v2472 = vsel %vm2296, -inf, %v1957
      %v2473 = vsel %vm2296, -inf, %v1959
      %v2474 = vsel %vm2296, -inf, %v2150
      %v2475 = vsel %vm2296, -inf, %v2152
      %v2476 = vsel %vm2297, -inf, %v1575
      %v2477 = vsel %vm2297, -inf, %v1577
      %v2478 = vsel %vm2297, -inf, %v1768
      %v2479 = vsel %vm2297, -inf, %v1770
      %v2480 = vsel %vm2297, -inf, %v1961
      %v2481 = vsel %vm2297, -inf, %v1963
      %v2482 = vsel %vm2297, -inf, %v2154
      %v2483 = vsel %vm2297, -inf, %v2156
      %v2484 = vsel %vm2298, -inf, %v1581
      %v2485 = vsel %vm2298, -inf, %v1583
      %v2486 = vsel %vm2298, -inf, %v1774
      %v2487 = vsel %vm2298, -inf, %v1776
      %v2488 = vsel %vm2298, -inf, %v1967
      %v2489 = vsel %vm2298, -inf, %v1969
      %v2490 = vsel %vm2298, -inf, %v2160
      %v2491 = vsel %vm2298, -inf, %v2162
      %v2492 = vsel %vm2299, -inf, %v1585
      %v2493 = vsel %vm2299, -inf, %v1587
      %v2494 = vsel %vm2299, -inf, %v1778
      %v2495 = vsel %vm2299, -inf, %v1780
      %v2496 = vsel %vm2299, -inf, %v1971
      %v2497 = vsel %vm2299, -inf, %v1973
      %v2498 = vsel %vm2299, -inf, %v2164
      %v2499 = vsel %vm2299, -inf, %v2166
      %v2500 = vsel %vm2300, -inf, %v1591
      %v2501 = vsel %vm2300, -inf, %v1593
      %v2502 = vsel %vm2300, -inf, %v1784
      %v2503 = vsel %vm2300, -inf, %v1786
      %v2504 = vsel %vm2300, -inf, %v1977
      %v2505 = vsel %vm2300, -inf, %v1979
      %v2506 = vsel %vm2300, -inf, %v2170
      %v2507 = vsel %vm2300, -inf, %v2172
      %v2508 = vsel %vm2301, -inf, %v1595
      %v2509 = vsel %vm2301, -inf, %v1597
      %v2510 = vsel %vm2301, -inf, %v1788
      %v2511 = vsel %vm2301, -inf, %v1790
      %v2512 = vsel %vm2301, -inf, %v1981
      %v2513 = vsel %vm2301, -inf, %v1983
      %v2514 = vsel %vm2301, -inf, %v2174
      %v2515 = vsel %vm2301, -inf, %v2176
      %v2516 = vsel %vm2302, -inf, %v1601
      %v2517 = vsel %vm2302, -inf, %v1603
      %v2518 = vsel %vm2302, -inf, %v1794
      %v2519 = vsel %vm2302, -inf, %v1796
      %v2520 = vsel %vm2302, -inf, %v1987
      %v2521 = vsel %vm2302, -inf, %v1989
      %v2522 = vsel %vm2302, -inf, %v2180
      %v2523 = vsel %vm2302, -inf, %v2182
      %v2524 = vsel %vm2303, -inf, %v1605
      %v2525 = vsel %vm2303, -inf, %v1607
      %v2526 = vsel %vm2303, -inf, %v1798
      %v2527 = vsel %vm2303, -inf, %v1800
      %v2528 = vsel %vm2303, -inf, %v1991
      %v2529 = vsel %vm2303, -inf, %v1993
      %v2530 = vsel %vm2303, -inf, %v2184
      %v2531 = vsel %vm2303, -inf, %v2186
      %v2532 = vsel %vm2304, -inf, %v1611
      %v2533 = vsel %vm2304, -inf, %v1613
      %v2534 = vsel %vm2304, -inf, %v1804
      %v2535 = vsel %vm2304, -inf, %v1806
      %v2536 = vsel %vm2304, -inf, %v1997
      %v2537 = vsel %vm2304, -inf, %v1999
      %v2538 = vsel %vm2304, -inf, %v2190
      %v2539 = vsel %vm2304, -inf, %v2192
      %v2540 = vsel %vm2305, -inf, %v1615
      %v2541 = vsel %vm2305, -inf, %v1617
      %v2542 = vsel %vm2305, -inf, %v1808
      %v2543 = vsel %vm2305, -inf, %v1810
      %v2544 = vsel %vm2305, -inf, %v2001
      %v2545 = vsel %vm2305, -inf, %v2003
      %v2546 = vsel %vm2305, -inf, %v2194
      %v2547 = vsel %vm2305, -inf, %v2196
      %v2548 = vsel %vm2306, -inf, %v1621
      %v2549 = vsel %vm2306, -inf, %v1623
      %v2550 = vsel %vm2306, -inf, %v1814
      %v2551 = vsel %vm2306, -inf, %v1816
      %v2552 = vsel %vm2306, -inf, %v2007
      %v2553 = vsel %vm2306, -inf, %v2009
      %v2554 = vsel %vm2306, -inf, %v2200
      %v2555 = vsel %vm2306, -inf, %v2202
      %v2556 = vsel %vm2307, -inf, %v1625
      %v2557 = vsel %vm2307, -inf, %v1627
      %v2558 = vsel %vm2307, -inf, %v1818
      %v2559 = vsel %vm2307, -inf, %v1820
      %v2560 = vsel %vm2307, -inf, %v2011
      %v2561 = vsel %vm2307, -inf, %v2013
      %v2562 = vsel %vm2307, -inf, %v2204
      %v2563 = vsel %vm2307, -inf, %v2206
      %v2564 = vld [vmem:[#allocation2] sm:$0xff]
      %v2565 = vmax.f32 %v2308, %v2316
      %v2566 = vmax.f32 %v2565, %v2324
      %v2567 = vmax.f32 %v2566, %v2332
      %v2568 = vmax.f32 %v2567, %v2340
      %v2569 = vmax.f32 %v2568, %v2348
      %v2570 = vmax.f32 %v2569, %v2356
      %v2571 = vmax.f32 %v2570, %v2364
      %v2572 = vmax.f32 %v2571, %v2372
      %v2573 = vmax.f32 %v2572, %v2380
      %v2574 = vmax.f32 %v2573, %v2388
      %v2575 = vmax.f32 %v2574, %v2396
      %v2576 = vmax.f32 %v2575, %v2404
      %v2577 = vmax.f32 %v2576, %v2412
      %v2578 = vmax.f32 %v2577, %v2420
      %v2579 = vmax.f32 %v2578, %v2428
      %v2580 = vmax.f32 %v2579, %v2436
      %v2581 = vmax.f32 %v2580, %v2444
      %v2582 = vmax.f32 %v2581, %v2452
      %v2583 = vmax.f32 %v2582, %v2460
      %v2584 = vmax.f32 %v2583, %v2468
      %v2585 = vmax.f32 %v2584, %v2476
      %v2586 = vmax.f32 %v2585, %v2484
      %v2587 = vmax.f32 %v2586, %v2492
      %v2588 = vmax.f32 %v2587, %v2500
      %v2589 = vmax.f32 %v2588, %v2508
      %v2590 = vmax.f32 %v2589, %v2516
      %v2591 = vmax.f32 %v2590, %v2524
      %v2592 = vmax.f32 %v2591, %v2532
      %v2593 = vmax.f32 %v2592, %v2540
      %v2594 = vmax.f32 %v2593, %v2548
      %v2595 = vmax.f32 %v2594, %v2556
      %v2596 = vrot.slane %v2595, 4
      %v2597 = vmax.f32 %v2595, %v2596
      %v2598 = vrot.slane %v2597, 2
      %v2599 = vmax.f32 %v2597, %v2598
      %v2600 = vrot.slane %v2599, 1
      %v2601 = vmax.f32 %v2599, %v2600
      %v2602 = vmax.f32 %v2309, %v2317
      %v2603 = vmax.f32 %v2602, %v2325
      %v2604 = vmax.f32 %v2603, %v2333
      %v2605 = vmax.f32 %v2604, %v2341
      %v2606 = vmax.f32 %v2605, %v2349
      %v2607 = vmax.f32 %v2606, %v2357
      %v2608 = vmax.f32 %v2607, %v2365
      %v2609 = vmax.f32 %v2608, %v2373
      %v2610 = vmax.f32 %v2609, %v2381
      %v2611 = vmax.f32 %v2610, %v2389
      %v2612 = vmax.f32 %v2611, %v2397
      %v2613 = vmax.f32 %v2612, %v2405
      %v2614 = vmax.f32 %v2613, %v2413
      %v2615 = vmax.f32 %v2614, %v2421
      %v2616 = vmax.f32 %v2615, %v2429
      %v2617 = vmax.f32 %v2616, %v2437
      %v2618 = vmax.f32 %v2617, %v2445
      %v2619 = vmax.f32 %v2618, %v2453
      %v2620 = vmax.f32 %v2619, %v2461
      %v2621 = vmax.f32 %v2620, %v2469
      %v2622 = vmax.f32 %v2621, %v2477
      %v2623 = vmax.f32 %v2622, %v2485
      %v2624 = vmax.f32 %v2623, %v2493
      %v2625 = vmax.f32 %v2624, %v2501
      %v2626 = vmax.f32 %v2625, %v2509
      %v2627 = vmax.f32 %v2626, %v2517
      %v2628 = vmax.f32 %v2627, %v2525
      %v2629 = vmax.f32 %v2628, %v2533
      %v2630 = vmax.f32 %v2629, %v2541
      %v2631 = vmax.f32 %v2630, %v2549
      %v2632 = vmax.f32 %v2631, %v2557
      %v2633 = vrot.slane %v2632, 4
      %v2634 = vmax.f32 %v2632, %v2633
      %v2635 = vrot.slane %v2634, 2
      %v2636 = vmax.f32 %v2634, %v2635
      %v2637 = vrot.slane %v2636, 1
      %v2638 = vmax.f32 %v2636, %v2637
      %v2639 = vmax.f32 %v2310, %v2318
      %v2640 = vmax.f32 %v2639, %v2326
      %v2641 = vmax.f32 %v2640, %v2334
      %v2642 = vmax.f32 %v2641, %v2342
      %v2643 = vmax.f32 %v2642, %v2350
      %v2644 = vmax.f32 %v2643, %v2358
      %v2645 = vmax.f32 %v2644, %v2366
      %v2646 = vmax.f32 %v2645, %v2374
      %v2647 = vmax.f32 %v2646, %v2382
      %v2648 = vmax.f32 %v2647, %v2390
      %v2649 = vmax.f32 %v2648, %v2398
      %v2650 = vmax.f32 %v2649, %v2406
      %v2651 = vmax.f32 %v2650, %v2414
      %v2652 = vmax.f32 %v2651, %v2422
      %v2653 = vmax.f32 %v2652, %v2430
      %v2654 = vmax.f32 %v2653, %v2438
      %v2655 = vmax.f32 %v2654, %v2446
      %v2656 = vmax.f32 %v2655, %v2454
      %v2657 = vmax.f32 %v2656, %v2462
      %v2658 = vmax.f32 %v2657, %v2470
      %v2659 = vmax.f32 %v2658, %v2478
      %v2660 = vmax.f32 %v2659, %v2486
      %v2661 = vmax.f32 %v2660, %v2494
      %v2662 = vmax.f32 %v2661, %v2502
      %v2663 = vmax.f32 %v2662, %v2510
      %v2664 = vmax.f32 %v2663, %v2518
      %v2665 = vmax.f32 %v2664, %v2526
      %v2666 = vmax.f32 %v2665, %v2534
      %v2667 = vmax.f32 %v2666, %v2542
      %v2668 = vmax.f32 %v2667, %v2550
      %v2669 = vmax.f32 %v2668, %v2558
      %v2670 = vrot.slane %v2669, 4
      %v2671 = vmax.f32 %v2669, %v2670
      %v2672 = vrot.slane %v2671, 2
      %v2673 = vmax.f32 %v2671, %v2672
      %v2674 = vrot.slane %v2673, 1
      %v2675 = vmax.f32 %v2673, %v2674
      %v2676 = vmax.f32 %v2311, %v2319
      %v2677 = vmax.f32 %v2676, %v2327
      %v2678 = vmax.f32 %v2677, %v2335
      %v2679 = vmax.f32 %v2678, %v2343
      %v2680 = vmax.f32 %v2679, %v2351
      %v2681 = vmax.f32 %v2680, %v2359
      %v2682 = vmax.f32 %v2681, %v2367
      %v2683 = vmax.f32 %v2682, %v2375
      %v2684 = vmax.f32 %v2683, %v2383
      %v2685 = vmax.f32 %v2684, %v2391
      %v2686 = vmax.f32 %v2685, %v2399
      %v2687 = vmax.f32 %v2686, %v2407
      %v2688 = vmax.f32 %v2687, %v2415
      %v2689 = vmax.f32 %v2688, %v2423
      %v2690 = vmax.f32 %v2689, %v2431
      %v2691 = vmax.f32 %v2690, %v2439
      %v2692 = vmax.f32 %v2691, %v2447
      %v2693 = vmax.f32 %v2692, %v2455
      %v2694 = vmax.f32 %v2693, %v2463
      %v2695 = vmax.f32 %v2694, %v2471
      %v2696 = vmax.f32 %v2695, %v2479
      %v2697 = vmax.f32 %v2696, %v2487
      %v2698 = vmax.f32 %v2697, %v2495
      %v2699 = vmax.f32 %v2698, %v2503
      %v2700 = vmax.f32 %v2699, %v2511
      %v2701 = vmax.f32 %v2700, %v2519
      %v2702 = vmax.f32 %v2701, %v2527
      %v2703 = vmax.f32 %v2702, %v2535
      %v2704 = vmax.f32 %v2703, %v2543
      %v2705 = vmax.f32 %v2704, %v2551
      %v2706 = vmax.f32 %v2705, %v2559
      %v2707 = vrot.slane %v2706, 4
      %v2708 = vmax.f32 %v2706, %v2707
      %v2709 = vrot.slane %v2708, 2
      %v2710 = vmax.f32 %v2708, %v2709
      %v2711 = vrot.slane %v2710, 1
      %v2712 = vmax.f32 %v2710, %v2711
      %v2713 = vmax.f32 %v2312, %v2320
      %v2714 = vmax.f32 %v2713, %v2328
      %v2715 = vmax.f32 %v2714, %v2336
      %v2716 = vmax.f32 %v2715, %v2344
      %v2717 = vmax.f32 %v2716, %v2352
      %v2718 = vmax.f32 %v2717, %v2360
      %v2719 = vmax.f32 %v2718, %v2368
      %v2720 = vmax.f32 %v2719, %v2376
      %v2721 = vmax.f32 %v2720, %v2384
      %v2722 = vmax.f32 %v2721, %v2392
      %v2723 = vmax.f32 %v2722, %v2400
      %v2724 = vmax.f32 %v2723, %v2408
      %v2725 = vmax.f32 %v2724, %v2416
      %v2726 = vmax.f32 %v2725, %v2424
      %v2727 = vmax.f32 %v2726, %v2432
      %v2728 = vmax.f32 %v2727, %v2440
      %v2729 = vmax.f32 %v2728, %v2448
      %v2730 = vmax.f32 %v2729, %v2456
      %v2731 = vmax.f32 %v2730, %v2464
      %v2732 = vmax.f32 %v2731, %v2472
      %v2733 = vmax.f32 %v2732, %v2480
      %v2734 = vmax.f32 %v2733, %v2488
      %v2735 = vmax.f32 %v2734, %v2496
      %v2736 = vmax.f32 %v2735, %v2504
      %v2737 = vmax.f32 %v2736, %v2512
      %v2738 = vmax.f32 %v2737, %v2520
      %v2739 = vmax.f32 %v2738, %v2528
      %v2740 = vmax.f32 %v2739, %v2536
      %v2741 = vmax.f32 %v2740, %v2544
      %v2742 = vmax.f32 %v2741, %v2552
      %v2743 = vmax.f32 %v2742, %v2560
      %v2744 = vrot.slane %v2743, 4
      %v2745 = vmax.f32 %v2743, %v2744
      %v2746 = vrot.slane %v2745, 2
      %v2747 = vmax.f32 %v2745, %v2746
      %v2748 = vrot.slane %v2747, 1
      %v2749 = vmax.f32 %v2747, %v2748
      %v2750 = vmax.f32 %v2313, %v2321
      %v2751 = vmax.f32 %v2750, %v2329
      %v2752 = vmax.f32 %v2751, %v2337
      %v2753 = vmax.f32 %v2752, %v2345
      %v2754 = vmax.f32 %v2753, %v2353
      %v2755 = vmax.f32 %v2754, %v2361
      %v2756 = vmax.f32 %v2755, %v2369
      %v2757 = vmax.f32 %v2756, %v2377
      %v2758 = vmax.f32 %v2757, %v2385
      %v2759 = vmax.f32 %v2758, %v2393
      %v2760 = vmax.f32 %v2759, %v2401
      %v2761 = vmax.f32 %v2760, %v2409
      %v2762 = vmax.f32 %v2761, %v2417
      %v2763 = vmax.f32 %v2762, %v2425
      %v2764 = vmax.f32 %v2763, %v2433
      %v2765 = vmax.f32 %v2764, %v2441
      %v2766 = vmax.f32 %v2765, %v2449
      %v2767 = vmax.f32 %v2766, %v2457
      %v2768 = vmax.f32 %v2767, %v2465
      %v2769 = vmax.f32 %v2768, %v2473
      %v2770 = vmax.f32 %v2769, %v2481
      %v2771 = vmax.f32 %v2770, %v2489
      %v2772 = vmax.f32 %v2771, %v2497
      %v2773 = vmax.f32 %v2772, %v2505
      %v2774 = vmax.f32 %v2773, %v2513
      %v2775 = vmax.f32 %v2774, %v2521
      %v2776 = vmax.f32 %v2775, %v2529
      %v2777 = vmax.f32 %v2776, %v2537
      %v2778 = vmax.f32 %v2777, %v2545
      %v2779 = vmax.f32 %v2778, %v2553
      %v2780 = vmax.f32 %v2779, %v2561
      %v2781 = vrot.slane %v2780, 4
      %v2782 = vmax.f32 %v2780, %v2781
      %v2783 = vrot.slane %v2782, 2
      %v2784 = vmax.f32 %v2782, %v2783
      %v2785 = vrot.slane %v2784, 1
      %v2786 = vmax.f32 %v2784, %v2785
      %v2787 = vmax.f32 %v2314, %v2322
      %v2788 = vmax.f32 %v2787, %v2330
      %v2789 = vmax.f32 %v2788, %v2338
      %v2790 = vmax.f32 %v2789, %v2346
      %v2791 = vmax.f32 %v2790, %v2354
      %v2792 = vmax.f32 %v2791, %v2362
      %v2793 = vmax.f32 %v2792, %v2370
      %v2794 = vmax.f32 %v2793, %v2378
      %v2795 = vmax.f32 %v2794, %v2386
      %v2796 = vmax.f32 %v2795, %v2394
      %v2797 = vmax.f32 %v2796, %v2402
      %v2798 = vmax.f32 %v2797, %v2410
      %v2799 = vmax.f32 %v2798, %v2418
      %v2800 = vmax.f32 %v2799, %v2426
      %v2801 = vmax.f32 %v2800, %v2434
      %v2802 = vmax.f32 %v2801, %v2442
      %v2803 = vmax.f32 %v2802, %v2450
      %v2804 = vmax.f32 %v2803, %v2458
      %v2805 = vmax.f32 %v2804, %v2466
      %v2806 = vmax.f32 %v2805, %v2474
      %v2807 = vmax.f32 %v2806, %v2482
      %v2808 = vmax.f32 %v2807, %v2490
      %v2809 = vmax.f32 %v2808, %v2498
      %v2810 = vmax.f32 %v2809, %v2506
      %v2811 = vmax.f32 %v2810, %v2514
      %v2812 = vmax.f32 %v2811, %v2522
      %v2813 = vmax.f32 %v2812, %v2530
      %v2814 = vmax.f32 %v2813, %v2538
      %v2815 = vmax.f32 %v2814, %v2546
      %v2816 = vmax.f32 %v2815, %v2554
      %v2817 = vmax.f32 %v2816, %v2562
      %v2818 = vrot.slane %v2817, 4
      %v2819 = vmax.f32 %v2817, %v2818
      %v2820 = vrot.slane %v2819, 2
      %v2821 = vmax.f32 %v2819, %v2820
      %v2822 = vrot.slane %v2821, 1
      %v2823 = vmax.f32 %v2821, %v2822
      %v2824 = vmax.f32 %v2315, %v2323
      %v2825 = vmax.f32 %v2824, %v2331
      %v2826 = vmax.f32 %v2825, %v2339
      %v2827 = vmax.f32 %v2826, %v2347
      %v2828 = vmax.f32 %v2827, %v2355
      %v2829 = vmax.f32 %v2828, %v2363
      %v2830 = vmax.f32 %v2829, %v2371
      %v2831 = vmax.f32 %v2830, %v2379
      %v2832 = vmax.f32 %v2831, %v2387
      %v2833 = vmax.f32 %v2832, %v2395
      %v2834 = vmax.f32 %v2833, %v2403
      %v2835 = vmax.f32 %v2834, %v2411
      %v2836 = vmax.f32 %v2835, %v2419
      %v2837 = vmax.f32 %v2836, %v2427
      %v2838 = vmax.f32 %v2837, %v2435
      %v2839 = vmax.f32 %v2838, %v2443
      %v2840 = vmax.f32 %v2839, %v2451
      %v2841 = vmax.f32 %v2840, %v2459
      %v2842 = vmax.f32 %v2841, %v2467
      %v2843 = vmax.f32 %v2842, %v2475
      %v2844 = vmax.f32 %v2843, %v2483
      %v2845 = vmax.f32 %v2844, %v2491
      %v2846 = vmax.f32 %v2845, %v2499
      %v2847 = vmax.f32 %v2846, %v2507
      %v2848 = vmax.f32 %v2847, %v2515
      %v2849 = vmax.f32 %v2848, %v2523
      %v2850 = vmax.f32 %v2849, %v2531
      %v2851 = vmax.f32 %v2850, %v2539
      %v2852 = vmax.f32 %v2851, %v2547
      %v2853 = vmax.f32 %v2852, %v2555
      %v2854 = vmax.f32 %v2853, %v2563
      %v2855 = vrot.slane %v2854, 4
      %v2856 = vmax.f32 %v2854, %v2855
      %v2857 = vrot.slane %v2856, 2
      %v2858 = vmax.f32 %v2856, %v2857
      %v2859 = vrot.slane %v2858, 1
      %v2860 = vmax.f32 %v2858, %v2859
      %v2869 = vcombine.low %v2601, %v2638
      %v2870 = vcombine.low %v2675, %v2712
      %v2871 = vcombine.low %v2749, %v2786
      %v2872 = vcombine.low %v2823, %v2860
      %v2874 = vunpack.c.l.s4 1966171168
      %v2875 = vunpack.c.0.s8 %v2874
      %v2876 = vlaneseq
      %v2877 = vshrl.u32 %v2876, 7
      %v2878 = vsub.s32 %v2875, %v2877
      %v2879 = vrot.slane %v2869, %v2878
      %v2881 = vunpack.c.l.s4 1966171168
      %v2882 = vunpack.c.0.s8 %v2881
      %v2883 = vlaneseq
      %v2884 = vshrl.u32 %v2883, 7
      %v2885 = vsub.s32 %v2882, %v2884
      %v2886 = vrot.slane %v2870, %v2885
      %v2888 = vunpack.c.l.s4 1966171168
      %v2889 = vunpack.c.0.s8 %v2888
      %v2890 = vlaneseq
      %v2891 = vshrl.u32 %v2890, 7
      %v2892 = vsub.s32 %v2889, %v2891
      %v2893 = vrot.slane %v2871, %v2892
      %v2895 = vunpack.c.l.s4 1966171168
      %v2896 = vunpack.c.0.s8 %v2895
      %v2897 = vlaneseq
      %v2898 = vshrl.u32 %v2897, 7
      %v2899 = vsub.s32 %v2896, %v2898
      %v2900 = vrot.slane %v2872, %v2899
      %v2901 = vcombine.low %v2879, %v2886
      %v2902 = vcombine.low %v2893, %v2900
      %v2904 = vunpack.c.l.s4 1966171168
      %v2905 = vunpack.c.0.s8 %v2904
      %v2906 = vlaneseq
      %v2907 = vshrl.u32 %v2906, 7
      %v2908 = vsub.s32 %v2905, %v2907
      %v2909 = vrot.slane %v2901, %v2908
      %v2911 = vunpack.c.l.s4 1966171168
      %v2912 = vunpack.c.0.s8 %v2911
      %v2913 = vlaneseq
      %v2914 = vshrl.u32 %v2913, 7
      %v2915 = vsub.s32 %v2912, %v2914
      %v2916 = vrot.slane %v2902, %v2915
      %v2917 = vcombine.low %v2909, %v2916
      %v2919 = vmax.f32 %v2564, %v2917
      %2920 = vst [vmem:[#allocation2] sm:$0xff] %v2919
      // Predicated region
      $region53: #{pointnetfeat_forward.5} parent=47 // pred_check
        %p2921 = pneg %p323
      $region54: #{pointnetfeat_forward.5} parent=47 // pred_check_branch
        %2923 = sbr.rel (%p2921) target = $region56
      $region55: #{pointnetfeat_forward.5} parent=47 // pred_region
        %v2924 = vld [vmem:[#allocation2] sm:$0xff]
        %v2925 = vadd.f32 %v2924, 0.0
        %2926 = vst [vmem:[%s321] sm:$0xff] %v2925
      $region56: #{pointnetfeat_forward.5} parent=47 // pred_fallthru
        _
      %p2927 = scmp.lt.s32.totalorder %s22, 1
      %s2928 = scalar_select %p2927, %s22, 1
      %s2929 = smul.addr %s2928, 8
      %s2930 = scalar_lea.vmem %s7, %s2929
      // Predicated region
      $region57: #{pointnetfeat_forward.5} parent=47 // pred_check
        %p2931 = pneg %p207
      $region58: #{pointnetfeat_forward.5} parent=47 // pred_check_branch
        %2933 = sbr.rel (%p2931) target = $region60
      $region59: #{pointnetfeat_forward.5} parent=47 // pred_region
        _
      $region60: #{pointnetfeat_forward.5} parent=47 // pred_fallthru
        _
    $region48: #{pointnetfeat_forward.5} parent=5 // pred_fallthru
      _
    %p2934 = scmp.le.s32.totalorder 2, %s13
    // Predicated region
    $region61: #{pointnetfeat_forward.5} parent=5 // pred_check
      %p2935 = pneg %p2934
    $region62: #{pointnetfeat_forward.5} parent=5 // pred_check_branch
      %2937 = sbr.rel (%p2935) target = $region64
    $region63: #{pointnetfeat_forward.5} parent=5 // pred_region
      %s2938 = ssub.s32 %s13, 2
      // Predicated region
      $region65: #{pointnetfeat_forward.5} parent=63 // pred_check
        %p2939 = pneg %p213
      $region66: #{pointnetfeat_forward.5} parent=63 // pred_check_branch
        %2941 = sbr.rel (%p2939) target = $region68
      $region67: #{pointnetfeat_forward.5} parent=63 // pred_region
        %p2942 = scmp.lt.s32.totalorder %s24, 1
        %s2943 = scalar_select %p2942, %s24, 1
        %s2944 = smul.addr %s2943, 8
        %s2945 = scalar_lea.vmem %s7, %s2944
      $region68: #{pointnetfeat_forward.5} parent=63 // pred_fallthru
        _
    $region64: #{pointnetfeat_forward.5} parent=5 // pred_fallthru
      _
  $region6: #{pointnetfeat_forward.5} parent=0 // loop_footer
    %s17 = sadd.s32 1, %s13
  $region7: #{pointnetfeat_forward.5} parent=0 // loop_footer_branch
    %12 = sbr.rel target = $region3
  $region8: #{pointnetfeat_forward.5} parent=0 // loop_exit
    _

</llo_original>
